<compile_context>
chip_gen: v7x
topology: tpu7x:2x2x1
jax: 0.10.0
libtpu: 0.0.40
codegen_flags: <defaults>
</compile_context>

<pallas_src>
import jax
import jax.numpy as jnp
from jax.experimental import pallas as pl
from jax.experimental.pallas import tpu as pltpu

RHO = 1.0        # Alt-Diff augmented-Lagrangian penalty
N_ITERS = 20     # fixed number of Alt-Diff iterations

EQ = 8           # equality-dual block padded to one 8-row sublane tile
IQ = 8           # inequality-dual block padded to one 8-row sublane tile
ND = EQ + IQ     # padded dual dimension


def altdiff_kernel(xt_ref, w1_ref, b1_ref, kmat_ref, cconst_ref, st_ref,
                   wzrec_ref, dc_ref, out_ref):
    f32 = jnp.float32
    HI = jax.lax.Precision.HIGHEST
    TB = xt_ref.shape[1]                       # batch rows of this tile (lanes)

    # ---- fc1 + ReLU, batch on lanes:  p^T = relu(W1 @ x^T + b1) ------------
    pT = jnp.maximum(
        jnp.dot(w1_ref[...], xt_ref[...], preferred_element_type=f32,
                precision=HI) + b1_ref[...], 0.0)                   # (nH, TB)

    # ---- single fused per-tile precompute dot -------------------------------
    #   rows [0:ND]      -> c1^T = (AG_pad q0)^T   (constant of the Az/Gz recursion)
    #   rows [ND:ND+nC]  -> f2^T = (W2 q0 + b2)^T  (constant of the fc2 output)
    # with q0 = Minv (rho A' b - p).
    cf = cconst_ref[...] - jnp.dot(kmat_ref[...], pT,
                                   preferred_element_type=f32, precision=HI)
    c1T = cf[:ND, :]                                                # (ND, TB)
    f2T = cf[ND:, :]                                                # (nC, TB)

    # Hoisted broadcast constants (padded rows are exactly zero).
    dc = dc_ref[...]                                                # (ND, 1)
    bB = jnp.broadcast_to(dc[:EQ, :], (EQ, TB))                     # eq rhs
    hB = jnp.broadcast_to(dc[EQ:, :], (IQ, TB))                     # ineq rhs

    # Lane-broadcast columns of S^T, hoisted out of the loop.  The per-iteration
    # K=ND contraction then runs on the VPU in exact f32 (no MXU round trip, no
    # multi-pass bf16 on the serial critical path).
    st = st_ref[...]                                                # (ND, ND) = S^T
    st_cols = [jnp.broadcast_to(st[:, k:k + 1], (ND, TB)) for k in range(ND)]

    def azgz_of(lam_t, w_t):
        # [Az ; Gz]^T = c1^T - S^T @ [lam ; w]^T, as ND rank-1 VPU updates.
        acc = c1T
        for k in range(EQ):
            acc = acc - st_cols[k] * lam_t[k:k + 1, :]
        for k in range(IQ):
            acc = acc - st_cols[EQ + k] * w_t[k:k + 1, :]
        return acc

    sT = jnp.zeros((IQ, TB), f32)
    lamT = jnp.zeros((EQ, TB), f32)
    nuT = jnp.zeros((IQ, TB), f32)

    # ---- N_ITERS-1 full Alt-Diff dual updates (fully unrolled) -------------
    for _ in range(N_ITERS - 1):
        wT = nuT + RHO * (sT - hB)
        azgz = azgz_of(lamT, wT)
        AzT = azgz[:EQ, :]
        GzT = azgz[EQ:, :]
        sT = jnp.maximum(-(1.0 / RHO) * nuT - (GzT - hB), 0.0)
        lamT = lamT + RHO * (AzT - bB)
        nuT = nuT + RHO * (GzT + sT - hB)

    # ---- peeled final iteration: only its z feeds the output, and the
    # z-recovery is folded into fc2:  logits^T = f2^T - (W2 Minv AG') d -------
    wT = nuT + RHO * (sT - hB)
    dT = jnp.concatenate([lamT, wT], axis=0)                        # (ND, TB)
    logitsT = f2T - jnp.dot(wzrec_ref[...], dT,
                            preferred_element_type=f32, precision=HI)

    # ---- log_softmax over the class (sublane) axis; batch stays lane-dense --
    m = jnp.max(logitsT, axis=0, keepdims=True)
    lse = m + jnp.log(jnp.sum(jnp.exp(logitsT - m), axis=0, keepdims=True))
    out_ref[...] = logitsT - lse


def _compute_minv(Q, A, G):
    """Minv = (Q + rho (A'A + G'G))^-1 via Cholesky (M is SPD), symmetrized."""
    HI = jax.lax.Precision.HIGHEST
    nH = Q.shape[0]
    M = Q.astype(jnp.float32) + RHO * (
        jnp.dot(A.T, A, precision=HI) + jnp.dot(G.T, G, precision=HI))
    cho = jax.scipy.linalg.cho_factor(M)
    Minv = jax.scipy.linalg.cho_solve(cho, jnp.eye(nH, dtype=jnp.float32))
    return 0.5 * (Minv + Minv.T)


def altdiff_forward(x, w1, b1, w2, b2, Q, G, h, A, bvec, *, tile_b=None):
    """x: (B, C, H, W) float32 (flattened like x.view(B, -1))."""
    HI = jax.lax.Precision.HIGHEST
    dot = lambda a, b: jnp.dot(a, b, precision=HI)

    B = x.shape[0]
    x_flat = x.reshape(B, -1).astype(jnp.float32)
    nF = x_flat.shape[1]
    nH = w1.shape[0]
    nC = w2.shape[0]
    neq = A.shape[0]
    nineq = G.shape[0]
    assert neq <= EQ and nineq <= IQ, "kernel assumes neq, nineq <= 8"

    Af = A.astype(jnp.float32)
    Gf = G.astype(jnp.float32)
    W1 = w1.astype(jnp.float32)
    W2 = w2.astype(jnp.float32)
    b1col = b1.reshape(nH, 1).astype(jnp.float32)
    b2col = b2.reshape(nC, 1).astype(jnp.float32)

    # Zero-pad the eq/ineq blocks to full 8-row sublane tiles: every in-kernel
    # concat/slice on the dual axis is tile aligned and padded duals stay 0.
    A_pad = jnp.zeros((EQ, nH), jnp.float32).at[:neq, :].set(Af)
    G_pad = jnp.zeros((IQ, nH), jnp.float32).at[:nineq, :].set(Gf)
    b_pad = jnp.zeros((EQ,), jnp.float32).at[:neq].set(bvec.astype(jnp.float32))
    h_pad = jnp.zeros((IQ,), jnp.float32).at[:nineq].set(h.astype(jnp.float32))
    AG = jnp.concatenate([A_pad, G_pad], axis=0)             # (ND, nH)

    # ---- batch-independent QP precompute (wrapper-side, HIGHEST matmuls) ----
    Minv = _compute_minv(Q, Af, Gf)
    AGMinv = dot(AG, Minv)                                    # (ND, nH)
    W2Minv = dot(W2, Minv)                                    # (nC, nH)
    ST = dot(AGMinv, AG.T).T                                  # (ND, ND) = (AG Minv AG')^T
    WZREC = dot(W2Minv, AG.T)                                 # (nC, ND) = W2 Minv AG'
    c0T = RHO * dot(Minv, dot(Af.T, bvec.reshape(neq, 1).astype(jnp.float32)))
    KMAT = jnp.concatenate([AGMinv, W2Minv], axis=0)          # (ND+nC, nH)
    CCONST = jnp.concatenate([dot(AG, c0T), dot(W2, c0T) + b2col], axis=0)
    dual_const = jnp.concatenate([b_pad, h_pad]).reshape(ND, 1)

    xT = x_flat.T                                             # (nF, B): batch on lanes

    if tile_b is None:
        # One big tile per TensorCore: single grid step on v5e/v6e (1 TC each);
        # >=2 parallel lane-aligned tiles when the batch splits by 256 (v7x has
        # 2 TCs).  VMEM is never a constraint at these operand sizes.
        if B % 256 == 0:
            tile_b = max(128, min(512, B // 2))
            while B % tile_b:
                tile_b -= 128
        else:
            tile_b = B
    assert B % tile_b == 0
    grid = (B // tile_b,)
    rep = lambda i: (0, 0)

    outT = pl.pallas_call(
        altdiff_kernel,
        out_shape=jax.ShapeDtypeStruct((nC, B), jnp.float32),
        grid=grid,
        in_specs=[
            pl.BlockSpec((nF, tile_b), lambda i: (0, i)),     # x^T (batch on lanes)
            pl.BlockSpec((nH, nF), rep),                      # W1
            pl.BlockSpec((nH, 1), rep),                       # b1 column
            pl.BlockSpec((ND + nC, nH), rep),                 # [AG Minv ; W2 Minv]
            pl.BlockSpec((ND + nC, 1), rep),                  # [AG c0 ; W2 c0 + b2]
            pl.BlockSpec((ND, ND), rep),                      # S^T
            pl.BlockSpec((nC, ND), rep),                      # W2 Minv AG'
            pl.BlockSpec((ND, 1), rep),                       # [b_pad ; h_pad]
        ],
        out_specs=pl.BlockSpec((nC, tile_b), lambda i: (0, i)),
        compiler_params=pltpu.CompilerParams(
            dimension_semantics=("parallel",)),
    )(xT, W1, b1col, KMAT, CCONST, ST, WZREC, dual_const)
    return outT.T                                             # (B, nC)


def altdiff_reference(x, w1, b1, w2, b2, Q, G, h, A, bvec):
    """Direct (per-iteration z) Alt-Diff forward in plain JAX, near-f32 exact."""
    HI = jax.lax.Precision.HIGHEST
    dot = lambda a, b: jnp.dot(a, b, precision=HI)
    B = x.shape[0]
    xf = x.reshape(B, -1).astype(jnp.float32)
    p = jnp.maximum(dot(xf, w1.T.astype(jnp.float32)) + b1, 0.0)
    Minv = _compute_minv(Q, A.astype(jnp.float32), G.astype(jnp.float32))
    neq, nineq = A.shape[0], G.shape[0]
    s = jnp.zeros((B, nineq), jnp.float32)
    lam = jnp.zeros((B, neq), jnp.float32)
    nu = jnp.zeros((B, nineq), jnp.float32)
    z = jnp.zeros((B, Q.shape[0]), jnp.float32)
    for _ in range(N_ITERS):
        w = nu + RHO * (s - h)
        rhs = RHO * dot(bvec, A) - p - dot(lam, A) - dot(w, G)
        z = dot(rhs, Minv)
        Az = dot(z, A.T)
        Gz = dot(z, G.T)
        s = jnp.maximum(-(1.0 / RHO) * nu - (Gz - h), 0.0)
        lam = lam + RHO * (Az - bvec)
        nu = nu + RHO * (Gz + s - h)
    logits = dot(z, w2.T.astype(jnp.float32)) + b2
    return jax.nn.log_softmax(logits, axis=1)


if __name__ == "__main__":
    key = jax.random.PRNGKey(0)
    ks = jax.random.split(key, 9)

    # Small shapes consistent with the module's forward pass.
    B, C, Hs, Ws = 16, 4, 4, 4
    nFeatures = C * Hs * Ws          # 64
    nHidden, nCls = 32, 10
    neq, nineq = 4, 6
    Qpenalty = 0.1

    x = jax.random.normal(ks[0], (B, C, Hs, Ws), jnp.float32)

    # Deterministic parameter init (shapes from AltDiff.__init__).
    bnd1 = 1.0 / (nFeatures ** 0.5)
    bnd2 = 1.0 / (nHidden ** 0.5)
    w1 = jax.random.uniform(ks[1], (nHidden, nFeatures), jnp.float32, -bnd1, bnd1)
    b1 = jax.random.uniform(ks[2], (nHidden,), jnp.float32, -bnd1, bnd1)
    w2 = jax.random.uniform(ks[3], (nCls, nHidden), jnp.float32, -bnd2, bnd2)
    b2 = jax.random.uniform(ks[4], (nCls,), jnp.float32, -bnd2, bnd2)

    Q = Qpenalty * jnp.eye(nHidden, dtype=jnp.float32)
    G = jax.random.uniform(ks[5], (nineq, nHidden), jnp.float32)
    h = jax.random.uniform(ks[6], (nineq,), jnp.float32)
    A = jax.random.uniform(ks[7], (neq, nHidden), jnp.float32)
    bvec = jnp.ones((neq,), jnp.float32)

    out = altdiff_forward(x, w1, b1, w2, b2, Q, G, h, A, bvec)
    out = jax.block_until_ready(out)
    assert out.shape == (B, nCls)
    assert bool(jnp.all(jnp.isfinite(out)))

    # Validate the fused dual-space kernel against the direct Alt-Diff iteration.
    ref = jax.block_until_ready(
        altdiff_reference(x, w1, b1, w2, b2, Q, G, h, A, bvec))
    err = float(jnp.max(jnp.abs(out - ref)))
    tol = 5e-3 * (1.0 + float(jnp.max(jnp.abs(ref))))
    assert err < tol, f"kernel vs reference mismatch: {err} (tol {tol})"

    print("KERNEL_OK")
</pallas_src>

<mosaic_0001>
module attributes {stable_mosaic.version = 11 : i64} {
  func.func @altdiff_kernel(%arg0: i32, %arg1: memref<64x16xf32, #tpu.memory_space<vmem>>, %arg2: memref<32x64xf32, #tpu.memory_space<vmem>>, %arg3: memref<32x1xf32, #tpu.memory_space<vmem>>, %arg4: memref<26x32xf32, #tpu.memory_space<vmem>>, %arg5: memref<26x1xf32, #tpu.memory_space<vmem>>, %arg6: memref<16x16xf32, #tpu.memory_space<vmem>>, %arg7: memref<10x16xf32, #tpu.memory_space<vmem>>, %arg8: memref<16x1xf32, #tpu.memory_space<vmem>>, %arg9: memref<10x16xf32, #tpu.memory_space<vmem>>) attributes {dimension_semantics = [#tpu.dimension_semantics<parallel>], iteration_bounds = array<i64: 1>, scalar_prefetch = 0 : i64, scratch_operands = 0 : i64, tpu.core_type = #tpu.core_type<tc>, window_params = [{transform_indices = @transform_0, window_bounds = array<i64: 64, 16>}, {pipeline_mode = #tpu.pipeline_mode<synchronous>, transform_indices = @transform_1, window_bounds = array<i64: 32, 64>}, {pipeline_mode = #tpu.pipeline_mode<synchronous>, transform_indices = @transform_2, window_bounds = array<i64: 32, 1>}, {pipeline_mode = #tpu.pipeline_mode<synchronous>, transform_indices = @transform_3, window_bounds = array<i64: 26, 32>}, {pipeline_mode = #tpu.pipeline_mode<synchronous>, transform_indices = @transform_4, window_bounds = array<i64: 26, 1>}, {pipeline_mode = #tpu.pipeline_mode<synchronous>, transform_indices = @transform_5, window_bounds = array<i64: 16, 16>}, {pipeline_mode = #tpu.pipeline_mode<synchronous>, transform_indices = @transform_6, window_bounds = array<i64: 10, 16>}, {pipeline_mode = #tpu.pipeline_mode<synchronous>, transform_indices = @transform_7, window_bounds = array<i64: 16, 1>}, {transform_indices = @transform_8, window_bounds = array<i64: 10, 16>}]} {
    %c0 = arith.constant 0 : index
    %c0_0 = arith.constant 0 : index
    %0 = vector.load %arg2[%c0, %c0_0] : memref<32x64xf32, #tpu.memory_space<vmem>>, vector<32x64xf32>
    %c0_1 = arith.constant 0 : index
    %c0_2 = arith.constant 0 : index
    %1 = vector.load %arg1[%c0_1, %c0_2] : memref<64x16xf32, #tpu.memory_space<vmem>>, vector<64x16xf32>
    %cst = arith.constant dense<0.000000e+00> : vector<32x16xf32>
    %2 = tpu.matmul %0, %1, %cst {dimension_numbers = #tpu.dot_dimension_numbers<[1], [0], [0], [1], [0, 0, 1, 1], [], []>, precision = #tpu.contract_precision<fp32>} : vector<32x64xf32>, vector<64x16xf32>, vector<32x16xf32> -> vector<32x16xf32>
    %c0_3 = arith.constant 0 : index
    %c0_4 = arith.constant 0 : index
    %3 = vector.load %arg3[%c0_3, %c0_4] : memref<32x1xf32, #tpu.memory_space<vmem>>, vector<32x1xf32>
    %4 = vector.broadcast %3 : vector<32x1xf32> to vector<32x16xf32>
    %5 = arith.addf %2, %4 : vector<32x16xf32>
    %cst_5 = arith.constant 0.000000e+00 : f32
    %6 = vector.broadcast %cst_5 : f32 to vector<32x16xf32>
    %7 = arith.maximumf %5, %6 : vector<32x16xf32>
    %c0_6 = arith.constant 0 : index
    %c0_7 = arith.constant 0 : index
    %8 = vector.load %arg5[%c0_6, %c0_7] : memref<26x1xf32, #tpu.memory_space<vmem>>, vector<26x1xf32>
    %c0_8 = arith.constant 0 : index
    %c0_9 = arith.constant 0 : index
    %9 = vector.load %arg4[%c0_8, %c0_9] : memref<26x32xf32, #tpu.memory_space<vmem>>, vector<26x32xf32>
    %cst_10 = arith.constant dense<0.000000e+00> : vector<26x16xf32>
    %10 = tpu.matmul %9, %7, %cst_10 {dimension_numbers = #tpu.dot_dimension_numbers<[1], [0], [0], [1], [0, 0, 1, 1], [], []>, precision = #tpu.contract_precision<fp32>} : vector<26x32xf32>, vector<32x16xf32>, vector<26x16xf32> -> vector<26x16xf32>
    %11 = vector.broadcast %8 : vector<26x1xf32> to vector<26x16xf32>
    %12 = arith.subf %11, %10 : vector<26x16xf32>
    %13 = vector.extract_strided_slice %12 {offsets = [0, 0], sizes = [16, 16], strides = [1, 1]} : vector<26x16xf32> to vector<16x16xf32>
    %14 = vector.extract_strided_slice %12 {offsets = [16, 0], sizes = [10, 16], strides = [1, 1]} : vector<26x16xf32> to vector<10x16xf32>
    %c0_11 = arith.constant 0 : index
    %c0_12 = arith.constant 0 : index
    %15 = vector.load %arg8[%c0_11, %c0_12] : memref<16x1xf32, #tpu.memory_space<vmem>>, vector<16x1xf32>
    %16 = vector.extract_strided_slice %15 {offsets = [0, 0], sizes = [8, 1], strides = [1, 1]} : vector<16x1xf32> to vector<8x1xf32>
    %17 = vector.shape_cast %16 : vector<8x1xf32> to vector<8x1xf32>
    %18 = vector.broadcast %17 : vector<8x1xf32> to vector<8x16xf32>
    %19 = vector.extract_strided_slice %15 {offsets = [8, 0], sizes = [8, 1], strides = [1, 1]} : vector<16x1xf32> to vector<8x1xf32>
    %20 = vector.shape_cast %19 : vector<8x1xf32> to vector<8x1xf32>
    %21 = vector.broadcast %20 : vector<8x1xf32> to vector<8x16xf32>
    %c0_13 = arith.constant 0 : index
    %c0_14 = arith.constant 0 : index
    %22 = vector.load %arg6[%c0_13, %c0_14] : memref<16x16xf32, #tpu.memory_space<vmem>>, vector<16x16xf32>
    %23 = vector.extract_strided_slice %22 {offsets = [0, 0], sizes = [16, 1], strides = [1, 1]} : vector<16x16xf32> to vector<16x1xf32>
    %24 = vector.shape_cast %23 : vector<16x1xf32> to vector<16x1xf32>
    %25 = vector.broadcast %24 : vector<16x1xf32> to vector<16x16xf32>
    %26 = vector.extract_strided_slice %22 {offsets = [0, 1], sizes = [16, 1], strides = [1, 1]} : vector<16x16xf32> to vector<16x1xf32>
    %27 = vector.shape_cast %26 : vector<16x1xf32> to vector<16x1xf32>
    %28 = vector.broadcast %27 : vector<16x1xf32> to vector<16x16xf32>
    %29 = vector.extract_strided_slice %22 {offsets = [0, 2], sizes = [16, 1], strides = [1, 1]} : vector<16x16xf32> to vector<16x1xf32>
    %30 = vector.shape_cast %29 : vector<16x1xf32> to vector<16x1xf32>
    %31 = vector.broadcast %30 : vector<16x1xf32> to vector<16x16xf32>
    %32 = vector.extract_strided_slice %22 {offsets = [0, 3], sizes = [16, 1], strides = [1, 1]} : vector<16x16xf32> to vector<16x1xf32>
    %33 = vector.shape_cast %32 : vector<16x1xf32> to vector<16x1xf32>
    %34 = vector.broadcast %33 : vector<16x1xf32> to vector<16x16xf32>
    %35 = vector.extract_strided_slice %22 {offsets = [0, 4], sizes = [16, 1], strides = [1, 1]} : vector<16x16xf32> to vector<16x1xf32>
    %36 = vector.shape_cast %35 : vector<16x1xf32> to vector<16x1xf32>
    %37 = vector.broadcast %36 : vector<16x1xf32> to vector<16x16xf32>
    %38 = vector.extract_strided_slice %22 {offsets = [0, 5], sizes = [16, 1], strides = [1, 1]} : vector<16x16xf32> to vector<16x1xf32>
    %39 = vector.shape_cast %38 : vector<16x1xf32> to vector<16x1xf32>
    %40 = vector.broadcast %39 : vector<16x1xf32> to vector<16x16xf32>
    %41 = vector.extract_strided_slice %22 {offsets = [0, 6], sizes = [16, 1], strides = [1, 1]} : vector<16x16xf32> to vector<16x1xf32>
    %42 = vector.shape_cast %41 : vector<16x1xf32> to vector<16x1xf32>
    %43 = vector.broadcast %42 : vector<16x1xf32> to vector<16x16xf32>
    %44 = vector.extract_strided_slice %22 {offsets = [0, 7], sizes = [16, 1], strides = [1, 1]} : vector<16x16xf32> to vector<16x1xf32>
    %45 = vector.shape_cast %44 : vector<16x1xf32> to vector<16x1xf32>
    %46 = vector.broadcast %45 : vector<16x1xf32> to vector<16x16xf32>
    %47 = vector.extract_strided_slice %22 {offsets = [0, 8], sizes = [16, 1], strides = [1, 1]} : vector<16x16xf32> to vector<16x1xf32>
    %48 = vector.shape_cast %47 : vector<16x1xf32> to vector<16x1xf32>
    %49 = vector.broadcast %48 : vector<16x1xf32> to vector<16x16xf32>
    %50 = vector.extract_strided_slice %22 {offsets = [0, 9], sizes = [16, 1], strides = [1, 1]} : vector<16x16xf32> to vector<16x1xf32>
    %51 = vector.shape_cast %50 : vector<16x1xf32> to vector<16x1xf32>
    %52 = vector.broadcast %51 : vector<16x1xf32> to vector<16x16xf32>
    %53 = vector.extract_strided_slice %22 {offsets = [0, 10], sizes = [16, 1], strides = [1, 1]} : vector<16x16xf32> to vector<16x1xf32>
    %54 = vector.shape_cast %53 : vector<16x1xf32> to vector<16x1xf32>
    %55 = vector.broadcast %54 : vector<16x1xf32> to vector<16x16xf32>
    %56 = vector.extract_strided_slice %22 {offsets = [0, 11], sizes = [16, 1], strides = [1, 1]} : vector<16x16xf32> to vector<16x1xf32>
    %57 = vector.shape_cast %56 : vector<16x1xf32> to vector<16x1xf32>
    %58 = vector.broadcast %57 : vector<16x1xf32> to vector<16x16xf32>
    %59 = vector.extract_strided_slice %22 {offsets = [0, 12], sizes = [16, 1], strides = [1, 1]} : vector<16x16xf32> to vector<16x1xf32>
    %60 = vector.shape_cast %59 : vector<16x1xf32> to vector<16x1xf32>
    %61 = vector.broadcast %60 : vector<16x1xf32> to vector<16x16xf32>
    %62 = vector.extract_strided_slice %22 {offsets = [0, 13], sizes = [16, 1], strides = [1, 1]} : vector<16x16xf32> to vector<16x1xf32>
    %63 = vector.shape_cast %62 : vector<16x1xf32> to vector<16x1xf32>
    %64 = vector.broadcast %63 : vector<16x1xf32> to vector<16x16xf32>
    %65 = vector.extract_strided_slice %22 {offsets = [0, 14], sizes = [16, 1], strides = [1, 1]} : vector<16x16xf32> to vector<16x1xf32>
    %66 = vector.shape_cast %65 : vector<16x1xf32> to vector<16x1xf32>
    %67 = vector.broadcast %66 : vector<16x1xf32> to vector<16x16xf32>
    %68 = vector.extract_strided_slice %22 {offsets = [0, 15], sizes = [16, 1], strides = [1, 1]} : vector<16x16xf32> to vector<16x1xf32>
    %69 = vector.shape_cast %68 : vector<16x1xf32> to vector<16x1xf32>
    %70 = vector.broadcast %69 : vector<16x1xf32> to vector<16x16xf32>
    %cst_15 = arith.constant 0.000000e+00 : f32
    %71 = vector.broadcast %cst_15 : f32 to vector<8x16xf32>
    %cst_16 = arith.constant 0.000000e+00 : f32
    %72 = vector.broadcast %cst_16 : f32 to vector<8x16xf32>
    %cst_17 = arith.constant 0.000000e+00 : f32
    %73 = vector.broadcast %cst_17 : f32 to vector<8x16xf32>
    %74 = arith.subf %71, %21 : vector<8x16xf32>
    %cst_18 = arith.constant 1.000000e+00 : f32
    %75 = vector.broadcast %cst_18 : f32 to vector<8x16xf32>
    %76 = arith.mulf %75, %74 : vector<8x16xf32>
    %77 = arith.addf %73, %76 : vector<8x16xf32>
    %78 = vector.extract_strided_slice %72 {offsets = [0, 0], sizes = [1, 16], strides = [1, 1]} : vector<8x16xf32> to vector<1x16xf32>
    %79 = vector.broadcast %78 : vector<1x16xf32> to vector<16x16xf32>
    %80 = arith.mulf %25, %79 : vector<16x16xf32>
    %81 = arith.subf %13, %80 : vector<16x16xf32>
    %82 = vector.extract_strided_slice %72 {offsets = [1, 0], sizes = [1, 16], strides = [1, 1]} : vector<8x16xf32> to vector<1x16xf32>
    %83 = vector.broadcast %82 : vector<1x16xf32> to vector<16x16xf32>
    %84 = arith.mulf %28, %83 : vector<16x16xf32>
    %85 = arith.subf %81, %84 : vector<16x16xf32>
    %86 = vector.extract_strided_slice %72 {offsets = [2, 0], sizes = [1, 16], strides = [1, 1]} : vector<8x16xf32> to vector<1x16xf32>
    %87 = vector.broadcast %86 : vector<1x16xf32> to vector<16x16xf32>
    %88 = arith.mulf %31, %87 : vector<16x16xf32>
    %89 = arith.subf %85, %88 : vector<16x16xf32>
    %90 = vector.extract_strided_slice %72 {offsets = [3, 0], sizes = [1, 16], strides = [1, 1]} : vector<8x16xf32> to vector<1x16xf32>
    %91 = vector.broadcast %90 : vector<1x16xf32> to vector<16x16xf32>
    %92 = arith.mulf %34, %91 : vector<16x16xf32>
    %93 = arith.subf %89, %92 : vector<16x16xf32>
    %94 = vector.extract_strided_slice %72 {offsets = [4, 0], sizes = [1, 16], strides = [1, 1]} : vector<8x16xf32> to vector<1x16xf32>
    %95 = vector.broadcast %94 : vector<1x16xf32> to vector<16x16xf32>
    %96 = arith.mulf %37, %95 : vector<16x16xf32>
    %97 = arith.subf %93, %96 : vector<16x16xf32>
    %98 = vector.extract_strided_slice %72 {offsets = [5, 0], sizes = [1, 16], strides = [1, 1]} : vector<8x16xf32> to vector<1x16xf32>
    %99 = vector.broadcast %98 : vector<1x16xf32> to vector<16x16xf32>
    %100 = arith.mulf %40, %99 : vector<16x16xf32>
    %101 = arith.subf %97, %100 : vector<16x16xf32>
    %102 = vector.extract_strided_slice %72 {offsets = [6, 0], sizes = [1, 16], strides = [1, 1]} : vector<8x16xf32> to vector<1x16xf32>
    %103 = vector.broadcast %102 : vector<1x16xf32> to vector<16x16xf32>
    %104 = arith.mulf %43, %103 : vector<16x16xf32>
    %105 = arith.subf %101, %104 : vector<16x16xf32>
    %106 = vector.extract_strided_slice %72 {offsets = [7, 0], sizes = [1, 16], strides = [1, 1]} : vector<8x16xf32> to vector<1x16xf32>
    %107 = vector.broadcast %106 : vector<1x16xf32> to vector<16x16xf32>
    %108 = arith.mulf %46, %107 : vector<16x16xf32>
    %109 = arith.subf %105, %108 : vector<16x16xf32>
    %110 = vector.extract_strided_slice %77 {offsets = [0, 0], sizes = [1, 16], strides = [1, 1]} : vector<8x16xf32> to vector<1x16xf32>
    %111 = vector.broadcast %110 : vector<1x16xf32> to vector<16x16xf32>
    %112 = arith.mulf %49, %111 : vector<16x16xf32>
    %113 = arith.subf %109, %112 : vector<16x16xf32>
    %114 = vector.extract_strided_slice %77 {offsets = [1, 0], sizes = [1, 16], strides = [1, 1]} : vector<8x16xf32> to vector<1x16xf32>
    %115 = vector.broadcast %114 : vector<1x16xf32> to vector<16x16xf32>
    %116 = arith.mulf %52, %115 : vector<16x16xf32>
    %117 = arith.subf %113, %116 : vector<16x16xf32>
    %118 = vector.extract_strided_slice %77 {offsets = [2, 0], sizes = [1, 16], strides = [1, 1]} : vector<8x16xf32> to vector<1x16xf32>
    %119 = vector.broadcast %118 : vector<1x16xf32> to vector<16x16xf32>
    %120 = arith.mulf %55, %119 : vector<16x16xf32>
    %121 = arith.subf %117, %120 : vector<16x16xf32>
    %122 = vector.extract_strided_slice %77 {offsets = [3, 0], sizes = [1, 16], strides = [1, 1]} : vector<8x16xf32> to vector<1x16xf32>
    %123 = vector.broadcast %122 : vector<1x16xf32> to vector<16x16xf32>
    %124 = arith.mulf %58, %123 : vector<16x16xf32>
    %125 = arith.subf %121, %124 : vector<16x16xf32>
    %126 = vector.extract_strided_slice %77 {offsets = [4, 0], sizes = [1, 16], strides = [1, 1]} : vector<8x16xf32> to vector<1x16xf32>
    %127 = vector.broadcast %126 : vector<1x16xf32> to vector<16x16xf32>
    %128 = arith.mulf %61, %127 : vector<16x16xf32>
    %129 = arith.subf %125, %128 : vector<16x16xf32>
    %130 = vector.extract_strided_slice %77 {offsets = [5, 0], sizes = [1, 16], strides = [1, 1]} : vector<8x16xf32> to vector<1x16xf32>
    %131 = vector.broadcast %130 : vector<1x16xf32> to vector<16x16xf32>
    %132 = arith.mulf %64, %131 : vector<16x16xf32>
    %133 = arith.subf %129, %132 : vector<16x16xf32>
    %134 = vector.extract_strided_slice %77 {offsets = [6, 0], sizes = [1, 16], strides = [1, 1]} : vector<8x16xf32> to vector<1x16xf32>
    %135 = vector.broadcast %134 : vector<1x16xf32> to vector<16x16xf32>
    %136 = arith.mulf %67, %135 : vector<16x16xf32>
    %137 = arith.subf %133, %136 : vector<16x16xf32>
    %138 = vector.extract_strided_slice %77 {offsets = [7, 0], sizes = [1, 16], strides = [1, 1]} : vector<8x16xf32> to vector<1x16xf32>
    %139 = vector.broadcast %138 : vector<1x16xf32> to vector<16x16xf32>
    %140 = arith.mulf %70, %139 : vector<16x16xf32>
    %141 = arith.subf %137, %140 : vector<16x16xf32>
    %142 = vector.extract_strided_slice %141 {offsets = [0, 0], sizes = [8, 16], strides = [1, 1]} : vector<16x16xf32> to vector<8x16xf32>
    %143 = vector.extract_strided_slice %141 {offsets = [8, 0], sizes = [8, 16], strides = [1, 1]} : vector<16x16xf32> to vector<8x16xf32>
    %cst_19 = arith.constant -1.000000e+00 : f32
    %144 = vector.broadcast %cst_19 : f32 to vector<8x16xf32>
    %145 = arith.mulf %144, %73 : vector<8x16xf32>
    %146 = arith.subf %143, %21 : vector<8x16xf32>
    %147 = arith.subf %145, %146 : vector<8x16xf32>
    %cst_20 = arith.constant 0.000000e+00 : f32
    %148 = vector.broadcast %cst_20 : f32 to vector<8x16xf32>
    %149 = arith.maximumf %147, %148 : vector<8x16xf32>
    %150 = arith.subf %142, %18 : vector<8x16xf32>
    %cst_21 = arith.constant 1.000000e+00 : f32
    %151 = vector.broadcast %cst_21 : f32 to vector<8x16xf32>
    %152 = arith.mulf %151, %150 : vector<8x16xf32>
    %153 = arith.addf %72, %152 : vector<8x16xf32>
    %154 = arith.addf %143, %149 : vector<8x16xf32>
    %155 = arith.subf %154, %21 : vector<8x16xf32>
    %cst_22 = arith.constant 1.000000e+00 : f32
    %156 = vector.broadcast %cst_22 : f32 to vector<8x16xf32>
    %157 = arith.mulf %156, %155 : vector<8x16xf32>
    %158 = arith.addf %73, %157 : vector<8x16xf32>
    %159 = arith.subf %149, %21 : vector<8x16xf32>
    %cst_23 = arith.constant 1.000000e+00 : f32
    %160 = vector.broadcast %cst_23 : f32 to vector<8x16xf32>
    %161 = arith.mulf %160, %159 : vector<8x16xf32>
    %162 = arith.addf %158, %161 : vector<8x16xf32>
    %163 = vector.extract_strided_slice %153 {offsets = [0, 0], sizes = [1, 16], strides = [1, 1]} : vector<8x16xf32> to vector<1x16xf32>
    %164 = vector.broadcast %163 : vector<1x16xf32> to vector<16x16xf32>
    %165 = arith.mulf %25, %164 : vector<16x16xf32>
    %166 = arith.subf %13, %165 : vector<16x16xf32>
    %167 = vector.extract_strided_slice %153 {offsets = [1, 0], sizes = [1, 16], strides = [1, 1]} : vector<8x16xf32> to vector<1x16xf32>
    %168 = vector.broadcast %167 : vector<1x16xf32> to vector<16x16xf32>
    %169 = arith.mulf %28, %168 : vector<16x16xf32>
    %170 = arith.subf %166, %169 : vector<16x16xf32>
    %171 = vector.extract_strided_slice %153 {offsets = [2, 0], sizes = [1, 16], strides = [1, 1]} : vector<8x16xf32> to vector<1x16xf32>
    %172 = vector.broadcast %171 : vector<1x16xf32> to vector<16x16xf32>
    %173 = arith.mulf %31, %172 : vector<16x16xf32>
    %174 = arith.subf %170, %173 : vector<16x16xf32>
    %175 = vector.extract_strided_slice %153 {offsets = [3, 0], sizes = [1, 16], strides = [1, 1]} : vector<8x16xf32> to vector<1x16xf32>
    %176 = vector.broadcast %175 : vector<1x16xf32> to vector<16x16xf32>
    %177 = arith.mulf %34, %176 : vector<16x16xf32>
    %178 = arith.subf %174, %177 : vector<16x16xf32>
    %179 = vector.extract_strided_slice %153 {offsets = [4, 0], sizes = [1, 16], strides = [1, 1]} : vector<8x16xf32> to vector<1x16xf32>
    %180 = vector.broadcast %179 : vector<1x16xf32> to vector<16x16xf32>
    %181 = arith.mulf %37, %180 : vector<16x16xf32>
    %182 = arith.subf %178, %181 : vector<16x16xf32>
    %183 = vector.extract_strided_slice %153 {offsets = [5, 0], sizes = [1, 16], strides = [1, 1]} : vector<8x16xf32> to vector<1x16xf32>
    %184 = vector.broadcast %183 : vector<1x16xf32> to vector<16x16xf32>
    %185 = arith.mulf %40, %184 : vector<16x16xf32>
    %186 = arith.subf %182, %185 : vector<16x16xf32>
    %187 = vector.extract_strided_slice %153 {offsets = [6, 0], sizes = [1, 16], strides = [1, 1]} : vector<8x16xf32> to vector<1x16xf32>
    %188 = vector.broadcast %187 : vector<1x16xf32> to vector<16x16xf32>
    %189 = arith.mulf %43, %188 : vector<16x16xf32>
    %190 = arith.subf %186, %189 : vector<16x16xf32>
    %191 = vector.extract_strided_slice %153 {offsets = [7, 0], sizes = [1, 16], strides = [1, 1]} : vector<8x16xf32> to vector<1x16xf32>
    %192 = vector.broadcast %191 : vector<1x16xf32> to vector<16x16xf32>
    %193 = arith.mulf %46, %192 : vector<16x16xf32>
    %194 = arith.subf %190, %193 : vector<16x16xf32>
    %195 = vector.extract_strided_slice %162 {offsets = [0, 0], sizes = [1, 16], strides = [1, 1]} : vector<8x16xf32> to vector<1x16xf32>
    %196 = vector.broadcast %195 : vector<1x16xf32> to vector<16x16xf32>
    %197 = arith.mulf %49, %196 : vector<16x16xf32>
    %198 = arith.subf %194, %197 : vector<16x16xf32>
    %199 = vector.extract_strided_slice %162 {offsets = [1, 0], sizes = [1, 16], strides = [1, 1]} : vector<8x16xf32> to vector<1x16xf32>
    %200 = vector.broadcast %199 : vector<1x16xf32> to vector<16x16xf32>
    %201 = arith.mulf %52, %200 : vector<16x16xf32>
    %202 = arith.subf %198, %201 : vector<16x16xf32>
    %203 = vector.extract_strided_slice %162 {offsets = [2, 0], sizes = [1, 16], strides = [1, 1]} : vector<8x16xf32> to vector<1x16xf32>
    %204 = vector.broadcast %203 : vector<1x16xf32> to vector<16x16xf32>
    %205 = arith.mulf %55, %204 : vector<16x16xf32>
    %206 = arith.subf %202, %205 : vector<16x16xf32>
    %207 = vector.extract_strided_slice %162 {offsets = [3, 0], sizes = [1, 16], strides = [1, 1]} : vector<8x16xf32> to vector<1x16xf32>
    %208 = vector.broadcast %207 : vector<1x16xf32> to vector<16x16xf32>
    %209 = arith.mulf %58, %208 : vector<16x16xf32>
    %210 = arith.subf %206, %209 : vector<16x16xf32>
    %211 = vector.extract_strided_slice %162 {offsets = [4, 0], sizes = [1, 16], strides = [1, 1]} : vector<8x16xf32> to vector<1x16xf32>
    %212 = vector.broadcast %211 : vector<1x16xf32> to vector<16x16xf32>
    %213 = arith.mulf %61, %212 : vector<16x16xf32>
    %214 = arith.subf %210, %213 : vector<16x16xf32>
    %215 = vector.extract_strided_slice %162 {offsets = [5, 0], sizes = [1, 16], strides = [1, 1]} : vector<8x16xf32> to vector<1x16xf32>
    %216 = vector.broadcast %215 : vector<1x16xf32> to vector<16x16xf32>
    %217 = arith.mulf %64, %216 : vector<16x16xf32>
    %218 = arith.subf %214, %217 : vector<16x16xf32>
    %219 = vector.extract_strided_slice %162 {offsets = [6, 0], sizes = [1, 16], strides = [1, 1]} : vector<8x16xf32> to vector<1x16xf32>
    %220 = vector.broadcast %219 : vector<1x16xf32> to vector<16x16xf32>
    %221 = arith.mulf %67, %220 : vector<16x16xf32>
    %222 = arith.subf %218, %221 : vector<16x16xf32>
    %223 = vector.extract_strided_slice %162 {offsets = [7, 0], sizes = [1, 16], strides = [1, 1]} : vector<8x16xf32> to vector<1x16xf32>
    %224 = vector.broadcast %223 : vector<1x16xf32> to vector<16x16xf32>
    %225 = arith.mulf %70, %224 : vector<16x16xf32>
    %226 = arith.subf %222, %225 : vector<16x16xf32>
    %227 = vector.extract_strided_slice %226 {offsets = [0, 0], sizes = [8, 16], strides = [1, 1]} : vector<16x16xf32> to vector<8x16xf32>
    %228 = vector.extract_strided_slice %226 {offsets = [8, 0], sizes = [8, 16], strides = [1, 1]} : vector<16x16xf32> to vector<8x16xf32>
    %cst_24 = arith.constant -1.000000e+00 : f32
    %229 = vector.broadcast %cst_24 : f32 to vector<8x16xf32>
    %230 = arith.mulf %229, %158 : vector<8x16xf32>
    %231 = arith.subf %228, %21 : vector<8x16xf32>
    %232 = arith.subf %230, %231 : vector<8x16xf32>
    %cst_25 = arith.constant 0.000000e+00 : f32
    %233 = vector.broadcast %cst_25 : f32 to vector<8x16xf32>
    %234 = arith.maximumf %232, %233 : vector<8x16xf32>
    %235 = arith.subf %227, %18 : vector<8x16xf32>
    %cst_26 = arith.constant 1.000000e+00 : f32
    %236 = vector.broadcast %cst_26 : f32 to vector<8x16xf32>
    %237 = arith.mulf %236, %235 : vector<8x16xf32>
    %238 = arith.addf %153, %237 : vector<8x16xf32>
    %239 = arith.addf %228, %234 : vector<8x16xf32>
    %240 = arith.subf %239, %21 : vector<8x16xf32>
    %cst_27 = arith.constant 1.000000e+00 : f32
    %241 = vector.broadcast %cst_27 : f32 to vector<8x16xf32>
    %242 = arith.mulf %241, %240 : vector<8x16xf32>
    %243 = arith.addf %158, %242 : vector<8x16xf32>
    %244 = arith.subf %234, %21 : vector<8x16xf32>
    %cst_28 = arith.constant 1.000000e+00 : f32
    %245 = vector.broadcast %cst_28 : f32 to vector<8x16xf32>
    %246 = arith.mulf %245, %244 : vector<8x16xf32>
    %247 = arith.addf %243, %246 : vector<8x16xf32>
    %248 = vector.extract_strided_slice %238 {offsets = [0, 0], sizes = [1, 16], strides = [1, 1]} : vector<8x16xf32> to vector<1x16xf32>
    %249 = vector.broadcast %248 : vector<1x16xf32> to vector<16x16xf32>
    %250 = arith.mulf %25, %249 : vector<16x16xf32>
    %251 = arith.subf %13, %250 : vector<16x16xf32>
    %252 = vector.extract_strided_slice %238 {offsets = [1, 0], sizes = [1, 16], strides = [1, 1]} : vector<8x16xf32> to vector<1x16xf32>
    %253 = vector.broadcast %252 : vector<1x16xf32> to vector<16x16xf32>
    %254 = arith.mulf %28, %253 : vector<16x16xf32>
    %255 = arith.subf %251, %254 : vector<16x16xf32>
    %256 = vector.extract_strided_slice %238 {offsets = [2, 0], sizes = [1, 16], strides = [1, 1]} : vector<8x16xf32> to vector<1x16xf32>
    %257 = vector.broadcast %256 : vector<1x16xf32> to vector<16x16xf32>
    %258 = arith.mulf %31, %257 : vector<16x16xf32>
    %259 = arith.subf %255, %258 : vector<16x16xf32>
    %260 = vector.extract_strided_slice %238 {offsets = [3, 0], sizes = [1, 16], strides = [1, 1]} : vector<8x16xf32> to vector<1x16xf32>
    %261 = vector.broadcast %260 : vector<1x16xf32> to vector<16x16xf32>
    %262 = arith.mulf %34, %261 : vector<16x16xf32>
    %263 = arith.subf %259, %262 : vector<16x16xf32>
    %264 = vector.extract_strided_slice %238 {offsets = [4, 0], sizes = [1, 16], strides = [1, 1]} : vector<8x16xf32> to vector<1x16xf32>
    %265 = vector.broadcast %264 : vector<1x16xf32> to vector<16x16xf32>
    %266 = arith.mulf %37, %265 : vector<16x16xf32>
    %267 = arith.subf %263, %266 : vector<16x16xf32>
    %268 = vector.extract_strided_slice %238 {offsets = [5, 0], sizes = [1, 16], strides = [1, 1]} : vector<8x16xf32> to vector<1x16xf32>
    %269 = vector.broadcast %268 : vector<1x16xf32> to vector<16x16xf32>
    %270 = arith.mulf %40, %269 : vector<16x16xf32>
    %271 = arith.subf %267, %270 : vector<16x16xf32>
    %272 = vector.extract_strided_slice %238 {offsets = [6, 0], sizes = [1, 16], strides = [1, 1]} : vector<8x16xf32> to vector<1x16xf32>
    %273 = vector.broadcast %272 : vector<1x16xf32> to vector<16x16xf32>
    %274 = arith.mulf %43, %273 : vector<16x16xf32>
    %275 = arith.subf %271, %274 : vector<16x16xf32>
    %276 = vector.extract_strided_slice %238 {offsets = [7, 0], sizes = [1, 16], strides = [1, 1]} : vector<8x16xf32> to vector<1x16xf32>
    %277 = vector.broadcast %276 : vector<1x16xf32> to vector<16x16xf32>
    %278 = arith.mulf %46, %277 : vector<16x16xf32>
    %279 = arith.subf %275, %278 : vector<16x16xf32>
    %280 = vector.extract_strided_slice %247 {offsets = [0, 0], sizes = [1, 16], strides = [1, 1]} : vector<8x16xf32> to vector<1x16xf32>
    %281 = vector.broadcast %280 : vector<1x16xf32> to vector<16x16xf32>
    %282 = arith.mulf %49, %281 : vector<16x16xf32>
    %283 = arith.subf %279, %282 : vector<16x16xf32>
    %284 = vector.extract_strided_slice %247 {offsets = [1, 0], sizes = [1, 16], strides = [1, 1]} : vector<8x16xf32> to vector<1x16xf32>
    %285 = vector.broadcast %284 : vector<1x16xf32> to vector<16x16xf32>
    %286 = arith.mulf %52, %285 : vector<16x16xf32>
    %287 = arith.subf %283, %286 : vector<16x16xf32>
    %288 = vector.extract_strided_slice %247 {offsets = [2, 0], sizes = [1, 16], strides = [1, 1]} : vector<8x16xf32> to vector<1x16xf32>
    %289 = vector.broadcast %288 : vector<1x16xf32> to vector<16x16xf32>
    %290 = arith.mulf %55, %289 : vector<16x16xf32>
    %291 = arith.subf %287, %290 : vector<16x16xf32>
    %292 = vector.extract_strided_slice %247 {offsets = [3, 0], sizes = [1, 16], strides = [1, 1]} : vector<8x16xf32> to vector<1x16xf32>
    %293 = vector.broadcast %292 : vector<1x16xf32> to vector<16x16xf32>
    %294 = arith.mulf %58, %293 : vector<16x16xf32>
    %295 = arith.subf %291, %294 : vector<16x16xf32>
    %296 = vector.extract_strided_slice %247 {offsets = [4, 0], sizes = [1, 16], strides = [1, 1]} : vector<8x16xf32> to vector<1x16xf32>
    %297 = vector.broadcast %296 : vector<1x16xf32> to vector<16x16xf32>
    %298 = arith.mulf %61, %297 : vector<16x16xf32>
    %299 = arith.subf %295, %298 : vector<16x16xf32>
    %300 = vector.extract_strided_slice %247 {offsets = [5, 0], sizes = [1, 16], strides = [1, 1]} : vector<8x16xf32> to vector<1x16xf32>
    %301 = vector.broadcast %300 : vector<1x16xf32> to vector<16x16xf32>
    %302 = arith.mulf %64, %301 : vector<16x16xf32>
    %303 = arith.subf %299, %302 : vector<16x16xf32>
    %304 = vector.extract_strided_slice %247 {offsets = [6, 0], sizes = [1, 16], strides = [1, 1]} : vector<8x16xf32> to vector<1x16xf32>
    %305 = vector.broadcast %304 : vector<1x16xf32> to vector<16x16xf32>
    %306 = arith.mulf %67, %305 : vector<16x16xf32>
    %307 = arith.subf %303, %306 : vector<16x16xf32>
    %308 = vector.extract_strided_slice %247 {offsets = [7, 0], sizes = [1, 16], strides = [1, 1]} : vector<8x16xf32> to vector<1x16xf32>
    %309 = vector.broadcast %308 : vector<1x16xf32> to vector<16x16xf32>
    %310 = arith.mulf %70, %309 : vector<16x16xf32>
    %311 = arith.subf %307, %310 : vector<16x16xf32>
    %312 = vector.extract_strided_slice %311 {offsets = [0, 0], sizes = [8, 16], strides = [1, 1]} : vector<16x16xf32> to vector<8x16xf32>
    %313 = vector.extract_strided_slice %311 {offsets = [8, 0], sizes = [8, 16], strides = [1, 1]} : vector<16x16xf32> to vector<8x16xf32>
    %cst_29 = arith.constant -1.000000e+00 : f32
    %314 = vector.broadcast %cst_29 : f32 to vector<8x16xf32>
    %315 = arith.mulf %314, %243 : vector<8x16xf32>
    %316 = arith.subf %313, %21 : vector<8x16xf32>
    %317 = arith.subf %315, %316 : vector<8x16xf32>
    %cst_30 = arith.constant 0.000000e+00 : f32
    %318 = vector.broadcast %cst_30 : f32 to vector<8x16xf32>
    %319 = arith.maximumf %317, %318 : vector<8x16xf32>
    %320 = arith.subf %312, %18 : vector<8x16xf32>
    %cst_31 = arith.constant 1.000000e+00 : f32
    %321 = vector.broadcast %cst_31 : f32 to vector<8x16xf32>
    %322 = arith.mulf %321, %320 : vector<8x16xf32>
    %323 = arith.addf %238, %322 : vector<8x16xf32>
    %324 = arith.addf %313, %319 : vector<8x16xf32>
    %325 = arith.subf %324, %21 : vector<8x16xf32>
    %cst_32 = arith.constant 1.000000e+00 : f32
    %326 = vector.broadcast %cst_32 : f32 to vector<8x16xf32>
    %327 = arith.mulf %326, %325 : vector<8x16xf32>
    %328 = arith.addf %243, %327 : vector<8x16xf32>
    %329 = arith.subf %319, %21 : vector<8x16xf32>
    %cst_33 = arith.constant 1.000000e+00 : f32
    %330 = vector.broadcast %cst_33 : f32 to vector<8x16xf32>
    %331 = arith.mulf %330, %329 : vector<8x16xf32>
    %332 = arith.addf %328, %331 : vector<8x16xf32>
    %333 = vector.extract_strided_slice %323 {offsets = [0, 0], sizes = [1, 16], strides = [1, 1]} : vector<8x16xf32> to vector<1x16xf32>
    %334 = vector.broadcast %333 : vector<1x16xf32> to vector<16x16xf32>
    %335 = arith.mulf %25, %334 : vector<16x16xf32>
    %336 = arith.subf %13, %335 : vector<16x16xf32>
    %337 = vector.extract_strided_slice %323 {offsets = [1, 0], sizes = [1, 16], strides = [1, 1]} : vector<8x16xf32> to vector<1x16xf32>
    %338 = vector.broadcast %337 : vector<1x16xf32> to vector<16x16xf32>
    %339 = arith.mulf %28, %338 : vector<16x16xf32>
    %340 = arith.subf %336, %339 : vector<16x16xf32>
    %341 = vector.extract_strided_slice %323 {offsets = [2, 0], sizes = [1, 16], strides = [1, 1]} : vector<8x16xf32> to vector<1x16xf32>
    %342 = vector.broadcast %341 : vector<1x16xf32> to vector<16x16xf32>
    %343 = arith.mulf %31, %342 : vector<16x16xf32>
    %344 = arith.subf %340, %343 : vector<16x16xf32>
    %345 = vector.extract_strided_slice %323 {offsets = [3, 0], sizes = [1, 16], strides = [1, 1]} : vector<8x16xf32> to vector<1x16xf32>
    %346 = vector.broadcast %345 : vector<1x16xf32> to vector<16x16xf32>
    %347 = arith.mulf %34, %346 : vector<16x16xf32>
    %348 = arith.subf %344, %347 : vector<16x16xf32>
    %349 = vector.extract_strided_slice %323 {offsets = [4, 0], sizes = [1, 16], strides = [1, 1]} : vector<8x16xf32> to vector<1x16xf32>
    %350 = vector.broadcast %349 : vector<1x16xf32> to vector<16x16xf32>
    %351 = arith.mulf %37, %350 : vector<16x16xf32>
    %352 = arith.subf %348, %351 : vector<16x16xf32>
    %353 = vector.extract_strided_slice %323 {offsets = [5, 0], sizes = [1, 16], strides = [1, 1]} : vector<8x16xf32> to vector<1x16xf32>
    %354 = vector.broadcast %353 : vector<1x16xf32> to vector<16x16xf32>
    %355 = arith.mulf %40, %354 : vector<16x16xf32>
    %356 = arith.subf %352, %355 : vector<16x16xf32>
    %357 = vector.extract_strided_slice %323 {offsets = [6, 0], sizes = [1, 16], strides = [1, 1]} : vector<8x16xf32> to vector<1x16xf32>
    %358 = vector.broadcast %357 : vector<1x16xf32> to vector<16x16xf32>
    %359 = arith.mulf %43, %358 : vector<16x16xf32>
    %360 = arith.subf %356, %359 : vector<16x16xf32>
    %361 = vector.extract_strided_slice %323 {offsets = [7, 0], sizes = [1, 16], strides = [1, 1]} : vector<8x16xf32> to vector<1x16xf32>
    %362 = vector.broadcast %361 : vector<1x16xf32> to vector<16x16xf32>
    %363 = arith.mulf %46, %362 : vector<16x16xf32>
    %364 = arith.subf %360, %363 : vector<16x16xf32>
    %365 = vector.extract_strided_slice %332 {offsets = [0, 0], sizes = [1, 16], strides = [1, 1]} : vector<8x16xf32> to vector<1x16xf32>
    %366 = vector.broadcast %365 : vector<1x16xf32> to vector<16x16xf32>
    %367 = arith.mulf %49, %366 : vector<16x16xf32>
    %368 = arith.subf %364, %367 : vector<16x16xf32>
    %369 = vector.extract_strided_slice %332 {offsets = [1, 0], sizes = [1, 16], strides = [1, 1]} : vector<8x16xf32> to vector<1x16xf32>
    %370 = vector.broadcast %369 : vector<1x16xf32> to vector<16x16xf32>
    %371 = arith.mulf %52, %370 : vector<16x16xf32>
    %372 = arith.subf %368, %371 : vector<16x16xf32>
    %373 = vector.extract_strided_slice %332 {offsets = [2, 0], sizes = [1, 16], strides = [1, 1]} : vector<8x16xf32> to vector<1x16xf32>
    %374 = vector.broadcast %373 : vector<1x16xf32> to vector<16x16xf32>
    %375 = arith.mulf %55, %374 : vector<16x16xf32>
    %376 = arith.subf %372, %375 : vector<16x16xf32>
    %377 = vector.extract_strided_slice %332 {offsets = [3, 0], sizes = [1, 16], strides = [1, 1]} : vector<8x16xf32> to vector<1x16xf32>
    %378 = vector.broadcast %377 : vector<1x16xf32> to vector<16x16xf32>
    %379 = arith.mulf %58, %378 : vector<16x16xf32>
    %380 = arith.subf %376, %379 : vector<16x16xf32>
    %381 = vector.extract_strided_slice %332 {offsets = [4, 0], sizes = [1, 16], strides = [1, 1]} : vector<8x16xf32> to vector<1x16xf32>
    %382 = vector.broadcast %381 : vector<1x16xf32> to vector<16x16xf32>
    %383 = arith.mulf %61, %382 : vector<16x16xf32>
    %384 = arith.subf %380, %383 : vector<16x16xf32>
    %385 = vector.extract_strided_slice %332 {offsets = [5, 0], sizes = [1, 16], strides = [1, 1]} : vector<8x16xf32> to vector<1x16xf32>
    %386 = vector.broadcast %385 : vector<1x16xf32> to vector<16x16xf32>
    %387 = arith.mulf %64, %386 : vector<16x16xf32>
    %388 = arith.subf %384, %387 : vector<16x16xf32>
    %389 = vector.extract_strided_slice %332 {offsets = [6, 0], sizes = [1, 16], strides = [1, 1]} : vector<8x16xf32> to vector<1x16xf32>
    %390 = vector.broadcast %389 : vector<1x16xf32> to vector<16x16xf32>
    %391 = arith.mulf %67, %390 : vector<16x16xf32>
    %392 = arith.subf %388, %391 : vector<16x16xf32>
    %393 = vector.extract_strided_slice %332 {offsets = [7, 0], sizes = [1, 16], strides = [1, 1]} : vector<8x16xf32> to vector<1x16xf32>
    %394 = vector.broadcast %393 : vector<1x16xf32> to vector<16x16xf32>
    %395 = arith.mulf %70, %394 : vector<16x16xf32>
    %396 = arith.subf %392, %395 : vector<16x16xf32>
    %397 = vector.extract_strided_slice %396 {offsets = [0, 0], sizes = [8, 16], strides = [1, 1]} : vector<16x16xf32> to vector<8x16xf32>
    %398 = vector.extract_strided_slice %396 {offsets = [8, 0], sizes = [8, 16], strides = [1, 1]} : vector<16x16xf32> to vector<8x16xf32>
    %cst_34 = arith.constant -1.000000e+00 : f32
    %399 = vector.broadcast %cst_34 : f32 to vector<8x16xf32>
    %400 = arith.mulf %399, %328 : vector<8x16xf32>
    %401 = arith.subf %398, %21 : vector<8x16xf32>
    %402 = arith.subf %400, %401 : vector<8x16xf32>
    %cst_35 = arith.constant 0.000000e+00 : f32
    %403 = vector.broadcast %cst_35 : f32 to vector<8x16xf32>
    %404 = arith.maximumf %402, %403 : vector<8x16xf32>
    %405 = arith.subf %397, %18 : vector<8x16xf32>
    %cst_36 = arith.constant 1.000000e+00 : f32
    %406 = vector.broadcast %cst_36 : f32 to vector<8x16xf32>
    %407 = arith.mulf %406, %405 : vector<8x16xf32>
    %408 = arith.addf %323, %407 : vector<8x16xf32>
    %409 = arith.addf %398, %404 : vector<8x16xf32>
    %410 = arith.subf %409, %21 : vector<8x16xf32>
    %cst_37 = arith.constant 1.000000e+00 : f32
    %411 = vector.broadcast %cst_37 : f32 to vector<8x16xf32>
    %412 = arith.mulf %411, %410 : vector<8x16xf32>
    %413 = arith.addf %328, %412 : vector<8x16xf32>
    %414 = arith.subf %404, %21 : vector<8x16xf32>
    %cst_38 = arith.constant 1.000000e+00 : f32
    %415 = vector.broadcast %cst_38 : f32 to vector<8x16xf32>
    %416 = arith.mulf %415, %414 : vector<8x16xf32>
    %417 = arith.addf %413, %416 : vector<8x16xf32>
    %418 = vector.extract_strided_slice %408 {offsets = [0, 0], sizes = [1, 16], strides = [1, 1]} : vector<8x16xf32> to vector<1x16xf32>
    %419 = vector.broadcast %418 : vector<1x16xf32> to vector<16x16xf32>
    %420 = arith.mulf %25, %419 : vector<16x16xf32>
    %421 = arith.subf %13, %420 : vector<16x16xf32>
    %422 = vector.extract_strided_slice %408 {offsets = [1, 0], sizes = [1, 16], strides = [1, 1]} : vector<8x16xf32> to vector<1x16xf32>
    %423 = vector.broadcast %422 : vector<1x16xf32> to vector<16x16xf32>
    %424 = arith.mulf %28, %423 : vector<16x16xf32>
    %425 = arith.subf %421, %424 : vector<16x16xf32>
    %426 = vector.extract_strided_slice %408 {offsets = [2, 0], sizes = [1, 16], strides = [1, 1]} : vector<8x16xf32> to vector<1x16xf32>
    %427 = vector.broadcast %426 : vector<1x16xf32> to vector<16x16xf32>
    %428 = arith.mulf %31, %427 : vector<16x16xf32>
    %429 = arith.subf %425, %428 : vector<16x16xf32>
    %430 = vector.extract_strided_slice %408 {offsets = [3, 0], sizes = [1, 16], strides = [1, 1]} : vector<8x16xf32> to vector<1x16xf32>
    %431 = vector.broadcast %430 : vector<1x16xf32> to vector<16x16xf32>
    %432 = arith.mulf %34, %431 : vector<16x16xf32>
    %433 = arith.subf %429, %432 : vector<16x16xf32>
    %434 = vector.extract_strided_slice %408 {offsets = [4, 0], sizes = [1, 16], strides = [1, 1]} : vector<8x16xf32> to vector<1x16xf32>
    %435 = vector.broadcast %434 : vector<1x16xf32> to vector<16x16xf32>
    %436 = arith.mulf %37, %435 : vector<16x16xf32>
    %437 = arith.subf %433, %436 : vector<16x16xf32>
    %438 = vector.extract_strided_slice %408 {offsets = [5, 0], sizes = [1, 16], strides = [1, 1]} : vector<8x16xf32> to vector<1x16xf32>
    %439 = vector.broadcast %438 : vector<1x16xf32> to vector<16x16xf32>
    %440 = arith.mulf %40, %439 : vector<16x16xf32>
    %441 = arith.subf %437, %440 : vector<16x16xf32>
    %442 = vector.extract_strided_slice %408 {offsets = [6, 0], sizes = [1, 16], strides = [1, 1]} : vector<8x16xf32> to vector<1x16xf32>
    %443 = vector.broadcast %442 : vector<1x16xf32> to vector<16x16xf32>
    %444 = arith.mulf %43, %443 : vector<16x16xf32>
    %445 = arith.subf %441, %444 : vector<16x16xf32>
    %446 = vector.extract_strided_slice %408 {offsets = [7, 0], sizes = [1, 16], strides = [1, 1]} : vector<8x16xf32> to vector<1x16xf32>
    %447 = vector.broadcast %446 : vector<1x16xf32> to vector<16x16xf32>
    %448 = arith.mulf %46, %447 : vector<16x16xf32>
    %449 = arith.subf %445, %448 : vector<16x16xf32>
    %450 = vector.extract_strided_slice %417 {offsets = [0, 0], sizes = [1, 16], strides = [1, 1]} : vector<8x16xf32> to vector<1x16xf32>
    %451 = vector.broadcast %450 : vector<1x16xf32> to vector<16x16xf32>
    %452 = arith.mulf %49, %451 : vector<16x16xf32>
    %453 = arith.subf %449, %452 : vector<16x16xf32>
    %454 = vector.extract_strided_slice %417 {offsets = [1, 0], sizes = [1, 16], strides = [1, 1]} : vector<8x16xf32> to vector<1x16xf32>
    %455 = vector.broadcast %454 : vector<1x16xf32> to vector<16x16xf32>
    %456 = arith.mulf %52, %455 : vector<16x16xf32>
    %457 = arith.subf %453, %456 : vector<16x16xf32>
    %458 = vector.extract_strided_slice %417 {offsets = [2, 0], sizes = [1, 16], strides = [1, 1]} : vector<8x16xf32> to vector<1x16xf32>
    %459 = vector.broadcast %458 : vector<1x16xf32> to vector<16x16xf32>
    %460 = arith.mulf %55, %459 : vector<16x16xf32>
    %461 = arith.subf %457, %460 : vector<16x16xf32>
    %462 = vector.extract_strided_slice %417 {offsets = [3, 0], sizes = [1, 16], strides = [1, 1]} : vector<8x16xf32> to vector<1x16xf32>
    %463 = vector.broadcast %462 : vector<1x16xf32> to vector<16x16xf32>
    %464 = arith.mulf %58, %463 : vector<16x16xf32>
    %465 = arith.subf %461, %464 : vector<16x16xf32>
    %466 = vector.extract_strided_slice %417 {offsets = [4, 0], sizes = [1, 16], strides = [1, 1]} : vector<8x16xf32> to vector<1x16xf32>
    %467 = vector.broadcast %466 : vector<1x16xf32> to vector<16x16xf32>
    %468 = arith.mulf %61, %467 : vector<16x16xf32>
    %469 = arith.subf %465, %468 : vector<16x16xf32>
    %470 = vector.extract_strided_slice %417 {offsets = [5, 0], sizes = [1, 16], strides = [1, 1]} : vector<8x16xf32> to vector<1x16xf32>
    %471 = vector.broadcast %470 : vector<1x16xf32> to vector<16x16xf32>
    %472 = arith.mulf %64, %471 : vector<16x16xf32>
    %473 = arith.subf %469, %472 : vector<16x16xf32>
    %474 = vector.extract_strided_slice %417 {offsets = [6, 0], sizes = [1, 16], strides = [1, 1]} : vector<8x16xf32> to vector<1x16xf32>
    %475 = vector.broadcast %474 : vector<1x16xf32> to vector<16x16xf32>
    %476 = arith.mulf %67, %475 : vector<16x16xf32>
    %477 = arith.subf %473, %476 : vector<16x16xf32>
    %478 = vector.extract_strided_slice %417 {offsets = [7, 0], sizes = [1, 16], strides = [1, 1]} : vector<8x16xf32> to vector<1x16xf32>
    %479 = vector.broadcast %478 : vector<1x16xf32> to vector<16x16xf32>
    %480 = arith.mulf %70, %479 : vector<16x16xf32>
    %481 = arith.subf %477, %480 : vector<16x16xf32>
    %482 = vector.extract_strided_slice %481 {offsets = [0, 0], sizes = [8, 16], strides = [1, 1]} : vector<16x16xf32> to vector<8x16xf32>
    %483 = vector.extract_strided_slice %481 {offsets = [8, 0], sizes = [8, 16], strides = [1, 1]} : vector<16x16xf32> to vector<8x16xf32>
    %cst_39 = arith.constant -1.000000e+00 : f32
    %484 = vector.broadcast %cst_39 : f32 to vector<8x16xf32>
    %485 = arith.mulf %484, %413 : vector<8x16xf32>
    %486 = arith.subf %483, %21 : vector<8x16xf32>
    %487 = arith.subf %485, %486 : vector<8x16xf32>
    %cst_40 = arith.constant 0.000000e+00 : f32
    %488 = vector.broadcast %cst_40 : f32 to vector<8x16xf32>
    %489 = arith.maximumf %487, %488 : vector<8x16xf32>
    %490 = arith.subf %482, %18 : vector<8x16xf32>
    %cst_41 = arith.constant 1.000000e+00 : f32
    %491 = vector.broadcast %cst_41 : f32 to vector<8x16xf32>
    %492 = arith.mulf %491, %490 : vector<8x16xf32>
    %493 = arith.addf %408, %492 : vector<8x16xf32>
    %494 = arith.addf %483, %489 : vector<8x16xf32>
    %495 = arith.subf %494, %21 : vector<8x16xf32>
    %cst_42 = arith.constant 1.000000e+00 : f32
    %496 = vector.broadcast %cst_42 : f32 to vector<8x16xf32>
    %497 = arith.mulf %496, %495 : vector<8x16xf32>
    %498 = arith.addf %413, %497 : vector<8x16xf32>
    %499 = arith.subf %489, %21 : vector<8x16xf32>
    %cst_43 = arith.constant 1.000000e+00 : f32
    %500 = vector.broadcast %cst_43 : f32 to vector<8x16xf32>
    %501 = arith.mulf %500, %499 : vector<8x16xf32>
    %502 = arith.addf %498, %501 : vector<8x16xf32>
    %503 = vector.extract_strided_slice %493 {offsets = [0, 0], sizes = [1, 16], strides = [1, 1]} : vector<8x16xf32> to vector<1x16xf32>
    %504 = vector.broadcast %503 : vector<1x16xf32> to vector<16x16xf32>
    %505 = arith.mulf %25, %504 : vector<16x16xf32>
    %506 = arith.subf %13, %505 : vector<16x16xf32>
    %507 = vector.extract_strided_slice %493 {offsets = [1, 0], sizes = [1, 16], strides = [1, 1]} : vector<8x16xf32> to vector<1x16xf32>
    %508 = vector.broadcast %507 : vector<1x16xf32> to vector<16x16xf32>
    %509 = arith.mulf %28, %508 : vector<16x16xf32>
    %510 = arith.subf %506, %509 : vector<16x16xf32>
    %511 = vector.extract_strided_slice %493 {offsets = [2, 0], sizes = [1, 16], strides = [1, 1]} : vector<8x16xf32> to vector<1x16xf32>
    %512 = vector.broadcast %511 : vector<1x16xf32> to vector<16x16xf32>
    %513 = arith.mulf %31, %512 : vector<16x16xf32>
    %514 = arith.subf %510, %513 : vector<16x16xf32>
    %515 = vector.extract_strided_slice %493 {offsets = [3, 0], sizes = [1, 16], strides = [1, 1]} : vector<8x16xf32> to vector<1x16xf32>
    %516 = vector.broadcast %515 : vector<1x16xf32> to vector<16x16xf32>
    %517 = arith.mulf %34, %516 : vector<16x16xf32>
    %518 = arith.subf %514, %517 : vector<16x16xf32>
    %519 = vector.extract_strided_slice %493 {offsets = [4, 0], sizes = [1, 16], strides = [1, 1]} : vector<8x16xf32> to vector<1x16xf32>
    %520 = vector.broadcast %519 : vector<1x16xf32> to vector<16x16xf32>
    %521 = arith.mulf %37, %520 : vector<16x16xf32>
    %522 = arith.subf %518, %521 : vector<16x16xf32>
    %523 = vector.extract_strided_slice %493 {offsets = [5, 0], sizes = [1, 16], strides = [1, 1]} : vector<8x16xf32> to vector<1x16xf32>
    %524 = vector.broadcast %523 : vector<1x16xf32> to vector<16x16xf32>
    %525 = arith.mulf %40, %524 : vector<16x16xf32>
    %526 = arith.subf %522, %525 : vector<16x16xf32>
    %527 = vector.extract_strided_slice %493 {offsets = [6, 0], sizes = [1, 16], strides = [1, 1]} : vector<8x16xf32> to vector<1x16xf32>
    %528 = vector.broadcast %527 : vector<1x16xf32> to vector<16x16xf32>
    %529 = arith.mulf %43, %528 : vector<16x16xf32>
    %530 = arith.subf %526, %529 : vector<16x16xf32>
    %531 = vector.extract_strided_slice %493 {offsets = [7, 0], sizes = [1, 16], strides = [1, 1]} : vector<8x16xf32> to vector<1x16xf32>
    %532 = vector.broadcast %531 : vector<1x16xf32> to vector<16x16xf32>
    %533 = arith.mulf %46, %532 : vector<16x16xf32>
    %534 = arith.subf %530, %533 : vector<16x16xf32>
    %535 = vector.extract_strided_slice %502 {offsets = [0, 0], sizes = [1, 16], strides = [1, 1]} : vector<8x16xf32> to vector<1x16xf32>
    %536 = vector.broadcast %535 : vector<1x16xf32> to vector<16x16xf32>
    %537 = arith.mulf %49, %536 : vector<16x16xf32>
    %538 = arith.subf %534, %537 : vector<16x16xf32>
    %539 = vector.extract_strided_slice %502 {offsets = [1, 0], sizes = [1, 16], strides = [1, 1]} : vector<8x16xf32> to vector<1x16xf32>
    %540 = vector.broadcast %539 : vector<1x16xf32> to vector<16x16xf32>
    %541 = arith.mulf %52, %540 : vector<16x16xf32>
    %542 = arith.subf %538, %541 : vector<16x16xf32>
    %543 = vector.extract_strided_slice %502 {offsets = [2, 0], sizes = [1, 16], strides = [1, 1]} : vector<8x16xf32> to vector<1x16xf32>
    %544 = vector.broadcast %543 : vector<1x16xf32> to vector<16x16xf32>
    %545 = arith.mulf %55, %544 : vector<16x16xf32>
    %546 = arith.subf %542, %545 : vector<16x16xf32>
    %547 = vector.extract_strided_slice %502 {offsets = [3, 0], sizes = [1, 16], strides = [1, 1]} : vector<8x16xf32> to vector<1x16xf32>
    %548 = vector.broadcast %547 : vector<1x16xf32> to vector<16x16xf32>
    %549 = arith.mulf %58, %548 : vector<16x16xf32>
    %550 = arith.subf %546, %549 : vector<16x16xf32>
    %551 = vector.extract_strided_slice %502 {offsets = [4, 0], sizes = [1, 16], strides = [1, 1]} : vector<8x16xf32> to vector<1x16xf32>
    %552 = vector.broadcast %551 : vector<1x16xf32> to vector<16x16xf32>
    %553 = arith.mulf %61, %552 : vector<16x16xf32>
    %554 = arith.subf %550, %553 : vector<16x16xf32>
    %555 = vector.extract_strided_slice %502 {offsets = [5, 0], sizes = [1, 16], strides = [1, 1]} : vector<8x16xf32> to vector<1x16xf32>
    %556 = vector.broadcast %555 : vector<1x16xf32> to vector<16x16xf32>
    %557 = arith.mulf %64, %556 : vector<16x16xf32>
    %558 = arith.subf %554, %557 : vector<16x16xf32>
    %559 = vector.extract_strided_slice %502 {offsets = [6, 0], sizes = [1, 16], strides = [1, 1]} : vector<8x16xf32> to vector<1x16xf32>
    %560 = vector.broadcast %559 : vector<1x16xf32> to vector<16x16xf32>
    %561 = arith.mulf %67, %560 : vector<16x16xf32>
    %562 = arith.subf %558, %561 : vector<16x16xf32>
    %563 = vector.extract_strided_slice %502 {offsets = [7, 0], sizes = [1, 16], strides = [1, 1]} : vector<8x16xf32> to vector<1x16xf32>
    %564 = vector.broadcast %563 : vector<1x16xf32> to vector<16x16xf32>
    %565 = arith.mulf %70, %564 : vector<16x16xf32>
    %566 = arith.subf %562, %565 : vector<16x16xf32>
    %567 = vector.extract_strided_slice %566 {offsets = [0, 0], sizes = [8, 16], strides = [1, 1]} : vector<16x16xf32> to vector<8x16xf32>
    %568 = vector.extract_strided_slice %566 {offsets = [8, 0], sizes = [8, 16], strides = [1, 1]} : vector<16x16xf32> to vector<8x16xf32>
    %cst_44 = arith.constant -1.000000e+00 : f32
    %569 = vector.broadcast %cst_44 : f32 to vector<8x16xf32>
    %570 = arith.mulf %569, %498 : vector<8x16xf32>
    %571 = arith.subf %568, %21 : vector<8x16xf32>
    %572 = arith.subf %570, %571 : vector<8x16xf32>
    %cst_45 = arith.constant 0.000000e+00 : f32
    %573 = vector.broadcast %cst_45 : f32 to vector<8x16xf32>
    %574 = arith.maximumf %572, %573 : vector<8x16xf32>
    %575 = arith.subf %567, %18 : vector<8x16xf32>
    %cst_46 = arith.constant 1.000000e+00 : f32
    %576 = vector.broadcast %cst_46 : f32 to vector<8x16xf32>
    %577 = arith.mulf %576, %575 : vector<8x16xf32>
    %578 = arith.addf %493, %577 : vector<8x16xf32>
    %579 = arith.addf %568, %574 : vector<8x16xf32>
    %580 = arith.subf %579, %21 : vector<8x16xf32>
    %cst_47 = arith.constant 1.000000e+00 : f32
    %581 = vector.broadcast %cst_47 : f32 to vector<8x16xf32>
    %582 = arith.mulf %581, %580 : vector<8x16xf32>
    %583 = arith.addf %498, %582 : vector<8x16xf32>
    %584 = arith.subf %574, %21 : vector<8x16xf32>
    %cst_48 = arith.constant 1.000000e+00 : f32
    %585 = vector.broadcast %cst_48 : f32 to vector<8x16xf32>
    %586 = arith.mulf %585, %584 : vector<8x16xf32>
    %587 = arith.addf %583, %586 : vector<8x16xf32>
    %588 = vector.extract_strided_slice %578 {offsets = [0, 0], sizes = [1, 16], strides = [1, 1]} : vector<8x16xf32> to vector<1x16xf32>
    %589 = vector.broadcast %588 : vector<1x16xf32> to vector<16x16xf32>
    %590 = arith.mulf %25, %589 : vector<16x16xf32>
    %591 = arith.subf %13, %590 : vector<16x16xf32>
    %592 = vector.extract_strided_slice %578 {offsets = [1, 0], sizes = [1, 16], strides = [1, 1]} : vector<8x16xf32> to vector<1x16xf32>
    %593 = vector.broadcast %592 : vector<1x16xf32> to vector<16x16xf32>
    %594 = arith.mulf %28, %593 : vector<16x16xf32>
    %595 = arith.subf %591, %594 : vector<16x16xf32>
    %596 = vector.extract_strided_slice %578 {offsets = [2, 0], sizes = [1, 16], strides = [1, 1]} : vector<8x16xf32> to vector<1x16xf32>
    %597 = vector.broadcast %596 : vector<1x16xf32> to vector<16x16xf32>
    %598 = arith.mulf %31, %597 : vector<16x16xf32>
    %599 = arith.subf %595, %598 : vector<16x16xf32>
    %600 = vector.extract_strided_slice %578 {offsets = [3, 0], sizes = [1, 16], strides = [1, 1]} : vector<8x16xf32> to vector<1x16xf32>
    %601 = vector.broadcast %600 : vector<1x16xf32> to vector<16x16xf32>
    %602 = arith.mulf %34, %601 : vector<16x16xf32>
    %603 = arith.subf %599, %602 : vector<16x16xf32>
    %604 = vector.extract_strided_slice %578 {offsets = [4, 0], sizes = [1, 16], strides = [1, 1]} : vector<8x16xf32> to vector<1x16xf32>
    %605 = vector.broadcast %604 : vector<1x16xf32> to vector<16x16xf32>
    %606 = arith.mulf %37, %605 : vector<16x16xf32>
    %607 = arith.subf %603, %606 : vector<16x16xf32>
    %608 = vector.extract_strided_slice %578 {offsets = [5, 0], sizes = [1, 16], strides = [1, 1]} : vector<8x16xf32> to vector<1x16xf32>
    %609 = vector.broadcast %608 : vector<1x16xf32> to vector<16x16xf32>
    %610 = arith.mulf %40, %609 : vector<16x16xf32>
    %611 = arith.subf %607, %610 : vector<16x16xf32>
    %612 = vector.extract_strided_slice %578 {offsets = [6, 0], sizes = [1, 16], strides = [1, 1]} : vector<8x16xf32> to vector<1x16xf32>
    %613 = vector.broadcast %612 : vector<1x16xf32> to vector<16x16xf32>
    %614 = arith.mulf %43, %613 : vector<16x16xf32>
    %615 = arith.subf %611, %614 : vector<16x16xf32>
    %616 = vector.extract_strided_slice %578 {offsets = [7, 0], sizes = [1, 16], strides = [1, 1]} : vector<8x16xf32> to vector<1x16xf32>
    %617 = vector.broadcast %616 : vector<1x16xf32> to vector<16x16xf32>
    %618 = arith.mulf %46, %617 : vector<16x16xf32>
    %619 = arith.subf %615, %618 : vector<16x16xf32>
    %620 = vector.extract_strided_slice %587 {offsets = [0, 0], sizes = [1, 16], strides = [1, 1]} : vector<8x16xf32> to vector<1x16xf32>
    %621 = vector.broadcast %620 : vector<1x16xf32> to vector<16x16xf32>
    %622 = arith.mulf %49, %621 : vector<16x16xf32>
    %623 = arith.subf %619, %622 : vector<16x16xf32>
    %624 = vector.extract_strided_slice %587 {offsets = [1, 0], sizes = [1, 16], strides = [1, 1]} : vector<8x16xf32> to vector<1x16xf32>
    %625 = vector.broadcast %624 : vector<1x16xf32> to vector<16x16xf32>
    %626 = arith.mulf %52, %625 : vector<16x16xf32>
    %627 = arith.subf %623, %626 : vector<16x16xf32>
    %628 = vector.extract_strided_slice %587 {offsets = [2, 0], sizes = [1, 16], strides = [1, 1]} : vector<8x16xf32> to vector<1x16xf32>
    %629 = vector.broadcast %628 : vector<1x16xf32> to vector<16x16xf32>
    %630 = arith.mulf %55, %629 : vector<16x16xf32>
    %631 = arith.subf %627, %630 : vector<16x16xf32>
    %632 = vector.extract_strided_slice %587 {offsets = [3, 0], sizes = [1, 16], strides = [1, 1]} : vector<8x16xf32> to vector<1x16xf32>
    %633 = vector.broadcast %632 : vector<1x16xf32> to vector<16x16xf32>
    %634 = arith.mulf %58, %633 : vector<16x16xf32>
    %635 = arith.subf %631, %634 : vector<16x16xf32>
    %636 = vector.extract_strided_slice %587 {offsets = [4, 0], sizes = [1, 16], strides = [1, 1]} : vector<8x16xf32> to vector<1x16xf32>
    %637 = vector.broadcast %636 : vector<1x16xf32> to vector<16x16xf32>
    %638 = arith.mulf %61, %637 : vector<16x16xf32>
    %639 = arith.subf %635, %638 : vector<16x16xf32>
    %640 = vector.extract_strided_slice %587 {offsets = [5, 0], sizes = [1, 16], strides = [1, 1]} : vector<8x16xf32> to vector<1x16xf32>
    %641 = vector.broadcast %640 : vector<1x16xf32> to vector<16x16xf32>
    %642 = arith.mulf %64, %641 : vector<16x16xf32>
    %643 = arith.subf %639, %642 : vector<16x16xf32>
    %644 = vector.extract_strided_slice %587 {offsets = [6, 0], sizes = [1, 16], strides = [1, 1]} : vector<8x16xf32> to vector<1x16xf32>
    %645 = vector.broadcast %644 : vector<1x16xf32> to vector<16x16xf32>
    %646 = arith.mulf %67, %645 : vector<16x16xf32>
    %647 = arith.subf %643, %646 : vector<16x16xf32>
    %648 = vector.extract_strided_slice %587 {offsets = [7, 0], sizes = [1, 16], strides = [1, 1]} : vector<8x16xf32> to vector<1x16xf32>
    %649 = vector.broadcast %648 : vector<1x16xf32> to vector<16x16xf32>
    %650 = arith.mulf %70, %649 : vector<16x16xf32>
    %651 = arith.subf %647, %650 : vector<16x16xf32>
    %652 = vector.extract_strided_slice %651 {offsets = [0, 0], sizes = [8, 16], strides = [1, 1]} : vector<16x16xf32> to vector<8x16xf32>
    %653 = vector.extract_strided_slice %651 {offsets = [8, 0], sizes = [8, 16], strides = [1, 1]} : vector<16x16xf32> to vector<8x16xf32>
    %cst_49 = arith.constant -1.000000e+00 : f32
    %654 = vector.broadcast %cst_49 : f32 to vector<8x16xf32>
    %655 = arith.mulf %654, %583 : vector<8x16xf32>
    %656 = arith.subf %653, %21 : vector<8x16xf32>
    %657 = arith.subf %655, %656 : vector<8x16xf32>
    %cst_50 = arith.constant 0.000000e+00 : f32
    %658 = vector.broadcast %cst_50 : f32 to vector<8x16xf32>
    %659 = arith.maximumf %657, %658 : vector<8x16xf32>
    %660 = arith.subf %652, %18 : vector<8x16xf32>
    %cst_51 = arith.constant 1.000000e+00 : f32
    %661 = vector.broadcast %cst_51 : f32 to vector<8x16xf32>
    %662 = arith.mulf %661, %660 : vector<8x16xf32>
    %663 = arith.addf %578, %662 : vector<8x16xf32>
    %664 = arith.addf %653, %659 : vector<8x16xf32>
    %665 = arith.subf %664, %21 : vector<8x16xf32>
    %cst_52 = arith.constant 1.000000e+00 : f32
    %666 = vector.broadcast %cst_52 : f32 to vector<8x16xf32>
    %667 = arith.mulf %666, %665 : vector<8x16xf32>
    %668 = arith.addf %583, %667 : vector<8x16xf32>
    %669 = arith.subf %659, %21 : vector<8x16xf32>
    %cst_53 = arith.constant 1.000000e+00 : f32
    %670 = vector.broadcast %cst_53 : f32 to vector<8x16xf32>
    %671 = arith.mulf %670, %669 : vector<8x16xf32>
    %672 = arith.addf %668, %671 : vector<8x16xf32>
    %673 = vector.extract_strided_slice %663 {offsets = [0, 0], sizes = [1, 16], strides = [1, 1]} : vector<8x16xf32> to vector<1x16xf32>
    %674 = vector.broadcast %673 : vector<1x16xf32> to vector<16x16xf32>
    %675 = arith.mulf %25, %674 : vector<16x16xf32>
    %676 = arith.subf %13, %675 : vector<16x16xf32>
    %677 = vector.extract_strided_slice %663 {offsets = [1, 0], sizes = [1, 16], strides = [1, 1]} : vector<8x16xf32> to vector<1x16xf32>
    %678 = vector.broadcast %677 : vector<1x16xf32> to vector<16x16xf32>
    %679 = arith.mulf %28, %678 : vector<16x16xf32>
    %680 = arith.subf %676, %679 : vector<16x16xf32>
    %681 = vector.extract_strided_slice %663 {offsets = [2, 0], sizes = [1, 16], strides = [1, 1]} : vector<8x16xf32> to vector<1x16xf32>
    %682 = vector.broadcast %681 : vector<1x16xf32> to vector<16x16xf32>
    %683 = arith.mulf %31, %682 : vector<16x16xf32>
    %684 = arith.subf %680, %683 : vector<16x16xf32>
    %685 = vector.extract_strided_slice %663 {offsets = [3, 0], sizes = [1, 16], strides = [1, 1]} : vector<8x16xf32> to vector<1x16xf32>
    %686 = vector.broadcast %685 : vector<1x16xf32> to vector<16x16xf32>
    %687 = arith.mulf %34, %686 : vector<16x16xf32>
    %688 = arith.subf %684, %687 : vector<16x16xf32>
    %689 = vector.extract_strided_slice %663 {offsets = [4, 0], sizes = [1, 16], strides = [1, 1]} : vector<8x16xf32> to vector<1x16xf32>
    %690 = vector.broadcast %689 : vector<1x16xf32> to vector<16x16xf32>
    %691 = arith.mulf %37, %690 : vector<16x16xf32>
    %692 = arith.subf %688, %691 : vector<16x16xf32>
    %693 = vector.extract_strided_slice %663 {offsets = [5, 0], sizes = [1, 16], strides = [1, 1]} : vector<8x16xf32> to vector<1x16xf32>
    %694 = vector.broadcast %693 : vector<1x16xf32> to vector<16x16xf32>
    %695 = arith.mulf %40, %694 : vector<16x16xf32>
    %696 = arith.subf %692, %695 : vector<16x16xf32>
    %697 = vector.extract_strided_slice %663 {offsets = [6, 0], sizes = [1, 16], strides = [1, 1]} : vector<8x16xf32> to vector<1x16xf32>
    %698 = vector.broadcast %697 : vector<1x16xf32> to vector<16x16xf32>
    %699 = arith.mulf %43, %698 : vector<16x16xf32>
    %700 = arith.subf %696, %699 : vector<16x16xf32>
    %701 = vector.extract_strided_slice %663 {offsets = [7, 0], sizes = [1, 16], strides = [1, 1]} : vector<8x16xf32> to vector<1x16xf32>
    %702 = vector.broadcast %701 : vector<1x16xf32> to vector<16x16xf32>
    %703 = arith.mulf %46, %702 : vector<16x16xf32>
    %704 = arith.subf %700, %703 : vector<16x16xf32>
    %705 = vector.extract_strided_slice %672 {offsets = [0, 0], sizes = [1, 16], strides = [1, 1]} : vector<8x16xf32> to vector<1x16xf32>
    %706 = vector.broadcast %705 : vector<1x16xf32> to vector<16x16xf32>
    %707 = arith.mulf %49, %706 : vector<16x16xf32>
    %708 = arith.subf %704, %707 : vector<16x16xf32>
    %709 = vector.extract_strided_slice %672 {offsets = [1, 0], sizes = [1, 16], strides = [1, 1]} : vector<8x16xf32> to vector<1x16xf32>
    %710 = vector.broadcast %709 : vector<1x16xf32> to vector<16x16xf32>
    %711 = arith.mulf %52, %710 : vector<16x16xf32>
    %712 = arith.subf %708, %711 : vector<16x16xf32>
    %713 = vector.extract_strided_slice %672 {offsets = [2, 0], sizes = [1, 16], strides = [1, 1]} : vector<8x16xf32> to vector<1x16xf32>
    %714 = vector.broadcast %713 : vector<1x16xf32> to vector<16x16xf32>
    %715 = arith.mulf %55, %714 : vector<16x16xf32>
    %716 = arith.subf %712, %715 : vector<16x16xf32>
    %717 = vector.extract_strided_slice %672 {offsets = [3, 0], sizes = [1, 16], strides = [1, 1]} : vector<8x16xf32> to vector<1x16xf32>
    %718 = vector.broadcast %717 : vector<1x16xf32> to vector<16x16xf32>
    %719 = arith.mulf %58, %718 : vector<16x16xf32>
    %720 = arith.subf %716, %719 : vector<16x16xf32>
    %721 = vector.extract_strided_slice %672 {offsets = [4, 0], sizes = [1, 16], strides = [1, 1]} : vector<8x16xf32> to vector<1x16xf32>
    %722 = vector.broadcast %721 : vector<1x16xf32> to vector<16x16xf32>
    %723 = arith.mulf %61, %722 : vector<16x16xf32>
    %724 = arith.subf %720, %723 : vector<16x16xf32>
    %725 = vector.extract_strided_slice %672 {offsets = [5, 0], sizes = [1, 16], strides = [1, 1]} : vector<8x16xf32> to vector<1x16xf32>
    %726 = vector.broadcast %725 : vector<1x16xf32> to vector<16x16xf32>
    %727 = arith.mulf %64, %726 : vector<16x16xf32>
    %728 = arith.subf %724, %727 : vector<16x16xf32>
    %729 = vector.extract_strided_slice %672 {offsets = [6, 0], sizes = [1, 16], strides = [1, 1]} : vector<8x16xf32> to vector<1x16xf32>
    %730 = vector.broadcast %729 : vector<1x16xf32> to vector<16x16xf32>
    %731 = arith.mulf %67, %730 : vector<16x16xf32>
    %732 = arith.subf %728, %731 : vector<16x16xf32>
    %733 = vector.extract_strided_slice %672 {offsets = [7, 0], sizes = [1, 16], strides = [1, 1]} : vector<8x16xf32> to vector<1x16xf32>
    %734 = vector.broadcast %733 : vector<1x16xf32> to vector<16x16xf32>
    %735 = arith.mulf %70, %734 : vector<16x16xf32>
    %736 = arith.subf %732, %735 : vector<16x16xf32>
    %737 = vector.extract_strided_slice %736 {offsets = [0, 0], sizes = [8, 16], strides = [1, 1]} : vector<16x16xf32> to vector<8x16xf32>
    %738 = vector.extract_strided_slice %736 {offsets = [8, 0], sizes = [8, 16], strides = [1, 1]} : vector<16x16xf32> to vector<8x16xf32>
    %cst_54 = arith.constant -1.000000e+00 : f32
    %739 = vector.broadcast %cst_54 : f32 to vector<8x16xf32>
    %740 = arith.mulf %739, %668 : vector<8x16xf32>
    %741 = arith.subf %738, %21 : vector<8x16xf32>
    %742 = arith.subf %740, %741 : vector<8x16xf32>
    %cst_55 = arith.constant 0.000000e+00 : f32
    %743 = vector.broadcast %cst_55 : f32 to vector<8x16xf32>
    %744 = arith.maximumf %742, %743 : vector<8x16xf32>
    %745 = arith.subf %737, %18 : vector<8x16xf32>
    %cst_56 = arith.constant 1.000000e+00 : f32
    %746 = vector.broadcast %cst_56 : f32 to vector<8x16xf32>
    %747 = arith.mulf %746, %745 : vector<8x16xf32>
    %748 = arith.addf %663, %747 : vector<8x16xf32>
    %749 = arith.addf %738, %744 : vector<8x16xf32>
    %750 = arith.subf %749, %21 : vector<8x16xf32>
    %cst_57 = arith.constant 1.000000e+00 : f32
    %751 = vector.broadcast %cst_57 : f32 to vector<8x16xf32>
    %752 = arith.mulf %751, %750 : vector<8x16xf32>
    %753 = arith.addf %668, %752 : vector<8x16xf32>
    %754 = arith.subf %744, %21 : vector<8x16xf32>
    %cst_58 = arith.constant 1.000000e+00 : f32
    %755 = vector.broadcast %cst_58 : f32 to vector<8x16xf32>
    %756 = arith.mulf %755, %754 : vector<8x16xf32>
    %757 = arith.addf %753, %756 : vector<8x16xf32>
    %758 = vector.extract_strided_slice %748 {offsets = [0, 0], sizes = [1, 16], strides = [1, 1]} : vector<8x16xf32> to vector<1x16xf32>
    %759 = vector.broadcast %758 : vector<1x16xf32> to vector<16x16xf32>
    %760 = arith.mulf %25, %759 : vector<16x16xf32>
    %761 = arith.subf %13, %760 : vector<16x16xf32>
    %762 = vector.extract_strided_slice %748 {offsets = [1, 0], sizes = [1, 16], strides = [1, 1]} : vector<8x16xf32> to vector<1x16xf32>
    %763 = vector.broadcast %762 : vector<1x16xf32> to vector<16x16xf32>
    %764 = arith.mulf %28, %763 : vector<16x16xf32>
    %765 = arith.subf %761, %764 : vector<16x16xf32>
    %766 = vector.extract_strided_slice %748 {offsets = [2, 0], sizes = [1, 16], strides = [1, 1]} : vector<8x16xf32> to vector<1x16xf32>
    %767 = vector.broadcast %766 : vector<1x16xf32> to vector<16x16xf32>
    %768 = arith.mulf %31, %767 : vector<16x16xf32>
    %769 = arith.subf %765, %768 : vector<16x16xf32>
    %770 = vector.extract_strided_slice %748 {offsets = [3, 0], sizes = [1, 16], strides = [1, 1]} : vector<8x16xf32> to vector<1x16xf32>
    %771 = vector.broadcast %770 : vector<1x16xf32> to vector<16x16xf32>
    %772 = arith.mulf %34, %771 : vector<16x16xf32>
    %773 = arith.subf %769, %772 : vector<16x16xf32>
    %774 = vector.extract_strided_slice %748 {offsets = [4, 0], sizes = [1, 16], strides = [1, 1]} : vector<8x16xf32> to vector<1x16xf32>
    %775 = vector.broadcast %774 : vector<1x16xf32> to vector<16x16xf32>
    %776 = arith.mulf %37, %775 : vector<16x16xf32>
    %777 = arith.subf %773, %776 : vector<16x16xf32>
    %778 = vector.extract_strided_slice %748 {offsets = [5, 0], sizes = [1, 16], strides = [1, 1]} : vector<8x16xf32> to vector<1x16xf32>
    %779 = vector.broadcast %778 : vector<1x16xf32> to vector<16x16xf32>
    %780 = arith.mulf %40, %779 : vector<16x16xf32>
    %781 = arith.subf %777, %780 : vector<16x16xf32>
    %782 = vector.extract_strided_slice %748 {offsets = [6, 0], sizes = [1, 16], strides = [1, 1]} : vector<8x16xf32> to vector<1x16xf32>
    %783 = vector.broadcast %782 : vector<1x16xf32> to vector<16x16xf32>
    %784 = arith.mulf %43, %783 : vector<16x16xf32>
    %785 = arith.subf %781, %784 : vector<16x16xf32>
    %786 = vector.extract_strided_slice %748 {offsets = [7, 0], sizes = [1, 16], strides = [1, 1]} : vector<8x16xf32> to vector<1x16xf32>
    %787 = vector.broadcast %786 : vector<1x16xf32> to vector<16x16xf32>
    %788 = arith.mulf %46, %787 : vector<16x16xf32>
    %789 = arith.subf %785, %788 : vector<16x16xf32>
    %790 = vector.extract_strided_slice %757 {offsets = [0, 0], sizes = [1, 16], strides = [1, 1]} : vector<8x16xf32> to vector<1x16xf32>
    %791 = vector.broadcast %790 : vector<1x16xf32> to vector<16x16xf32>
    %792 = arith.mulf %49, %791 : vector<16x16xf32>
    %793 = arith.subf %789, %792 : vector<16x16xf32>
    %794 = vector.extract_strided_slice %757 {offsets = [1, 0], sizes = [1, 16], strides = [1, 1]} : vector<8x16xf32> to vector<1x16xf32>
    %795 = vector.broadcast %794 : vector<1x16xf32> to vector<16x16xf32>
    %796 = arith.mulf %52, %795 : vector<16x16xf32>
    %797 = arith.subf %793, %796 : vector<16x16xf32>
    %798 = vector.extract_strided_slice %757 {offsets = [2, 0], sizes = [1, 16], strides = [1, 1]} : vector<8x16xf32> to vector<1x16xf32>
    %799 = vector.broadcast %798 : vector<1x16xf32> to vector<16x16xf32>
    %800 = arith.mulf %55, %799 : vector<16x16xf32>
    %801 = arith.subf %797, %800 : vector<16x16xf32>
    %802 = vector.extract_strided_slice %757 {offsets = [3, 0], sizes = [1, 16], strides = [1, 1]} : vector<8x16xf32> to vector<1x16xf32>
    %803 = vector.broadcast %802 : vector<1x16xf32> to vector<16x16xf32>
    %804 = arith.mulf %58, %803 : vector<16x16xf32>
    %805 = arith.subf %801, %804 : vector<16x16xf32>
    %806 = vector.extract_strided_slice %757 {offsets = [4, 0], sizes = [1, 16], strides = [1, 1]} : vector<8x16xf32> to vector<1x16xf32>
    %807 = vector.broadcast %806 : vector<1x16xf32> to vector<16x16xf32>
    %808 = arith.mulf %61, %807 : vector<16x16xf32>
    %809 = arith.subf %805, %808 : vector<16x16xf32>
    %810 = vector.extract_strided_slice %757 {offsets = [5, 0], sizes = [1, 16], strides = [1, 1]} : vector<8x16xf32> to vector<1x16xf32>
    %811 = vector.broadcast %810 : vector<1x16xf32> to vector<16x16xf32>
    %812 = arith.mulf %64, %811 : vector<16x16xf32>
    %813 = arith.subf %809, %812 : vector<16x16xf32>
    %814 = vector.extract_strided_slice %757 {offsets = [6, 0], sizes = [1, 16], strides = [1, 1]} : vector<8x16xf32> to vector<1x16xf32>
    %815 = vector.broadcast %814 : vector<1x16xf32> to vector<16x16xf32>
    %816 = arith.mulf %67, %815 : vector<16x16xf32>
    %817 = arith.subf %813, %816 : vector<16x16xf32>
    %818 = vector.extract_strided_slice %757 {offsets = [7, 0], sizes = [1, 16], strides = [1, 1]} : vector<8x16xf32> to vector<1x16xf32>
    %819 = vector.broadcast %818 : vector<1x16xf32> to vector<16x16xf32>
    %820 = arith.mulf %70, %819 : vector<16x16xf32>
    %821 = arith.subf %817, %820 : vector<16x16xf32>
    %822 = vector.extract_strided_slice %821 {offsets = [0, 0], sizes = [8, 16], strides = [1, 1]} : vector<16x16xf32> to vector<8x16xf32>
    %823 = vector.extract_strided_slice %821 {offsets = [8, 0], sizes = [8, 16], strides = [1, 1]} : vector<16x16xf32> to vector<8x16xf32>
    %cst_59 = arith.constant -1.000000e+00 : f32
    %824 = vector.broadcast %cst_59 : f32 to vector<8x16xf32>
    %825 = arith.mulf %824, %753 : vector<8x16xf32>
    %826 = arith.subf %823, %21 : vector<8x16xf32>
    %827 = arith.subf %825, %826 : vector<8x16xf32>
    %cst_60 = arith.constant 0.000000e+00 : f32
    %828 = vector.broadcast %cst_60 : f32 to vector<8x16xf32>
    %829 = arith.maximumf %827, %828 : vector<8x16xf32>
    %830 = arith.subf %822, %18 : vector<8x16xf32>
    %cst_61 = arith.constant 1.000000e+00 : f32
    %831 = vector.broadcast %cst_61 : f32 to vector<8x16xf32>
    %832 = arith.mulf %831, %830 : vector<8x16xf32>
    %833 = arith.addf %748, %832 : vector<8x16xf32>
    %834 = arith.addf %823, %829 : vector<8x16xf32>
    %835 = arith.subf %834, %21 : vector<8x16xf32>
    %cst_62 = arith.constant 1.000000e+00 : f32
    %836 = vector.broadcast %cst_62 : f32 to vector<8x16xf32>
    %837 = arith.mulf %836, %835 : vector<8x16xf32>
    %838 = arith.addf %753, %837 : vector<8x16xf32>
    %839 = arith.subf %829, %21 : vector<8x16xf32>
    %cst_63 = arith.constant 1.000000e+00 : f32
    %840 = vector.broadcast %cst_63 : f32 to vector<8x16xf32>
    %841 = arith.mulf %840, %839 : vector<8x16xf32>
    %842 = arith.addf %838, %841 : vector<8x16xf32>
    %843 = vector.extract_strided_slice %833 {offsets = [0, 0], sizes = [1, 16], strides = [1, 1]} : vector<8x16xf32> to vector<1x16xf32>
    %844 = vector.broadcast %843 : vector<1x16xf32> to vector<16x16xf32>
    %845 = arith.mulf %25, %844 : vector<16x16xf32>
    %846 = arith.subf %13, %845 : vector<16x16xf32>
    %847 = vector.extract_strided_slice %833 {offsets = [1, 0], sizes = [1, 16], strides = [1, 1]} : vector<8x16xf32> to vector<1x16xf32>
    %848 = vector.broadcast %847 : vector<1x16xf32> to vector<16x16xf32>
    %849 = arith.mulf %28, %848 : vector<16x16xf32>
    %850 = arith.subf %846, %849 : vector<16x16xf32>
    %851 = vector.extract_strided_slice %833 {offsets = [2, 0], sizes = [1, 16], strides = [1, 1]} : vector<8x16xf32> to vector<1x16xf32>
    %852 = vector.broadcast %851 : vector<1x16xf32> to vector<16x16xf32>
    %853 = arith.mulf %31, %852 : vector<16x16xf32>
    %854 = arith.subf %850, %853 : vector<16x16xf32>
    %855 = vector.extract_strided_slice %833 {offsets = [3, 0], sizes = [1, 16], strides = [1, 1]} : vector<8x16xf32> to vector<1x16xf32>
    %856 = vector.broadcast %855 : vector<1x16xf32> to vector<16x16xf32>
    %857 = arith.mulf %34, %856 : vector<16x16xf32>
    %858 = arith.subf %854, %857 : vector<16x16xf32>
    %859 = vector.extract_strided_slice %833 {offsets = [4, 0], sizes = [1, 16], strides = [1, 1]} : vector<8x16xf32> to vector<1x16xf32>
    %860 = vector.broadcast %859 : vector<1x16xf32> to vector<16x16xf32>
    %861 = arith.mulf %37, %860 : vector<16x16xf32>
    %862 = arith.subf %858, %861 : vector<16x16xf32>
    %863 = vector.extract_strided_slice %833 {offsets = [5, 0], sizes = [1, 16], strides = [1, 1]} : vector<8x16xf32> to vector<1x16xf32>
    %864 = vector.broadcast %863 : vector<1x16xf32> to vector<16x16xf32>
    %865 = arith.mulf %40, %864 : vector<16x16xf32>
    %866 = arith.subf %862, %865 : vector<16x16xf32>
    %867 = vector.extract_strided_slice %833 {offsets = [6, 0], sizes = [1, 16], strides = [1, 1]} : vector<8x16xf32> to vector<1x16xf32>
    %868 = vector.broadcast %867 : vector<1x16xf32> to vector<16x16xf32>
    %869 = arith.mulf %43, %868 : vector<16x16xf32>
    %870 = arith.subf %866, %869 : vector<16x16xf32>
    %871 = vector.extract_strided_slice %833 {offsets = [7, 0], sizes = [1, 16], strides = [1, 1]} : vector<8x16xf32> to vector<1x16xf32>
    %872 = vector.broadcast %871 : vector<1x16xf32> to vector<16x16xf32>
    %873 = arith.mulf %46, %872 : vector<16x16xf32>
    %874 = arith.subf %870, %873 : vector<16x16xf32>
    %875 = vector.extract_strided_slice %842 {offsets = [0, 0], sizes = [1, 16], strides = [1, 1]} : vector<8x16xf32> to vector<1x16xf32>
    %876 = vector.broadcast %875 : vector<1x16xf32> to vector<16x16xf32>
    %877 = arith.mulf %49, %876 : vector<16x16xf32>
    %878 = arith.subf %874, %877 : vector<16x16xf32>
    %879 = vector.extract_strided_slice %842 {offsets = [1, 0], sizes = [1, 16], strides = [1, 1]} : vector<8x16xf32> to vector<1x16xf32>
    %880 = vector.broadcast %879 : vector<1x16xf32> to vector<16x16xf32>
    %881 = arith.mulf %52, %880 : vector<16x16xf32>
    %882 = arith.subf %878, %881 : vector<16x16xf32>
    %883 = vector.extract_strided_slice %842 {offsets = [2, 0], sizes = [1, 16], strides = [1, 1]} : vector<8x16xf32> to vector<1x16xf32>
    %884 = vector.broadcast %883 : vector<1x16xf32> to vector<16x16xf32>
    %885 = arith.mulf %55, %884 : vector<16x16xf32>
    %886 = arith.subf %882, %885 : vector<16x16xf32>
    %887 = vector.extract_strided_slice %842 {offsets = [3, 0], sizes = [1, 16], strides = [1, 1]} : vector<8x16xf32> to vector<1x16xf32>
    %888 = vector.broadcast %887 : vector<1x16xf32> to vector<16x16xf32>
    %889 = arith.mulf %58, %888 : vector<16x16xf32>
    %890 = arith.subf %886, %889 : vector<16x16xf32>
    %891 = vector.extract_strided_slice %842 {offsets = [4, 0], sizes = [1, 16], strides = [1, 1]} : vector<8x16xf32> to vector<1x16xf32>
    %892 = vector.broadcast %891 : vector<1x16xf32> to vector<16x16xf32>
    %893 = arith.mulf %61, %892 : vector<16x16xf32>
    %894 = arith.subf %890, %893 : vector<16x16xf32>
    %895 = vector.extract_strided_slice %842 {offsets = [5, 0], sizes = [1, 16], strides = [1, 1]} : vector<8x16xf32> to vector<1x16xf32>
    %896 = vector.broadcast %895 : vector<1x16xf32> to vector<16x16xf32>
    %897 = arith.mulf %64, %896 : vector<16x16xf32>
    %898 = arith.subf %894, %897 : vector<16x16xf32>
    %899 = vector.extract_strided_slice %842 {offsets = [6, 0], sizes = [1, 16], strides = [1, 1]} : vector<8x16xf32> to vector<1x16xf32>
    %900 = vector.broadcast %899 : vector<1x16xf32> to vector<16x16xf32>
    %901 = arith.mulf %67, %900 : vector<16x16xf32>
    %902 = arith.subf %898, %901 : vector<16x16xf32>
    %903 = vector.extract_strided_slice %842 {offsets = [7, 0], sizes = [1, 16], strides = [1, 1]} : vector<8x16xf32> to vector<1x16xf32>
    %904 = vector.broadcast %903 : vector<1x16xf32> to vector<16x16xf32>
    %905 = arith.mulf %70, %904 : vector<16x16xf32>
    %906 = arith.subf %902, %905 : vector<16x16xf32>
    %907 = vector.extract_strided_slice %906 {offsets = [0, 0], sizes = [8, 16], strides = [1, 1]} : vector<16x16xf32> to vector<8x16xf32>
    %908 = vector.extract_strided_slice %906 {offsets = [8, 0], sizes = [8, 16], strides = [1, 1]} : vector<16x16xf32> to vector<8x16xf32>
    %cst_64 = arith.constant -1.000000e+00 : f32
    %909 = vector.broadcast %cst_64 : f32 to vector<8x16xf32>
    %910 = arith.mulf %909, %838 : vector<8x16xf32>
    %911 = arith.subf %908, %21 : vector<8x16xf32>
    %912 = arith.subf %910, %911 : vector<8x16xf32>
    %cst_65 = arith.constant 0.000000e+00 : f32
    %913 = vector.broadcast %cst_65 : f32 to vector<8x16xf32>
    %914 = arith.maximumf %912, %913 : vector<8x16xf32>
    %915 = arith.subf %907, %18 : vector<8x16xf32>
    %cst_66 = arith.constant 1.000000e+00 : f32
    %916 = vector.broadcast %cst_66 : f32 to vector<8x16xf32>
    %917 = arith.mulf %916, %915 : vector<8x16xf32>
    %918 = arith.addf %833, %917 : vector<8x16xf32>
    %919 = arith.addf %908, %914 : vector<8x16xf32>
    %920 = arith.subf %919, %21 : vector<8x16xf32>
    %cst_67 = arith.constant 1.000000e+00 : f32
    %921 = vector.broadcast %cst_67 : f32 to vector<8x16xf32>
    %922 = arith.mulf %921, %920 : vector<8x16xf32>
    %923 = arith.addf %838, %922 : vector<8x16xf32>
    %924 = arith.subf %914, %21 : vector<8x16xf32>
    %cst_68 = arith.constant 1.000000e+00 : f32
    %925 = vector.broadcast %cst_68 : f32 to vector<8x16xf32>
    %926 = arith.mulf %925, %924 : vector<8x16xf32>
    %927 = arith.addf %923, %926 : vector<8x16xf32>
    %928 = vector.extract_strided_slice %918 {offsets = [0, 0], sizes = [1, 16], strides = [1, 1]} : vector<8x16xf32> to vector<1x16xf32>
    %929 = vector.broadcast %928 : vector<1x16xf32> to vector<16x16xf32>
    %930 = arith.mulf %25, %929 : vector<16x16xf32>
    %931 = arith.subf %13, %930 : vector<16x16xf32>
    %932 = vector.extract_strided_slice %918 {offsets = [1, 0], sizes = [1, 16], strides = [1, 1]} : vector<8x16xf32> to vector<1x16xf32>
    %933 = vector.broadcast %932 : vector<1x16xf32> to vector<16x16xf32>
    %934 = arith.mulf %28, %933 : vector<16x16xf32>
    %935 = arith.subf %931, %934 : vector<16x16xf32>
    %936 = vector.extract_strided_slice %918 {offsets = [2, 0], sizes = [1, 16], strides = [1, 1]} : vector<8x16xf32> to vector<1x16xf32>
    %937 = vector.broadcast %936 : vector<1x16xf32> to vector<16x16xf32>
    %938 = arith.mulf %31, %937 : vector<16x16xf32>
    %939 = arith.subf %935, %938 : vector<16x16xf32>
    %940 = vector.extract_strided_slice %918 {offsets = [3, 0], sizes = [1, 16], strides = [1, 1]} : vector<8x16xf32> to vector<1x16xf32>
    %941 = vector.broadcast %940 : vector<1x16xf32> to vector<16x16xf32>
    %942 = arith.mulf %34, %941 : vector<16x16xf32>
    %943 = arith.subf %939, %942 : vector<16x16xf32>
    %944 = vector.extract_strided_slice %918 {offsets = [4, 0], sizes = [1, 16], strides = [1, 1]} : vector<8x16xf32> to vector<1x16xf32>
    %945 = vector.broadcast %944 : vector<1x16xf32> to vector<16x16xf32>
    %946 = arith.mulf %37, %945 : vector<16x16xf32>
    %947 = arith.subf %943, %946 : vector<16x16xf32>
    %948 = vector.extract_strided_slice %918 {offsets = [5, 0], sizes = [1, 16], strides = [1, 1]} : vector<8x16xf32> to vector<1x16xf32>
    %949 = vector.broadcast %948 : vector<1x16xf32> to vector<16x16xf32>
    %950 = arith.mulf %40, %949 : vector<16x16xf32>
    %951 = arith.subf %947, %950 : vector<16x16xf32>
    %952 = vector.extract_strided_slice %918 {offsets = [6, 0], sizes = [1, 16], strides = [1, 1]} : vector<8x16xf32> to vector<1x16xf32>
    %953 = vector.broadcast %952 : vector<1x16xf32> to vector<16x16xf32>
    %954 = arith.mulf %43, %953 : vector<16x16xf32>
    %955 = arith.subf %951, %954 : vector<16x16xf32>
    %956 = vector.extract_strided_slice %918 {offsets = [7, 0], sizes = [1, 16], strides = [1, 1]} : vector<8x16xf32> to vector<1x16xf32>
    %957 = vector.broadcast %956 : vector<1x16xf32> to vector<16x16xf32>
    %958 = arith.mulf %46, %957 : vector<16x16xf32>
    %959 = arith.subf %955, %958 : vector<16x16xf32>
    %960 = vector.extract_strided_slice %927 {offsets = [0, 0], sizes = [1, 16], strides = [1, 1]} : vector<8x16xf32> to vector<1x16xf32>
    %961 = vector.broadcast %960 : vector<1x16xf32> to vector<16x16xf32>
    %962 = arith.mulf %49, %961 : vector<16x16xf32>
    %963 = arith.subf %959, %962 : vector<16x16xf32>
    %964 = vector.extract_strided_slice %927 {offsets = [1, 0], sizes = [1, 16], strides = [1, 1]} : vector<8x16xf32> to vector<1x16xf32>
    %965 = vector.broadcast %964 : vector<1x16xf32> to vector<16x16xf32>
    %966 = arith.mulf %52, %965 : vector<16x16xf32>
    %967 = arith.subf %963, %966 : vector<16x16xf32>
    %968 = vector.extract_strided_slice %927 {offsets = [2, 0], sizes = [1, 16], strides = [1, 1]} : vector<8x16xf32> to vector<1x16xf32>
    %969 = vector.broadcast %968 : vector<1x16xf32> to vector<16x16xf32>
    %970 = arith.mulf %55, %969 : vector<16x16xf32>
    %971 = arith.subf %967, %970 : vector<16x16xf32>
    %972 = vector.extract_strided_slice %927 {offsets = [3, 0], sizes = [1, 16], strides = [1, 1]} : vector<8x16xf32> to vector<1x16xf32>
    %973 = vector.broadcast %972 : vector<1x16xf32> to vector<16x16xf32>
    %974 = arith.mulf %58, %973 : vector<16x16xf32>
    %975 = arith.subf %971, %974 : vector<16x16xf32>
    %976 = vector.extract_strided_slice %927 {offsets = [4, 0], sizes = [1, 16], strides = [1, 1]} : vector<8x16xf32> to vector<1x16xf32>
    %977 = vector.broadcast %976 : vector<1x16xf32> to vector<16x16xf32>
    %978 = arith.mulf %61, %977 : vector<16x16xf32>
    %979 = arith.subf %975, %978 : vector<16x16xf32>
    %980 = vector.extract_strided_slice %927 {offsets = [5, 0], sizes = [1, 16], strides = [1, 1]} : vector<8x16xf32> to vector<1x16xf32>
    %981 = vector.broadcast %980 : vector<1x16xf32> to vector<16x16xf32>
    %982 = arith.mulf %64, %981 : vector<16x16xf32>
    %983 = arith.subf %979, %982 : vector<16x16xf32>
    %984 = vector.extract_strided_slice %927 {offsets = [6, 0], sizes = [1, 16], strides = [1, 1]} : vector<8x16xf32> to vector<1x16xf32>
    %985 = vector.broadcast %984 : vector<1x16xf32> to vector<16x16xf32>
    %986 = arith.mulf %67, %985 : vector<16x16xf32>
    %987 = arith.subf %983, %986 : vector<16x16xf32>
    %988 = vector.extract_strided_slice %927 {offsets = [7, 0], sizes = [1, 16], strides = [1, 1]} : vector<8x16xf32> to vector<1x16xf32>
    %989 = vector.broadcast %988 : vector<1x16xf32> to vector<16x16xf32>
    %990 = arith.mulf %70, %989 : vector<16x16xf32>
    %991 = arith.subf %987, %990 : vector<16x16xf32>
    %992 = vector.extract_strided_slice %991 {offsets = [0, 0], sizes = [8, 16], strides = [1, 1]} : vector<16x16xf32> to vector<8x16xf32>
    %993 = vector.extract_strided_slice %991 {offsets = [8, 0], sizes = [8, 16], strides = [1, 1]} : vector<16x16xf32> to vector<8x16xf32>
    %cst_69 = arith.constant -1.000000e+00 : f32
    %994 = vector.broadcast %cst_69 : f32 to vector<8x16xf32>
    %995 = arith.mulf %994, %923 : vector<8x16xf32>
    %996 = arith.subf %993, %21 : vector<8x16xf32>
    %997 = arith.subf %995, %996 : vector<8x16xf32>
    %cst_70 = arith.constant 0.000000e+00 : f32
    %998 = vector.broadcast %cst_70 : f32 to vector<8x16xf32>
    %999 = arith.maximumf %997, %998 : vector<8x16xf32>
    %1000 = arith.subf %992, %18 : vector<8x16xf32>
    %cst_71 = arith.constant 1.000000e+00 : f32
    %1001 = vector.broadcast %cst_71 : f32 to vector<8x16xf32>
    %1002 = arith.mulf %1001, %1000 : vector<8x16xf32>
    %1003 = arith.addf %918, %1002 : vector<8x16xf32>
    %1004 = arith.addf %993, %999 : vector<8x16xf32>
    %1005 = arith.subf %1004, %21 : vector<8x16xf32>
    %cst_72 = arith.constant 1.000000e+00 : f32
    %1006 = vector.broadcast %cst_72 : f32 to vector<8x16xf32>
    %1007 = arith.mulf %1006, %1005 : vector<8x16xf32>
    %1008 = arith.addf %923, %1007 : vector<8x16xf32>
    %1009 = arith.subf %999, %21 : vector<8x16xf32>
    %cst_73 = arith.constant 1.000000e+00 : f32
    %1010 = vector.broadcast %cst_73 : f32 to vector<8x16xf32>
    %1011 = arith.mulf %1010, %1009 : vector<8x16xf32>
    %1012 = arith.addf %1008, %1011 : vector<8x16xf32>
    %1013 = vector.extract_strided_slice %1003 {offsets = [0, 0], sizes = [1, 16], strides = [1, 1]} : vector<8x16xf32> to vector<1x16xf32>
    %1014 = vector.broadcast %1013 : vector<1x16xf32> to vector<16x16xf32>
    %1015 = arith.mulf %25, %1014 : vector<16x16xf32>
    %1016 = arith.subf %13, %1015 : vector<16x16xf32>
    %1017 = vector.extract_strided_slice %1003 {offsets = [1, 0], sizes = [1, 16], strides = [1, 1]} : vector<8x16xf32> to vector<1x16xf32>
    %1018 = vector.broadcast %1017 : vector<1x16xf32> to vector<16x16xf32>
    %1019 = arith.mulf %28, %1018 : vector<16x16xf32>
    %1020 = arith.subf %1016, %1019 : vector<16x16xf32>
    %1021 = vector.extract_strided_slice %1003 {offsets = [2, 0], sizes = [1, 16], strides = [1, 1]} : vector<8x16xf32> to vector<1x16xf32>
    %1022 = vector.broadcast %1021 : vector<1x16xf32> to vector<16x16xf32>
    %1023 = arith.mulf %31, %1022 : vector<16x16xf32>
    %1024 = arith.subf %1020, %1023 : vector<16x16xf32>
    %1025 = vector.extract_strided_slice %1003 {offsets = [3, 0], sizes = [1, 16], strides = [1, 1]} : vector<8x16xf32> to vector<1x16xf32>
    %1026 = vector.broadcast %1025 : vector<1x16xf32> to vector<16x16xf32>
    %1027 = arith.mulf %34, %1026 : vector<16x16xf32>
    %1028 = arith.subf %1024, %1027 : vector<16x16xf32>
    %1029 = vector.extract_strided_slice %1003 {offsets = [4, 0], sizes = [1, 16], strides = [1, 1]} : vector<8x16xf32> to vector<1x16xf32>
    %1030 = vector.broadcast %1029 : vector<1x16xf32> to vector<16x16xf32>
    %1031 = arith.mulf %37, %1030 : vector<16x16xf32>
    %1032 = arith.subf %1028, %1031 : vector<16x16xf32>
    %1033 = vector.extract_strided_slice %1003 {offsets = [5, 0], sizes = [1, 16], strides = [1, 1]} : vector<8x16xf32> to vector<1x16xf32>
    %1034 = vector.broadcast %1033 : vector<1x16xf32> to vector<16x16xf32>
    %1035 = arith.mulf %40, %1034 : vector<16x16xf32>
    %1036 = arith.subf %1032, %1035 : vector<16x16xf32>
    %1037 = vector.extract_strided_slice %1003 {offsets = [6, 0], sizes = [1, 16], strides = [1, 1]} : vector<8x16xf32> to vector<1x16xf32>
    %1038 = vector.broadcast %1037 : vector<1x16xf32> to vector<16x16xf32>
    %1039 = arith.mulf %43, %1038 : vector<16x16xf32>
    %1040 = arith.subf %1036, %1039 : vector<16x16xf32>
    %1041 = vector.extract_strided_slice %1003 {offsets = [7, 0], sizes = [1, 16], strides = [1, 1]} : vector<8x16xf32> to vector<1x16xf32>
    %1042 = vector.broadcast %1041 : vector<1x16xf32> to vector<16x16xf32>
    %1043 = arith.mulf %46, %1042 : vector<16x16xf32>
    %1044 = arith.subf %1040, %1043 : vector<16x16xf32>
    %1045 = vector.extract_strided_slice %1012 {offsets = [0, 0], sizes = [1, 16], strides = [1, 1]} : vector<8x16xf32> to vector<1x16xf32>
    %1046 = vector.broadcast %1045 : vector<1x16xf32> to vector<16x16xf32>
    %1047 = arith.mulf %49, %1046 : vector<16x16xf32>
    %1048 = arith.subf %1044, %1047 : vector<16x16xf32>
    %1049 = vector.extract_strided_slice %1012 {offsets = [1, 0], sizes = [1, 16], strides = [1, 1]} : vector<8x16xf32> to vector<1x16xf32>
    %1050 = vector.broadcast %1049 : vector<1x16xf32> to vector<16x16xf32>
    %1051 = arith.mulf %52, %1050 : vector<16x16xf32>
    %1052 = arith.subf %1048, %1051 : vector<16x16xf32>
    %1053 = vector.extract_strided_slice %1012 {offsets = [2, 0], sizes = [1, 16], strides = [1, 1]} : vector<8x16xf32> to vector<1x16xf32>
    %1054 = vector.broadcast %1053 : vector<1x16xf32> to vector<16x16xf32>
    %1055 = arith.mulf %55, %1054 : vector<16x16xf32>
    %1056 = arith.subf %1052, %1055 : vector<16x16xf32>
    %1057 = vector.extract_strided_slice %1012 {offsets = [3, 0], sizes = [1, 16], strides = [1, 1]} : vector<8x16xf32> to vector<1x16xf32>
    %1058 = vector.broadcast %1057 : vector<1x16xf32> to vector<16x16xf32>
    %1059 = arith.mulf %58, %1058 : vector<16x16xf32>
    %1060 = arith.subf %1056, %1059 : vector<16x16xf32>
    %1061 = vector.extract_strided_slice %1012 {offsets = [4, 0], sizes = [1, 16], strides = [1, 1]} : vector<8x16xf32> to vector<1x16xf32>
    %1062 = vector.broadcast %1061 : vector<1x16xf32> to vector<16x16xf32>
    %1063 = arith.mulf %61, %1062 : vector<16x16xf32>
    %1064 = arith.subf %1060, %1063 : vector<16x16xf32>
    %1065 = vector.extract_strided_slice %1012 {offsets = [5, 0], sizes = [1, 16], strides = [1, 1]} : vector<8x16xf32> to vector<1x16xf32>
    %1066 = vector.broadcast %1065 : vector<1x16xf32> to vector<16x16xf32>
    %1067 = arith.mulf %64, %1066 : vector<16x16xf32>
    %1068 = arith.subf %1064, %1067 : vector<16x16xf32>
    %1069 = vector.extract_strided_slice %1012 {offsets = [6, 0], sizes = [1, 16], strides = [1, 1]} : vector<8x16xf32> to vector<1x16xf32>
    %1070 = vector.broadcast %1069 : vector<1x16xf32> to vector<16x16xf32>
    %1071 = arith.mulf %67, %1070 : vector<16x16xf32>
    %1072 = arith.subf %1068, %1071 : vector<16x16xf32>
    %1073 = vector.extract_strided_slice %1012 {offsets = [7, 0], sizes = [1, 16], strides = [1, 1]} : vector<8x16xf32> to vector<1x16xf32>
    %1074 = vector.broadcast %1073 : vector<1x16xf32> to vector<16x16xf32>
    %1075 = arith.mulf %70, %1074 : vector<16x16xf32>
    %1076 = arith.subf %1072, %1075 : vector<16x16xf32>
    %1077 = vector.extract_strided_slice %1076 {offsets = [0, 0], sizes = [8, 16], strides = [1, 1]} : vector<16x16xf32> to vector<8x16xf32>
    %1078 = vector.extract_strided_slice %1076 {offsets = [8, 0], sizes = [8, 16], strides = [1, 1]} : vector<16x16xf32> to vector<8x16xf32>
    %cst_74 = arith.constant -1.000000e+00 : f32
    %1079 = vector.broadcast %cst_74 : f32 to vector<8x16xf32>
    %1080 = arith.mulf %1079, %1008 : vector<8x16xf32>
    %1081 = arith.subf %1078, %21 : vector<8x16xf32>
    %1082 = arith.subf %1080, %1081 : vector<8x16xf32>
    %cst_75 = arith.constant 0.000000e+00 : f32
    %1083 = vector.broadcast %cst_75 : f32 to vector<8x16xf32>
    %1084 = arith.maximumf %1082, %1083 : vector<8x16xf32>
    %1085 = arith.subf %1077, %18 : vector<8x16xf32>
    %cst_76 = arith.constant 1.000000e+00 : f32
    %1086 = vector.broadcast %cst_76 : f32 to vector<8x16xf32>
    %1087 = arith.mulf %1086, %1085 : vector<8x16xf32>
    %1088 = arith.addf %1003, %1087 : vector<8x16xf32>
    %1089 = arith.addf %1078, %1084 : vector<8x16xf32>
    %1090 = arith.subf %1089, %21 : vector<8x16xf32>
    %cst_77 = arith.constant 1.000000e+00 : f32
    %1091 = vector.broadcast %cst_77 : f32 to vector<8x16xf32>
    %1092 = arith.mulf %1091, %1090 : vector<8x16xf32>
    %1093 = arith.addf %1008, %1092 : vector<8x16xf32>
    %1094 = arith.subf %1084, %21 : vector<8x16xf32>
    %cst_78 = arith.constant 1.000000e+00 : f32
    %1095 = vector.broadcast %cst_78 : f32 to vector<8x16xf32>
    %1096 = arith.mulf %1095, %1094 : vector<8x16xf32>
    %1097 = arith.addf %1093, %1096 : vector<8x16xf32>
    %1098 = vector.extract_strided_slice %1088 {offsets = [0, 0], sizes = [1, 16], strides = [1, 1]} : vector<8x16xf32> to vector<1x16xf32>
    %1099 = vector.broadcast %1098 : vector<1x16xf32> to vector<16x16xf32>
    %1100 = arith.mulf %25, %1099 : vector<16x16xf32>
    %1101 = arith.subf %13, %1100 : vector<16x16xf32>
    %1102 = vector.extract_strided_slice %1088 {offsets = [1, 0], sizes = [1, 16], strides = [1, 1]} : vector<8x16xf32> to vector<1x16xf32>
    %1103 = vector.broadcast %1102 : vector<1x16xf32> to vector<16x16xf32>
    %1104 = arith.mulf %28, %1103 : vector<16x16xf32>
    %1105 = arith.subf %1101, %1104 : vector<16x16xf32>
    %1106 = vector.extract_strided_slice %1088 {offsets = [2, 0], sizes = [1, 16], strides = [1, 1]} : vector<8x16xf32> to vector<1x16xf32>
    %1107 = vector.broadcast %1106 : vector<1x16xf32> to vector<16x16xf32>
    %1108 = arith.mulf %31, %1107 : vector<16x16xf32>
    %1109 = arith.subf %1105, %1108 : vector<16x16xf32>
    %1110 = vector.extract_strided_slice %1088 {offsets = [3, 0], sizes = [1, 16], strides = [1, 1]} : vector<8x16xf32> to vector<1x16xf32>
    %1111 = vector.broadcast %1110 : vector<1x16xf32> to vector<16x16xf32>
    %1112 = arith.mulf %34, %1111 : vector<16x16xf32>
    %1113 = arith.subf %1109, %1112 : vector<16x16xf32>
    %1114 = vector.extract_strided_slice %1088 {offsets = [4, 0], sizes = [1, 16], strides = [1, 1]} : vector<8x16xf32> to vector<1x16xf32>
    %1115 = vector.broadcast %1114 : vector<1x16xf32> to vector<16x16xf32>
    %1116 = arith.mulf %37, %1115 : vector<16x16xf32>
    %1117 = arith.subf %1113, %1116 : vector<16x16xf32>
    %1118 = vector.extract_strided_slice %1088 {offsets = [5, 0], sizes = [1, 16], strides = [1, 1]} : vector<8x16xf32> to vector<1x16xf32>
    %1119 = vector.broadcast %1118 : vector<1x16xf32> to vector<16x16xf32>
    %1120 = arith.mulf %40, %1119 : vector<16x16xf32>
    %1121 = arith.subf %1117, %1120 : vector<16x16xf32>
    %1122 = vector.extract_strided_slice %1088 {offsets = [6, 0], sizes = [1, 16], strides = [1, 1]} : vector<8x16xf32> to vector<1x16xf32>
    %1123 = vector.broadcast %1122 : vector<1x16xf32> to vector<16x16xf32>
    %1124 = arith.mulf %43, %1123 : vector<16x16xf32>
    %1125 = arith.subf %1121, %1124 : vector<16x16xf32>
    %1126 = vector.extract_strided_slice %1088 {offsets = [7, 0], sizes = [1, 16], strides = [1, 1]} : vector<8x16xf32> to vector<1x16xf32>
    %1127 = vector.broadcast %1126 : vector<1x16xf32> to vector<16x16xf32>
    %1128 = arith.mulf %46, %1127 : vector<16x16xf32>
    %1129 = arith.subf %1125, %1128 : vector<16x16xf32>
    %1130 = vector.extract_strided_slice %1097 {offsets = [0, 0], sizes = [1, 16], strides = [1, 1]} : vector<8x16xf32> to vector<1x16xf32>
    %1131 = vector.broadcast %1130 : vector<1x16xf32> to vector<16x16xf32>
    %1132 = arith.mulf %49, %1131 : vector<16x16xf32>
    %1133 = arith.subf %1129, %1132 : vector<16x16xf32>
    %1134 = vector.extract_strided_slice %1097 {offsets = [1, 0], sizes = [1, 16], strides = [1, 1]} : vector<8x16xf32> to vector<1x16xf32>
    %1135 = vector.broadcast %1134 : vector<1x16xf32> to vector<16x16xf32>
    %1136 = arith.mulf %52, %1135 : vector<16x16xf32>
    %1137 = arith.subf %1133, %1136 : vector<16x16xf32>
    %1138 = vector.extract_strided_slice %1097 {offsets = [2, 0], sizes = [1, 16], strides = [1, 1]} : vector<8x16xf32> to vector<1x16xf32>
    %1139 = vector.broadcast %1138 : vector<1x16xf32> to vector<16x16xf32>
    %1140 = arith.mulf %55, %1139 : vector<16x16xf32>
    %1141 = arith.subf %1137, %1140 : vector<16x16xf32>
    %1142 = vector.extract_strided_slice %1097 {offsets = [3, 0], sizes = [1, 16], strides = [1, 1]} : vector<8x16xf32> to vector<1x16xf32>
    %1143 = vector.broadcast %1142 : vector<1x16xf32> to vector<16x16xf32>
    %1144 = arith.mulf %58, %1143 : vector<16x16xf32>
    %1145 = arith.subf %1141, %1144 : vector<16x16xf32>
    %1146 = vector.extract_strided_slice %1097 {offsets = [4, 0], sizes = [1, 16], strides = [1, 1]} : vector<8x16xf32> to vector<1x16xf32>
    %1147 = vector.broadcast %1146 : vector<1x16xf32> to vector<16x16xf32>
    %1148 = arith.mulf %61, %1147 : vector<16x16xf32>
    %1149 = arith.subf %1145, %1148 : vector<16x16xf32>
    %1150 = vector.extract_strided_slice %1097 {offsets = [5, 0], sizes = [1, 16], strides = [1, 1]} : vector<8x16xf32> to vector<1x16xf32>
    %1151 = vector.broadcast %1150 : vector<1x16xf32> to vector<16x16xf32>
    %1152 = arith.mulf %64, %1151 : vector<16x16xf32>
    %1153 = arith.subf %1149, %1152 : vector<16x16xf32>
    %1154 = vector.extract_strided_slice %1097 {offsets = [6, 0], sizes = [1, 16], strides = [1, 1]} : vector<8x16xf32> to vector<1x16xf32>
    %1155 = vector.broadcast %1154 : vector<1x16xf32> to vector<16x16xf32>
    %1156 = arith.mulf %67, %1155 : vector<16x16xf32>
    %1157 = arith.subf %1153, %1156 : vector<16x16xf32>
    %1158 = vector.extract_strided_slice %1097 {offsets = [7, 0], sizes = [1, 16], strides = [1, 1]} : vector<8x16xf32> to vector<1x16xf32>
    %1159 = vector.broadcast %1158 : vector<1x16xf32> to vector<16x16xf32>
    %1160 = arith.mulf %70, %1159 : vector<16x16xf32>
    %1161 = arith.subf %1157, %1160 : vector<16x16xf32>
    %1162 = vector.extract_strided_slice %1161 {offsets = [0, 0], sizes = [8, 16], strides = [1, 1]} : vector<16x16xf32> to vector<8x16xf32>
    %1163 = vector.extract_strided_slice %1161 {offsets = [8, 0], sizes = [8, 16], strides = [1, 1]} : vector<16x16xf32> to vector<8x16xf32>
    %cst_79 = arith.constant -1.000000e+00 : f32
    %1164 = vector.broadcast %cst_79 : f32 to vector<8x16xf32>
    %1165 = arith.mulf %1164, %1093 : vector<8x16xf32>
    %1166 = arith.subf %1163, %21 : vector<8x16xf32>
    %1167 = arith.subf %1165, %1166 : vector<8x16xf32>
    %cst_80 = arith.constant 0.000000e+00 : f32
    %1168 = vector.broadcast %cst_80 : f32 to vector<8x16xf32>
    %1169 = arith.maximumf %1167, %1168 : vector<8x16xf32>
    %1170 = arith.subf %1162, %18 : vector<8x16xf32>
    %cst_81 = arith.constant 1.000000e+00 : f32
    %1171 = vector.broadcast %cst_81 : f32 to vector<8x16xf32>
    %1172 = arith.mulf %1171, %1170 : vector<8x16xf32>
    %1173 = arith.addf %1088, %1172 : vector<8x16xf32>
    %1174 = arith.addf %1163, %1169 : vector<8x16xf32>
    %1175 = arith.subf %1174, %21 : vector<8x16xf32>
    %cst_82 = arith.constant 1.000000e+00 : f32
    %1176 = vector.broadcast %cst_82 : f32 to vector<8x16xf32>
    %1177 = arith.mulf %1176, %1175 : vector<8x16xf32>
    %1178 = arith.addf %1093, %1177 : vector<8x16xf32>
    %1179 = arith.subf %1169, %21 : vector<8x16xf32>
    %cst_83 = arith.constant 1.000000e+00 : f32
    %1180 = vector.broadcast %cst_83 : f32 to vector<8x16xf32>
    %1181 = arith.mulf %1180, %1179 : vector<8x16xf32>
    %1182 = arith.addf %1178, %1181 : vector<8x16xf32>
    %1183 = vector.extract_strided_slice %1173 {offsets = [0, 0], sizes = [1, 16], strides = [1, 1]} : vector<8x16xf32> to vector<1x16xf32>
    %1184 = vector.broadcast %1183 : vector<1x16xf32> to vector<16x16xf32>
    %1185 = arith.mulf %25, %1184 : vector<16x16xf32>
    %1186 = arith.subf %13, %1185 : vector<16x16xf32>
    %1187 = vector.extract_strided_slice %1173 {offsets = [1, 0], sizes = [1, 16], strides = [1, 1]} : vector<8x16xf32> to vector<1x16xf32>
    %1188 = vector.broadcast %1187 : vector<1x16xf32> to vector<16x16xf32>
    %1189 = arith.mulf %28, %1188 : vector<16x16xf32>
    %1190 = arith.subf %1186, %1189 : vector<16x16xf32>
    %1191 = vector.extract_strided_slice %1173 {offsets = [2, 0], sizes = [1, 16], strides = [1, 1]} : vector<8x16xf32> to vector<1x16xf32>
    %1192 = vector.broadcast %1191 : vector<1x16xf32> to vector<16x16xf32>
    %1193 = arith.mulf %31, %1192 : vector<16x16xf32>
    %1194 = arith.subf %1190, %1193 : vector<16x16xf32>
    %1195 = vector.extract_strided_slice %1173 {offsets = [3, 0], sizes = [1, 16], strides = [1, 1]} : vector<8x16xf32> to vector<1x16xf32>
    %1196 = vector.broadcast %1195 : vector<1x16xf32> to vector<16x16xf32>
    %1197 = arith.mulf %34, %1196 : vector<16x16xf32>
    %1198 = arith.subf %1194, %1197 : vector<16x16xf32>
    %1199 = vector.extract_strided_slice %1173 {offsets = [4, 0], sizes = [1, 16], strides = [1, 1]} : vector<8x16xf32> to vector<1x16xf32>
    %1200 = vector.broadcast %1199 : vector<1x16xf32> to vector<16x16xf32>
    %1201 = arith.mulf %37, %1200 : vector<16x16xf32>
    %1202 = arith.subf %1198, %1201 : vector<16x16xf32>
    %1203 = vector.extract_strided_slice %1173 {offsets = [5, 0], sizes = [1, 16], strides = [1, 1]} : vector<8x16xf32> to vector<1x16xf32>
    %1204 = vector.broadcast %1203 : vector<1x16xf32> to vector<16x16xf32>
    %1205 = arith.mulf %40, %1204 : vector<16x16xf32>
    %1206 = arith.subf %1202, %1205 : vector<16x16xf32>
    %1207 = vector.extract_strided_slice %1173 {offsets = [6, 0], sizes = [1, 16], strides = [1, 1]} : vector<8x16xf32> to vector<1x16xf32>
    %1208 = vector.broadcast %1207 : vector<1x16xf32> to vector<16x16xf32>
    %1209 = arith.mulf %43, %1208 : vector<16x16xf32>
    %1210 = arith.subf %1206, %1209 : vector<16x16xf32>
    %1211 = vector.extract_strided_slice %1173 {offsets = [7, 0], sizes = [1, 16], strides = [1, 1]} : vector<8x16xf32> to vector<1x16xf32>
    %1212 = vector.broadcast %1211 : vector<1x16xf32> to vector<16x16xf32>
    %1213 = arith.mulf %46, %1212 : vector<16x16xf32>
    %1214 = arith.subf %1210, %1213 : vector<16x16xf32>
    %1215 = vector.extract_strided_slice %1182 {offsets = [0, 0], sizes = [1, 16], strides = [1, 1]} : vector<8x16xf32> to vector<1x16xf32>
    %1216 = vector.broadcast %1215 : vector<1x16xf32> to vector<16x16xf32>
    %1217 = arith.mulf %49, %1216 : vector<16x16xf32>
    %1218 = arith.subf %1214, %1217 : vector<16x16xf32>
    %1219 = vector.extract_strided_slice %1182 {offsets = [1, 0], sizes = [1, 16], strides = [1, 1]} : vector<8x16xf32> to vector<1x16xf32>
    %1220 = vector.broadcast %1219 : vector<1x16xf32> to vector<16x16xf32>
    %1221 = arith.mulf %52, %1220 : vector<16x16xf32>
    %1222 = arith.subf %1218, %1221 : vector<16x16xf32>
    %1223 = vector.extract_strided_slice %1182 {offsets = [2, 0], sizes = [1, 16], strides = [1, 1]} : vector<8x16xf32> to vector<1x16xf32>
    %1224 = vector.broadcast %1223 : vector<1x16xf32> to vector<16x16xf32>
    %1225 = arith.mulf %55, %1224 : vector<16x16xf32>
    %1226 = arith.subf %1222, %1225 : vector<16x16xf32>
    %1227 = vector.extract_strided_slice %1182 {offsets = [3, 0], sizes = [1, 16], strides = [1, 1]} : vector<8x16xf32> to vector<1x16xf32>
    %1228 = vector.broadcast %1227 : vector<1x16xf32> to vector<16x16xf32>
    %1229 = arith.mulf %58, %1228 : vector<16x16xf32>
    %1230 = arith.subf %1226, %1229 : vector<16x16xf32>
    %1231 = vector.extract_strided_slice %1182 {offsets = [4, 0], sizes = [1, 16], strides = [1, 1]} : vector<8x16xf32> to vector<1x16xf32>
    %1232 = vector.broadcast %1231 : vector<1x16xf32> to vector<16x16xf32>
    %1233 = arith.mulf %61, %1232 : vector<16x16xf32>
    %1234 = arith.subf %1230, %1233 : vector<16x16xf32>
    %1235 = vector.extract_strided_slice %1182 {offsets = [5, 0], sizes = [1, 16], strides = [1, 1]} : vector<8x16xf32> to vector<1x16xf32>
    %1236 = vector.broadcast %1235 : vector<1x16xf32> to vector<16x16xf32>
    %1237 = arith.mulf %64, %1236 : vector<16x16xf32>
    %1238 = arith.subf %1234, %1237 : vector<16x16xf32>
    %1239 = vector.extract_strided_slice %1182 {offsets = [6, 0], sizes = [1, 16], strides = [1, 1]} : vector<8x16xf32> to vector<1x16xf32>
    %1240 = vector.broadcast %1239 : vector<1x16xf32> to vector<16x16xf32>
    %1241 = arith.mulf %67, %1240 : vector<16x16xf32>
    %1242 = arith.subf %1238, %1241 : vector<16x16xf32>
    %1243 = vector.extract_strided_slice %1182 {offsets = [7, 0], sizes = [1, 16], strides = [1, 1]} : vector<8x16xf32> to vector<1x16xf32>
    %1244 = vector.broadcast %1243 : vector<1x16xf32> to vector<16x16xf32>
    %1245 = arith.mulf %70, %1244 : vector<16x16xf32>
    %1246 = arith.subf %1242, %1245 : vector<16x16xf32>
    %1247 = vector.extract_strided_slice %1246 {offsets = [0, 0], sizes = [8, 16], strides = [1, 1]} : vector<16x16xf32> to vector<8x16xf32>
    %1248 = vector.extract_strided_slice %1246 {offsets = [8, 0], sizes = [8, 16], strides = [1, 1]} : vector<16x16xf32> to vector<8x16xf32>
    %cst_84 = arith.constant -1.000000e+00 : f32
    %1249 = vector.broadcast %cst_84 : f32 to vector<8x16xf32>
    %1250 = arith.mulf %1249, %1178 : vector<8x16xf32>
    %1251 = arith.subf %1248, %21 : vector<8x16xf32>
    %1252 = arith.subf %1250, %1251 : vector<8x16xf32>
    %cst_85 = arith.constant 0.000000e+00 : f32
    %1253 = vector.broadcast %cst_85 : f32 to vector<8x16xf32>
    %1254 = arith.maximumf %1252, %1253 : vector<8x16xf32>
    %1255 = arith.subf %1247, %18 : vector<8x16xf32>
    %cst_86 = arith.constant 1.000000e+00 : f32
    %1256 = vector.broadcast %cst_86 : f32 to vector<8x16xf32>
    %1257 = arith.mulf %1256, %1255 : vector<8x16xf32>
    %1258 = arith.addf %1173, %1257 : vector<8x16xf32>
    %1259 = arith.addf %1248, %1254 : vector<8x16xf32>
    %1260 = arith.subf %1259, %21 : vector<8x16xf32>
    %cst_87 = arith.constant 1.000000e+00 : f32
    %1261 = vector.broadcast %cst_87 : f32 to vector<8x16xf32>
    %1262 = arith.mulf %1261, %1260 : vector<8x16xf32>
    %1263 = arith.addf %1178, %1262 : vector<8x16xf32>
    %1264 = arith.subf %1254, %21 : vector<8x16xf32>
    %cst_88 = arith.constant 1.000000e+00 : f32
    %1265 = vector.broadcast %cst_88 : f32 to vector<8x16xf32>
    %1266 = arith.mulf %1265, %1264 : vector<8x16xf32>
    %1267 = arith.addf %1263, %1266 : vector<8x16xf32>
    %1268 = vector.extract_strided_slice %1258 {offsets = [0, 0], sizes = [1, 16], strides = [1, 1]} : vector<8x16xf32> to vector<1x16xf32>
    %1269 = vector.broadcast %1268 : vector<1x16xf32> to vector<16x16xf32>
    %1270 = arith.mulf %25, %1269 : vector<16x16xf32>
    %1271 = arith.subf %13, %1270 : vector<16x16xf32>
    %1272 = vector.extract_strided_slice %1258 {offsets = [1, 0], sizes = [1, 16], strides = [1, 1]} : vector<8x16xf32> to vector<1x16xf32>
    %1273 = vector.broadcast %1272 : vector<1x16xf32> to vector<16x16xf32>
    %1274 = arith.mulf %28, %1273 : vector<16x16xf32>
    %1275 = arith.subf %1271, %1274 : vector<16x16xf32>
    %1276 = vector.extract_strided_slice %1258 {offsets = [2, 0], sizes = [1, 16], strides = [1, 1]} : vector<8x16xf32> to vector<1x16xf32>
    %1277 = vector.broadcast %1276 : vector<1x16xf32> to vector<16x16xf32>
    %1278 = arith.mulf %31, %1277 : vector<16x16xf32>
    %1279 = arith.subf %1275, %1278 : vector<16x16xf32>
    %1280 = vector.extract_strided_slice %1258 {offsets = [3, 0], sizes = [1, 16], strides = [1, 1]} : vector<8x16xf32> to vector<1x16xf32>
    %1281 = vector.broadcast %1280 : vector<1x16xf32> to vector<16x16xf32>
    %1282 = arith.mulf %34, %1281 : vector<16x16xf32>
    %1283 = arith.subf %1279, %1282 : vector<16x16xf32>
    %1284 = vector.extract_strided_slice %1258 {offsets = [4, 0], sizes = [1, 16], strides = [1, 1]} : vector<8x16xf32> to vector<1x16xf32>
    %1285 = vector.broadcast %1284 : vector<1x16xf32> to vector<16x16xf32>
    %1286 = arith.mulf %37, %1285 : vector<16x16xf32>
    %1287 = arith.subf %1283, %1286 : vector<16x16xf32>
    %1288 = vector.extract_strided_slice %1258 {offsets = [5, 0], sizes = [1, 16], strides = [1, 1]} : vector<8x16xf32> to vector<1x16xf32>
    %1289 = vector.broadcast %1288 : vector<1x16xf32> to vector<16x16xf32>
    %1290 = arith.mulf %40, %1289 : vector<16x16xf32>
    %1291 = arith.subf %1287, %1290 : vector<16x16xf32>
    %1292 = vector.extract_strided_slice %1258 {offsets = [6, 0], sizes = [1, 16], strides = [1, 1]} : vector<8x16xf32> to vector<1x16xf32>
    %1293 = vector.broadcast %1292 : vector<1x16xf32> to vector<16x16xf32>
    %1294 = arith.mulf %43, %1293 : vector<16x16xf32>
    %1295 = arith.subf %1291, %1294 : vector<16x16xf32>
    %1296 = vector.extract_strided_slice %1258 {offsets = [7, 0], sizes = [1, 16], strides = [1, 1]} : vector<8x16xf32> to vector<1x16xf32>
    %1297 = vector.broadcast %1296 : vector<1x16xf32> to vector<16x16xf32>
    %1298 = arith.mulf %46, %1297 : vector<16x16xf32>
    %1299 = arith.subf %1295, %1298 : vector<16x16xf32>
    %1300 = vector.extract_strided_slice %1267 {offsets = [0, 0], sizes = [1, 16], strides = [1, 1]} : vector<8x16xf32> to vector<1x16xf32>
    %1301 = vector.broadcast %1300 : vector<1x16xf32> to vector<16x16xf32>
    %1302 = arith.mulf %49, %1301 : vector<16x16xf32>
    %1303 = arith.subf %1299, %1302 : vector<16x16xf32>
    %1304 = vector.extract_strided_slice %1267 {offsets = [1, 0], sizes = [1, 16], strides = [1, 1]} : vector<8x16xf32> to vector<1x16xf32>
    %1305 = vector.broadcast %1304 : vector<1x16xf32> to vector<16x16xf32>
    %1306 = arith.mulf %52, %1305 : vector<16x16xf32>
    %1307 = arith.subf %1303, %1306 : vector<16x16xf32>
    %1308 = vector.extract_strided_slice %1267 {offsets = [2, 0], sizes = [1, 16], strides = [1, 1]} : vector<8x16xf32> to vector<1x16xf32>
    %1309 = vector.broadcast %1308 : vector<1x16xf32> to vector<16x16xf32>
    %1310 = arith.mulf %55, %1309 : vector<16x16xf32>
    %1311 = arith.subf %1307, %1310 : vector<16x16xf32>
    %1312 = vector.extract_strided_slice %1267 {offsets = [3, 0], sizes = [1, 16], strides = [1, 1]} : vector<8x16xf32> to vector<1x16xf32>
    %1313 = vector.broadcast %1312 : vector<1x16xf32> to vector<16x16xf32>
    %1314 = arith.mulf %58, %1313 : vector<16x16xf32>
    %1315 = arith.subf %1311, %1314 : vector<16x16xf32>
    %1316 = vector.extract_strided_slice %1267 {offsets = [4, 0], sizes = [1, 16], strides = [1, 1]} : vector<8x16xf32> to vector<1x16xf32>
    %1317 = vector.broadcast %1316 : vector<1x16xf32> to vector<16x16xf32>
    %1318 = arith.mulf %61, %1317 : vector<16x16xf32>
    %1319 = arith.subf %1315, %1318 : vector<16x16xf32>
    %1320 = vector.extract_strided_slice %1267 {offsets = [5, 0], sizes = [1, 16], strides = [1, 1]} : vector<8x16xf32> to vector<1x16xf32>
    %1321 = vector.broadcast %1320 : vector<1x16xf32> to vector<16x16xf32>
    %1322 = arith.mulf %64, %1321 : vector<16x16xf32>
    %1323 = arith.subf %1319, %1322 : vector<16x16xf32>
    %1324 = vector.extract_strided_slice %1267 {offsets = [6, 0], sizes = [1, 16], strides = [1, 1]} : vector<8x16xf32> to vector<1x16xf32>
    %1325 = vector.broadcast %1324 : vector<1x16xf32> to vector<16x16xf32>
    %1326 = arith.mulf %67, %1325 : vector<16x16xf32>
    %1327 = arith.subf %1323, %1326 : vector<16x16xf32>
    %1328 = vector.extract_strided_slice %1267 {offsets = [7, 0], sizes = [1, 16], strides = [1, 1]} : vector<8x16xf32> to vector<1x16xf32>
    %1329 = vector.broadcast %1328 : vector<1x16xf32> to vector<16x16xf32>
    %1330 = arith.mulf %70, %1329 : vector<16x16xf32>
    %1331 = arith.subf %1327, %1330 : vector<16x16xf32>
    %1332 = vector.extract_strided_slice %1331 {offsets = [0, 0], sizes = [8, 16], strides = [1, 1]} : vector<16x16xf32> to vector<8x16xf32>
    %1333 = vector.extract_strided_slice %1331 {offsets = [8, 0], sizes = [8, 16], strides = [1, 1]} : vector<16x16xf32> to vector<8x16xf32>
    %cst_89 = arith.constant -1.000000e+00 : f32
    %1334 = vector.broadcast %cst_89 : f32 to vector<8x16xf32>
    %1335 = arith.mulf %1334, %1263 : vector<8x16xf32>
    %1336 = arith.subf %1333, %21 : vector<8x16xf32>
    %1337 = arith.subf %1335, %1336 : vector<8x16xf32>
    %cst_90 = arith.constant 0.000000e+00 : f32
    %1338 = vector.broadcast %cst_90 : f32 to vector<8x16xf32>
    %1339 = arith.maximumf %1337, %1338 : vector<8x16xf32>
    %1340 = arith.subf %1332, %18 : vector<8x16xf32>
    %cst_91 = arith.constant 1.000000e+00 : f32
    %1341 = vector.broadcast %cst_91 : f32 to vector<8x16xf32>
    %1342 = arith.mulf %1341, %1340 : vector<8x16xf32>
    %1343 = arith.addf %1258, %1342 : vector<8x16xf32>
    %1344 = arith.addf %1333, %1339 : vector<8x16xf32>
    %1345 = arith.subf %1344, %21 : vector<8x16xf32>
    %cst_92 = arith.constant 1.000000e+00 : f32
    %1346 = vector.broadcast %cst_92 : f32 to vector<8x16xf32>
    %1347 = arith.mulf %1346, %1345 : vector<8x16xf32>
    %1348 = arith.addf %1263, %1347 : vector<8x16xf32>
    %1349 = arith.subf %1339, %21 : vector<8x16xf32>
    %cst_93 = arith.constant 1.000000e+00 : f32
    %1350 = vector.broadcast %cst_93 : f32 to vector<8x16xf32>
    %1351 = arith.mulf %1350, %1349 : vector<8x16xf32>
    %1352 = arith.addf %1348, %1351 : vector<8x16xf32>
    %1353 = vector.extract_strided_slice %1343 {offsets = [0, 0], sizes = [1, 16], strides = [1, 1]} : vector<8x16xf32> to vector<1x16xf32>
    %1354 = vector.broadcast %1353 : vector<1x16xf32> to vector<16x16xf32>
    %1355 = arith.mulf %25, %1354 : vector<16x16xf32>
    %1356 = arith.subf %13, %1355 : vector<16x16xf32>
    %1357 = vector.extract_strided_slice %1343 {offsets = [1, 0], sizes = [1, 16], strides = [1, 1]} : vector<8x16xf32> to vector<1x16xf32>
    %1358 = vector.broadcast %1357 : vector<1x16xf32> to vector<16x16xf32>
    %1359 = arith.mulf %28, %1358 : vector<16x16xf32>
    %1360 = arith.subf %1356, %1359 : vector<16x16xf32>
    %1361 = vector.extract_strided_slice %1343 {offsets = [2, 0], sizes = [1, 16], strides = [1, 1]} : vector<8x16xf32> to vector<1x16xf32>
    %1362 = vector.broadcast %1361 : vector<1x16xf32> to vector<16x16xf32>
    %1363 = arith.mulf %31, %1362 : vector<16x16xf32>
    %1364 = arith.subf %1360, %1363 : vector<16x16xf32>
    %1365 = vector.extract_strided_slice %1343 {offsets = [3, 0], sizes = [1, 16], strides = [1, 1]} : vector<8x16xf32> to vector<1x16xf32>
    %1366 = vector.broadcast %1365 : vector<1x16xf32> to vector<16x16xf32>
    %1367 = arith.mulf %34, %1366 : vector<16x16xf32>
    %1368 = arith.subf %1364, %1367 : vector<16x16xf32>
    %1369 = vector.extract_strided_slice %1343 {offsets = [4, 0], sizes = [1, 16], strides = [1, 1]} : vector<8x16xf32> to vector<1x16xf32>
    %1370 = vector.broadcast %1369 : vector<1x16xf32> to vector<16x16xf32>
    %1371 = arith.mulf %37, %1370 : vector<16x16xf32>
    %1372 = arith.subf %1368, %1371 : vector<16x16xf32>
    %1373 = vector.extract_strided_slice %1343 {offsets = [5, 0], sizes = [1, 16], strides = [1, 1]} : vector<8x16xf32> to vector<1x16xf32>
    %1374 = vector.broadcast %1373 : vector<1x16xf32> to vector<16x16xf32>
    %1375 = arith.mulf %40, %1374 : vector<16x16xf32>
    %1376 = arith.subf %1372, %1375 : vector<16x16xf32>
    %1377 = vector.extract_strided_slice %1343 {offsets = [6, 0], sizes = [1, 16], strides = [1, 1]} : vector<8x16xf32> to vector<1x16xf32>
    %1378 = vector.broadcast %1377 : vector<1x16xf32> to vector<16x16xf32>
    %1379 = arith.mulf %43, %1378 : vector<16x16xf32>
    %1380 = arith.subf %1376, %1379 : vector<16x16xf32>
    %1381 = vector.extract_strided_slice %1343 {offsets = [7, 0], sizes = [1, 16], strides = [1, 1]} : vector<8x16xf32> to vector<1x16xf32>
    %1382 = vector.broadcast %1381 : vector<1x16xf32> to vector<16x16xf32>
    %1383 = arith.mulf %46, %1382 : vector<16x16xf32>
    %1384 = arith.subf %1380, %1383 : vector<16x16xf32>
    %1385 = vector.extract_strided_slice %1352 {offsets = [0, 0], sizes = [1, 16], strides = [1, 1]} : vector<8x16xf32> to vector<1x16xf32>
    %1386 = vector.broadcast %1385 : vector<1x16xf32> to vector<16x16xf32>
    %1387 = arith.mulf %49, %1386 : vector<16x16xf32>
    %1388 = arith.subf %1384, %1387 : vector<16x16xf32>
    %1389 = vector.extract_strided_slice %1352 {offsets = [1, 0], sizes = [1, 16], strides = [1, 1]} : vector<8x16xf32> to vector<1x16xf32>
    %1390 = vector.broadcast %1389 : vector<1x16xf32> to vector<16x16xf32>
    %1391 = arith.mulf %52, %1390 : vector<16x16xf32>
    %1392 = arith.subf %1388, %1391 : vector<16x16xf32>
    %1393 = vector.extract_strided_slice %1352 {offsets = [2, 0], sizes = [1, 16], strides = [1, 1]} : vector<8x16xf32> to vector<1x16xf32>
    %1394 = vector.broadcast %1393 : vector<1x16xf32> to vector<16x16xf32>
    %1395 = arith.mulf %55, %1394 : vector<16x16xf32>
    %1396 = arith.subf %1392, %1395 : vector<16x16xf32>
    %1397 = vector.extract_strided_slice %1352 {offsets = [3, 0], sizes = [1, 16], strides = [1, 1]} : vector<8x16xf32> to vector<1x16xf32>
    %1398 = vector.broadcast %1397 : vector<1x16xf32> to vector<16x16xf32>
    %1399 = arith.mulf %58, %1398 : vector<16x16xf32>
    %1400 = arith.subf %1396, %1399 : vector<16x16xf32>
    %1401 = vector.extract_strided_slice %1352 {offsets = [4, 0], sizes = [1, 16], strides = [1, 1]} : vector<8x16xf32> to vector<1x16xf32>
    %1402 = vector.broadcast %1401 : vector<1x16xf32> to vector<16x16xf32>
    %1403 = arith.mulf %61, %1402 : vector<16x16xf32>
    %1404 = arith.subf %1400, %1403 : vector<16x16xf32>
    %1405 = vector.extract_strided_slice %1352 {offsets = [5, 0], sizes = [1, 16], strides = [1, 1]} : vector<8x16xf32> to vector<1x16xf32>
    %1406 = vector.broadcast %1405 : vector<1x16xf32> to vector<16x16xf32>
    %1407 = arith.mulf %64, %1406 : vector<16x16xf32>
    %1408 = arith.subf %1404, %1407 : vector<16x16xf32>
    %1409 = vector.extract_strided_slice %1352 {offsets = [6, 0], sizes = [1, 16], strides = [1, 1]} : vector<8x16xf32> to vector<1x16xf32>
    %1410 = vector.broadcast %1409 : vector<1x16xf32> to vector<16x16xf32>
    %1411 = arith.mulf %67, %1410 : vector<16x16xf32>
    %1412 = arith.subf %1408, %1411 : vector<16x16xf32>
    %1413 = vector.extract_strided_slice %1352 {offsets = [7, 0], sizes = [1, 16], strides = [1, 1]} : vector<8x16xf32> to vector<1x16xf32>
    %1414 = vector.broadcast %1413 : vector<1x16xf32> to vector<16x16xf32>
    %1415 = arith.mulf %70, %1414 : vector<16x16xf32>
    %1416 = arith.subf %1412, %1415 : vector<16x16xf32>
    %1417 = vector.extract_strided_slice %1416 {offsets = [0, 0], sizes = [8, 16], strides = [1, 1]} : vector<16x16xf32> to vector<8x16xf32>
    %1418 = vector.extract_strided_slice %1416 {offsets = [8, 0], sizes = [8, 16], strides = [1, 1]} : vector<16x16xf32> to vector<8x16xf32>
    %cst_94 = arith.constant -1.000000e+00 : f32
    %1419 = vector.broadcast %cst_94 : f32 to vector<8x16xf32>
    %1420 = arith.mulf %1419, %1348 : vector<8x16xf32>
    %1421 = arith.subf %1418, %21 : vector<8x16xf32>
    %1422 = arith.subf %1420, %1421 : vector<8x16xf32>
    %cst_95 = arith.constant 0.000000e+00 : f32
    %1423 = vector.broadcast %cst_95 : f32 to vector<8x16xf32>
    %1424 = arith.maximumf %1422, %1423 : vector<8x16xf32>
    %1425 = arith.subf %1417, %18 : vector<8x16xf32>
    %cst_96 = arith.constant 1.000000e+00 : f32
    %1426 = vector.broadcast %cst_96 : f32 to vector<8x16xf32>
    %1427 = arith.mulf %1426, %1425 : vector<8x16xf32>
    %1428 = arith.addf %1343, %1427 : vector<8x16xf32>
    %1429 = arith.addf %1418, %1424 : vector<8x16xf32>
    %1430 = arith.subf %1429, %21 : vector<8x16xf32>
    %cst_97 = arith.constant 1.000000e+00 : f32
    %1431 = vector.broadcast %cst_97 : f32 to vector<8x16xf32>
    %1432 = arith.mulf %1431, %1430 : vector<8x16xf32>
    %1433 = arith.addf %1348, %1432 : vector<8x16xf32>
    %1434 = arith.subf %1424, %21 : vector<8x16xf32>
    %cst_98 = arith.constant 1.000000e+00 : f32
    %1435 = vector.broadcast %cst_98 : f32 to vector<8x16xf32>
    %1436 = arith.mulf %1435, %1434 : vector<8x16xf32>
    %1437 = arith.addf %1433, %1436 : vector<8x16xf32>
    %1438 = vector.extract_strided_slice %1428 {offsets = [0, 0], sizes = [1, 16], strides = [1, 1]} : vector<8x16xf32> to vector<1x16xf32>
    %1439 = vector.broadcast %1438 : vector<1x16xf32> to vector<16x16xf32>
    %1440 = arith.mulf %25, %1439 : vector<16x16xf32>
    %1441 = arith.subf %13, %1440 : vector<16x16xf32>
    %1442 = vector.extract_strided_slice %1428 {offsets = [1, 0], sizes = [1, 16], strides = [1, 1]} : vector<8x16xf32> to vector<1x16xf32>
    %1443 = vector.broadcast %1442 : vector<1x16xf32> to vector<16x16xf32>
    %1444 = arith.mulf %28, %1443 : vector<16x16xf32>
    %1445 = arith.subf %1441, %1444 : vector<16x16xf32>
    %1446 = vector.extract_strided_slice %1428 {offsets = [2, 0], sizes = [1, 16], strides = [1, 1]} : vector<8x16xf32> to vector<1x16xf32>
    %1447 = vector.broadcast %1446 : vector<1x16xf32> to vector<16x16xf32>
    %1448 = arith.mulf %31, %1447 : vector<16x16xf32>
    %1449 = arith.subf %1445, %1448 : vector<16x16xf32>
    %1450 = vector.extract_strided_slice %1428 {offsets = [3, 0], sizes = [1, 16], strides = [1, 1]} : vector<8x16xf32> to vector<1x16xf32>
    %1451 = vector.broadcast %1450 : vector<1x16xf32> to vector<16x16xf32>
    %1452 = arith.mulf %34, %1451 : vector<16x16xf32>
    %1453 = arith.subf %1449, %1452 : vector<16x16xf32>
    %1454 = vector.extract_strided_slice %1428 {offsets = [4, 0], sizes = [1, 16], strides = [1, 1]} : vector<8x16xf32> to vector<1x16xf32>
    %1455 = vector.broadcast %1454 : vector<1x16xf32> to vector<16x16xf32>
    %1456 = arith.mulf %37, %1455 : vector<16x16xf32>
    %1457 = arith.subf %1453, %1456 : vector<16x16xf32>
    %1458 = vector.extract_strided_slice %1428 {offsets = [5, 0], sizes = [1, 16], strides = [1, 1]} : vector<8x16xf32> to vector<1x16xf32>
    %1459 = vector.broadcast %1458 : vector<1x16xf32> to vector<16x16xf32>
    %1460 = arith.mulf %40, %1459 : vector<16x16xf32>
    %1461 = arith.subf %1457, %1460 : vector<16x16xf32>
    %1462 = vector.extract_strided_slice %1428 {offsets = [6, 0], sizes = [1, 16], strides = [1, 1]} : vector<8x16xf32> to vector<1x16xf32>
    %1463 = vector.broadcast %1462 : vector<1x16xf32> to vector<16x16xf32>
    %1464 = arith.mulf %43, %1463 : vector<16x16xf32>
    %1465 = arith.subf %1461, %1464 : vector<16x16xf32>
    %1466 = vector.extract_strided_slice %1428 {offsets = [7, 0], sizes = [1, 16], strides = [1, 1]} : vector<8x16xf32> to vector<1x16xf32>
    %1467 = vector.broadcast %1466 : vector<1x16xf32> to vector<16x16xf32>
    %1468 = arith.mulf %46, %1467 : vector<16x16xf32>
    %1469 = arith.subf %1465, %1468 : vector<16x16xf32>
    %1470 = vector.extract_strided_slice %1437 {offsets = [0, 0], sizes = [1, 16], strides = [1, 1]} : vector<8x16xf32> to vector<1x16xf32>
    %1471 = vector.broadcast %1470 : vector<1x16xf32> to vector<16x16xf32>
    %1472 = arith.mulf %49, %1471 : vector<16x16xf32>
    %1473 = arith.subf %1469, %1472 : vector<16x16xf32>
    %1474 = vector.extract_strided_slice %1437 {offsets = [1, 0], sizes = [1, 16], strides = [1, 1]} : vector<8x16xf32> to vector<1x16xf32>
    %1475 = vector.broadcast %1474 : vector<1x16xf32> to vector<16x16xf32>
    %1476 = arith.mulf %52, %1475 : vector<16x16xf32>
    %1477 = arith.subf %1473, %1476 : vector<16x16xf32>
    %1478 = vector.extract_strided_slice %1437 {offsets = [2, 0], sizes = [1, 16], strides = [1, 1]} : vector<8x16xf32> to vector<1x16xf32>
    %1479 = vector.broadcast %1478 : vector<1x16xf32> to vector<16x16xf32>
    %1480 = arith.mulf %55, %1479 : vector<16x16xf32>
    %1481 = arith.subf %1477, %1480 : vector<16x16xf32>
    %1482 = vector.extract_strided_slice %1437 {offsets = [3, 0], sizes = [1, 16], strides = [1, 1]} : vector<8x16xf32> to vector<1x16xf32>
    %1483 = vector.broadcast %1482 : vector<1x16xf32> to vector<16x16xf32>
    %1484 = arith.mulf %58, %1483 : vector<16x16xf32>
    %1485 = arith.subf %1481, %1484 : vector<16x16xf32>
    %1486 = vector.extract_strided_slice %1437 {offsets = [4, 0], sizes = [1, 16], strides = [1, 1]} : vector<8x16xf32> to vector<1x16xf32>
    %1487 = vector.broadcast %1486 : vector<1x16xf32> to vector<16x16xf32>
    %1488 = arith.mulf %61, %1487 : vector<16x16xf32>
    %1489 = arith.subf %1485, %1488 : vector<16x16xf32>
    %1490 = vector.extract_strided_slice %1437 {offsets = [5, 0], sizes = [1, 16], strides = [1, 1]} : vector<8x16xf32> to vector<1x16xf32>
    %1491 = vector.broadcast %1490 : vector<1x16xf32> to vector<16x16xf32>
    %1492 = arith.mulf %64, %1491 : vector<16x16xf32>
    %1493 = arith.subf %1489, %1492 : vector<16x16xf32>
    %1494 = vector.extract_strided_slice %1437 {offsets = [6, 0], sizes = [1, 16], strides = [1, 1]} : vector<8x16xf32> to vector<1x16xf32>
    %1495 = vector.broadcast %1494 : vector<1x16xf32> to vector<16x16xf32>
    %1496 = arith.mulf %67, %1495 : vector<16x16xf32>
    %1497 = arith.subf %1493, %1496 : vector<16x16xf32>
    %1498 = vector.extract_strided_slice %1437 {offsets = [7, 0], sizes = [1, 16], strides = [1, 1]} : vector<8x16xf32> to vector<1x16xf32>
    %1499 = vector.broadcast %1498 : vector<1x16xf32> to vector<16x16xf32>
    %1500 = arith.mulf %70, %1499 : vector<16x16xf32>
    %1501 = arith.subf %1497, %1500 : vector<16x16xf32>
    %1502 = vector.extract_strided_slice %1501 {offsets = [0, 0], sizes = [8, 16], strides = [1, 1]} : vector<16x16xf32> to vector<8x16xf32>
    %1503 = vector.extract_strided_slice %1501 {offsets = [8, 0], sizes = [8, 16], strides = [1, 1]} : vector<16x16xf32> to vector<8x16xf32>
    %cst_99 = arith.constant -1.000000e+00 : f32
    %1504 = vector.broadcast %cst_99 : f32 to vector<8x16xf32>
    %1505 = arith.mulf %1504, %1433 : vector<8x16xf32>
    %1506 = arith.subf %1503, %21 : vector<8x16xf32>
    %1507 = arith.subf %1505, %1506 : vector<8x16xf32>
    %cst_100 = arith.constant 0.000000e+00 : f32
    %1508 = vector.broadcast %cst_100 : f32 to vector<8x16xf32>
    %1509 = arith.maximumf %1507, %1508 : vector<8x16xf32>
    %1510 = arith.subf %1502, %18 : vector<8x16xf32>
    %cst_101 = arith.constant 1.000000e+00 : f32
    %1511 = vector.broadcast %cst_101 : f32 to vector<8x16xf32>
    %1512 = arith.mulf %1511, %1510 : vector<8x16xf32>
    %1513 = arith.addf %1428, %1512 : vector<8x16xf32>
    %1514 = arith.addf %1503, %1509 : vector<8x16xf32>
    %1515 = arith.subf %1514, %21 : vector<8x16xf32>
    %cst_102 = arith.constant 1.000000e+00 : f32
    %1516 = vector.broadcast %cst_102 : f32 to vector<8x16xf32>
    %1517 = arith.mulf %1516, %1515 : vector<8x16xf32>
    %1518 = arith.addf %1433, %1517 : vector<8x16xf32>
    %1519 = arith.subf %1509, %21 : vector<8x16xf32>
    %cst_103 = arith.constant 1.000000e+00 : f32
    %1520 = vector.broadcast %cst_103 : f32 to vector<8x16xf32>
    %1521 = arith.mulf %1520, %1519 : vector<8x16xf32>
    %1522 = arith.addf %1518, %1521 : vector<8x16xf32>
    %1523 = vector.extract_strided_slice %1513 {offsets = [0, 0], sizes = [1, 16], strides = [1, 1]} : vector<8x16xf32> to vector<1x16xf32>
    %1524 = vector.broadcast %1523 : vector<1x16xf32> to vector<16x16xf32>
    %1525 = arith.mulf %25, %1524 : vector<16x16xf32>
    %1526 = arith.subf %13, %1525 : vector<16x16xf32>
    %1527 = vector.extract_strided_slice %1513 {offsets = [1, 0], sizes = [1, 16], strides = [1, 1]} : vector<8x16xf32> to vector<1x16xf32>
    %1528 = vector.broadcast %1527 : vector<1x16xf32> to vector<16x16xf32>
    %1529 = arith.mulf %28, %1528 : vector<16x16xf32>
    %1530 = arith.subf %1526, %1529 : vector<16x16xf32>
    %1531 = vector.extract_strided_slice %1513 {offsets = [2, 0], sizes = [1, 16], strides = [1, 1]} : vector<8x16xf32> to vector<1x16xf32>
    %1532 = vector.broadcast %1531 : vector<1x16xf32> to vector<16x16xf32>
    %1533 = arith.mulf %31, %1532 : vector<16x16xf32>
    %1534 = arith.subf %1530, %1533 : vector<16x16xf32>
    %1535 = vector.extract_strided_slice %1513 {offsets = [3, 0], sizes = [1, 16], strides = [1, 1]} : vector<8x16xf32> to vector<1x16xf32>
    %1536 = vector.broadcast %1535 : vector<1x16xf32> to vector<16x16xf32>
    %1537 = arith.mulf %34, %1536 : vector<16x16xf32>
    %1538 = arith.subf %1534, %1537 : vector<16x16xf32>
    %1539 = vector.extract_strided_slice %1513 {offsets = [4, 0], sizes = [1, 16], strides = [1, 1]} : vector<8x16xf32> to vector<1x16xf32>
    %1540 = vector.broadcast %1539 : vector<1x16xf32> to vector<16x16xf32>
    %1541 = arith.mulf %37, %1540 : vector<16x16xf32>
    %1542 = arith.subf %1538, %1541 : vector<16x16xf32>
    %1543 = vector.extract_strided_slice %1513 {offsets = [5, 0], sizes = [1, 16], strides = [1, 1]} : vector<8x16xf32> to vector<1x16xf32>
    %1544 = vector.broadcast %1543 : vector<1x16xf32> to vector<16x16xf32>
    %1545 = arith.mulf %40, %1544 : vector<16x16xf32>
    %1546 = arith.subf %1542, %1545 : vector<16x16xf32>
    %1547 = vector.extract_strided_slice %1513 {offsets = [6, 0], sizes = [1, 16], strides = [1, 1]} : vector<8x16xf32> to vector<1x16xf32>
    %1548 = vector.broadcast %1547 : vector<1x16xf32> to vector<16x16xf32>
    %1549 = arith.mulf %43, %1548 : vector<16x16xf32>
    %1550 = arith.subf %1546, %1549 : vector<16x16xf32>
    %1551 = vector.extract_strided_slice %1513 {offsets = [7, 0], sizes = [1, 16], strides = [1, 1]} : vector<8x16xf32> to vector<1x16xf32>
    %1552 = vector.broadcast %1551 : vector<1x16xf32> to vector<16x16xf32>
    %1553 = arith.mulf %46, %1552 : vector<16x16xf32>
    %1554 = arith.subf %1550, %1553 : vector<16x16xf32>
    %1555 = vector.extract_strided_slice %1522 {offsets = [0, 0], sizes = [1, 16], strides = [1, 1]} : vector<8x16xf32> to vector<1x16xf32>
    %1556 = vector.broadcast %1555 : vector<1x16xf32> to vector<16x16xf32>
    %1557 = arith.mulf %49, %1556 : vector<16x16xf32>
    %1558 = arith.subf %1554, %1557 : vector<16x16xf32>
    %1559 = vector.extract_strided_slice %1522 {offsets = [1, 0], sizes = [1, 16], strides = [1, 1]} : vector<8x16xf32> to vector<1x16xf32>
    %1560 = vector.broadcast %1559 : vector<1x16xf32> to vector<16x16xf32>
    %1561 = arith.mulf %52, %1560 : vector<16x16xf32>
    %1562 = arith.subf %1558, %1561 : vector<16x16xf32>
    %1563 = vector.extract_strided_slice %1522 {offsets = [2, 0], sizes = [1, 16], strides = [1, 1]} : vector<8x16xf32> to vector<1x16xf32>
    %1564 = vector.broadcast %1563 : vector<1x16xf32> to vector<16x16xf32>
    %1565 = arith.mulf %55, %1564 : vector<16x16xf32>
    %1566 = arith.subf %1562, %1565 : vector<16x16xf32>
    %1567 = vector.extract_strided_slice %1522 {offsets = [3, 0], sizes = [1, 16], strides = [1, 1]} : vector<8x16xf32> to vector<1x16xf32>
    %1568 = vector.broadcast %1567 : vector<1x16xf32> to vector<16x16xf32>
    %1569 = arith.mulf %58, %1568 : vector<16x16xf32>
    %1570 = arith.subf %1566, %1569 : vector<16x16xf32>
    %1571 = vector.extract_strided_slice %1522 {offsets = [4, 0], sizes = [1, 16], strides = [1, 1]} : vector<8x16xf32> to vector<1x16xf32>
    %1572 = vector.broadcast %1571 : vector<1x16xf32> to vector<16x16xf32>
    %1573 = arith.mulf %61, %1572 : vector<16x16xf32>
    %1574 = arith.subf %1570, %1573 : vector<16x16xf32>
    %1575 = vector.extract_strided_slice %1522 {offsets = [5, 0], sizes = [1, 16], strides = [1, 1]} : vector<8x16xf32> to vector<1x16xf32>
    %1576 = vector.broadcast %1575 : vector<1x16xf32> to vector<16x16xf32>
    %1577 = arith.mulf %64, %1576 : vector<16x16xf32>
    %1578 = arith.subf %1574, %1577 : vector<16x16xf32>
    %1579 = vector.extract_strided_slice %1522 {offsets = [6, 0], sizes = [1, 16], strides = [1, 1]} : vector<8x16xf32> to vector<1x16xf32>
    %1580 = vector.broadcast %1579 : vector<1x16xf32> to vector<16x16xf32>
    %1581 = arith.mulf %67, %1580 : vector<16x16xf32>
    %1582 = arith.subf %1578, %1581 : vector<16x16xf32>
    %1583 = vector.extract_strided_slice %1522 {offsets = [7, 0], sizes = [1, 16], strides = [1, 1]} : vector<8x16xf32> to vector<1x16xf32>
    %1584 = vector.broadcast %1583 : vector<1x16xf32> to vector<16x16xf32>
    %1585 = arith.mulf %70, %1584 : vector<16x16xf32>
    %1586 = arith.subf %1582, %1585 : vector<16x16xf32>
    %1587 = vector.extract_strided_slice %1586 {offsets = [0, 0], sizes = [8, 16], strides = [1, 1]} : vector<16x16xf32> to vector<8x16xf32>
    %1588 = vector.extract_strided_slice %1586 {offsets = [8, 0], sizes = [8, 16], strides = [1, 1]} : vector<16x16xf32> to vector<8x16xf32>
    %cst_104 = arith.constant -1.000000e+00 : f32
    %1589 = vector.broadcast %cst_104 : f32 to vector<8x16xf32>
    %1590 = arith.mulf %1589, %1518 : vector<8x16xf32>
    %1591 = arith.subf %1588, %21 : vector<8x16xf32>
    %1592 = arith.subf %1590, %1591 : vector<8x16xf32>
    %cst_105 = arith.constant 0.000000e+00 : f32
    %1593 = vector.broadcast %cst_105 : f32 to vector<8x16xf32>
    %1594 = arith.maximumf %1592, %1593 : vector<8x16xf32>
    %1595 = arith.subf %1587, %18 : vector<8x16xf32>
    %cst_106 = arith.constant 1.000000e+00 : f32
    %1596 = vector.broadcast %cst_106 : f32 to vector<8x16xf32>
    %1597 = arith.mulf %1596, %1595 : vector<8x16xf32>
    %1598 = arith.addf %1513, %1597 : vector<8x16xf32>
    %1599 = arith.addf %1588, %1594 : vector<8x16xf32>
    %1600 = arith.subf %1599, %21 : vector<8x16xf32>
    %cst_107 = arith.constant 1.000000e+00 : f32
    %1601 = vector.broadcast %cst_107 : f32 to vector<8x16xf32>
    %1602 = arith.mulf %1601, %1600 : vector<8x16xf32>
    %1603 = arith.addf %1518, %1602 : vector<8x16xf32>
    %1604 = arith.subf %1594, %21 : vector<8x16xf32>
    %cst_108 = arith.constant 1.000000e+00 : f32
    %1605 = vector.broadcast %cst_108 : f32 to vector<8x16xf32>
    %1606 = arith.mulf %1605, %1604 : vector<8x16xf32>
    %1607 = arith.addf %1603, %1606 : vector<8x16xf32>
    %1608 = vector.extract_strided_slice %1598 {offsets = [0, 0], sizes = [1, 16], strides = [1, 1]} : vector<8x16xf32> to vector<1x16xf32>
    %1609 = vector.broadcast %1608 : vector<1x16xf32> to vector<16x16xf32>
    %1610 = arith.mulf %25, %1609 : vector<16x16xf32>
    %1611 = arith.subf %13, %1610 : vector<16x16xf32>
    %1612 = vector.extract_strided_slice %1598 {offsets = [1, 0], sizes = [1, 16], strides = [1, 1]} : vector<8x16xf32> to vector<1x16xf32>
    %1613 = vector.broadcast %1612 : vector<1x16xf32> to vector<16x16xf32>
    %1614 = arith.mulf %28, %1613 : vector<16x16xf32>
    %1615 = arith.subf %1611, %1614 : vector<16x16xf32>
    %1616 = vector.extract_strided_slice %1598 {offsets = [2, 0], sizes = [1, 16], strides = [1, 1]} : vector<8x16xf32> to vector<1x16xf32>
    %1617 = vector.broadcast %1616 : vector<1x16xf32> to vector<16x16xf32>
    %1618 = arith.mulf %31, %1617 : vector<16x16xf32>
    %1619 = arith.subf %1615, %1618 : vector<16x16xf32>
    %1620 = vector.extract_strided_slice %1598 {offsets = [3, 0], sizes = [1, 16], strides = [1, 1]} : vector<8x16xf32> to vector<1x16xf32>
    %1621 = vector.broadcast %1620 : vector<1x16xf32> to vector<16x16xf32>
    %1622 = arith.mulf %34, %1621 : vector<16x16xf32>
    %1623 = arith.subf %1619, %1622 : vector<16x16xf32>
    %1624 = vector.extract_strided_slice %1598 {offsets = [4, 0], sizes = [1, 16], strides = [1, 1]} : vector<8x16xf32> to vector<1x16xf32>
    %1625 = vector.broadcast %1624 : vector<1x16xf32> to vector<16x16xf32>
    %1626 = arith.mulf %37, %1625 : vector<16x16xf32>
    %1627 = arith.subf %1623, %1626 : vector<16x16xf32>
    %1628 = vector.extract_strided_slice %1598 {offsets = [5, 0], sizes = [1, 16], strides = [1, 1]} : vector<8x16xf32> to vector<1x16xf32>
    %1629 = vector.broadcast %1628 : vector<1x16xf32> to vector<16x16xf32>
    %1630 = arith.mulf %40, %1629 : vector<16x16xf32>
    %1631 = arith.subf %1627, %1630 : vector<16x16xf32>
    %1632 = vector.extract_strided_slice %1598 {offsets = [6, 0], sizes = [1, 16], strides = [1, 1]} : vector<8x16xf32> to vector<1x16xf32>
    %1633 = vector.broadcast %1632 : vector<1x16xf32> to vector<16x16xf32>
    %1634 = arith.mulf %43, %1633 : vector<16x16xf32>
    %1635 = arith.subf %1631, %1634 : vector<16x16xf32>
    %1636 = vector.extract_strided_slice %1598 {offsets = [7, 0], sizes = [1, 16], strides = [1, 1]} : vector<8x16xf32> to vector<1x16xf32>
    %1637 = vector.broadcast %1636 : vector<1x16xf32> to vector<16x16xf32>
    %1638 = arith.mulf %46, %1637 : vector<16x16xf32>
    %1639 = arith.subf %1635, %1638 : vector<16x16xf32>
    %1640 = vector.extract_strided_slice %1607 {offsets = [0, 0], sizes = [1, 16], strides = [1, 1]} : vector<8x16xf32> to vector<1x16xf32>
    %1641 = vector.broadcast %1640 : vector<1x16xf32> to vector<16x16xf32>
    %1642 = arith.mulf %49, %1641 : vector<16x16xf32>
    %1643 = arith.subf %1639, %1642 : vector<16x16xf32>
    %1644 = vector.extract_strided_slice %1607 {offsets = [1, 0], sizes = [1, 16], strides = [1, 1]} : vector<8x16xf32> to vector<1x16xf32>
    %1645 = vector.broadcast %1644 : vector<1x16xf32> to vector<16x16xf32>
    %1646 = arith.mulf %52, %1645 : vector<16x16xf32>
    %1647 = arith.subf %1643, %1646 : vector<16x16xf32>
    %1648 = vector.extract_strided_slice %1607 {offsets = [2, 0], sizes = [1, 16], strides = [1, 1]} : vector<8x16xf32> to vector<1x16xf32>
    %1649 = vector.broadcast %1648 : vector<1x16xf32> to vector<16x16xf32>
    %1650 = arith.mulf %55, %1649 : vector<16x16xf32>
    %1651 = arith.subf %1647, %1650 : vector<16x16xf32>
    %1652 = vector.extract_strided_slice %1607 {offsets = [3, 0], sizes = [1, 16], strides = [1, 1]} : vector<8x16xf32> to vector<1x16xf32>
    %1653 = vector.broadcast %1652 : vector<1x16xf32> to vector<16x16xf32>
    %1654 = arith.mulf %58, %1653 : vector<16x16xf32>
    %1655 = arith.subf %1651, %1654 : vector<16x16xf32>
    %1656 = vector.extract_strided_slice %1607 {offsets = [4, 0], sizes = [1, 16], strides = [1, 1]} : vector<8x16xf32> to vector<1x16xf32>
    %1657 = vector.broadcast %1656 : vector<1x16xf32> to vector<16x16xf32>
    %1658 = arith.mulf %61, %1657 : vector<16x16xf32>
    %1659 = arith.subf %1655, %1658 : vector<16x16xf32>
    %1660 = vector.extract_strided_slice %1607 {offsets = [5, 0], sizes = [1, 16], strides = [1, 1]} : vector<8x16xf32> to vector<1x16xf32>
    %1661 = vector.broadcast %1660 : vector<1x16xf32> to vector<16x16xf32>
    %1662 = arith.mulf %64, %1661 : vector<16x16xf32>
    %1663 = arith.subf %1659, %1662 : vector<16x16xf32>
    %1664 = vector.extract_strided_slice %1607 {offsets = [6, 0], sizes = [1, 16], strides = [1, 1]} : vector<8x16xf32> to vector<1x16xf32>
    %1665 = vector.broadcast %1664 : vector<1x16xf32> to vector<16x16xf32>
    %1666 = arith.mulf %67, %1665 : vector<16x16xf32>
    %1667 = arith.subf %1663, %1666 : vector<16x16xf32>
    %1668 = vector.extract_strided_slice %1607 {offsets = [7, 0], sizes = [1, 16], strides = [1, 1]} : vector<8x16xf32> to vector<1x16xf32>
    %1669 = vector.broadcast %1668 : vector<1x16xf32> to vector<16x16xf32>
    %1670 = arith.mulf %70, %1669 : vector<16x16xf32>
    %1671 = arith.subf %1667, %1670 : vector<16x16xf32>
    %1672 = vector.extract_strided_slice %1671 {offsets = [0, 0], sizes = [8, 16], strides = [1, 1]} : vector<16x16xf32> to vector<8x16xf32>
    %1673 = vector.extract_strided_slice %1671 {offsets = [8, 0], sizes = [8, 16], strides = [1, 1]} : vector<16x16xf32> to vector<8x16xf32>
    %cst_109 = arith.constant -1.000000e+00 : f32
    %1674 = vector.broadcast %cst_109 : f32 to vector<8x16xf32>
    %1675 = arith.mulf %1674, %1603 : vector<8x16xf32>
    %1676 = arith.subf %1673, %21 : vector<8x16xf32>
    %1677 = arith.subf %1675, %1676 : vector<8x16xf32>
    %cst_110 = arith.constant 0.000000e+00 : f32
    %1678 = vector.broadcast %cst_110 : f32 to vector<8x16xf32>
    %1679 = arith.maximumf %1677, %1678 : vector<8x16xf32>
    %1680 = arith.subf %1672, %18 : vector<8x16xf32>
    %cst_111 = arith.constant 1.000000e+00 : f32
    %1681 = vector.broadcast %cst_111 : f32 to vector<8x16xf32>
    %1682 = arith.mulf %1681, %1680 : vector<8x16xf32>
    %1683 = arith.addf %1598, %1682 : vector<8x16xf32>
    %1684 = arith.addf %1673, %1679 : vector<8x16xf32>
    %1685 = arith.subf %1684, %21 : vector<8x16xf32>
    %cst_112 = arith.constant 1.000000e+00 : f32
    %1686 = vector.broadcast %cst_112 : f32 to vector<8x16xf32>
    %1687 = arith.mulf %1686, %1685 : vector<8x16xf32>
    %1688 = arith.addf %1603, %1687 : vector<8x16xf32>
    %1689 = arith.subf %1679, %21 : vector<8x16xf32>
    %cst_113 = arith.constant 1.000000e+00 : f32
    %1690 = vector.broadcast %cst_113 : f32 to vector<8x16xf32>
    %1691 = arith.mulf %1690, %1689 : vector<8x16xf32>
    %1692 = arith.addf %1688, %1691 : vector<8x16xf32>
    %1693 = tpu.concatenate %1683, %1692 in 0 : vector<8x16xf32>, vector<8x16xf32> -> vector<16x16xf32>
    %c0_114 = arith.constant 0 : index
    %c0_115 = arith.constant 0 : index
    %1694 = vector.load %arg7[%c0_114, %c0_115] : memref<10x16xf32, #tpu.memory_space<vmem>>, vector<10x16xf32>
    %cst_116 = arith.constant dense<0.000000e+00> : vector<10x16xf32>
    %1695 = tpu.matmul %1694, %1693, %cst_116 {dimension_numbers = #tpu.dot_dimension_numbers<[1], [0], [0], [1], [0, 0, 1, 1], [], []>, precision = #tpu.contract_precision<fp32>} : vector<10x16xf32>, vector<16x16xf32>, vector<10x16xf32> -> vector<10x16xf32>
    %1696 = arith.subf %14, %1695 : vector<10x16xf32>
    %cst_117 = arith.constant dense<0xFF800000> : vector<16xf32>
    %1697 = vector.multi_reduction <maximumf>, %1696, %cst_117 [0] : vector<10x16xf32> to vector<16xf32>
    %1698 = vector.shape_cast %1697 : vector<16xf32> to vector<1x16xf32>
    %1699 = vector.broadcast %1698 : vector<1x16xf32> to vector<10x16xf32>
    %1700 = arith.subf %1696, %1699 : vector<10x16xf32>
    %1701 = math.exp %1700 : vector<10x16xf32>
    %cst_118 = arith.constant dense<0.000000e+00> : vector<16xf32>
    %1702 = vector.multi_reduction <add>, %1701, %cst_118 [0] : vector<10x16xf32> to vector<16xf32>
    %1703 = vector.shape_cast %1702 : vector<16xf32> to vector<1x16xf32>
    %1704 = math.log %1703 : vector<1x16xf32>
    %1705 = arith.addf %1698, %1704 : vector<1x16xf32>
    %1706 = vector.broadcast %1705 : vector<1x16xf32> to vector<10x16xf32>
    %1707 = arith.subf %1696, %1706 : vector<10x16xf32>
    %c0_119 = arith.constant 0 : index
    %c0_120 = arith.constant 0 : index
    %1708 = vector.load %arg9[%c0_119, %c0_120] : memref<10x16xf32, #tpu.memory_space<vmem>>, vector<10x16xf32>
    tpu.vector_store %arg9[%c0_119, %c0_120], %1707 {strides = array<i32>} : memref<10x16xf32, #tpu.memory_space<vmem>>, vector<10x16xf32>,
    return
  }
  func.func @transform_0(%arg0: i32) -> (i32, i32) {
    %c0_i32 = arith.constant 0 : i32
    %c0_i32_0 = arith.constant 0 : i32
    return %c0_i32, %arg0 : i32, i32
  }
  func.func @transform_1(%arg0: i32) -> (i32, i32) {
    %c0_i32 = arith.constant 0 : i32
    %c0_i32_0 = arith.constant 0 : i32
    %c0_i32_1 = arith.constant 0 : i32
    return %c0_i32, %c0_i32_0 : i32, i32
  }
  func.func @transform_2(%arg0: i32) -> (i32, i32) {
    %c0_i32 = arith.constant 0 : i32
    %c0_i32_0 = arith.constant 0 : i32
    %c0_i32_1 = arith.constant 0 : i32
    return %c0_i32, %c0_i32_0 : i32, i32
  }
  func.func @transform_3(%arg0: i32) -> (i32, i32) {
    %c0_i32 = arith.constant 0 : i32
    %c0_i32_0 = arith.constant 0 : i32
    %c0_i32_1 = arith.constant 0 : i32
    return %c0_i32, %c0_i32_0 : i32, i32
  }
  func.func @transform_4(%arg0: i32) -> (i32, i32) {
    %c0_i32 = arith.constant 0 : i32
    %c0_i32_0 = arith.constant 0 : i32
    %c0_i32_1 = arith.constant 0 : i32
    return %c0_i32, %c0_i32_0 : i32, i32
  }
  func.func @transform_5(%arg0: i32) -> (i32, i32) {
    %c0_i32 = arith.constant 0 : i32
    %c0_i32_0 = arith.constant 0 : i32
    %c0_i32_1 = arith.constant 0 : i32
    return %c0_i32, %c0_i32_0 : i32, i32
  }
  func.func @transform_6(%arg0: i32) -> (i32, i32) {
    %c0_i32 = arith.constant 0 : i32
    %c0_i32_0 = arith.constant 0 : i32
    %c0_i32_1 = arith.constant 0 : i32
    return %c0_i32, %c0_i32_0 : i32, i32
  }
  func.func @transform_7(%arg0: i32) -> (i32, i32) {
    %c0_i32 = arith.constant 0 : i32
    %c0_i32_0 = arith.constant 0 : i32
    %c0_i32_1 = arith.constant 0 : i32
    return %c0_i32, %c0_i32_0 : i32, i32
  }
  func.func @transform_8(%arg0: i32) -> (i32, i32) {
    %c0_i32 = arith.constant 0 : i32
    %c0_i32_0 = arith.constant 0 : i32
    return %c0_i32, %arg0 : i32, i32
  }
}

</mosaic_0001>

<llo_original>
// kernel: tpu_custom_call.1
$region0: #{tpu_custom_call.1}
  #allocation0 [shape = 'u32[]', space=smem, size = 0x4, offset = 0x4, fixed_abs, tag = 'smem constant byte address 0x4 - core index']
  #allocation1 [shape = 'u32[144,128]{1,0:T(1,128)}', space=vmem, size = 0x12000, scoped, tag = 'internal scratch']
  %s0 = inlined_call_operand.vmem [shape: f32[64,16], index: 0, kind: input, shape index: {}]
  %s1 = inlined_call_operand.vmem [shape: f32[32,64], index: 1, kind: input, shape index: {}]
  %s2 = inlined_call_operand.vmem [shape: f32[32,1], index: 2, kind: input, shape index: {}]
  %s3 = inlined_call_operand.vmem [shape: f32[26,32], index: 3, kind: input, shape index: {}]
  %s4 = inlined_call_operand.vmem [shape: f32[26,1], index: 4, kind: input, shape index: {}]
  %s5 = inlined_call_operand.vmem [shape: f32[16,16], index: 5, kind: input, shape index: {}]
  %s6 = inlined_call_operand.vmem [shape: f32[10,16], index: 6, kind: input, shape index: {}]
  %s7 = inlined_call_operand.vmem [shape: f32[16,1], index: 7, kind: input, shape index: {}]
  %s8 = inlined_call_operand.hbm [shape: f32[10,16], index: 8, kind: output, shape index: {}]
  %s9 = sld [smem:[#allocation0]]
  $region42: #{tpu_custom_call.1} parent=0
    _
  %s11 = ssub.s32 1, %s9
  %s12 = scalar_select 0, %s11, %s9
  $region1: #{tpu_custom_call.1} parent=0
    #allocation2 [shape = 'u8[8192]{0}', space=vmem, size = 0x2000, scoped, tag = 'output window, operand 0, single buffered']
    #allocation3 [shape = 's32[1]{0}', space=sflag, size = 0x4, scoped, tag = 'scoped memory for tpu_custom_call.1']
    %13 = vsyncpa [#allocation3], 0
    // Predicated region
    $region2: #{tpu_custom_call.1} parent=1 // pred_check
      _
    $region3: #{tpu_custom_call.1} parent=1 // pred_check_branch
      %15 = sbr.rel (0) target = $region5
    $region4: #{tpu_custom_call.1} parent=1 // pred_region
      _
    $region5: #{tpu_custom_call.1} parent=1 // pred_fallthru
      _
    // Predicated region
    $region6: #{tpu_custom_call.1} parent=1 // pred_check
      _
    $region7: #{tpu_custom_call.1} parent=1 // pred_check_branch
      %17 = sbr.rel (0) target = $region9
    $region8: #{tpu_custom_call.1} parent=1 // pred_region
      _
    $region9: #{tpu_custom_call.1} parent=1 // pred_fallthru
      _
    // Predicated region
    $region10: #{tpu_custom_call.1} parent=1 // pred_check
      _
    $region11: #{tpu_custom_call.1} parent=1 // pred_check_branch
      %19 = sbr.rel (0) target = $region13
    $region12: #{tpu_custom_call.1} parent=1 // pred_region
      _
    $region13: #{tpu_custom_call.1} parent=1 // pred_fallthru
      _
    // Predicated region
    $region14: #{tpu_custom_call.1} parent=1 // pred_check
      _
    $region15: #{tpu_custom_call.1} parent=1 // pred_check_branch
      %21 = sbr.rel (0) target = $region17
    $region16: #{tpu_custom_call.1} parent=1 // pred_region
      _
    $region17: #{tpu_custom_call.1} parent=1 // pred_fallthru
      _
    // Predicated region
    $region18: #{tpu_custom_call.1} parent=1 // pred_check
      _
    $region19: #{tpu_custom_call.1} parent=1 // pred_check_branch
      %23 = sbr.rel (0) target = $region21
    $region20: #{tpu_custom_call.1} parent=1 // pred_region
      _
    $region21: #{tpu_custom_call.1} parent=1 // pred_fallthru
      _
    // Predicated region
    $region22: #{tpu_custom_call.1} parent=1 // pred_check
      _
    $region23: #{tpu_custom_call.1} parent=1 // pred_check_branch
      %25 = sbr.rel (0) target = $region25
    $region24: #{tpu_custom_call.1} parent=1 // pred_region
      _
    $region25: #{tpu_custom_call.1} parent=1 // pred_fallthru
      _
    // Predicated region
    $region26: #{tpu_custom_call.1} parent=1 // pred_check
      _
    $region27: #{tpu_custom_call.1} parent=1 // pred_check_branch
      %27 = sbr.rel (0) target = $region29
    $region28: #{tpu_custom_call.1} parent=1 // pred_region
      _
    $region29: #{tpu_custom_call.1} parent=1 // pred_fallthru
      _
    // Predicated region
    $region30: #{tpu_custom_call.1} parent=1 // pred_check
      _
    $region31: #{tpu_custom_call.1} parent=1 // pred_check_branch
      %29 = sbr.rel (0) target = $region33
    $region32: #{tpu_custom_call.1} parent=1 // pred_region
      _
    $region33: #{tpu_custom_call.1} parent=1 // pred_fallthru
      _
    %v30 = vld [vmem:[%s1] sm:$0xff]
    %v31 = vld [vmem:[%s1 + $0x8] sm:$0xff]
    %v32 = vld [vmem:[%s1 + $0x10] sm:$0xff]
    %v33 = vld [vmem:[%s1 + $0x18] sm:$0xff]
    %v34 = vld [vmem:[%s0] sm:$0xff]
    %v35 = vld [vmem:[%s0 + $0x8] sm:$0xff]
    %v36 = vld [vmem:[%s0 + $0x10] sm:$0xff]
    %v37 = vld [vmem:[%s0 + $0x18] sm:$0xff]
    %v38 = vld [vmem:[%s0 + $0x20] sm:$0xff]
    %v39 = vld [vmem:[%s0 + $0x28] sm:$0xff]
    %v40 = vld [vmem:[%s0 + $0x30] sm:$0xff]
    %v41 = vld [vmem:[%s0 + $0x38] sm:$0xff]
    %v42 = vld [vmem:[%s2] sm:$0xff]
    %v43 = vld [vmem:[%s2 + $0x8] sm:$0xff]
    %v44 = vld [vmem:[%s2 + $0x10] sm:$0xff]
    %v45 = vld [vmem:[%s2 + $0x18] sm:$0xff]
    %47 = vset.pattern.permute.xlu0 0
    %48 = vperm.xlu0 %47, %v42
    %v49 = vpop.permute.xlu0 %48
    %52 = vset.pattern.permute.xlu0 0
    %53 = vperm.xlu0 %52, %v43
    %v54 = vpop.permute.xlu0 %53
    %57 = vset.pattern.permute.xlu0 0
    %58 = vperm.xlu0 %57, %v44
    %v59 = vpop.permute.xlu0 %58
    %62 = vset.pattern.permute.xlu0 0
    %63 = vperm.xlu0 %62, %v45
    %v64 = vpop.permute.xlu0 %63
    %vm66 = vcmask 523264
    %v68 = vsel %vm66, %v30, 0
    %v71 = vsel %vm66, %v31, 0
    %v74 = vsel %vm66, %v32, 0
    %v77 = vsel %vm66, %v33, 0
    %79 = vmatprep.subr.mxu0 0.0
    %v80 = vand.u32 %v34, 4294901760
    %81 = vmatpush1.msra.mxu0 %v80
    %82 = vmatprep.subr.mxu0 0.0
    %v83 = vand.u32 %v35, 4294901760
    %84 = vmatpush1.msra.mxu0 %v83
    %85 = vmatprep.subr.mxu0 0.0
    %v86 = vand.u32 %v36, 4294901760
    %87 = vmatpush1.msra.mxu0 %v86
    %88 = vmatprep.subr.mxu0 0.0
    %v89 = vand.u32 %v37, 4294901760
    %90 = vmatpush1.msra.mxu0 %v89
    %91 = vmatprep.subr.mxu0 0.0
    %v92 = vand.u32 %v38, 4294901760
    %93 = vmatpush1.msra.mxu0 %v92
    %94 = vmatprep.subr.mxu0 0.0
    %v95 = vand.u32 %v39, 4294901760
    %96 = vmatpush1.msra.mxu0 %v95
    %97 = vmatprep.subr.mxu0 0.0
    %v98 = vand.u32 %v40, 4294901760
    %99 = vmatpush1.msra.mxu0 %v98
    %100 = vmatprep.subr.mxu0 0.0
    %v101 = vand.u32 %v41, 4294901760
    %102 = vmatpush1.msra.mxu0 %v101
    %103 = vmatprep.subr.mxu0 0.0
    %104 = vmatpush1.msra.mxu0 0.0
    %105 = vmatprep.subr.mxu0 0.0
    %106 = vmatpush1.msra.mxu0 0.0
    %107 = vmatprep.subr.mxu0 0.0
    %108 = vmatpush1.msra.mxu0 0.0
    %109 = vmatprep.subr.mxu0 0.0
    %110 = vmatpush1.msra.mxu0 0.0
    %111 = vmatprep.subr.mxu0 0.0
    %112 = vmatpush1.msra.mxu0 0.0
    %113 = vmatprep.subr.mxu0 0.0
    %114 = vmatpush1.msra.mxu0 0.0
    %115 = vmatprep.subr.mxu0 0.0
    %116 = vmatpush1.msra.mxu0 0.0
    %117 = vmatprep.subr.mxu0 0.0
    %118 = vmatpush1.msra.mxu0 0.0
    %119 = vmatprep.subr.mxu0 0.0
    %120 = vmatpush1.msra.mxu0 0.0
    %121 = vmatprep.subr.mxu0 0.0
    %122 = vmatpush1.msra.mxu0 0.0
    %123 = vmatprep.subr.mxu0 0.0
    %124 = vmatpush1.msra.mxu0 0.0
    %125 = vmatprep.subr.mxu0 0.0
    %126 = vmatpush1.msra.mxu0 0.0
    %127 = vmatprep.subr.mxu0 0.0
    %128 = vmatpush1.msra.mxu0 0.0
    %129 = vmatprep.subr.mxu0 0.0
    %130 = vmatpush1.msra.mxu0 0.0
    %131 = vmatprep.subr.mxu0 0.0
    %132 = vmatpush1.msra.mxu0 0.0
    %133 = vmatprep.subr.mxu0 0.0
    %134 = vmatpush1.msra.mxu0 0.0
    %135 = vmatprep.subr.mxu0 0.0
    %136 = vmatpush1.msra.mxu0 0.0
    %137 = vmatprep.subr.mxu0 0.0
    %138 = vmatpush1.msra.mxu0 0.0
    %139 = vmatprep.subr.mxu0 0.0
    %140 = vmatpush1.msra.mxu0 0.0
    %141 = vmatprep.subr.mxu0 0.0
    %142 = vmatpush1.msra.mxu0 0.0
    %143 = vmatprep.subr.mxu0 0.0
    %144 = vmatpush1.msra.mxu0 0.0
    %145 = vmatprep.subr.mxu0 0.0
    %146 = vmatpush1.msra.mxu0 0.0
    %147 = vmatprep.subr.mxu0 0.0
    %148 = vmatpush1.msra.mxu0 0.0
    %149 = vmatprep.subr.mxu0 0.0
    %150 = vmatpush1.msra.mxu0 0.0
    %151 = vmatprep.mubr.f32.mxu0 0.0
    %v152 = vand.u32 %v68, 4294901760
    %v153 = vsub.f32 %v68, %v152
    %v154 = vand.u32 %v153, 4294901760
    %v155 = vsub.f32 %v153, %v154
    %v156 = vand.u32 %v155, 4294901760
    %157 = vmatmul.mubr.f32.gmra.mrb[0].mxu0 %v156
    %v158 = vpop.f32.mrb[0].mxu0
    %v159 = vadd.f32 %v49, %v158
    %v160 = vpop.f32.mrb[0].mxu0
    %161 = vmatprep.mubr.f32.mxu0 0.0
    %v162 = vand.u32 %v71, 4294901760
    %v163 = vsub.f32 %v71, %v162
    %v164 = vand.u32 %v163, 4294901760
    %v165 = vsub.f32 %v163, %v164
    %v166 = vand.u32 %v165, 4294901760
    %167 = vmatmul.mubr.f32.gmra.mrb[0].mxu0 %v166
    %v168 = vpop.f32.mrb[0].mxu0
    %v169 = vadd.f32 %v54, %v168
    %v170 = vpop.f32.mrb[0].mxu0
    %171 = vmatprep.mubr.f32.mxu0 0.0
    %v172 = vand.u32 %v74, 4294901760
    %v173 = vsub.f32 %v74, %v172
    %v174 = vand.u32 %v173, 4294901760
    %v175 = vsub.f32 %v173, %v174
    %v176 = vand.u32 %v175, 4294901760
    %177 = vmatmul.mubr.f32.gmra.mrb[0].mxu0 %v176
    %v178 = vpop.f32.mrb[0].mxu0
    %v179 = vadd.f32 %v59, %v178
    %v180 = vpop.f32.mrb[0].mxu0
    %181 = vmatprep.mubr.f32.mxu0 0.0
    %v182 = vand.u32 %v77, 4294901760
    %v183 = vsub.f32 %v77, %v182
    %v184 = vand.u32 %v183, 4294901760
    %v185 = vsub.f32 %v183, %v184
    %v186 = vand.u32 %v185, 4294901760
    %187 = vmatmul.mubr.f32.gmra.mrb[0].mxu0 %v186
    %v188 = vpop.f32.mrb[0].mxu0
    %v189 = vadd.f32 %v64, %v188
    %v190 = vpop.f32.mrb[0].mxu0
    %191 = vdwg.mxu0
    %192 = vmatprep.subr.mxu0 0.0
    %v193 = vand.u32 %v34, 4294901760
    %v194 = vsub.f32 %v34, %v193
    %v195 = vand.u32 %v194, 4294901760
    %v196 = vsub.f32 %v194, %v195
    %v197 = vand.u32 %v196, 4294901760
    %198 = vmatpush1.msra.mxu0 %v197
    %199 = vmatprep.subr.mxu0 0.0
    %v200 = vand.u32 %v35, 4294901760
    %v201 = vsub.f32 %v35, %v200
    %v202 = vand.u32 %v201, 4294901760
    %v203 = vsub.f32 %v201, %v202
    %v204 = vand.u32 %v203, 4294901760
    %205 = vmatpush1.msra.mxu0 %v204
    %206 = vmatprep.subr.mxu0 0.0
    %v207 = vand.u32 %v36, 4294901760
    %v208 = vsub.f32 %v36, %v207
    %v209 = vand.u32 %v208, 4294901760
    %v210 = vsub.f32 %v208, %v209
    %v211 = vand.u32 %v210, 4294901760
    %212 = vmatpush1.msra.mxu0 %v211
    %213 = vmatprep.subr.mxu0 0.0
    %v214 = vand.u32 %v37, 4294901760
    %v215 = vsub.f32 %v37, %v214
    %v216 = vand.u32 %v215, 4294901760
    %v217 = vsub.f32 %v215, %v216
    %v218 = vand.u32 %v217, 4294901760
    %219 = vmatpush1.msra.mxu0 %v218
    %220 = vmatprep.subr.mxu0 0.0
    %v221 = vand.u32 %v38, 4294901760
    %v222 = vsub.f32 %v38, %v221
    %v223 = vand.u32 %v222, 4294901760
    %v224 = vsub.f32 %v222, %v223
    %v225 = vand.u32 %v224, 4294901760
    %226 = vmatpush1.msra.mxu0 %v225
    %227 = vmatprep.subr.mxu0 0.0
    %v228 = vand.u32 %v39, 4294901760
    %v229 = vsub.f32 %v39, %v228
    %v230 = vand.u32 %v229, 4294901760
    %v231 = vsub.f32 %v229, %v230
    %v232 = vand.u32 %v231, 4294901760
    %233 = vmatpush1.msra.mxu0 %v232
    %234 = vmatprep.subr.mxu0 0.0
    %v235 = vand.u32 %v40, 4294901760
    %v236 = vsub.f32 %v40, %v235
    %v237 = vand.u32 %v236, 4294901760
    %v238 = vsub.f32 %v236, %v237
    %v239 = vand.u32 %v238, 4294901760
    %240 = vmatpush1.msra.mxu0 %v239
    %241 = vmatprep.subr.mxu0 0.0
    %v242 = vand.u32 %v41, 4294901760
    %v243 = vsub.f32 %v41, %v242
    %v244 = vand.u32 %v243, 4294901760
    %v245 = vsub.f32 %v243, %v244
    %v246 = vand.u32 %v245, 4294901760
    %247 = vmatpush1.msra.mxu0 %v246
    %248 = vmatprep.subr.mxu0 0.0
    %249 = vmatpush1.msra.mxu0 0.0
    %250 = vmatprep.subr.mxu0 0.0
    %251 = vmatpush1.msra.mxu0 0.0
    %252 = vmatprep.subr.mxu0 0.0
    %253 = vmatpush1.msra.mxu0 0.0
    %254 = vmatprep.subr.mxu0 0.0
    %255 = vmatpush1.msra.mxu0 0.0
    %256 = vmatprep.subr.mxu0 0.0
    %257 = vmatpush1.msra.mxu0 0.0
    %258 = vmatprep.subr.mxu0 0.0
    %259 = vmatpush1.msra.mxu0 0.0
    %260 = vmatprep.subr.mxu0 0.0
    %261 = vmatpush1.msra.mxu0 0.0
    %262 = vmatprep.subr.mxu0 0.0
    %263 = vmatpush1.msra.mxu0 0.0
    %264 = vmatprep.subr.mxu0 0.0
    %265 = vmatpush1.msra.mxu0 0.0
    %266 = vmatprep.subr.mxu0 0.0
    %267 = vmatpush1.msra.mxu0 0.0
    %268 = vmatprep.subr.mxu0 0.0
    %269 = vmatpush1.msra.mxu0 0.0
    %270 = vmatprep.subr.mxu0 0.0
    %271 = vmatpush1.msra.mxu0 0.0
    %272 = vmatprep.subr.mxu0 0.0
    %273 = vmatpush1.msra.mxu0 0.0
    %274 = vmatprep.subr.mxu0 0.0
    %275 = vmatpush1.msra.mxu0 0.0
    %276 = vmatprep.subr.mxu0 0.0
    %277 = vmatpush1.msra.mxu0 0.0
    %278 = vmatprep.subr.mxu0 0.0
    %279 = vmatpush1.msra.mxu0 0.0
    %280 = vmatprep.subr.mxu0 0.0
    %281 = vmatpush1.msra.mxu0 0.0
    %282 = vmatprep.subr.mxu0 0.0
    %283 = vmatpush1.msra.mxu0 0.0
    %284 = vmatprep.subr.mxu0 0.0
    %285 = vmatpush1.msra.mxu0 0.0
    %286 = vmatprep.subr.mxu0 0.0
    %287 = vmatpush1.msra.mxu0 0.0
    %288 = vmatprep.subr.mxu0 0.0
    %289 = vmatpush1.msra.mxu0 0.0
    %290 = vmatprep.subr.mxu0 0.0
    %291 = vmatpush1.msra.mxu0 0.0
    %292 = vmatprep.subr.mxu0 0.0
    %293 = vmatpush1.msra.mxu0 0.0
    %294 = vmatprep.subr.mxu0 0.0
    %295 = vmatpush1.msra.mxu0 0.0
    %296 = vmatprep.mubr.f32.mxu0 0.0
    %v297 = vand.u32 %v68, 4294901760
    %298 = vmatmul.mubr.f32.gmra.mrb[0].mxu0 %v297
    %v299 = vpop.f32.mrb[0].mxu0
    %v300 = vadd.f32 %v159, %v299
    %v301 = vpop.f32.mrb[0].mxu0
    %302 = vmatprep.mubr.f32.mxu0 0.0
    %v303 = vand.u32 %v71, 4294901760
    %304 = vmatmul.mubr.f32.gmra.mrb[0].mxu0 %v303
    %v305 = vpop.f32.mrb[0].mxu0
    %v306 = vadd.f32 %v169, %v305
    %v307 = vpop.f32.mrb[0].mxu0
    %308 = vmatprep.mubr.f32.mxu0 0.0
    %v309 = vand.u32 %v74, 4294901760
    %310 = vmatmul.mubr.f32.gmra.mrb[0].mxu0 %v309
    %v311 = vpop.f32.mrb[0].mxu0
    %v312 = vadd.f32 %v179, %v311
    %v313 = vpop.f32.mrb[0].mxu0
    %314 = vmatprep.mubr.f32.mxu0 0.0
    %v315 = vand.u32 %v77, 4294901760
    %316 = vmatmul.mubr.f32.gmra.mrb[0].mxu0 %v315
    %v317 = vpop.f32.mrb[0].mxu0
    %v318 = vadd.f32 %v189, %v317
    %v319 = vpop.f32.mrb[0].mxu0
    %320 = vdwg.mxu0
    %321 = vmatprep.subr.mxu0 0.0
    %v322 = vand.u32 %v34, 4294901760
    %v323 = vsub.f32 %v34, %v322
    %324 = vmatpush1.msra.mxu0 %v323
    %325 = vmatprep.subr.mxu0 0.0
    %v326 = vand.u32 %v35, 4294901760
    %v327 = vsub.f32 %v35, %v326
    %328 = vmatpush1.msra.mxu0 %v327
    %329 = vmatprep.subr.mxu0 0.0
    %v330 = vand.u32 %v36, 4294901760
    %v331 = vsub.f32 %v36, %v330
    %332 = vmatpush1.msra.mxu0 %v331
    %333 = vmatprep.subr.mxu0 0.0
    %v334 = vand.u32 %v37, 4294901760
    %v335 = vsub.f32 %v37, %v334
    %336 = vmatpush1.msra.mxu0 %v335
    %337 = vmatprep.subr.mxu0 0.0
    %v338 = vand.u32 %v38, 4294901760
    %v339 = vsub.f32 %v38, %v338
    %340 = vmatpush1.msra.mxu0 %v339
    %341 = vmatprep.subr.mxu0 0.0
    %v342 = vand.u32 %v39, 4294901760
    %v343 = vsub.f32 %v39, %v342
    %344 = vmatpush1.msra.mxu0 %v343
    %345 = vmatprep.subr.mxu0 0.0
    %v346 = vand.u32 %v40, 4294901760
    %v347 = vsub.f32 %v40, %v346
    %348 = vmatpush1.msra.mxu0 %v347
    %349 = vmatprep.subr.mxu0 0.0
    %v350 = vand.u32 %v41, 4294901760
    %v351 = vsub.f32 %v41, %v350
    %352 = vmatpush1.msra.mxu0 %v351
    %353 = vmatprep.subr.mxu0 0.0
    %354 = vmatpush1.msra.mxu0 0.0
    %355 = vmatprep.subr.mxu0 0.0
    %356 = vmatpush1.msra.mxu0 0.0
    %357 = vmatprep.subr.mxu0 0.0
    %358 = vmatpush1.msra.mxu0 0.0
    %359 = vmatprep.subr.mxu0 0.0
    %360 = vmatpush1.msra.mxu0 0.0
    %361 = vmatprep.subr.mxu0 0.0
    %362 = vmatpush1.msra.mxu0 0.0
    %363 = vmatprep.subr.mxu0 0.0
    %364 = vmatpush1.msra.mxu0 0.0
    %365 = vmatprep.subr.mxu0 0.0
    %366 = vmatpush1.msra.mxu0 0.0
    %367 = vmatprep.subr.mxu0 0.0
    %368 = vmatpush1.msra.mxu0 0.0
    %369 = vmatprep.subr.mxu0 0.0
    %370 = vmatpush1.msra.mxu0 0.0
    %371 = vmatprep.subr.mxu0 0.0
    %372 = vmatpush1.msra.mxu0 0.0
    %373 = vmatprep.subr.mxu0 0.0
    %374 = vmatpush1.msra.mxu0 0.0
    %375 = vmatprep.subr.mxu0 0.0
    %376 = vmatpush1.msra.mxu0 0.0
    %377 = vmatprep.subr.mxu0 0.0
    %378 = vmatpush1.msra.mxu0 0.0
    %379 = vmatprep.subr.mxu0 0.0
    %380 = vmatpush1.msra.mxu0 0.0
    %381 = vmatprep.subr.mxu0 0.0
    %382 = vmatpush1.msra.mxu0 0.0
    %383 = vmatprep.subr.mxu0 0.0
    %384 = vmatpush1.msra.mxu0 0.0
    %385 = vmatprep.subr.mxu0 0.0
    %386 = vmatpush1.msra.mxu0 0.0
    %387 = vmatprep.subr.mxu0 0.0
    %388 = vmatpush1.msra.mxu0 0.0
    %389 = vmatprep.subr.mxu0 0.0
    %390 = vmatpush1.msra.mxu0 0.0
    %391 = vmatprep.subr.mxu0 0.0
    %392 = vmatpush1.msra.mxu0 0.0
    %393 = vmatprep.subr.mxu0 0.0
    %394 = vmatpush1.msra.mxu0 0.0
    %395 = vmatprep.subr.mxu0 0.0
    %396 = vmatpush1.msra.mxu0 0.0
    %397 = vmatprep.subr.mxu0 0.0
    %398 = vmatpush1.msra.mxu0 0.0
    %399 = vmatprep.subr.mxu0 0.0
    %400 = vmatpush1.msra.mxu0 0.0
    %401 = vmatprep.mubr.f32.mxu0 0.0
    %v402 = vand.u32 %v68, 4294901760
    %v403 = vsub.f32 %v68, %v402
    %404 = vmatmul.mubr.f32.gmra.mrb[0].mxu0 %v403
    %v405 = vpop.f32.mrb[0].mxu0
    %v406 = vadd.f32 %v300, %v405
    %v407 = vpop.f32.mrb[0].mxu0
    %408 = vmatprep.mubr.f32.mxu0 0.0
    %v409 = vand.u32 %v71, 4294901760
    %v410 = vsub.f32 %v71, %v409
    %411 = vmatmul.mubr.f32.gmra.mrb[0].mxu0 %v410
    %v412 = vpop.f32.mrb[0].mxu0
    %v413 = vadd.f32 %v306, %v412
    %v414 = vpop.f32.mrb[0].mxu0
    %415 = vmatprep.mubr.f32.mxu0 0.0
    %v416 = vand.u32 %v74, 4294901760
    %v417 = vsub.f32 %v74, %v416
    %418 = vmatmul.mubr.f32.gmra.mrb[0].mxu0 %v417
    %v419 = vpop.f32.mrb[0].mxu0
    %v420 = vadd.f32 %v312, %v419
    %v421 = vpop.f32.mrb[0].mxu0
    %422 = vmatprep.mubr.f32.mxu0 0.0
    %v423 = vand.u32 %v77, 4294901760
    %v424 = vsub.f32 %v77, %v423
    %425 = vmatmul.mubr.f32.gmra.mrb[0].mxu0 %v424
    %v426 = vpop.f32.mrb[0].mxu0
    %v427 = vadd.f32 %v318, %v426
    %v428 = vpop.f32.mrb[0].mxu0
    %429 = vdwg.mxu0
    %430 = vmatprep.subr.mxu0 0.0
    %v431 = vand.u32 %v34, 4294901760
    %432 = vmatpush1.msra.mxu0 %v431
    %433 = vmatprep.subr.mxu0 0.0
    %v434 = vand.u32 %v35, 4294901760
    %435 = vmatpush1.msra.mxu0 %v434
    %436 = vmatprep.subr.mxu0 0.0
    %v437 = vand.u32 %v36, 4294901760
    %438 = vmatpush1.msra.mxu0 %v437
    %439 = vmatprep.subr.mxu0 0.0
    %v440 = vand.u32 %v37, 4294901760
    %441 = vmatpush1.msra.mxu0 %v440
    %442 = vmatprep.subr.mxu0 0.0
    %v443 = vand.u32 %v38, 4294901760
    %444 = vmatpush1.msra.mxu0 %v443
    %445 = vmatprep.subr.mxu0 0.0
    %v446 = vand.u32 %v39, 4294901760
    %447 = vmatpush1.msra.mxu0 %v446
    %448 = vmatprep.subr.mxu0 0.0
    %v449 = vand.u32 %v40, 4294901760
    %450 = vmatpush1.msra.mxu0 %v449
    %451 = vmatprep.subr.mxu0 0.0
    %v452 = vand.u32 %v41, 4294901760
    %453 = vmatpush1.msra.mxu0 %v452
    %454 = vmatprep.subr.mxu0 0.0
    %455 = vmatpush1.msra.mxu0 0.0
    %456 = vmatprep.subr.mxu0 0.0
    %457 = vmatpush1.msra.mxu0 0.0
    %458 = vmatprep.subr.mxu0 0.0
    %459 = vmatpush1.msra.mxu0 0.0
    %460 = vmatprep.subr.mxu0 0.0
    %461 = vmatpush1.msra.mxu0 0.0
    %462 = vmatprep.subr.mxu0 0.0
    %463 = vmatpush1.msra.mxu0 0.0
    %464 = vmatprep.subr.mxu0 0.0
    %465 = vmatpush1.msra.mxu0 0.0
    %466 = vmatprep.subr.mxu0 0.0
    %467 = vmatpush1.msra.mxu0 0.0
    %468 = vmatprep.subr.mxu0 0.0
    %469 = vmatpush1.msra.mxu0 0.0
    %470 = vmatprep.subr.mxu0 0.0
    %471 = vmatpush1.msra.mxu0 0.0
    %472 = vmatprep.subr.mxu0 0.0
    %473 = vmatpush1.msra.mxu0 0.0
    %474 = vmatprep.subr.mxu0 0.0
    %475 = vmatpush1.msra.mxu0 0.0
    %476 = vmatprep.subr.mxu0 0.0
    %477 = vmatpush1.msra.mxu0 0.0
    %478 = vmatprep.subr.mxu0 0.0
    %479 = vmatpush1.msra.mxu0 0.0
    %480 = vmatprep.subr.mxu0 0.0
    %481 = vmatpush1.msra.mxu0 0.0
    %482 = vmatprep.subr.mxu0 0.0
    %483 = vmatpush1.msra.mxu0 0.0
    %484 = vmatprep.subr.mxu0 0.0
    %485 = vmatpush1.msra.mxu0 0.0
    %486 = vmatprep.subr.mxu0 0.0
    %487 = vmatpush1.msra.mxu0 0.0
    %488 = vmatprep.subr.mxu0 0.0
    %489 = vmatpush1.msra.mxu0 0.0
    %490 = vmatprep.subr.mxu0 0.0
    %491 = vmatpush1.msra.mxu0 0.0
    %492 = vmatprep.subr.mxu0 0.0
    %493 = vmatpush1.msra.mxu0 0.0
    %494 = vmatprep.subr.mxu0 0.0
    %495 = vmatpush1.msra.mxu0 0.0
    %496 = vmatprep.subr.mxu0 0.0
    %497 = vmatpush1.msra.mxu0 0.0
    %498 = vmatprep.subr.mxu0 0.0
    %499 = vmatpush1.msra.mxu0 0.0
    %500 = vmatprep.subr.mxu0 0.0
    %501 = vmatpush1.msra.mxu0 0.0
    %502 = vmatprep.mubr.f32.mxu0 0.0
    %v503 = vand.u32 %v68, 4294901760
    %v504 = vsub.f32 %v68, %v503
    %v505 = vand.u32 %v504, 4294901760
    %506 = vmatmul.mubr.f32.gmra.mrb[0].mxu0 %v505
    %v507 = vpop.f32.mrb[0].mxu0
    %v508 = vadd.f32 %v406, %v507
    %v509 = vpop.f32.mrb[0].mxu0
    %510 = vmatprep.mubr.f32.mxu0 0.0
    %v511 = vand.u32 %v71, 4294901760
    %v512 = vsub.f32 %v71, %v511
    %v513 = vand.u32 %v512, 4294901760
    %514 = vmatmul.mubr.f32.gmra.mrb[0].mxu0 %v513
    %v515 = vpop.f32.mrb[0].mxu0
    %v516 = vadd.f32 %v413, %v515
    %v517 = vpop.f32.mrb[0].mxu0
    %518 = vmatprep.mubr.f32.mxu0 0.0
    %v519 = vand.u32 %v74, 4294901760
    %v520 = vsub.f32 %v74, %v519
    %v521 = vand.u32 %v520, 4294901760
    %522 = vmatmul.mubr.f32.gmra.mrb[0].mxu0 %v521
    %v523 = vpop.f32.mrb[0].mxu0
    %v524 = vadd.f32 %v420, %v523
    %v525 = vpop.f32.mrb[0].mxu0
    %526 = vmatprep.mubr.f32.mxu0 0.0
    %v527 = vand.u32 %v77, 4294901760
    %v528 = vsub.f32 %v77, %v527
    %v529 = vand.u32 %v528, 4294901760
    %530 = vmatmul.mubr.f32.gmra.mrb[0].mxu0 %v529
    %v531 = vpop.f32.mrb[0].mxu0
    %v532 = vadd.f32 %v427, %v531
    %v533 = vpop.f32.mrb[0].mxu0
    %534 = vdwg.mxu0
    %535 = vmatprep.subr.mxu0 0.0
    %v536 = vand.u32 %v34, 4294901760
    %v537 = vsub.f32 %v34, %v536
    %v538 = vand.u32 %v537, 4294901760
    %539 = vmatpush1.msra.mxu0 %v538
    %540 = vmatprep.subr.mxu0 0.0
    %v541 = vand.u32 %v35, 4294901760
    %v542 = vsub.f32 %v35, %v541
    %v543 = vand.u32 %v542, 4294901760
    %544 = vmatpush1.msra.mxu0 %v543
    %545 = vmatprep.subr.mxu0 0.0
    %v546 = vand.u32 %v36, 4294901760
    %v547 = vsub.f32 %v36, %v546
    %v548 = vand.u32 %v547, 4294901760
    %549 = vmatpush1.msra.mxu0 %v548
    %550 = vmatprep.subr.mxu0 0.0
    %v551 = vand.u32 %v37, 4294901760
    %v552 = vsub.f32 %v37, %v551
    %v553 = vand.u32 %v552, 4294901760
    %554 = vmatpush1.msra.mxu0 %v553
    %555 = vmatprep.subr.mxu0 0.0
    %v556 = vand.u32 %v38, 4294901760
    %v557 = vsub.f32 %v38, %v556
    %v558 = vand.u32 %v557, 4294901760
    %559 = vmatpush1.msra.mxu0 %v558
    %560 = vmatprep.subr.mxu0 0.0
    %v561 = vand.u32 %v39, 4294901760
    %v562 = vsub.f32 %v39, %v561
    %v563 = vand.u32 %v562, 4294901760
    %564 = vmatpush1.msra.mxu0 %v563
    %565 = vmatprep.subr.mxu0 0.0
    %v566 = vand.u32 %v40, 4294901760
    %v567 = vsub.f32 %v40, %v566
    %v568 = vand.u32 %v567, 4294901760
    %569 = vmatpush1.msra.mxu0 %v568
    %570 = vmatprep.subr.mxu0 0.0
    %v571 = vand.u32 %v41, 4294901760
    %v572 = vsub.f32 %v41, %v571
    %v573 = vand.u32 %v572, 4294901760
    %574 = vmatpush1.msra.mxu0 %v573
    %575 = vmatprep.subr.mxu0 0.0
    %576 = vmatpush1.msra.mxu0 0.0
    %577 = vmatprep.subr.mxu0 0.0
    %578 = vmatpush1.msra.mxu0 0.0
    %579 = vmatprep.subr.mxu0 0.0
    %580 = vmatpush1.msra.mxu0 0.0
    %581 = vmatprep.subr.mxu0 0.0
    %582 = vmatpush1.msra.mxu0 0.0
    %583 = vmatprep.subr.mxu0 0.0
    %584 = vmatpush1.msra.mxu0 0.0
    %585 = vmatprep.subr.mxu0 0.0
    %586 = vmatpush1.msra.mxu0 0.0
    %587 = vmatprep.subr.mxu0 0.0
    %588 = vmatpush1.msra.mxu0 0.0
    %589 = vmatprep.subr.mxu0 0.0
    %590 = vmatpush1.msra.mxu0 0.0
    %591 = vmatprep.subr.mxu0 0.0
    %592 = vmatpush1.msra.mxu0 0.0
    %593 = vmatprep.subr.mxu0 0.0
    %594 = vmatpush1.msra.mxu0 0.0
    %595 = vmatprep.subr.mxu0 0.0
    %596 = vmatpush1.msra.mxu0 0.0
    %597 = vmatprep.subr.mxu0 0.0
    %598 = vmatpush1.msra.mxu0 0.0
    %599 = vmatprep.subr.mxu0 0.0
    %600 = vmatpush1.msra.mxu0 0.0
    %601 = vmatprep.subr.mxu0 0.0
    %602 = vmatpush1.msra.mxu0 0.0
    %603 = vmatprep.subr.mxu0 0.0
    %604 = vmatpush1.msra.mxu0 0.0
    %605 = vmatprep.subr.mxu0 0.0
    %606 = vmatpush1.msra.mxu0 0.0
    %607 = vmatprep.subr.mxu0 0.0
    %608 = vmatpush1.msra.mxu0 0.0
    %609 = vmatprep.subr.mxu0 0.0
    %610 = vmatpush1.msra.mxu0 0.0
    %611 = vmatprep.subr.mxu0 0.0
    %612 = vmatpush1.msra.mxu0 0.0
    %613 = vmatprep.subr.mxu0 0.0
    %614 = vmatpush1.msra.mxu0 0.0
    %615 = vmatprep.subr.mxu0 0.0
    %616 = vmatpush1.msra.mxu0 0.0
    %617 = vmatprep.subr.mxu0 0.0
    %618 = vmatpush1.msra.mxu0 0.0
    %619 = vmatprep.subr.mxu0 0.0
    %620 = vmatpush1.msra.mxu0 0.0
    %621 = vmatprep.subr.mxu0 0.0
    %622 = vmatpush1.msra.mxu0 0.0
    %623 = vmatprep.mubr.f32.mxu0 0.0
    %v624 = vand.u32 %v68, 4294901760
    %625 = vmatmul.mubr.f32.gmra.mrb[0].mxu0 %v624
    %v626 = vpop.f32.mrb[0].mxu0
    %v627 = vadd.f32 %v508, %v626
    %v628 = vpop.f32.mrb[0].mxu0
    %629 = vmatprep.mubr.f32.mxu0 0.0
    %v630 = vand.u32 %v71, 4294901760
    %631 = vmatmul.mubr.f32.gmra.mrb[0].mxu0 %v630
    %v632 = vpop.f32.mrb[0].mxu0
    %v633 = vadd.f32 %v516, %v632
    %v634 = vpop.f32.mrb[0].mxu0
    %635 = vmatprep.mubr.f32.mxu0 0.0
    %v636 = vand.u32 %v74, 4294901760
    %637 = vmatmul.mubr.f32.gmra.mrb[0].mxu0 %v636
    %v638 = vpop.f32.mrb[0].mxu0
    %v639 = vadd.f32 %v524, %v638
    %v640 = vpop.f32.mrb[0].mxu0
    %641 = vmatprep.mubr.f32.mxu0 0.0
    %v642 = vand.u32 %v77, 4294901760
    %643 = vmatmul.mubr.f32.gmra.mrb[0].mxu0 %v642
    %v644 = vpop.f32.mrb[0].mxu0
    %v645 = vadd.f32 %v532, %v644
    %v646 = vpop.f32.mrb[0].mxu0
    %647 = vdwg.mxu0
    %648 = vmatprep.subr.mxu0 0.0
    %v649 = vand.u32 %v34, 4294901760
    %650 = vmatpush1.msra.mxu0 %v649
    %651 = vmatprep.subr.mxu0 0.0
    %v652 = vand.u32 %v35, 4294901760
    %653 = vmatpush1.msra.mxu0 %v652
    %654 = vmatprep.subr.mxu0 0.0
    %v655 = vand.u32 %v36, 4294901760
    %656 = vmatpush1.msra.mxu0 %v655
    %657 = vmatprep.subr.mxu0 0.0
    %v658 = vand.u32 %v37, 4294901760
    %659 = vmatpush1.msra.mxu0 %v658
    %660 = vmatprep.subr.mxu0 0.0
    %v661 = vand.u32 %v38, 4294901760
    %662 = vmatpush1.msra.mxu0 %v661
    %663 = vmatprep.subr.mxu0 0.0
    %v664 = vand.u32 %v39, 4294901760
    %665 = vmatpush1.msra.mxu0 %v664
    %666 = vmatprep.subr.mxu0 0.0
    %v667 = vand.u32 %v40, 4294901760
    %668 = vmatpush1.msra.mxu0 %v667
    %669 = vmatprep.subr.mxu0 0.0
    %v670 = vand.u32 %v41, 4294901760
    %671 = vmatpush1.msra.mxu0 %v670
    %672 = vmatprep.subr.mxu0 0.0
    %673 = vmatpush1.msra.mxu0 0.0
    %674 = vmatprep.subr.mxu0 0.0
    %675 = vmatpush1.msra.mxu0 0.0
    %676 = vmatprep.subr.mxu0 0.0
    %677 = vmatpush1.msra.mxu0 0.0
    %678 = vmatprep.subr.mxu0 0.0
    %679 = vmatpush1.msra.mxu0 0.0
    %680 = vmatprep.subr.mxu0 0.0
    %681 = vmatpush1.msra.mxu0 0.0
    %682 = vmatprep.subr.mxu0 0.0
    %683 = vmatpush1.msra.mxu0 0.0
    %684 = vmatprep.subr.mxu0 0.0
    %685 = vmatpush1.msra.mxu0 0.0
    %686 = vmatprep.subr.mxu0 0.0
    %687 = vmatpush1.msra.mxu0 0.0
    %688 = vmatprep.subr.mxu0 0.0
    %689 = vmatpush1.msra.mxu0 0.0
    %690 = vmatprep.subr.mxu0 0.0
    %691 = vmatpush1.msra.mxu0 0.0
    %692 = vmatprep.subr.mxu0 0.0
    %693 = vmatpush1.msra.mxu0 0.0
    %694 = vmatprep.subr.mxu0 0.0
    %695 = vmatpush1.msra.mxu0 0.0
    %696 = vmatprep.subr.mxu0 0.0
    %697 = vmatpush1.msra.mxu0 0.0
    %698 = vmatprep.subr.mxu0 0.0
    %699 = vmatpush1.msra.mxu0 0.0
    %700 = vmatprep.subr.mxu0 0.0
    %701 = vmatpush1.msra.mxu0 0.0
    %702 = vmatprep.subr.mxu0 0.0
    %703 = vmatpush1.msra.mxu0 0.0
    %704 = vmatprep.subr.mxu0 0.0
    %705 = vmatpush1.msra.mxu0 0.0
    %706 = vmatprep.subr.mxu0 0.0
    %707 = vmatpush1.msra.mxu0 0.0
    %708 = vmatprep.subr.mxu0 0.0
    %709 = vmatpush1.msra.mxu0 0.0
    %710 = vmatprep.subr.mxu0 0.0
    %711 = vmatpush1.msra.mxu0 0.0
    %712 = vmatprep.subr.mxu0 0.0
    %713 = vmatpush1.msra.mxu0 0.0
    %714 = vmatprep.subr.mxu0 0.0
    %715 = vmatpush1.msra.mxu0 0.0
    %716 = vmatprep.subr.mxu0 0.0
    %717 = vmatpush1.msra.mxu0 0.0
    %718 = vmatprep.subr.mxu0 0.0
    %719 = vmatpush1.msra.mxu0 0.0
    %720 = vmatprep.mubr.f32.mxu0 0.0
    %v721 = vand.u32 %v68, 4294901760
    %722 = vmatmul.mubr.f32.gmra.mrb[0].mxu0 %v721
    %v723 = vpop.f32.mrb[0].mxu0
    %v724 = vadd.f32 %v627, %v723
    %v725 = vpop.f32.mrb[0].mxu0
    %726 = vmatprep.mubr.f32.mxu0 0.0
    %v727 = vand.u32 %v71, 4294901760
    %728 = vmatmul.mubr.f32.gmra.mrb[0].mxu0 %v727
    %v729 = vpop.f32.mrb[0].mxu0
    %v730 = vadd.f32 %v633, %v729
    %v731 = vpop.f32.mrb[0].mxu0
    %732 = vmatprep.mubr.f32.mxu0 0.0
    %v733 = vand.u32 %v74, 4294901760
    %734 = vmatmul.mubr.f32.gmra.mrb[0].mxu0 %v733
    %v735 = vpop.f32.mrb[0].mxu0
    %v736 = vadd.f32 %v639, %v735
    %v737 = vpop.f32.mrb[0].mxu0
    %738 = vmatprep.mubr.f32.mxu0 0.0
    %v739 = vand.u32 %v77, 4294901760
    %740 = vmatmul.mubr.f32.gmra.mrb[0].mxu0 %v739
    %v741 = vpop.f32.mrb[0].mxu0
    %v742 = vadd.f32 %v645, %v741
    %v743 = vpop.f32.mrb[0].mxu0
    %744 = vdwg.mxu0
    %v745 = vmax.f32 %v724, 0.0
    %v746 = vmax.f32 %v730, 0.0
    %v747 = vmax.f32 %v736, 0.0
    %v748 = vmax.f32 %v742, 0.0
    %v749 = vld [vmem:[%s4] sm:$0xff]
    %v750 = vld [vmem:[%s4 + $0x8] sm:$0xff]
    %v751 = vld [vmem:[%s4 + $0x10] sm:$0xff]
    %v752 = vld [vmem:[%s4 + $0x18] sm:$0x3]
    %v753 = vld [vmem:[%s3] sm:$0xff]
    %v754 = vld [vmem:[%s3 + $0x8] sm:$0xff]
    %v755 = vld [vmem:[%s3 + $0x10] sm:$0xff]
    %v756 = vld [vmem:[%s3 + $0x18] sm:$0x3]
    %vm757 = vcmask 261120
    %v759 = vsel %vm757, %v753, 0
    %v762 = vsel %vm757, %v754, 0
    %v765 = vsel %vm757, %v755, 0
    %v768 = vsel %vm757, %v756, 0
    %770 = vmatprep.subr.mxu0 0.0
    %v771 = vand.u32 %v745, 4294901760
    %772 = vmatpush1.msra.mxu0 %v771
    %773 = vmatprep.subr.mxu0 0.0
    %v774 = vand.u32 %v746, 4294901760
    %775 = vmatpush1.msra.mxu0 %v774
    %776 = vmatprep.subr.mxu0 0.0
    %v777 = vand.u32 %v747, 4294901760
    %778 = vmatpush1.msra.mxu0 %v777
    %779 = vmatprep.subr.mxu0 0.0
    %v780 = vand.u32 %v748, 4294901760
    %781 = vmatpush1.msra.mxu0 %v780
    %782 = vmatprep.subr.mxu0 0.0
    %783 = vmatpush1.msra.mxu0 0.0
    %784 = vmatprep.subr.mxu0 0.0
    %785 = vmatpush1.msra.mxu0 0.0
    %786 = vmatprep.subr.mxu0 0.0
    %787 = vmatpush1.msra.mxu0 0.0
    %788 = vmatprep.subr.mxu0 0.0
    %789 = vmatpush1.msra.mxu0 0.0
    %790 = vmatprep.subr.mxu0 0.0
    %791 = vmatpush1.msra.mxu0 0.0
    %792 = vmatprep.subr.mxu0 0.0
    %793 = vmatpush1.msra.mxu0 0.0
    %794 = vmatprep.subr.mxu0 0.0
    %795 = vmatpush1.msra.mxu0 0.0
    %796 = vmatprep.subr.mxu0 0.0
    %797 = vmatpush1.msra.mxu0 0.0
    %798 = vmatprep.subr.mxu0 0.0
    %799 = vmatpush1.msra.mxu0 0.0
    %800 = vmatprep.subr.mxu0 0.0
    %801 = vmatpush1.msra.mxu0 0.0
    %802 = vmatprep.subr.mxu0 0.0
    %803 = vmatpush1.msra.mxu0 0.0
    %804 = vmatprep.subr.mxu0 0.0
    %805 = vmatpush1.msra.mxu0 0.0
    %806 = vmatprep.subr.mxu0 0.0
    %807 = vmatpush1.msra.mxu0 0.0
    %808 = vmatprep.subr.mxu0 0.0
    %809 = vmatpush1.msra.mxu0 0.0
    %810 = vmatprep.subr.mxu0 0.0
    %811 = vmatpush1.msra.mxu0 0.0
    %812 = vmatprep.subr.mxu0 0.0
    %813 = vmatpush1.msra.mxu0 0.0
    %814 = vmatprep.subr.mxu0 0.0
    %815 = vmatpush1.msra.mxu0 0.0
    %816 = vmatprep.subr.mxu0 0.0
    %817 = vmatpush1.msra.mxu0 0.0
    %818 = vmatprep.subr.mxu0 0.0
    %819 = vmatpush1.msra.mxu0 0.0
    %820 = vmatprep.subr.mxu0 0.0
    %821 = vmatpush1.msra.mxu0 0.0
    %822 = vmatprep.subr.mxu0 0.0
    %823 = vmatpush1.msra.mxu0 0.0
    %824 = vmatprep.subr.mxu0 0.0
    %825 = vmatpush1.msra.mxu0 0.0
    %826 = vmatprep.subr.mxu0 0.0
    %827 = vmatpush1.msra.mxu0 0.0
    %828 = vmatprep.subr.mxu0 0.0
    %829 = vmatpush1.msra.mxu0 0.0
    %830 = vmatprep.subr.mxu0 0.0
    %831 = vmatpush1.msra.mxu0 0.0
    %832 = vmatprep.subr.mxu0 0.0
    %833 = vmatpush1.msra.mxu0 0.0
    %834 = vmatprep.subr.mxu0 0.0
    %835 = vmatpush1.msra.mxu0 0.0
    %836 = vmatprep.subr.mxu0 0.0
    %837 = vmatpush1.msra.mxu0 0.0
    %838 = vmatprep.mubr.f32.mxu0 0.0
    %v839 = vand.u32 %v759, 4294901760
    %v840 = vsub.f32 %v759, %v839
    %v841 = vand.u32 %v840, 4294901760
    %v842 = vsub.f32 %v840, %v841
    %v843 = vand.u32 %v842, 4294901760
    %844 = vmatmul.mubr.f32.gmra.mrb[0].mxu0 %v843
    %v845 = vpop.f32.mrb[0].mxu0
    %v846 = vadd.f32 0.0, %v845
    %v847 = vpop.f32.mrb[0].mxu0
    %848 = vmatprep.mubr.f32.mxu0 0.0
    %v849 = vand.u32 %v762, 4294901760
    %v850 = vsub.f32 %v762, %v849
    %v851 = vand.u32 %v850, 4294901760
    %v852 = vsub.f32 %v850, %v851
    %v853 = vand.u32 %v852, 4294901760
    %854 = vmatmul.mubr.f32.gmra.mrb[0].mxu0 %v853
    %v855 = vpop.f32.mrb[0].mxu0
    %v856 = vadd.f32 0.0, %v855
    %v857 = vpop.f32.mrb[0].mxu0
    %858 = vmatprep.mubr.f32.mxu0 0.0
    %v859 = vand.u32 %v765, 4294901760
    %v860 = vsub.f32 %v765, %v859
    %v861 = vand.u32 %v860, 4294901760
    %v862 = vsub.f32 %v860, %v861
    %v863 = vand.u32 %v862, 4294901760
    %864 = vmatmul.mubr.f32.gmra.mrb[0].mxu0 %v863
    %v865 = vpop.f32.mrb[0].mxu0
    %v866 = vadd.f32 0.0, %v865
    %v867 = vpop.f32.mrb[0].mxu0
    %868 = vmatprep.mubr.f32.mxu0 0.0
    %v869 = vand.u32 %v768, 4294901760
    %v870 = vsub.f32 %v768, %v869
    %v871 = vand.u32 %v870, 4294901760
    %v872 = vsub.f32 %v870, %v871
    %v873 = vand.u32 %v872, 4294901760
    %874 = vmatmul.mubr.f32.gmra.mrb[0].mxu0 %v873
    %v875 = vpop.f32.mrb[0].mxu0
    %v876 = vadd.f32 0.0, %v875
    %v877 = vpop.f32.mrb[0].mxu0
    %878 = vdwg.mxu0
    %879 = vmatprep.subr.mxu0 0.0
    %v880 = vand.u32 %v745, 4294901760
    %v881 = vsub.f32 %v745, %v880
    %v882 = vand.u32 %v881, 4294901760
    %v883 = vsub.f32 %v881, %v882
    %v884 = vand.u32 %v883, 4294901760
    %885 = vmatpush1.msra.mxu0 %v884
    %886 = vmatprep.subr.mxu0 0.0
    %v887 = vand.u32 %v746, 4294901760
    %v888 = vsub.f32 %v746, %v887
    %v889 = vand.u32 %v888, 4294901760
    %v890 = vsub.f32 %v888, %v889
    %v891 = vand.u32 %v890, 4294901760
    %892 = vmatpush1.msra.mxu0 %v891
    %893 = vmatprep.subr.mxu0 0.0
    %v894 = vand.u32 %v747, 4294901760
    %v895 = vsub.f32 %v747, %v894
    %v896 = vand.u32 %v895, 4294901760
    %v897 = vsub.f32 %v895, %v896
    %v898 = vand.u32 %v897, 4294901760
    %899 = vmatpush1.msra.mxu0 %v898
    %900 = vmatprep.subr.mxu0 0.0
    %v901 = vand.u32 %v748, 4294901760
    %v902 = vsub.f32 %v748, %v901
    %v903 = vand.u32 %v902, 4294901760
    %v904 = vsub.f32 %v902, %v903
    %v905 = vand.u32 %v904, 4294901760
    %906 = vmatpush1.msra.mxu0 %v905
    %907 = vmatprep.subr.mxu0 0.0
    %908 = vmatpush1.msra.mxu0 0.0
    %909 = vmatprep.subr.mxu0 0.0
    %910 = vmatpush1.msra.mxu0 0.0
    %911 = vmatprep.subr.mxu0 0.0
    %912 = vmatpush1.msra.mxu0 0.0
    %913 = vmatprep.subr.mxu0 0.0
    %914 = vmatpush1.msra.mxu0 0.0
    %915 = vmatprep.subr.mxu0 0.0
    %916 = vmatpush1.msra.mxu0 0.0
    %917 = vmatprep.subr.mxu0 0.0
    %918 = vmatpush1.msra.mxu0 0.0
    %919 = vmatprep.subr.mxu0 0.0
    %920 = vmatpush1.msra.mxu0 0.0
    %921 = vmatprep.subr.mxu0 0.0
    %922 = vmatpush1.msra.mxu0 0.0
    %923 = vmatprep.subr.mxu0 0.0
    %924 = vmatpush1.msra.mxu0 0.0
    %925 = vmatprep.subr.mxu0 0.0
    %926 = vmatpush1.msra.mxu0 0.0
    %927 = vmatprep.subr.mxu0 0.0
    %928 = vmatpush1.msra.mxu0 0.0
    %929 = vmatprep.subr.mxu0 0.0
    %930 = vmatpush1.msra.mxu0 0.0
    %931 = vmatprep.subr.mxu0 0.0
    %932 = vmatpush1.msra.mxu0 0.0
    %933 = vmatprep.subr.mxu0 0.0
    %934 = vmatpush1.msra.mxu0 0.0
    %935 = vmatprep.subr.mxu0 0.0
    %936 = vmatpush1.msra.mxu0 0.0
    %937 = vmatprep.subr.mxu0 0.0
    %938 = vmatpush1.msra.mxu0 0.0
    %939 = vmatprep.subr.mxu0 0.0
    %940 = vmatpush1.msra.mxu0 0.0
    %941 = vmatprep.subr.mxu0 0.0
    %942 = vmatpush1.msra.mxu0 0.0
    %943 = vmatprep.subr.mxu0 0.0
    %944 = vmatpush1.msra.mxu0 0.0
    %945 = vmatprep.subr.mxu0 0.0
    %946 = vmatpush1.msra.mxu0 0.0
    %947 = vmatprep.subr.mxu0 0.0
    %948 = vmatpush1.msra.mxu0 0.0
    %949 = vmatprep.subr.mxu0 0.0
    %950 = vmatpush1.msra.mxu0 0.0
    %951 = vmatprep.subr.mxu0 0.0
    %952 = vmatpush1.msra.mxu0 0.0
    %953 = vmatprep.subr.mxu0 0.0
    %954 = vmatpush1.msra.mxu0 0.0
    %955 = vmatprep.subr.mxu0 0.0
    %956 = vmatpush1.msra.mxu0 0.0
    %957 = vmatprep.subr.mxu0 0.0
    %958 = vmatpush1.msra.mxu0 0.0
    %959 = vmatprep.subr.mxu0 0.0
    %960 = vmatpush1.msra.mxu0 0.0
    %961 = vmatprep.subr.mxu0 0.0
    %962 = vmatpush1.msra.mxu0 0.0
    %963 = vmatprep.mubr.f32.mxu0 0.0
    %v964 = vand.u32 %v759, 4294901760
    %965 = vmatmul.mubr.f32.gmra.mrb[0].mxu0 %v964
    %v966 = vpop.f32.mrb[0].mxu0
    %v967 = vadd.f32 %v846, %v966
    %v968 = vpop.f32.mrb[0].mxu0
    %969 = vmatprep.mubr.f32.mxu0 0.0
    %v970 = vand.u32 %v762, 4294901760
    %971 = vmatmul.mubr.f32.gmra.mrb[0].mxu0 %v970
    %v972 = vpop.f32.mrb[0].mxu0
    %v973 = vadd.f32 %v856, %v972
    %v974 = vpop.f32.mrb[0].mxu0
    %975 = vmatprep.mubr.f32.mxu0 0.0
    %v976 = vand.u32 %v765, 4294901760
    %977 = vmatmul.mubr.f32.gmra.mrb[0].mxu0 %v976
    %v978 = vpop.f32.mrb[0].mxu0
    %v979 = vadd.f32 %v866, %v978
    %v980 = vpop.f32.mrb[0].mxu0
    %981 = vmatprep.mubr.f32.mxu0 0.0
    %v982 = vand.u32 %v768, 4294901760
    %983 = vmatmul.mubr.f32.gmra.mrb[0].mxu0 %v982
    %v984 = vpop.f32.mrb[0].mxu0
    %v985 = vadd.f32 %v876, %v984
    %v986 = vpop.f32.mrb[0].mxu0
    %987 = vdwg.mxu0
    %988 = vmatprep.subr.mxu0 0.0
    %v989 = vand.u32 %v745, 4294901760
    %v990 = vsub.f32 %v745, %v989
    %991 = vmatpush1.msra.mxu0 %v990
    %992 = vmatprep.subr.mxu0 0.0
    %v993 = vand.u32 %v746, 4294901760
    %v994 = vsub.f32 %v746, %v993
    %995 = vmatpush1.msra.mxu0 %v994
    %996 = vmatprep.subr.mxu0 0.0
    %v997 = vand.u32 %v747, 4294901760
    %v998 = vsub.f32 %v747, %v997
    %999 = vmatpush1.msra.mxu0 %v998
    %1000 = vmatprep.subr.mxu0 0.0
    %v1001 = vand.u32 %v748, 4294901760
    %v1002 = vsub.f32 %v748, %v1001
    %1003 = vmatpush1.msra.mxu0 %v1002
    %1004 = vmatprep.subr.mxu0 0.0
    %1005 = vmatpush1.msra.mxu0 0.0
    %1006 = vmatprep.subr.mxu0 0.0
    %1007 = vmatpush1.msra.mxu0 0.0
    %1008 = vmatprep.subr.mxu0 0.0
    %1009 = vmatpush1.msra.mxu0 0.0
    %1010 = vmatprep.subr.mxu0 0.0
    %1011 = vmatpush1.msra.mxu0 0.0
    %1012 = vmatprep.subr.mxu0 0.0
    %1013 = vmatpush1.msra.mxu0 0.0
    %1014 = vmatprep.subr.mxu0 0.0
    %1015 = vmatpush1.msra.mxu0 0.0
    %1016 = vmatprep.subr.mxu0 0.0
    %1017 = vmatpush1.msra.mxu0 0.0
    %1018 = vmatprep.subr.mxu0 0.0
    %1019 = vmatpush1.msra.mxu0 0.0
    %1020 = vmatprep.subr.mxu0 0.0
    %1021 = vmatpush1.msra.mxu0 0.0
    %1022 = vmatprep.subr.mxu0 0.0
    %1023 = vmatpush1.msra.mxu0 0.0
    %1024 = vmatprep.subr.mxu0 0.0
    %1025 = vmatpush1.msra.mxu0 0.0
    %1026 = vmatprep.subr.mxu0 0.0
    %1027 = vmatpush1.msra.mxu0 0.0
    %1028 = vmatprep.subr.mxu0 0.0
    %1029 = vmatpush1.msra.mxu0 0.0
    %1030 = vmatprep.subr.mxu0 0.0
    %1031 = vmatpush1.msra.mxu0 0.0
    %1032 = vmatprep.subr.mxu0 0.0
    %1033 = vmatpush1.msra.mxu0 0.0
    %1034 = vmatprep.subr.mxu0 0.0
    %1035 = vmatpush1.msra.mxu0 0.0
    %1036 = vmatprep.subr.mxu0 0.0
    %1037 = vmatpush1.msra.mxu0 0.0
    %1038 = vmatprep.subr.mxu0 0.0
    %1039 = vmatpush1.msra.mxu0 0.0
    %1040 = vmatprep.subr.mxu0 0.0
    %1041 = vmatpush1.msra.mxu0 0.0
    %1042 = vmatprep.subr.mxu0 0.0
    %1043 = vmatpush1.msra.mxu0 0.0
    %1044 = vmatprep.subr.mxu0 0.0
    %1045 = vmatpush1.msra.mxu0 0.0
    %1046 = vmatprep.subr.mxu0 0.0
    %1047 = vmatpush1.msra.mxu0 0.0
    %1048 = vmatprep.subr.mxu0 0.0
    %1049 = vmatpush1.msra.mxu0 0.0
    %1050 = vmatprep.subr.mxu0 0.0
    %1051 = vmatpush1.msra.mxu0 0.0
    %1052 = vmatprep.subr.mxu0 0.0
    %1053 = vmatpush1.msra.mxu0 0.0
    %1054 = vmatprep.subr.mxu0 0.0
    %1055 = vmatpush1.msra.mxu0 0.0
    %1056 = vmatprep.subr.mxu0 0.0
    %1057 = vmatpush1.msra.mxu0 0.0
    %1058 = vmatprep.subr.mxu0 0.0
    %1059 = vmatpush1.msra.mxu0 0.0
    %1060 = vmatprep.mubr.f32.mxu0 0.0
    %v1061 = vand.u32 %v759, 4294901760
    %v1062 = vsub.f32 %v759, %v1061
    %1063 = vmatmul.mubr.f32.gmra.mrb[0].mxu0 %v1062
    %v1064 = vpop.f32.mrb[0].mxu0
    %v1065 = vadd.f32 %v967, %v1064
    %v1066 = vpop.f32.mrb[0].mxu0
    %1067 = vmatprep.mubr.f32.mxu0 0.0
    %v1068 = vand.u32 %v762, 4294901760
    %v1069 = vsub.f32 %v762, %v1068
    %1070 = vmatmul.mubr.f32.gmra.mrb[0].mxu0 %v1069
    %v1071 = vpop.f32.mrb[0].mxu0
    %v1072 = vadd.f32 %v973, %v1071
    %v1073 = vpop.f32.mrb[0].mxu0
    %1074 = vmatprep.mubr.f32.mxu0 0.0
    %v1075 = vand.u32 %v765, 4294901760
    %v1076 = vsub.f32 %v765, %v1075
    %1077 = vmatmul.mubr.f32.gmra.mrb[0].mxu0 %v1076
    %v1078 = vpop.f32.mrb[0].mxu0
    %v1079 = vadd.f32 %v979, %v1078
    %v1080 = vpop.f32.mrb[0].mxu0
    %1081 = vmatprep.mubr.f32.mxu0 0.0
    %v1082 = vand.u32 %v768, 4294901760
    %v1083 = vsub.f32 %v768, %v1082
    %1084 = vmatmul.mubr.f32.gmra.mrb[0].mxu0 %v1083
    %v1085 = vpop.f32.mrb[0].mxu0
    %v1086 = vadd.f32 %v985, %v1085
    %v1087 = vpop.f32.mrb[0].mxu0
    %1088 = vdwg.mxu0
    %1089 = vmatprep.subr.mxu0 0.0
    %v1090 = vand.u32 %v745, 4294901760
    %1091 = vmatpush1.msra.mxu0 %v1090
    %1092 = vmatprep.subr.mxu0 0.0
    %v1093 = vand.u32 %v746, 4294901760
    %1094 = vmatpush1.msra.mxu0 %v1093
    %1095 = vmatprep.subr.mxu0 0.0
    %v1096 = vand.u32 %v747, 4294901760
    %1097 = vmatpush1.msra.mxu0 %v1096
    %1098 = vmatprep.subr.mxu0 0.0
    %v1099 = vand.u32 %v748, 4294901760
    %1100 = vmatpush1.msra.mxu0 %v1099
    %1101 = vmatprep.subr.mxu0 0.0
    %1102 = vmatpush1.msra.mxu0 0.0
    %1103 = vmatprep.subr.mxu0 0.0
    %1104 = vmatpush1.msra.mxu0 0.0
    %1105 = vmatprep.subr.mxu0 0.0
    %1106 = vmatpush1.msra.mxu0 0.0
    %1107 = vmatprep.subr.mxu0 0.0
    %1108 = vmatpush1.msra.mxu0 0.0
    %1109 = vmatprep.subr.mxu0 0.0
    %1110 = vmatpush1.msra.mxu0 0.0
    %1111 = vmatprep.subr.mxu0 0.0
    %1112 = vmatpush1.msra.mxu0 0.0
    %1113 = vmatprep.subr.mxu0 0.0
    %1114 = vmatpush1.msra.mxu0 0.0
    %1115 = vmatprep.subr.mxu0 0.0
    %1116 = vmatpush1.msra.mxu0 0.0
    %1117 = vmatprep.subr.mxu0 0.0
    %1118 = vmatpush1.msra.mxu0 0.0
    %1119 = vmatprep.subr.mxu0 0.0
    %1120 = vmatpush1.msra.mxu0 0.0
    %1121 = vmatprep.subr.mxu0 0.0
    %1122 = vmatpush1.msra.mxu0 0.0
    %1123 = vmatprep.subr.mxu0 0.0
    %1124 = vmatpush1.msra.mxu0 0.0
    %1125 = vmatprep.subr.mxu0 0.0
    %1126 = vmatpush1.msra.mxu0 0.0
    %1127 = vmatprep.subr.mxu0 0.0
    %1128 = vmatpush1.msra.mxu0 0.0
    %1129 = vmatprep.subr.mxu0 0.0
    %1130 = vmatpush1.msra.mxu0 0.0
    %1131 = vmatprep.subr.mxu0 0.0
    %1132 = vmatpush1.msra.mxu0 0.0
    %1133 = vmatprep.subr.mxu0 0.0
    %1134 = vmatpush1.msra.mxu0 0.0
    %1135 = vmatprep.subr.mxu0 0.0
    %1136 = vmatpush1.msra.mxu0 0.0
    %1137 = vmatprep.subr.mxu0 0.0
    %1138 = vmatpush1.msra.mxu0 0.0
    %1139 = vmatprep.subr.mxu0 0.0
    %1140 = vmatpush1.msra.mxu0 0.0
    %1141 = vmatprep.subr.mxu0 0.0
    %1142 = vmatpush1.msra.mxu0 0.0
    %1143 = vmatprep.subr.mxu0 0.0
    %1144 = vmatpush1.msra.mxu0 0.0
    %1145 = vmatprep.subr.mxu0 0.0
    %1146 = vmatpush1.msra.mxu0 0.0
    %1147 = vmatprep.subr.mxu0 0.0
    %1148 = vmatpush1.msra.mxu0 0.0
    %1149 = vmatprep.subr.mxu0 0.0
    %1150 = vmatpush1.msra.mxu0 0.0
    %1151 = vmatprep.subr.mxu0 0.0
    %1152 = vmatpush1.msra.mxu0 0.0
    %1153 = vmatprep.subr.mxu0 0.0
    %1154 = vmatpush1.msra.mxu0 0.0
    %1155 = vmatprep.subr.mxu0 0.0
    %1156 = vmatpush1.msra.mxu0 0.0
    %1157 = vmatprep.mubr.f32.mxu0 0.0
    %v1158 = vand.u32 %v759, 4294901760
    %v1159 = vsub.f32 %v759, %v1158
    %v1160 = vand.u32 %v1159, 4294901760
    %1161 = vmatmul.mubr.f32.gmra.mrb[0].mxu0 %v1160
    %v1162 = vpop.f32.mrb[0].mxu0
    %v1163 = vadd.f32 %v1065, %v1162
    %v1164 = vpop.f32.mrb[0].mxu0
    %1165 = vmatprep.mubr.f32.mxu0 0.0
    %v1166 = vand.u32 %v762, 4294901760
    %v1167 = vsub.f32 %v762, %v1166
    %v1168 = vand.u32 %v1167, 4294901760
    %1169 = vmatmul.mubr.f32.gmra.mrb[0].mxu0 %v1168
    %v1170 = vpop.f32.mrb[0].mxu0
    %v1171 = vadd.f32 %v1072, %v1170
    %v1172 = vpop.f32.mrb[0].mxu0
    %1173 = vmatprep.mubr.f32.mxu0 0.0
    %v1174 = vand.u32 %v765, 4294901760
    %v1175 = vsub.f32 %v765, %v1174
    %v1176 = vand.u32 %v1175, 4294901760
    %1177 = vmatmul.mubr.f32.gmra.mrb[0].mxu0 %v1176
    %v1178 = vpop.f32.mrb[0].mxu0
    %v1179 = vadd.f32 %v1079, %v1178
    %v1180 = vpop.f32.mrb[0].mxu0
    %1181 = vmatprep.mubr.f32.mxu0 0.0
    %v1182 = vand.u32 %v768, 4294901760
    %v1183 = vsub.f32 %v768, %v1182
    %v1184 = vand.u32 %v1183, 4294901760
    %1185 = vmatmul.mubr.f32.gmra.mrb[0].mxu0 %v1184
    %v1186 = vpop.f32.mrb[0].mxu0
    %v1187 = vadd.f32 %v1086, %v1186
    %v1188 = vpop.f32.mrb[0].mxu0
    %1189 = vdwg.mxu0
    %1190 = vmatprep.subr.mxu0 0.0
    %v1191 = vand.u32 %v745, 4294901760
    %v1192 = vsub.f32 %v745, %v1191
    %v1193 = vand.u32 %v1192, 4294901760
    %1194 = vmatpush1.msra.mxu0 %v1193
    %1195 = vmatprep.subr.mxu0 0.0
    %v1196 = vand.u32 %v746, 4294901760
    %v1197 = vsub.f32 %v746, %v1196
    %v1198 = vand.u32 %v1197, 4294901760
    %1199 = vmatpush1.msra.mxu0 %v1198
    %1200 = vmatprep.subr.mxu0 0.0
    %v1201 = vand.u32 %v747, 4294901760
    %v1202 = vsub.f32 %v747, %v1201
    %v1203 = vand.u32 %v1202, 4294901760
    %1204 = vmatpush1.msra.mxu0 %v1203
    %1205 = vmatprep.subr.mxu0 0.0
    %v1206 = vand.u32 %v748, 4294901760
    %v1207 = vsub.f32 %v748, %v1206
    %v1208 = vand.u32 %v1207, 4294901760
    %1209 = vmatpush1.msra.mxu0 %v1208
    %1210 = vmatprep.subr.mxu0 0.0
    %1211 = vmatpush1.msra.mxu0 0.0
    %1212 = vmatprep.subr.mxu0 0.0
    %1213 = vmatpush1.msra.mxu0 0.0
    %1214 = vmatprep.subr.mxu0 0.0
    %1215 = vmatpush1.msra.mxu0 0.0
    %1216 = vmatprep.subr.mxu0 0.0
    %1217 = vmatpush1.msra.mxu0 0.0
    %1218 = vmatprep.subr.mxu0 0.0
    %1219 = vmatpush1.msra.mxu0 0.0
    %1220 = vmatprep.subr.mxu0 0.0
    %1221 = vmatpush1.msra.mxu0 0.0
    %1222 = vmatprep.subr.mxu0 0.0
    %1223 = vmatpush1.msra.mxu0 0.0
    %1224 = vmatprep.subr.mxu0 0.0
    %1225 = vmatpush1.msra.mxu0 0.0
    %1226 = vmatprep.subr.mxu0 0.0
    %1227 = vmatpush1.msra.mxu0 0.0
    %1228 = vmatprep.subr.mxu0 0.0
    %1229 = vmatpush1.msra.mxu0 0.0
    %1230 = vmatprep.subr.mxu0 0.0
    %1231 = vmatpush1.msra.mxu0 0.0
    %1232 = vmatprep.subr.mxu0 0.0
    %1233 = vmatpush1.msra.mxu0 0.0
    %1234 = vmatprep.subr.mxu0 0.0
    %1235 = vmatpush1.msra.mxu0 0.0
    %1236 = vmatprep.subr.mxu0 0.0
    %1237 = vmatpush1.msra.mxu0 0.0
    %1238 = vmatprep.subr.mxu0 0.0
    %1239 = vmatpush1.msra.mxu0 0.0
    %1240 = vmatprep.subr.mxu0 0.0
    %1241 = vmatpush1.msra.mxu0 0.0
    %1242 = vmatprep.subr.mxu0 0.0
    %1243 = vmatpush1.msra.mxu0 0.0
    %1244 = vmatprep.subr.mxu0 0.0
    %1245 = vmatpush1.msra.mxu0 0.0
    %1246 = vmatprep.subr.mxu0 0.0
    %1247 = vmatpush1.msra.mxu0 0.0
    %1248 = vmatprep.subr.mxu0 0.0
    %1249 = vmatpush1.msra.mxu0 0.0
    %1250 = vmatprep.subr.mxu0 0.0
    %1251 = vmatpush1.msra.mxu0 0.0
    %1252 = vmatprep.subr.mxu0 0.0
    %1253 = vmatpush1.msra.mxu0 0.0
    %1254 = vmatprep.subr.mxu0 0.0
    %1255 = vmatpush1.msra.mxu0 0.0
    %1256 = vmatprep.subr.mxu0 0.0
    %1257 = vmatpush1.msra.mxu0 0.0
    %1258 = vmatprep.subr.mxu0 0.0
    %1259 = vmatpush1.msra.mxu0 0.0
    %1260 = vmatprep.subr.mxu0 0.0
    %1261 = vmatpush1.msra.mxu0 0.0
    %1262 = vmatprep.subr.mxu0 0.0
    %1263 = vmatpush1.msra.mxu0 0.0
    %1264 = vmatprep.subr.mxu0 0.0
    %1265 = vmatpush1.msra.mxu0 0.0
    %1266 = vmatprep.mubr.f32.mxu0 0.0
    %v1267 = vand.u32 %v759, 4294901760
    %1268 = vmatmul.mubr.f32.gmra.mrb[0].mxu0 %v1267
    %v1269 = vpop.f32.mrb[0].mxu0
    %v1270 = vadd.f32 %v1163, %v1269
    %v1271 = vpop.f32.mrb[0].mxu0
    %1272 = vmatprep.mubr.f32.mxu0 0.0
    %v1273 = vand.u32 %v762, 4294901760
    %1274 = vmatmul.mubr.f32.gmra.mrb[0].mxu0 %v1273
    %v1275 = vpop.f32.mrb[0].mxu0
    %v1276 = vadd.f32 %v1171, %v1275
    %v1277 = vpop.f32.mrb[0].mxu0
    %1278 = vmatprep.mubr.f32.mxu0 0.0
    %v1279 = vand.u32 %v765, 4294901760
    %1280 = vmatmul.mubr.f32.gmra.mrb[0].mxu0 %v1279
    %v1281 = vpop.f32.mrb[0].mxu0
    %v1282 = vadd.f32 %v1179, %v1281
    %v1283 = vpop.f32.mrb[0].mxu0
    %1284 = vmatprep.mubr.f32.mxu0 0.0
    %v1285 = vand.u32 %v768, 4294901760
    %1286 = vmatmul.mubr.f32.gmra.mrb[0].mxu0 %v1285
    %v1287 = vpop.f32.mrb[0].mxu0
    %v1288 = vadd.f32 %v1187, %v1287
    %v1289 = vpop.f32.mrb[0].mxu0
    %1290 = vdwg.mxu0
    %1291 = vmatprep.subr.mxu0 0.0
    %v1292 = vand.u32 %v745, 4294901760
    %1293 = vmatpush1.msra.mxu0 %v1292
    %1294 = vmatprep.subr.mxu0 0.0
    %v1295 = vand.u32 %v746, 4294901760
    %1296 = vmatpush1.msra.mxu0 %v1295
    %1297 = vmatprep.subr.mxu0 0.0
    %v1298 = vand.u32 %v747, 4294901760
    %1299 = vmatpush1.msra.mxu0 %v1298
    %1300 = vmatprep.subr.mxu0 0.0
    %v1301 = vand.u32 %v748, 4294901760
    %1302 = vmatpush1.msra.mxu0 %v1301
    %1303 = vmatprep.subr.mxu0 0.0
    %1304 = vmatpush1.msra.mxu0 0.0
    %1305 = vmatprep.subr.mxu0 0.0
    %1306 = vmatpush1.msra.mxu0 0.0
    %1307 = vmatprep.subr.mxu0 0.0
    %1308 = vmatpush1.msra.mxu0 0.0
    %1309 = vmatprep.subr.mxu0 0.0
    %1310 = vmatpush1.msra.mxu0 0.0
    %1311 = vmatprep.subr.mxu0 0.0
    %1312 = vmatpush1.msra.mxu0 0.0
    %1313 = vmatprep.subr.mxu0 0.0
    %1314 = vmatpush1.msra.mxu0 0.0
    %1315 = vmatprep.subr.mxu0 0.0
    %1316 = vmatpush1.msra.mxu0 0.0
    %1317 = vmatprep.subr.mxu0 0.0
    %1318 = vmatpush1.msra.mxu0 0.0
    %1319 = vmatprep.subr.mxu0 0.0
    %1320 = vmatpush1.msra.mxu0 0.0
    %1321 = vmatprep.subr.mxu0 0.0
    %1322 = vmatpush1.msra.mxu0 0.0
    %1323 = vmatprep.subr.mxu0 0.0
    %1324 = vmatpush1.msra.mxu0 0.0
    %1325 = vmatprep.subr.mxu0 0.0
    %1326 = vmatpush1.msra.mxu0 0.0
    %1327 = vmatprep.subr.mxu0 0.0
    %1328 = vmatpush1.msra.mxu0 0.0
    %1329 = vmatprep.subr.mxu0 0.0
    %1330 = vmatpush1.msra.mxu0 0.0
    %1331 = vmatprep.subr.mxu0 0.0
    %1332 = vmatpush1.msra.mxu0 0.0
    %1333 = vmatprep.subr.mxu0 0.0
    %1334 = vmatpush1.msra.mxu0 0.0
    %1335 = vmatprep.subr.mxu0 0.0
    %1336 = vmatpush1.msra.mxu0 0.0
    %1337 = vmatprep.subr.mxu0 0.0
    %1338 = vmatpush1.msra.mxu0 0.0
    %1339 = vmatprep.subr.mxu0 0.0
    %1340 = vmatpush1.msra.mxu0 0.0
    %1341 = vmatprep.subr.mxu0 0.0
    %1342 = vmatpush1.msra.mxu0 0.0
    %1343 = vmatprep.subr.mxu0 0.0
    %1344 = vmatpush1.msra.mxu0 0.0
    %1345 = vmatprep.subr.mxu0 0.0
    %1346 = vmatpush1.msra.mxu0 0.0
    %1347 = vmatprep.subr.mxu0 0.0
    %1348 = vmatpush1.msra.mxu0 0.0
    %1349 = vmatprep.subr.mxu0 0.0
    %1350 = vmatpush1.msra.mxu0 0.0
    %1351 = vmatprep.subr.mxu0 0.0
    %1352 = vmatpush1.msra.mxu0 0.0
    %1353 = vmatprep.subr.mxu0 0.0
    %1354 = vmatpush1.msra.mxu0 0.0
    %1355 = vmatprep.subr.mxu0 0.0
    %1356 = vmatpush1.msra.mxu0 0.0
    %1357 = vmatprep.subr.mxu0 0.0
    %1358 = vmatpush1.msra.mxu0 0.0
    %1359 = vmatprep.mubr.f32.mxu0 0.0
    %v1360 = vand.u32 %v759, 4294901760
    %1361 = vmatmul.mubr.f32.gmra.mrb[0].mxu0 %v1360
    %v1362 = vpop.f32.mrb[0].mxu0
    %v1363 = vadd.f32 %v1270, %v1362
    %v1364 = vpop.f32.mrb[0].mxu0
    %1365 = vmatprep.mubr.f32.mxu0 0.0
    %v1366 = vand.u32 %v762, 4294901760
    %1367 = vmatmul.mubr.f32.gmra.mrb[0].mxu0 %v1366
    %v1368 = vpop.f32.mrb[0].mxu0
    %v1369 = vadd.f32 %v1276, %v1368
    %v1370 = vpop.f32.mrb[0].mxu0
    %1371 = vmatprep.mubr.f32.mxu0 0.0
    %v1372 = vand.u32 %v765, 4294901760
    %1373 = vmatmul.mubr.f32.gmra.mrb[0].mxu0 %v1372
    %v1374 = vpop.f32.mrb[0].mxu0
    %v1375 = vadd.f32 %v1282, %v1374
    %v1376 = vpop.f32.mrb[0].mxu0
    %1377 = vmatprep.mubr.f32.mxu0 0.0
    %v1378 = vand.u32 %v768, 4294901760
    %1379 = vmatmul.mubr.f32.gmra.mrb[0].mxu0 %v1378
    %v1380 = vpop.f32.mrb[0].mxu0
    %v1381 = vadd.f32 %v1288, %v1380
    %v1382 = vpop.f32.mrb[0].mxu0
    %1383 = vdwg.mxu0
    %1385 = vset.pattern.permute.xlu0 0
    %1386 = vperm.xlu0 %1385, %v749
    %v1387 = vpop.permute.xlu0 %1386
    %1390 = vset.pattern.permute.xlu0 0
    %1391 = vperm.xlu0 %1390, %v750
    %v1392 = vpop.permute.xlu0 %1391
    %1395 = vset.pattern.permute.xlu0 0
    %1396 = vperm.xlu0 %1395, %v751
    %v1397 = vpop.permute.xlu0 %1396
    %1400 = vset.pattern.permute.xlu0 0
    %1401 = vperm.xlu0 %1400, %v752
    %v1402 = vpop.permute.xlu0 %1401
    %v1404 = vsub.f32 %v1387, %v1363
    %v1405 = vsub.f32 %v1392, %v1369
    %v1406 = vsub.f32 %v1397, %v1375
    %v1407 = vsub.f32 %v1402, %v1381
    %v1408 = vld [vmem:[%s7] sm:$0xff]
    %v1409 = vld [vmem:[%s7 + $0x8] sm:$0xff]
    %1411 = vset.pattern.permute.xlu0 0
    %1412 = vperm.xlu0 %1411, %v1408
    %v1413 = vpop.permute.xlu0 %1412
    %1416 = vset.pattern.permute.xlu0 0
    %1417 = vperm.xlu0 %1416, %v1409
    %v1418 = vpop.permute.xlu0 %1417
    %v1420 = vld [vmem:[%s5] sm:$0xff]
    %v1421 = vld [vmem:[%s5 + $0x8] sm:$0xff]
    %1423 = vset.pattern.permute.xlu0 0
    %1424 = vperm.xlu0 %1423, %v1420
    %v1425 = vpop.permute.xlu0 %1424
    %1428 = vset.pattern.permute.xlu0 0
    %1429 = vperm.xlu0 %1428, %v1421
    %v1430 = vpop.permute.xlu0 %1429
    %1432 = vset.pattern.permute.xlu0 1
    %1433 = vperm.xlu0 %1432, %v1420
    %v1434 = vpop.permute.xlu0 %1433
    %1436 = vset.pattern.permute.xlu0 1
    %1437 = vperm.xlu0 %1436, %v1421
    %v1438 = vpop.permute.xlu0 %1437
    %1440 = vset.pattern.permute.xlu0 2
    %1441 = vperm.xlu0 %1440, %v1420
    %v1442 = vpop.permute.xlu0 %1441
    %1444 = vset.pattern.permute.xlu0 2
    %1445 = vperm.xlu0 %1444, %v1421
    %v1446 = vpop.permute.xlu0 %1445
    %1448 = vset.pattern.permute.xlu0 3
    %1449 = vperm.xlu0 %1448, %v1420
    %v1450 = vpop.permute.xlu0 %1449
    %1452 = vset.pattern.permute.xlu0 3
    %1453 = vperm.xlu0 %1452, %v1421
    %v1454 = vpop.permute.xlu0 %1453
    %1456 = vset.pattern.permute.xlu0 4
    %1457 = vperm.xlu0 %1456, %v1420
    %v1458 = vpop.permute.xlu0 %1457
    %1460 = vset.pattern.permute.xlu0 4
    %1461 = vperm.xlu0 %1460, %v1421
    %v1462 = vpop.permute.xlu0 %1461
    %1464 = vset.pattern.permute.xlu0 5
    %1465 = vperm.xlu0 %1464, %v1420
    %v1466 = vpop.permute.xlu0 %1465
    %1468 = vset.pattern.permute.xlu0 5
    %1469 = vperm.xlu0 %1468, %v1421
    %v1470 = vpop.permute.xlu0 %1469
    %1472 = vset.pattern.permute.xlu0 6
    %1473 = vperm.xlu0 %1472, %v1420
    %v1474 = vpop.permute.xlu0 %1473
    %1476 = vset.pattern.permute.xlu0 6
    %1477 = vperm.xlu0 %1476, %v1421
    %v1478 = vpop.permute.xlu0 %1477
    %1480 = vset.pattern.permute.xlu0 7
    %1481 = vperm.xlu0 %1480, %v1420
    %v1482 = vpop.permute.xlu0 %1481
    %1484 = vset.pattern.permute.xlu0 7
    %1485 = vperm.xlu0 %1484, %v1421
    %v1486 = vpop.permute.xlu0 %1485
    %1488 = vset.pattern.permute.xlu0 8
    %1489 = vperm.xlu0 %1488, %v1420
    %v1490 = vpop.permute.xlu0 %1489
    %1492 = vset.pattern.permute.xlu0 8
    %1493 = vperm.xlu0 %1492, %v1421
    %v1494 = vpop.permute.xlu0 %1493
    %1496 = vset.pattern.permute.xlu0 9
    %1497 = vperm.xlu0 %1496, %v1420
    %v1498 = vpop.permute.xlu0 %1497
    %1500 = vset.pattern.permute.xlu0 9
    %1501 = vperm.xlu0 %1500, %v1421
    %v1502 = vpop.permute.xlu0 %1501
    %1504 = vset.pattern.permute.xlu0 10
    %1505 = vperm.xlu0 %1504, %v1420
    %v1506 = vpop.permute.xlu0 %1505
    %1508 = vset.pattern.permute.xlu0 10
    %1509 = vperm.xlu0 %1508, %v1421
    %v1510 = vpop.permute.xlu0 %1509
    %1512 = vset.pattern.permute.xlu0 11
    %1513 = vperm.xlu0 %1512, %v1420
    %v1514 = vpop.permute.xlu0 %1513
    %1516 = vset.pattern.permute.xlu0 11
    %1517 = vperm.xlu0 %1516, %v1421
    %v1518 = vpop.permute.xlu0 %1517
    %1520 = vset.pattern.permute.xlu0 12
    %1521 = vperm.xlu0 %1520, %v1420
    %v1522 = vpop.permute.xlu0 %1521
    %1524 = vset.pattern.permute.xlu0 12
    %1525 = vperm.xlu0 %1524, %v1421
    %v1526 = vpop.permute.xlu0 %1525
    %1528 = vset.pattern.permute.xlu0 13
    %1529 = vperm.xlu0 %1528, %v1420
    %v1530 = vpop.permute.xlu0 %1529
    %1532 = vset.pattern.permute.xlu0 13
    %1533 = vperm.xlu0 %1532, %v1421
    %v1534 = vpop.permute.xlu0 %1533
    %1536 = vset.pattern.permute.xlu0 14
    %1537 = vperm.xlu0 %1536, %v1420
    %v1538 = vpop.permute.xlu0 %1537
    %1540 = vset.pattern.permute.xlu0 14
    %1541 = vperm.xlu0 %1540, %v1421
    %v1542 = vpop.permute.xlu0 %1541
    %1544 = vset.pattern.permute.xlu0 15
    %1545 = vperm.xlu0 %1544, %v1420
    %v1546 = vpop.permute.xlu0 %1545
    %1548 = vset.pattern.permute.xlu0 15
    %1549 = vperm.xlu0 %1548, %v1421
    %v1550 = vpop.permute.xlu0 %1549
    %v1552 = vsub.f32 0.0, %v1418
    %v1553 = vadd.f32 %v1552, 0.0
    %v1554 = vmul.f32 %v1425, 0.0
    %v1555 = vmul.f32 %v1430, 0.0
    %v1556 = vsub.f32 %v1404, %v1554
    %v1557 = vsub.f32 %v1405, %v1555
    %v1558 = vmul.f32 %v1434, 0.0
    %v1559 = vmul.f32 %v1438, 0.0
    %v1560 = vsub.f32 %v1556, %v1558
    %v1561 = vsub.f32 %v1557, %v1559
    %v1562 = vmul.f32 %v1442, 0.0
    %v1563 = vmul.f32 %v1446, 0.0
    %v1564 = vsub.f32 %v1560, %v1562
    %v1565 = vsub.f32 %v1561, %v1563
    %v1566 = vmul.f32 %v1450, 0.0
    %v1567 = vmul.f32 %v1454, 0.0
    %v1568 = vsub.f32 %v1564, %v1566
    %v1569 = vsub.f32 %v1565, %v1567
    %v1570 = vmul.f32 %v1458, 0.0
    %v1571 = vmul.f32 %v1462, 0.0
    %v1572 = vsub.f32 %v1568, %v1570
    %v1573 = vsub.f32 %v1569, %v1571
    %v1574 = vmul.f32 %v1466, 0.0
    %v1575 = vmul.f32 %v1470, 0.0
    %v1576 = vsub.f32 %v1572, %v1574
    %v1577 = vsub.f32 %v1573, %v1575
    %v1578 = vmul.f32 %v1474, 0.0
    %v1579 = vmul.f32 %v1478, 0.0
    %v1580 = vsub.f32 %v1576, %v1578
    %v1581 = vsub.f32 %v1577, %v1579
    %v1582 = vmul.f32 %v1482, 0.0
    %v1583 = vmul.f32 %v1486, 0.0
    %v1584 = vsub.f32 %v1580, %v1582
    %v1585 = vsub.f32 %v1581, %v1583
    %v1586 = vlaneseq
    %v1587 = vshrl.u32 %v1586, 7
    %v1588 = vsub.s32 0, %v1587
    %v1589 = vrot.slane %v1553, %v1588
    %v1590 = vmul.f32 %v1490, %v1589
    %v1591 = vmul.f32 %v1494, %v1589
    %v1592 = vsub.f32 %v1584, %v1590
    %v1593 = vsub.f32 %v1585, %v1591
    %v1594 = vlaneseq
    %v1595 = vshrl.u32 %v1594, 7
    %v1596 = vsub.s32 1, %v1595
    %v1597 = vrot.slane %v1553, %v1596
    %v1598 = vmul.f32 %v1498, %v1597
    %v1599 = vmul.f32 %v1502, %v1597
    %v1600 = vsub.f32 %v1592, %v1598
    %v1601 = vsub.f32 %v1593, %v1599
    %v1602 = vlaneseq
    %v1603 = vshrl.u32 %v1602, 7
    %v1604 = vsub.s32 2, %v1603
    %v1605 = vrot.slane %v1553, %v1604
    %v1606 = vmul.f32 %v1506, %v1605
    %v1607 = vmul.f32 %v1510, %v1605
    %v1608 = vsub.f32 %v1600, %v1606
    %v1609 = vsub.f32 %v1601, %v1607
    %v1610 = vlaneseq
    %v1611 = vshrl.u32 %v1610, 7
    %v1612 = vsub.s32 3, %v1611
    %v1613 = vrot.slane %v1553, %v1612
    %v1614 = vmul.f32 %v1514, %v1613
    %v1615 = vmul.f32 %v1518, %v1613
    %v1616 = vsub.f32 %v1608, %v1614
    %v1617 = vsub.f32 %v1609, %v1615
    %v1618 = vlaneseq
    %v1619 = vshrl.u32 %v1618, 7
    %v1620 = vsub.s32 4, %v1619
    %v1621 = vrot.slane %v1553, %v1620
    %v1622 = vmul.f32 %v1522, %v1621
    %v1623 = vmul.f32 %v1526, %v1621
    %v1624 = vsub.f32 %v1616, %v1622
    %v1625 = vsub.f32 %v1617, %v1623
    %v1626 = vlaneseq
    %v1627 = vshrl.u32 %v1626, 7
    %v1628 = vsub.s32 5, %v1627
    %v1629 = vrot.slane %v1553, %v1628
    %v1630 = vmul.f32 %v1530, %v1629
    %v1631 = vmul.f32 %v1534, %v1629
    %v1632 = vsub.f32 %v1624, %v1630
    %v1633 = vsub.f32 %v1625, %v1631
    %v1634 = vlaneseq
    %v1635 = vshrl.u32 %v1634, 7
    %v1636 = vsub.s32 6, %v1635
    %v1637 = vrot.slane %v1553, %v1636
    %v1638 = vmul.f32 %v1538, %v1637
    %v1639 = vmul.f32 %v1542, %v1637
    %v1640 = vsub.f32 %v1632, %v1638
    %v1641 = vsub.f32 %v1633, %v1639
    %v1642 = vlaneseq
    %v1643 = vshrl.u32 %v1642, 7
    %v1644 = vsub.s32 7, %v1643
    %v1645 = vrot.slane %v1553, %v1644
    %v1646 = vmul.f32 %v1546, %v1645
    %v1647 = vmul.f32 %v1550, %v1645
    %v1648 = vsub.f32 %v1640, %v1646
    %v1649 = vsub.f32 %v1641, %v1647
    %v1650 = vsub.f32 %v1649, %v1418
    %v1651 = vsub.f32 -0.0, %v1650
    %v1652 = vmax.f32 %v1651, 0.0
    %v1653 = vsub.f32 %v1648, %v1413
    %v1654 = vadd.f32 %v1653, 0.0
    %v1655 = vadd.f32 %v1649, %v1652
    %v1656 = vsub.f32 %v1655, %v1418
    %v1657 = vadd.f32 %v1656, 0.0
    %v1658 = vsub.f32 %v1652, %v1418
    %v1659 = vadd.f32 %v1657, %v1658
    %v1660 = vlaneseq
    %v1661 = vshrl.u32 %v1660, 7
    %v1662 = vsub.s32 0, %v1661
    %v1663 = vrot.slane %v1654, %v1662
    %v1664 = vmul.f32 %v1425, %v1663
    %v1665 = vmul.f32 %v1430, %v1663
    %v1666 = vsub.f32 %v1404, %v1664
    %v1667 = vsub.f32 %v1405, %v1665
    %v1668 = vlaneseq
    %v1669 = vshrl.u32 %v1668, 7
    %v1670 = vsub.s32 1, %v1669
    %v1671 = vrot.slane %v1654, %v1670
    %v1672 = vmul.f32 %v1434, %v1671
    %v1673 = vmul.f32 %v1438, %v1671
    %v1674 = vsub.f32 %v1666, %v1672
    %v1675 = vsub.f32 %v1667, %v1673
    %v1676 = vlaneseq
    %v1677 = vshrl.u32 %v1676, 7
    %v1678 = vsub.s32 2, %v1677
    %v1679 = vrot.slane %v1654, %v1678
    %v1680 = vmul.f32 %v1442, %v1679
    %v1681 = vmul.f32 %v1446, %v1679
    %v1682 = vsub.f32 %v1674, %v1680
    %v1683 = vsub.f32 %v1675, %v1681
    %v1684 = vlaneseq
    %v1685 = vshrl.u32 %v1684, 7
    %v1686 = vsub.s32 3, %v1685
    %v1687 = vrot.slane %v1654, %v1686
    %v1688 = vmul.f32 %v1450, %v1687
    %v1689 = vmul.f32 %v1454, %v1687
    %v1690 = vsub.f32 %v1682, %v1688
    %v1691 = vsub.f32 %v1683, %v1689
    %v1692 = vlaneseq
    %v1693 = vshrl.u32 %v1692, 7
    %v1694 = vsub.s32 4, %v1693
    %v1695 = vrot.slane %v1654, %v1694
    %v1696 = vmul.f32 %v1458, %v1695
    %v1697 = vmul.f32 %v1462, %v1695
    %v1698 = vsub.f32 %v1690, %v1696
    %v1699 = vsub.f32 %v1691, %v1697
    %v1700 = vlaneseq
    %v1701 = vshrl.u32 %v1700, 7
    %v1702 = vsub.s32 5, %v1701
    %v1703 = vrot.slane %v1654, %v1702
    %v1704 = vmul.f32 %v1466, %v1703
    %v1705 = vmul.f32 %v1470, %v1703
    %v1706 = vsub.f32 %v1698, %v1704
    %v1707 = vsub.f32 %v1699, %v1705
    %v1708 = vlaneseq
    %v1709 = vshrl.u32 %v1708, 7
    %v1710 = vsub.s32 6, %v1709
    %v1711 = vrot.slane %v1654, %v1710
    %v1712 = vmul.f32 %v1474, %v1711
    %v1713 = vmul.f32 %v1478, %v1711
    %v1714 = vsub.f32 %v1706, %v1712
    %v1715 = vsub.f32 %v1707, %v1713
    %v1716 = vlaneseq
    %v1717 = vshrl.u32 %v1716, 7
    %v1718 = vsub.s32 7, %v1717
    %v1719 = vrot.slane %v1654, %v1718
    %v1720 = vmul.f32 %v1482, %v1719
    %v1721 = vmul.f32 %v1486, %v1719
    %v1722 = vsub.f32 %v1714, %v1720
    %v1723 = vsub.f32 %v1715, %v1721
    %v1724 = vlaneseq
    %v1725 = vshrl.u32 %v1724, 7
    %v1726 = vsub.s32 0, %v1725
    %v1727 = vrot.slane %v1659, %v1726
    %v1728 = vmul.f32 %v1490, %v1727
    %v1729 = vmul.f32 %v1494, %v1727
    %v1730 = vsub.f32 %v1722, %v1728
    %v1731 = vsub.f32 %v1723, %v1729
    %v1732 = vlaneseq
    %v1733 = vshrl.u32 %v1732, 7
    %v1734 = vsub.s32 1, %v1733
    %v1735 = vrot.slane %v1659, %v1734
    %v1736 = vmul.f32 %v1498, %v1735
    %v1737 = vmul.f32 %v1502, %v1735
    %v1738 = vsub.f32 %v1730, %v1736
    %v1739 = vsub.f32 %v1731, %v1737
    %v1740 = vlaneseq
    %v1741 = vshrl.u32 %v1740, 7
    %v1742 = vsub.s32 2, %v1741
    %v1743 = vrot.slane %v1659, %v1742
    %v1744 = vmul.f32 %v1506, %v1743
    %v1745 = vmul.f32 %v1510, %v1743
    %v1746 = vsub.f32 %v1738, %v1744
    %v1747 = vsub.f32 %v1739, %v1745
    %v1748 = vlaneseq
    %v1749 = vshrl.u32 %v1748, 7
    %v1750 = vsub.s32 3, %v1749
    %v1751 = vrot.slane %v1659, %v1750
    %v1752 = vmul.f32 %v1514, %v1751
    %v1753 = vmul.f32 %v1518, %v1751
    %v1754 = vsub.f32 %v1746, %v1752
    %v1755 = vsub.f32 %v1747, %v1753
    %v1756 = vlaneseq
    %v1757 = vshrl.u32 %v1756, 7
    %v1758 = vsub.s32 4, %v1757
    %v1759 = vrot.slane %v1659, %v1758
    %v1760 = vmul.f32 %v1522, %v1759
    %v1761 = vmul.f32 %v1526, %v1759
    %v1762 = vsub.f32 %v1754, %v1760
    %v1763 = vsub.f32 %v1755, %v1761
    %v1764 = vlaneseq
    %v1765 = vshrl.u32 %v1764, 7
    %v1766 = vsub.s32 5, %v1765
    %v1767 = vrot.slane %v1659, %v1766
    %v1768 = vmul.f32 %v1530, %v1767
    %v1769 = vmul.f32 %v1534, %v1767
    %v1770 = vsub.f32 %v1762, %v1768
    %v1771 = vsub.f32 %v1763, %v1769
    %v1772 = vlaneseq
    %v1773 = vshrl.u32 %v1772, 7
    %v1774 = vsub.s32 6, %v1773
    %v1775 = vrot.slane %v1659, %v1774
    %v1776 = vmul.f32 %v1538, %v1775
    %v1777 = vmul.f32 %v1542, %v1775
    %v1778 = vsub.f32 %v1770, %v1776
    %v1779 = vsub.f32 %v1771, %v1777
    %v1780 = vlaneseq
    %v1781 = vshrl.u32 %v1780, 7
    %v1782 = vsub.s32 7, %v1781
    %v1783 = vrot.slane %v1659, %v1782
    %v1784 = vmul.f32 %v1546, %v1783
    %v1785 = vmul.f32 %v1550, %v1783
    %v1786 = vsub.f32 %v1778, %v1784
    %v1787 = vsub.f32 %v1779, %v1785
    %v1788 = vmul.f32 %v1657, -1.0
    %v1789 = vsub.f32 %v1787, %v1418
    %v1790 = vsub.f32 %v1788, %v1789
    %v1791 = vmax.f32 %v1790, 0.0
    %v1792 = vsub.f32 %v1786, %v1413
    %v1793 = vadd.f32 %v1654, %v1792
    %v1794 = vadd.f32 %v1787, %v1791
    %v1795 = vsub.f32 %v1794, %v1418
    %v1796 = vadd.f32 %v1657, %v1795
    %v1797 = vsub.f32 %v1791, %v1418
    %v1798 = vadd.f32 %v1796, %v1797
    %v1799 = vlaneseq
    %v1800 = vshrl.u32 %v1799, 7
    %v1801 = vsub.s32 0, %v1800
    %v1802 = vrot.slane %v1793, %v1801
    %v1803 = vmul.f32 %v1425, %v1802
    %v1804 = vmul.f32 %v1430, %v1802
    %v1805 = vsub.f32 %v1404, %v1803
    %v1806 = vsub.f32 %v1405, %v1804
    %v1807 = vlaneseq
    %v1808 = vshrl.u32 %v1807, 7
    %v1809 = vsub.s32 1, %v1808
    %v1810 = vrot.slane %v1793, %v1809
    %v1811 = vmul.f32 %v1434, %v1810
    %v1812 = vmul.f32 %v1438, %v1810
    %v1813 = vsub.f32 %v1805, %v1811
    %v1814 = vsub.f32 %v1806, %v1812
    %v1815 = vlaneseq
    %v1816 = vshrl.u32 %v1815, 7
    %v1817 = vsub.s32 2, %v1816
    %v1818 = vrot.slane %v1793, %v1817
    %v1819 = vmul.f32 %v1442, %v1818
    %v1820 = vmul.f32 %v1446, %v1818
    %v1821 = vsub.f32 %v1813, %v1819
    %v1822 = vsub.f32 %v1814, %v1820
    %v1823 = vlaneseq
    %v1824 = vshrl.u32 %v1823, 7
    %v1825 = vsub.s32 3, %v1824
    %v1826 = vrot.slane %v1793, %v1825
    %v1827 = vmul.f32 %v1450, %v1826
    %v1828 = vmul.f32 %v1454, %v1826
    %v1829 = vsub.f32 %v1821, %v1827
    %v1830 = vsub.f32 %v1822, %v1828
    %v1831 = vlaneseq
    %v1832 = vshrl.u32 %v1831, 7
    %v1833 = vsub.s32 4, %v1832
    %v1834 = vrot.slane %v1793, %v1833
    %v1835 = vmul.f32 %v1458, %v1834
    %v1836 = vmul.f32 %v1462, %v1834
    %v1837 = vsub.f32 %v1829, %v1835
    %v1838 = vsub.f32 %v1830, %v1836
    %v1839 = vlaneseq
    %v1840 = vshrl.u32 %v1839, 7
    %v1841 = vsub.s32 5, %v1840
    %v1842 = vrot.slane %v1793, %v1841
    %v1843 = vmul.f32 %v1466, %v1842
    %v1844 = vmul.f32 %v1470, %v1842
    %v1845 = vsub.f32 %v1837, %v1843
    %v1846 = vsub.f32 %v1838, %v1844
    %v1847 = vlaneseq
    %v1848 = vshrl.u32 %v1847, 7
    %v1849 = vsub.s32 6, %v1848
    %v1850 = vrot.slane %v1793, %v1849
    %v1851 = vmul.f32 %v1474, %v1850
    %v1852 = vmul.f32 %v1478, %v1850
    %v1853 = vsub.f32 %v1845, %v1851
    %v1854 = vsub.f32 %v1846, %v1852
    %v1855 = vlaneseq
    %v1856 = vshrl.u32 %v1855, 7
    %v1857 = vsub.s32 7, %v1856
    %v1858 = vrot.slane %v1793, %v1857
    %v1859 = vmul.f32 %v1482, %v1858
    %v1860 = vmul.f32 %v1486, %v1858
    %v1861 = vsub.f32 %v1853, %v1859
    %v1862 = vsub.f32 %v1854, %v1860
    %v1863 = vlaneseq
    %v1864 = vshrl.u32 %v1863, 7
    %v1865 = vsub.s32 0, %v1864
    %v1866 = vrot.slane %v1798, %v1865
    %v1867 = vmul.f32 %v1490, %v1866
    %v1868 = vmul.f32 %v1494, %v1866
    %v1869 = vsub.f32 %v1861, %v1867
    %v1870 = vsub.f32 %v1862, %v1868
    %v1871 = vlaneseq
    %v1872 = vshrl.u32 %v1871, 7
    %v1873 = vsub.s32 1, %v1872
    %v1874 = vrot.slane %v1798, %v1873
    %v1875 = vmul.f32 %v1498, %v1874
    %v1876 = vmul.f32 %v1502, %v1874
    %v1877 = vsub.f32 %v1869, %v1875
    %v1878 = vsub.f32 %v1870, %v1876
    %v1879 = vlaneseq
    %v1880 = vshrl.u32 %v1879, 7
    %v1881 = vsub.s32 2, %v1880
    %v1882 = vrot.slane %v1798, %v1881
    %v1883 = vmul.f32 %v1506, %v1882
    %v1884 = vmul.f32 %v1510, %v1882
    %v1885 = vsub.f32 %v1877, %v1883
    %v1886 = vsub.f32 %v1878, %v1884
    %v1887 = vlaneseq
    %v1888 = vshrl.u32 %v1887, 7
    %v1889 = vsub.s32 3, %v1888
    %v1890 = vrot.slane %v1798, %v1889
    %v1891 = vmul.f32 %v1514, %v1890
    %v1892 = vmul.f32 %v1518, %v1890
    %v1893 = vsub.f32 %v1885, %v1891
    %v1894 = vsub.f32 %v1886, %v1892
    %v1895 = vlaneseq
    %v1896 = vshrl.u32 %v1895, 7
    %v1897 = vsub.s32 4, %v1896
    %v1898 = vrot.slane %v1798, %v1897
    %v1899 = vmul.f32 %v1522, %v1898
    %v1900 = vmul.f32 %v1526, %v1898
    %v1901 = vsub.f32 %v1893, %v1899
    %v1902 = vsub.f32 %v1894, %v1900
    %v1903 = vlaneseq
    %v1904 = vshrl.u32 %v1903, 7
    %v1905 = vsub.s32 5, %v1904
    %v1906 = vrot.slane %v1798, %v1905
    %v1907 = vmul.f32 %v1530, %v1906
    %v1908 = vmul.f32 %v1534, %v1906
    %v1909 = vsub.f32 %v1901, %v1907
    %v1910 = vsub.f32 %v1902, %v1908
    %v1911 = vlaneseq
    %v1912 = vshrl.u32 %v1911, 7
    %v1913 = vsub.s32 6, %v1912
    %v1914 = vrot.slane %v1798, %v1913
    %v1915 = vmul.f32 %v1538, %v1914
    %v1916 = vmul.f32 %v1542, %v1914
    %v1917 = vsub.f32 %v1909, %v1915
    %v1918 = vsub.f32 %v1910, %v1916
    %v1919 = vlaneseq
    %v1920 = vshrl.u32 %v1919, 7
    %v1921 = vsub.s32 7, %v1920
    %v1922 = vrot.slane %v1798, %v1921
    %v1923 = vmul.f32 %v1546, %v1922
    %v1924 = vmul.f32 %v1550, %v1922
    %v1925 = vsub.f32 %v1917, %v1923
    %v1926 = vsub.f32 %v1918, %v1924
    %v1927 = vmul.f32 %v1796, -1.0
    %v1928 = vsub.f32 %v1926, %v1418
    %v1929 = vsub.f32 %v1927, %v1928
    %v1930 = vmax.f32 %v1929, 0.0
    %v1931 = vsub.f32 %v1925, %v1413
    %v1932 = vadd.f32 %v1793, %v1931
    %v1933 = vadd.f32 %v1926, %v1930
    %v1934 = vsub.f32 %v1933, %v1418
    %v1935 = vadd.f32 %v1796, %v1934
    %v1936 = vsub.f32 %v1930, %v1418
    %v1937 = vadd.f32 %v1935, %v1936
    %v1938 = vlaneseq
    %v1939 = vshrl.u32 %v1938, 7
    %v1940 = vsub.s32 0, %v1939
    %v1941 = vrot.slane %v1932, %v1940
    %v1942 = vmul.f32 %v1425, %v1941
    %v1943 = vmul.f32 %v1430, %v1941
    %v1944 = vsub.f32 %v1404, %v1942
    %v1945 = vsub.f32 %v1405, %v1943
    %v1946 = vlaneseq
    %v1947 = vshrl.u32 %v1946, 7
    %v1948 = vsub.s32 1, %v1947
    %v1949 = vrot.slane %v1932, %v1948
    %v1950 = vmul.f32 %v1434, %v1949
    %v1951 = vmul.f32 %v1438, %v1949
    %v1952 = vsub.f32 %v1944, %v1950
    %v1953 = vsub.f32 %v1945, %v1951
    %v1954 = vlaneseq
    %v1955 = vshrl.u32 %v1954, 7
    %v1956 = vsub.s32 2, %v1955
    %v1957 = vrot.slane %v1932, %v1956
    %v1958 = vmul.f32 %v1442, %v1957
    %v1959 = vmul.f32 %v1446, %v1957
    %v1960 = vsub.f32 %v1952, %v1958
    %v1961 = vsub.f32 %v1953, %v1959
    %v1962 = vlaneseq
    %v1963 = vshrl.u32 %v1962, 7
    %v1964 = vsub.s32 3, %v1963
    %v1965 = vrot.slane %v1932, %v1964
    %v1966 = vmul.f32 %v1450, %v1965
    %v1967 = vmul.f32 %v1454, %v1965
    %v1968 = vsub.f32 %v1960, %v1966
    %v1969 = vsub.f32 %v1961, %v1967
    %v1970 = vlaneseq
    %v1971 = vshrl.u32 %v1970, 7
    %v1972 = vsub.s32 4, %v1971
    %v1973 = vrot.slane %v1932, %v1972
    %v1974 = vmul.f32 %v1458, %v1973
    %v1975 = vmul.f32 %v1462, %v1973
    %v1976 = vsub.f32 %v1968, %v1974
    %v1977 = vsub.f32 %v1969, %v1975
    %v1978 = vlaneseq
    %v1979 = vshrl.u32 %v1978, 7
    %v1980 = vsub.s32 5, %v1979
    %v1981 = vrot.slane %v1932, %v1980
    %v1982 = vmul.f32 %v1466, %v1981
    %v1983 = vmul.f32 %v1470, %v1981
    %v1984 = vsub.f32 %v1976, %v1982
    %v1985 = vsub.f32 %v1977, %v1983
    %v1986 = vlaneseq
    %v1987 = vshrl.u32 %v1986, 7
    %v1988 = vsub.s32 6, %v1987
    %v1989 = vrot.slane %v1932, %v1988
    %v1990 = vmul.f32 %v1474, %v1989
    %v1991 = vmul.f32 %v1478, %v1989
    %v1992 = vsub.f32 %v1984, %v1990
    %v1993 = vsub.f32 %v1985, %v1991
    %v1994 = vlaneseq
    %v1995 = vshrl.u32 %v1994, 7
    %v1996 = vsub.s32 7, %v1995
    %v1997 = vrot.slane %v1932, %v1996
    %v1998 = vmul.f32 %v1482, %v1997
    %v1999 = vmul.f32 %v1486, %v1997
    %v2000 = vsub.f32 %v1992, %v1998
    %v2001 = vsub.f32 %v1993, %v1999
    %v2002 = vlaneseq
    %v2003 = vshrl.u32 %v2002, 7
    %v2004 = vsub.s32 0, %v2003
    %v2005 = vrot.slane %v1937, %v2004
    %v2006 = vmul.f32 %v1490, %v2005
    %v2007 = vmul.f32 %v1494, %v2005
    %v2008 = vsub.f32 %v2000, %v2006
    %v2009 = vsub.f32 %v2001, %v2007
    %v2010 = vlaneseq
    %v2011 = vshrl.u32 %v2010, 7
    %v2012 = vsub.s32 1, %v2011
    %v2013 = vrot.slane %v1937, %v2012
    %v2014 = vmul.f32 %v1498, %v2013
    %v2015 = vmul.f32 %v1502, %v2013
    %v2016 = vsub.f32 %v2008, %v2014
    %v2017 = vsub.f32 %v2009, %v2015
    %v2018 = vlaneseq
    %v2019 = vshrl.u32 %v2018, 7
    %v2020 = vsub.s32 2, %v2019
    %v2021 = vrot.slane %v1937, %v2020
    %v2022 = vmul.f32 %v1506, %v2021
    %v2023 = vmul.f32 %v1510, %v2021
    %v2024 = vsub.f32 %v2016, %v2022
    %v2025 = vsub.f32 %v2017, %v2023
    %v2026 = vlaneseq
    %v2027 = vshrl.u32 %v2026, 7
    %v2028 = vsub.s32 3, %v2027
    %v2029 = vrot.slane %v1937, %v2028
    %v2030 = vmul.f32 %v1514, %v2029
    %v2031 = vmul.f32 %v1518, %v2029
    %v2032 = vsub.f32 %v2024, %v2030
    %v2033 = vsub.f32 %v2025, %v2031
    %v2034 = vlaneseq
    %v2035 = vshrl.u32 %v2034, 7
    %v2036 = vsub.s32 4, %v2035
    %v2037 = vrot.slane %v1937, %v2036
    %v2038 = vmul.f32 %v1522, %v2037
    %v2039 = vmul.f32 %v1526, %v2037
    %v2040 = vsub.f32 %v2032, %v2038
    %v2041 = vsub.f32 %v2033, %v2039
    %v2042 = vlaneseq
    %v2043 = vshrl.u32 %v2042, 7
    %v2044 = vsub.s32 5, %v2043
    %v2045 = vrot.slane %v1937, %v2044
    %v2046 = vmul.f32 %v1530, %v2045
    %v2047 = vmul.f32 %v1534, %v2045
    %v2048 = vsub.f32 %v2040, %v2046
    %v2049 = vsub.f32 %v2041, %v2047
    %v2050 = vlaneseq
    %v2051 = vshrl.u32 %v2050, 7
    %v2052 = vsub.s32 6, %v2051
    %v2053 = vrot.slane %v1937, %v2052
    %v2054 = vmul.f32 %v1538, %v2053
    %v2055 = vmul.f32 %v1542, %v2053
    %v2056 = vsub.f32 %v2048, %v2054
    %v2057 = vsub.f32 %v2049, %v2055
    %v2058 = vlaneseq
    %v2059 = vshrl.u32 %v2058, 7
    %v2060 = vsub.s32 7, %v2059
    %v2061 = vrot.slane %v1937, %v2060
    %v2062 = vmul.f32 %v1546, %v2061
    %v2063 = vmul.f32 %v1550, %v2061
    %v2064 = vsub.f32 %v2056, %v2062
    %v2065 = vsub.f32 %v2057, %v2063
    %v2066 = vmul.f32 %v1935, -1.0
    %v2067 = vsub.f32 %v2065, %v1418
    %v2068 = vsub.f32 %v2066, %v2067
    %v2069 = vmax.f32 %v2068, 0.0
    %v2070 = vsub.f32 %v2064, %v1413
    %v2071 = vadd.f32 %v1932, %v2070
    %v2072 = vadd.f32 %v2065, %v2069
    %v2073 = vsub.f32 %v2072, %v1418
    %v2074 = vadd.f32 %v1935, %v2073
    %v2075 = vsub.f32 %v2069, %v1418
    %v2076 = vadd.f32 %v2074, %v2075
    %v2077 = vlaneseq
    %v2078 = vshrl.u32 %v2077, 7
    %v2079 = vsub.s32 0, %v2078
    %v2080 = vrot.slane %v2071, %v2079
    %v2081 = vmul.f32 %v1425, %v2080
    %v2082 = vmul.f32 %v1430, %v2080
    %v2083 = vsub.f32 %v1404, %v2081
    %v2084 = vsub.f32 %v1405, %v2082
    %v2085 = vlaneseq
    %v2086 = vshrl.u32 %v2085, 7
    %v2087 = vsub.s32 1, %v2086
    %v2088 = vrot.slane %v2071, %v2087
    %v2089 = vmul.f32 %v1434, %v2088
    %v2090 = vmul.f32 %v1438, %v2088
    %v2091 = vsub.f32 %v2083, %v2089
    %v2092 = vsub.f32 %v2084, %v2090
    %v2093 = vlaneseq
    %v2094 = vshrl.u32 %v2093, 7
    %v2095 = vsub.s32 2, %v2094
    %v2096 = vrot.slane %v2071, %v2095
    %v2097 = vmul.f32 %v1442, %v2096
    %v2098 = vmul.f32 %v1446, %v2096
    %v2099 = vsub.f32 %v2091, %v2097
    %v2100 = vsub.f32 %v2092, %v2098
    %v2101 = vlaneseq
    %v2102 = vshrl.u32 %v2101, 7
    %v2103 = vsub.s32 3, %v2102
    %v2104 = vrot.slane %v2071, %v2103
    %v2105 = vmul.f32 %v1450, %v2104
    %v2106 = vmul.f32 %v1454, %v2104
    %v2107 = vsub.f32 %v2099, %v2105
    %v2108 = vsub.f32 %v2100, %v2106
    %v2109 = vlaneseq
    %v2110 = vshrl.u32 %v2109, 7
    %v2111 = vsub.s32 4, %v2110
    %v2112 = vrot.slane %v2071, %v2111
    %v2113 = vmul.f32 %v1458, %v2112
    %v2114 = vmul.f32 %v1462, %v2112
    %v2115 = vsub.f32 %v2107, %v2113
    %v2116 = vsub.f32 %v2108, %v2114
    %v2117 = vlaneseq
    %v2118 = vshrl.u32 %v2117, 7
    %v2119 = vsub.s32 5, %v2118
    %v2120 = vrot.slane %v2071, %v2119
    %v2121 = vmul.f32 %v1466, %v2120
    %v2122 = vmul.f32 %v1470, %v2120
    %v2123 = vsub.f32 %v2115, %v2121
    %v2124 = vsub.f32 %v2116, %v2122
    %v2125 = vlaneseq
    %v2126 = vshrl.u32 %v2125, 7
    %v2127 = vsub.s32 6, %v2126
    %v2128 = vrot.slane %v2071, %v2127
    %v2129 = vmul.f32 %v1474, %v2128
    %v2130 = vmul.f32 %v1478, %v2128
    %v2131 = vsub.f32 %v2123, %v2129
    %v2132 = vsub.f32 %v2124, %v2130
    %v2133 = vlaneseq
    %v2134 = vshrl.u32 %v2133, 7
    %v2135 = vsub.s32 7, %v2134
    %v2136 = vrot.slane %v2071, %v2135
    %v2137 = vmul.f32 %v1482, %v2136
    %v2138 = vmul.f32 %v1486, %v2136
    %v2139 = vsub.f32 %v2131, %v2137
    %v2140 = vsub.f32 %v2132, %v2138
    %v2141 = vlaneseq
    %v2142 = vshrl.u32 %v2141, 7
    %v2143 = vsub.s32 0, %v2142
    %v2144 = vrot.slane %v2076, %v2143
    %v2145 = vmul.f32 %v1490, %v2144
    %v2146 = vmul.f32 %v1494, %v2144
    %v2147 = vsub.f32 %v2139, %v2145
    %v2148 = vsub.f32 %v2140, %v2146
    %v2149 = vlaneseq
    %v2150 = vshrl.u32 %v2149, 7
    %v2151 = vsub.s32 1, %v2150
    %v2152 = vrot.slane %v2076, %v2151
    %v2153 = vmul.f32 %v1498, %v2152
    %v2154 = vmul.f32 %v1502, %v2152
    %v2155 = vsub.f32 %v2147, %v2153
    %v2156 = vsub.f32 %v2148, %v2154
    %v2157 = vlaneseq
    %v2158 = vshrl.u32 %v2157, 7
    %v2159 = vsub.s32 2, %v2158
    %v2160 = vrot.slane %v2076, %v2159
    %v2161 = vmul.f32 %v1506, %v2160
    %v2162 = vmul.f32 %v1510, %v2160
    %v2163 = vsub.f32 %v2155, %v2161
    %v2164 = vsub.f32 %v2156, %v2162
    %v2165 = vlaneseq
    %v2166 = vshrl.u32 %v2165, 7
    %v2167 = vsub.s32 3, %v2166
    %v2168 = vrot.slane %v2076, %v2167
    %v2169 = vmul.f32 %v1514, %v2168
    %v2170 = vmul.f32 %v1518, %v2168
    %v2171 = vsub.f32 %v2163, %v2169
    %v2172 = vsub.f32 %v2164, %v2170
    %v2173 = vlaneseq
    %v2174 = vshrl.u32 %v2173, 7
    %v2175 = vsub.s32 4, %v2174
    %v2176 = vrot.slane %v2076, %v2175
    %v2177 = vmul.f32 %v1522, %v2176
    %v2178 = vmul.f32 %v1526, %v2176
    %v2179 = vsub.f32 %v2171, %v2177
    %v2180 = vsub.f32 %v2172, %v2178
    %v2181 = vlaneseq
    %v2182 = vshrl.u32 %v2181, 7
    %v2183 = vsub.s32 5, %v2182
    %v2184 = vrot.slane %v2076, %v2183
    %v2185 = vmul.f32 %v1530, %v2184
    %v2186 = vmul.f32 %v1534, %v2184
    %v2187 = vsub.f32 %v2179, %v2185
    %v2188 = vsub.f32 %v2180, %v2186
    %v2189 = vlaneseq
    %v2190 = vshrl.u32 %v2189, 7
    %v2191 = vsub.s32 6, %v2190
    %v2192 = vrot.slane %v2076, %v2191
    %v2193 = vmul.f32 %v1538, %v2192
    %v2194 = vmul.f32 %v1542, %v2192
    %v2195 = vsub.f32 %v2187, %v2193
    %v2196 = vsub.f32 %v2188, %v2194
    %v2197 = vlaneseq
    %v2198 = vshrl.u32 %v2197, 7
    %v2199 = vsub.s32 7, %v2198
    %v2200 = vrot.slane %v2076, %v2199
    %v2201 = vmul.f32 %v1546, %v2200
    %v2202 = vmul.f32 %v1550, %v2200
    %v2203 = vsub.f32 %v2195, %v2201
    %v2204 = vsub.f32 %v2196, %v2202
    %v2205 = vmul.f32 %v2074, -1.0
    %v2206 = vsub.f32 %v2204, %v1418
    %v2207 = vsub.f32 %v2205, %v2206
    %v2208 = vmax.f32 %v2207, 0.0
    %v2209 = vsub.f32 %v2203, %v1413
    %v2210 = vadd.f32 %v2071, %v2209
    %v2211 = vadd.f32 %v2204, %v2208
    %v2212 = vsub.f32 %v2211, %v1418
    %v2213 = vadd.f32 %v2074, %v2212
    %v2214 = vsub.f32 %v2208, %v1418
    %v2215 = vadd.f32 %v2213, %v2214
    %v2216 = vlaneseq
    %v2217 = vshrl.u32 %v2216, 7
    %v2218 = vsub.s32 0, %v2217
    %v2219 = vrot.slane %v2210, %v2218
    %v2220 = vmul.f32 %v1425, %v2219
    %v2221 = vmul.f32 %v1430, %v2219
    %v2222 = vsub.f32 %v1404, %v2220
    %v2223 = vsub.f32 %v1405, %v2221
    %v2224 = vlaneseq
    %v2225 = vshrl.u32 %v2224, 7
    %v2226 = vsub.s32 1, %v2225
    %v2227 = vrot.slane %v2210, %v2226
    %v2228 = vmul.f32 %v1434, %v2227
    %v2229 = vmul.f32 %v1438, %v2227
    %v2230 = vsub.f32 %v2222, %v2228
    %v2231 = vsub.f32 %v2223, %v2229
    %v2232 = vlaneseq
    %v2233 = vshrl.u32 %v2232, 7
    %v2234 = vsub.s32 2, %v2233
    %v2235 = vrot.slane %v2210, %v2234
    %v2236 = vmul.f32 %v1442, %v2235
    %v2237 = vmul.f32 %v1446, %v2235
    %v2238 = vsub.f32 %v2230, %v2236
    %v2239 = vsub.f32 %v2231, %v2237
    %v2240 = vlaneseq
    %v2241 = vshrl.u32 %v2240, 7
    %v2242 = vsub.s32 3, %v2241
    %v2243 = vrot.slane %v2210, %v2242
    %v2244 = vmul.f32 %v1450, %v2243
    %v2245 = vmul.f32 %v1454, %v2243
    %v2246 = vsub.f32 %v2238, %v2244
    %v2247 = vsub.f32 %v2239, %v2245
    %v2248 = vlaneseq
    %v2249 = vshrl.u32 %v2248, 7
    %v2250 = vsub.s32 4, %v2249
    %v2251 = vrot.slane %v2210, %v2250
    %v2252 = vmul.f32 %v1458, %v2251
    %v2253 = vmul.f32 %v1462, %v2251
    %v2254 = vsub.f32 %v2246, %v2252
    %v2255 = vsub.f32 %v2247, %v2253
    %v2256 = vlaneseq
    %v2257 = vshrl.u32 %v2256, 7
    %v2258 = vsub.s32 5, %v2257
    %v2259 = vrot.slane %v2210, %v2258
    %v2260 = vmul.f32 %v1466, %v2259
    %v2261 = vmul.f32 %v1470, %v2259
    %v2262 = vsub.f32 %v2254, %v2260
    %v2263 = vsub.f32 %v2255, %v2261
    %v2264 = vlaneseq
    %v2265 = vshrl.u32 %v2264, 7
    %v2266 = vsub.s32 6, %v2265
    %v2267 = vrot.slane %v2210, %v2266
    %v2268 = vmul.f32 %v1474, %v2267
    %v2269 = vmul.f32 %v1478, %v2267
    %v2270 = vsub.f32 %v2262, %v2268
    %v2271 = vsub.f32 %v2263, %v2269
    %v2272 = vlaneseq
    %v2273 = vshrl.u32 %v2272, 7
    %v2274 = vsub.s32 7, %v2273
    %v2275 = vrot.slane %v2210, %v2274
    %v2276 = vmul.f32 %v1482, %v2275
    %v2277 = vmul.f32 %v1486, %v2275
    %v2278 = vsub.f32 %v2270, %v2276
    %v2279 = vsub.f32 %v2271, %v2277
    %v2280 = vlaneseq
    %v2281 = vshrl.u32 %v2280, 7
    %v2282 = vsub.s32 0, %v2281
    %v2283 = vrot.slane %v2215, %v2282
    %v2284 = vmul.f32 %v1490, %v2283
    %v2285 = vmul.f32 %v1494, %v2283
    %v2286 = vsub.f32 %v2278, %v2284
    %v2287 = vsub.f32 %v2279, %v2285
    %v2288 = vlaneseq
    %v2289 = vshrl.u32 %v2288, 7
    %v2290 = vsub.s32 1, %v2289
    %v2291 = vrot.slane %v2215, %v2290
    %v2292 = vmul.f32 %v1498, %v2291
    %v2293 = vmul.f32 %v1502, %v2291
    %v2294 = vsub.f32 %v2286, %v2292
    %v2295 = vsub.f32 %v2287, %v2293
    %v2296 = vlaneseq
    %v2297 = vshrl.u32 %v2296, 7
    %v2298 = vsub.s32 2, %v2297
    %v2299 = vrot.slane %v2215, %v2298
    %v2300 = vmul.f32 %v1506, %v2299
    %v2301 = vmul.f32 %v1510, %v2299
    %v2302 = vsub.f32 %v2294, %v2300
    %v2303 = vsub.f32 %v2295, %v2301
    %v2304 = vlaneseq
    %v2305 = vshrl.u32 %v2304, 7
    %v2306 = vsub.s32 3, %v2305
    %v2307 = vrot.slane %v2215, %v2306
    %v2308 = vmul.f32 %v1514, %v2307
    %v2309 = vmul.f32 %v1518, %v2307
    %v2310 = vsub.f32 %v2302, %v2308
    %v2311 = vsub.f32 %v2303, %v2309
    %v2312 = vlaneseq
    %v2313 = vshrl.u32 %v2312, 7
    %v2314 = vsub.s32 4, %v2313
    %v2315 = vrot.slane %v2215, %v2314
    %v2316 = vmul.f32 %v1522, %v2315
    %v2317 = vmul.f32 %v1526, %v2315
    %v2318 = vsub.f32 %v2310, %v2316
    %v2319 = vsub.f32 %v2311, %v2317
    %v2320 = vlaneseq
    %v2321 = vshrl.u32 %v2320, 7
    %v2322 = vsub.s32 5, %v2321
    %v2323 = vrot.slane %v2215, %v2322
    %v2324 = vmul.f32 %v1530, %v2323
    %v2325 = vmul.f32 %v1534, %v2323
    %v2326 = vsub.f32 %v2318, %v2324
    %v2327 = vsub.f32 %v2319, %v2325
    %v2328 = vlaneseq
    %v2329 = vshrl.u32 %v2328, 7
    %v2330 = vsub.s32 6, %v2329
    %v2331 = vrot.slane %v2215, %v2330
    %v2332 = vmul.f32 %v1538, %v2331
    %v2333 = vmul.f32 %v1542, %v2331
    %v2334 = vsub.f32 %v2326, %v2332
    %v2335 = vsub.f32 %v2327, %v2333
    %v2336 = vlaneseq
    %v2337 = vshrl.u32 %v2336, 7
    %v2338 = vsub.s32 7, %v2337
    %v2339 = vrot.slane %v2215, %v2338
    %v2340 = vmul.f32 %v1546, %v2339
    %v2341 = vmul.f32 %v1550, %v2339
    %v2342 = vsub.f32 %v2334, %v2340
    %v2343 = vsub.f32 %v2335, %v2341
    %v2344 = vmul.f32 %v2213, -1.0
    %v2345 = vsub.f32 %v2343, %v1418
    %v2346 = vsub.f32 %v2344, %v2345
    %v2347 = vmax.f32 %v2346, 0.0
    %v2348 = vsub.f32 %v2342, %v1413
    %v2349 = vadd.f32 %v2210, %v2348
    %v2350 = vadd.f32 %v2343, %v2347
    %v2351 = vsub.f32 %v2350, %v1418
    %v2352 = vadd.f32 %v2213, %v2351
    %v2353 = vsub.f32 %v2347, %v1418
    %v2354 = vadd.f32 %v2352, %v2353
    %v2355 = vlaneseq
    %v2356 = vshrl.u32 %v2355, 7
    %v2357 = vsub.s32 0, %v2356
    %v2358 = vrot.slane %v2349, %v2357
    %v2359 = vmul.f32 %v1425, %v2358
    %v2360 = vmul.f32 %v1430, %v2358
    %v2361 = vsub.f32 %v1404, %v2359
    %v2362 = vsub.f32 %v1405, %v2360
    %v2363 = vlaneseq
    %v2364 = vshrl.u32 %v2363, 7
    %v2365 = vsub.s32 1, %v2364
    %v2366 = vrot.slane %v2349, %v2365
    %v2367 = vmul.f32 %v1434, %v2366
    %v2368 = vmul.f32 %v1438, %v2366
    %v2369 = vsub.f32 %v2361, %v2367
    %v2370 = vsub.f32 %v2362, %v2368
    %v2371 = vlaneseq
    %v2372 = vshrl.u32 %v2371, 7
    %v2373 = vsub.s32 2, %v2372
    %v2374 = vrot.slane %v2349, %v2373
    %v2375 = vmul.f32 %v1442, %v2374
    %v2376 = vmul.f32 %v1446, %v2374
    %v2377 = vsub.f32 %v2369, %v2375
    %v2378 = vsub.f32 %v2370, %v2376
    %v2379 = vlaneseq
    %v2380 = vshrl.u32 %v2379, 7
    %v2381 = vsub.s32 3, %v2380
    %v2382 = vrot.slane %v2349, %v2381
    %v2383 = vmul.f32 %v1450, %v2382
    %v2384 = vmul.f32 %v1454, %v2382
    %v2385 = vsub.f32 %v2377, %v2383
    %v2386 = vsub.f32 %v2378, %v2384
    %v2387 = vlaneseq
    %v2388 = vshrl.u32 %v2387, 7
    %v2389 = vsub.s32 4, %v2388
    %v2390 = vrot.slane %v2349, %v2389
    %v2391 = vmul.f32 %v1458, %v2390
    %v2392 = vmul.f32 %v1462, %v2390
    %v2393 = vsub.f32 %v2385, %v2391
    %v2394 = vsub.f32 %v2386, %v2392
    %v2395 = vlaneseq
    %v2396 = vshrl.u32 %v2395, 7
    %v2397 = vsub.s32 5, %v2396
    %v2398 = vrot.slane %v2349, %v2397
    %v2399 = vmul.f32 %v1466, %v2398
    %v2400 = vmul.f32 %v1470, %v2398
    %v2401 = vsub.f32 %v2393, %v2399
    %v2402 = vsub.f32 %v2394, %v2400
    %v2403 = vlaneseq
    %v2404 = vshrl.u32 %v2403, 7
    %v2405 = vsub.s32 6, %v2404
    %v2406 = vrot.slane %v2349, %v2405
    %v2407 = vmul.f32 %v1474, %v2406
    %v2408 = vmul.f32 %v1478, %v2406
    %v2409 = vsub.f32 %v2401, %v2407
    %v2410 = vsub.f32 %v2402, %v2408
    %v2411 = vlaneseq
    %v2412 = vshrl.u32 %v2411, 7
    %v2413 = vsub.s32 7, %v2412
    %v2414 = vrot.slane %v2349, %v2413
    %v2415 = vmul.f32 %v1482, %v2414
    %v2416 = vmul.f32 %v1486, %v2414
    %v2417 = vsub.f32 %v2409, %v2415
    %v2418 = vsub.f32 %v2410, %v2416
    %v2419 = vlaneseq
    %v2420 = vshrl.u32 %v2419, 7
    %v2421 = vsub.s32 0, %v2420
    %v2422 = vrot.slane %v2354, %v2421
    %v2423 = vmul.f32 %v1490, %v2422
    %v2424 = vmul.f32 %v1494, %v2422
    %v2425 = vsub.f32 %v2417, %v2423
    %v2426 = vsub.f32 %v2418, %v2424
    %v2427 = vlaneseq
    %v2428 = vshrl.u32 %v2427, 7
    %v2429 = vsub.s32 1, %v2428
    %v2430 = vrot.slane %v2354, %v2429
    %v2431 = vmul.f32 %v1498, %v2430
    %v2432 = vmul.f32 %v1502, %v2430
    %v2433 = vsub.f32 %v2425, %v2431
    %v2434 = vsub.f32 %v2426, %v2432
    %v2435 = vlaneseq
    %v2436 = vshrl.u32 %v2435, 7
    %v2437 = vsub.s32 2, %v2436
    %v2438 = vrot.slane %v2354, %v2437
    %v2439 = vmul.f32 %v1506, %v2438
    %v2440 = vmul.f32 %v1510, %v2438
    %v2441 = vsub.f32 %v2433, %v2439
    %v2442 = vsub.f32 %v2434, %v2440
    %v2443 = vlaneseq
    %v2444 = vshrl.u32 %v2443, 7
    %v2445 = vsub.s32 3, %v2444
    %v2446 = vrot.slane %v2354, %v2445
    %v2447 = vmul.f32 %v1514, %v2446
    %v2448 = vmul.f32 %v1518, %v2446
    %v2449 = vsub.f32 %v2441, %v2447
    %v2450 = vsub.f32 %v2442, %v2448
    %v2451 = vlaneseq
    %v2452 = vshrl.u32 %v2451, 7
    %v2453 = vsub.s32 4, %v2452
    %v2454 = vrot.slane %v2354, %v2453
    %v2455 = vmul.f32 %v1522, %v2454
    %v2456 = vmul.f32 %v1526, %v2454
    %v2457 = vsub.f32 %v2449, %v2455
    %v2458 = vsub.f32 %v2450, %v2456
    %v2459 = vlaneseq
    %v2460 = vshrl.u32 %v2459, 7
    %v2461 = vsub.s32 5, %v2460
    %v2462 = vrot.slane %v2354, %v2461
    %v2463 = vmul.f32 %v1530, %v2462
    %v2464 = vmul.f32 %v1534, %v2462
    %v2465 = vsub.f32 %v2457, %v2463
    %v2466 = vsub.f32 %v2458, %v2464
    %v2467 = vlaneseq
    %v2468 = vshrl.u32 %v2467, 7
    %v2469 = vsub.s32 6, %v2468
    %v2470 = vrot.slane %v2354, %v2469
    %v2471 = vmul.f32 %v1538, %v2470
    %v2472 = vmul.f32 %v1542, %v2470
    %v2473 = vsub.f32 %v2465, %v2471
    %v2474 = vsub.f32 %v2466, %v2472
    %v2475 = vlaneseq
    %v2476 = vshrl.u32 %v2475, 7
    %v2477 = vsub.s32 7, %v2476
    %v2478 = vrot.slane %v2354, %v2477
    %v2479 = vmul.f32 %v1546, %v2478
    %v2480 = vmul.f32 %v1550, %v2478
    %v2481 = vsub.f32 %v2473, %v2479
    %v2482 = vsub.f32 %v2474, %v2480
    %v2483 = vmul.f32 %v2352, -1.0
    %v2484 = vsub.f32 %v2482, %v1418
    %v2485 = vsub.f32 %v2483, %v2484
    %v2486 = vmax.f32 %v2485, 0.0
    %v2487 = vsub.f32 %v2481, %v1413
    %v2488 = vadd.f32 %v2349, %v2487
    %v2489 = vadd.f32 %v2482, %v2486
    %v2490 = vsub.f32 %v2489, %v1418
    %v2491 = vadd.f32 %v2352, %v2490
    %v2492 = vsub.f32 %v2486, %v1418
    %v2493 = vadd.f32 %v2491, %v2492
    %v2494 = vlaneseq
    %v2495 = vshrl.u32 %v2494, 7
    %v2496 = vsub.s32 0, %v2495
    %v2497 = vrot.slane %v2488, %v2496
    %v2498 = vmul.f32 %v1425, %v2497
    %v2499 = vmul.f32 %v1430, %v2497
    %v2500 = vsub.f32 %v1404, %v2498
    %v2501 = vsub.f32 %v1405, %v2499
    %v2502 = vlaneseq
    %v2503 = vshrl.u32 %v2502, 7
    %v2504 = vsub.s32 1, %v2503
    %v2505 = vrot.slane %v2488, %v2504
    %v2506 = vmul.f32 %v1434, %v2505
    %v2507 = vmul.f32 %v1438, %v2505
    %v2508 = vsub.f32 %v2500, %v2506
    %v2509 = vsub.f32 %v2501, %v2507
    %v2510 = vlaneseq
    %v2511 = vshrl.u32 %v2510, 7
    %v2512 = vsub.s32 2, %v2511
    %v2513 = vrot.slane %v2488, %v2512
    %v2514 = vmul.f32 %v1442, %v2513
    %v2515 = vmul.f32 %v1446, %v2513
    %v2516 = vsub.f32 %v2508, %v2514
    %v2517 = vsub.f32 %v2509, %v2515
    %v2518 = vlaneseq
    %v2519 = vshrl.u32 %v2518, 7
    %v2520 = vsub.s32 3, %v2519
    %v2521 = vrot.slane %v2488, %v2520
    %v2522 = vmul.f32 %v1450, %v2521
    %v2523 = vmul.f32 %v1454, %v2521
    %v2524 = vsub.f32 %v2516, %v2522
    %v2525 = vsub.f32 %v2517, %v2523
    %v2526 = vlaneseq
    %v2527 = vshrl.u32 %v2526, 7
    %v2528 = vsub.s32 4, %v2527
    %v2529 = vrot.slane %v2488, %v2528
    %v2530 = vmul.f32 %v1458, %v2529
    %v2531 = vmul.f32 %v1462, %v2529
    %v2532 = vsub.f32 %v2524, %v2530
    %v2533 = vsub.f32 %v2525, %v2531
    %v2534 = vlaneseq
    %v2535 = vshrl.u32 %v2534, 7
    %v2536 = vsub.s32 5, %v2535
    %v2537 = vrot.slane %v2488, %v2536
    %v2538 = vmul.f32 %v1466, %v2537
    %v2539 = vmul.f32 %v1470, %v2537
    %v2540 = vsub.f32 %v2532, %v2538
    %v2541 = vsub.f32 %v2533, %v2539
    %v2542 = vlaneseq
    %v2543 = vshrl.u32 %v2542, 7
    %v2544 = vsub.s32 6, %v2543
    %v2545 = vrot.slane %v2488, %v2544
    %v2546 = vmul.f32 %v1474, %v2545
    %v2547 = vmul.f32 %v1478, %v2545
    %v2548 = vsub.f32 %v2540, %v2546
    %v2549 = vsub.f32 %v2541, %v2547
    %v2550 = vlaneseq
    %v2551 = vshrl.u32 %v2550, 7
    %v2552 = vsub.s32 7, %v2551
    %v2553 = vrot.slane %v2488, %v2552
    %v2554 = vmul.f32 %v1482, %v2553
    %v2555 = vmul.f32 %v1486, %v2553
    %v2556 = vsub.f32 %v2548, %v2554
    %v2557 = vsub.f32 %v2549, %v2555
    %v2558 = vlaneseq
    %v2559 = vshrl.u32 %v2558, 7
    %v2560 = vsub.s32 0, %v2559
    %v2561 = vrot.slane %v2493, %v2560
    %v2562 = vmul.f32 %v1490, %v2561
    %v2563 = vmul.f32 %v1494, %v2561
    %v2564 = vsub.f32 %v2556, %v2562
    %v2565 = vsub.f32 %v2557, %v2563
    %v2566 = vlaneseq
    %v2567 = vshrl.u32 %v2566, 7
    %v2568 = vsub.s32 1, %v2567
    %v2569 = vrot.slane %v2493, %v2568
    %v2570 = vmul.f32 %v1498, %v2569
    %v2571 = vmul.f32 %v1502, %v2569
    %v2572 = vsub.f32 %v2564, %v2570
    %v2573 = vsub.f32 %v2565, %v2571
    %v2574 = vlaneseq
    %v2575 = vshrl.u32 %v2574, 7
    %v2576 = vsub.s32 2, %v2575
    %v2577 = vrot.slane %v2493, %v2576
    %v2578 = vmul.f32 %v1506, %v2577
    %v2579 = vmul.f32 %v1510, %v2577
    %v2580 = vsub.f32 %v2572, %v2578
    %v2581 = vsub.f32 %v2573, %v2579
    %v2582 = vlaneseq
    %v2583 = vshrl.u32 %v2582, 7
    %v2584 = vsub.s32 3, %v2583
    %v2585 = vrot.slane %v2493, %v2584
    %v2586 = vmul.f32 %v1514, %v2585
    %v2587 = vmul.f32 %v1518, %v2585
    %v2588 = vsub.f32 %v2580, %v2586
    %v2589 = vsub.f32 %v2581, %v2587
    %v2590 = vlaneseq
    %v2591 = vshrl.u32 %v2590, 7
    %v2592 = vsub.s32 4, %v2591
    %v2593 = vrot.slane %v2493, %v2592
    %v2594 = vmul.f32 %v1522, %v2593
    %v2595 = vmul.f32 %v1526, %v2593
    %v2596 = vsub.f32 %v2588, %v2594
    %v2597 = vsub.f32 %v2589, %v2595
    %v2598 = vlaneseq
    %v2599 = vshrl.u32 %v2598, 7
    %v2600 = vsub.s32 5, %v2599
    %v2601 = vrot.slane %v2493, %v2600
    %v2602 = vmul.f32 %v1530, %v2601
    %v2603 = vmul.f32 %v1534, %v2601
    %v2604 = vsub.f32 %v2596, %v2602
    %v2605 = vsub.f32 %v2597, %v2603
    %v2606 = vlaneseq
    %v2607 = vshrl.u32 %v2606, 7
    %v2608 = vsub.s32 6, %v2607
    %v2609 = vrot.slane %v2493, %v2608
    %v2610 = vmul.f32 %v1538, %v2609
    %v2611 = vmul.f32 %v1542, %v2609
    %v2612 = vsub.f32 %v2604, %v2610
    %v2613 = vsub.f32 %v2605, %v2611
    %v2614 = vlaneseq
    %v2615 = vshrl.u32 %v2614, 7
    %v2616 = vsub.s32 7, %v2615
    %v2617 = vrot.slane %v2493, %v2616
    %v2618 = vmul.f32 %v1546, %v2617
    %v2619 = vmul.f32 %v1550, %v2617
    %v2620 = vsub.f32 %v2612, %v2618
    %v2621 = vsub.f32 %v2613, %v2619
    %v2622 = vmul.f32 %v2491, -1.0
    %v2623 = vsub.f32 %v2621, %v1418
    %v2624 = vsub.f32 %v2622, %v2623
    %v2625 = vmax.f32 %v2624, 0.0
    %v2626 = vsub.f32 %v2620, %v1413
    %v2627 = vadd.f32 %v2488, %v2626
    %v2628 = vadd.f32 %v2621, %v2625
    %v2629 = vsub.f32 %v2628, %v1418
    %v2630 = vadd.f32 %v2491, %v2629
    %v2631 = vsub.f32 %v2625, %v1418
    %v2632 = vadd.f32 %v2630, %v2631
    %v2633 = vlaneseq
    %v2634 = vshrl.u32 %v2633, 7
    %v2635 = vsub.s32 0, %v2634
    %v2636 = vrot.slane %v2627, %v2635
    %v2637 = vmul.f32 %v1425, %v2636
    %v2638 = vmul.f32 %v1430, %v2636
    %v2639 = vsub.f32 %v1404, %v2637
    %v2640 = vsub.f32 %v1405, %v2638
    %v2641 = vlaneseq
    %v2642 = vshrl.u32 %v2641, 7
    %v2643 = vsub.s32 1, %v2642
    %v2644 = vrot.slane %v2627, %v2643
    %v2645 = vmul.f32 %v1434, %v2644
    %v2646 = vmul.f32 %v1438, %v2644
    %v2647 = vsub.f32 %v2639, %v2645
    %v2648 = vsub.f32 %v2640, %v2646
    %v2649 = vlaneseq
    %v2650 = vshrl.u32 %v2649, 7
    %v2651 = vsub.s32 2, %v2650
    %v2652 = vrot.slane %v2627, %v2651
    %v2653 = vmul.f32 %v1442, %v2652
    %v2654 = vmul.f32 %v1446, %v2652
    %v2655 = vsub.f32 %v2647, %v2653
    %v2656 = vsub.f32 %v2648, %v2654
    %v2657 = vlaneseq
    %v2658 = vshrl.u32 %v2657, 7
    %v2659 = vsub.s32 3, %v2658
    %v2660 = vrot.slane %v2627, %v2659
    %v2661 = vmul.f32 %v1450, %v2660
    %v2662 = vmul.f32 %v1454, %v2660
    %v2663 = vsub.f32 %v2655, %v2661
    %v2664 = vsub.f32 %v2656, %v2662
    %v2665 = vlaneseq
    %v2666 = vshrl.u32 %v2665, 7
    %v2667 = vsub.s32 4, %v2666
    %v2668 = vrot.slane %v2627, %v2667
    %v2669 = vmul.f32 %v1458, %v2668
    %v2670 = vmul.f32 %v1462, %v2668
    %v2671 = vsub.f32 %v2663, %v2669
    %v2672 = vsub.f32 %v2664, %v2670
    %v2673 = vlaneseq
    %v2674 = vshrl.u32 %v2673, 7
    %v2675 = vsub.s32 5, %v2674
    %v2676 = vrot.slane %v2627, %v2675
    %v2677 = vmul.f32 %v1466, %v2676
    %v2678 = vmul.f32 %v1470, %v2676
    %v2679 = vsub.f32 %v2671, %v2677
    %v2680 = vsub.f32 %v2672, %v2678
    %v2681 = vlaneseq
    %v2682 = vshrl.u32 %v2681, 7
    %v2683 = vsub.s32 6, %v2682
    %v2684 = vrot.slane %v2627, %v2683
    %v2685 = vmul.f32 %v1474, %v2684
    %v2686 = vmul.f32 %v1478, %v2684
    %v2687 = vsub.f32 %v2679, %v2685
    %v2688 = vsub.f32 %v2680, %v2686
    %v2689 = vlaneseq
    %v2690 = vshrl.u32 %v2689, 7
    %v2691 = vsub.s32 7, %v2690
    %v2692 = vrot.slane %v2627, %v2691
    %v2693 = vmul.f32 %v1482, %v2692
    %v2694 = vmul.f32 %v1486, %v2692
    %v2695 = vsub.f32 %v2687, %v2693
    %v2696 = vsub.f32 %v2688, %v2694
    %v2697 = vlaneseq
    %v2698 = vshrl.u32 %v2697, 7
    %v2699 = vsub.s32 0, %v2698
    %v2700 = vrot.slane %v2632, %v2699
    %v2701 = vmul.f32 %v1490, %v2700
    %v2702 = vmul.f32 %v1494, %v2700
    %v2703 = vsub.f32 %v2695, %v2701
    %v2704 = vsub.f32 %v2696, %v2702
    %v2705 = vlaneseq
    %v2706 = vshrl.u32 %v2705, 7
    %v2707 = vsub.s32 1, %v2706
    %v2708 = vrot.slane %v2632, %v2707
    %v2709 = vmul.f32 %v1498, %v2708
    %v2710 = vmul.f32 %v1502, %v2708
    %v2711 = vsub.f32 %v2703, %v2709
    %v2712 = vsub.f32 %v2704, %v2710
    %v2713 = vlaneseq
    %v2714 = vshrl.u32 %v2713, 7
    %v2715 = vsub.s32 2, %v2714
    %v2716 = vrot.slane %v2632, %v2715
    %v2717 = vmul.f32 %v1506, %v2716
    %v2718 = vmul.f32 %v1510, %v2716
    %v2719 = vsub.f32 %v2711, %v2717
    %v2720 = vsub.f32 %v2712, %v2718
    %v2721 = vlaneseq
    %v2722 = vshrl.u32 %v2721, 7
    %v2723 = vsub.s32 3, %v2722
    %v2724 = vrot.slane %v2632, %v2723
    %v2725 = vmul.f32 %v1514, %v2724
    %v2726 = vmul.f32 %v1518, %v2724
    %v2727 = vsub.f32 %v2719, %v2725
    %v2728 = vsub.f32 %v2720, %v2726
    %v2729 = vlaneseq
    %v2730 = vshrl.u32 %v2729, 7
    %v2731 = vsub.s32 4, %v2730
    %v2732 = vrot.slane %v2632, %v2731
    %v2733 = vmul.f32 %v1522, %v2732
    %v2734 = vmul.f32 %v1526, %v2732
    %v2735 = vsub.f32 %v2727, %v2733
    %v2736 = vsub.f32 %v2728, %v2734
    %v2737 = vlaneseq
    %v2738 = vshrl.u32 %v2737, 7
    %v2739 = vsub.s32 5, %v2738
    %v2740 = vrot.slane %v2632, %v2739
    %v2741 = vmul.f32 %v1530, %v2740
    %v2742 = vmul.f32 %v1534, %v2740
    %v2743 = vsub.f32 %v2735, %v2741
    %v2744 = vsub.f32 %v2736, %v2742
    %v2745 = vlaneseq
    %v2746 = vshrl.u32 %v2745, 7
    %v2747 = vsub.s32 6, %v2746
    %v2748 = vrot.slane %v2632, %v2747
    %v2749 = vmul.f32 %v1538, %v2748
    %v2750 = vmul.f32 %v1542, %v2748
    %v2751 = vsub.f32 %v2743, %v2749
    %v2752 = vsub.f32 %v2744, %v2750
    %v2753 = vlaneseq
    %v2754 = vshrl.u32 %v2753, 7
    %v2755 = vsub.s32 7, %v2754
    %v2756 = vrot.slane %v2632, %v2755
    %v2757 = vmul.f32 %v1546, %v2756
    %v2758 = vmul.f32 %v1550, %v2756
    %v2759 = vsub.f32 %v2751, %v2757
    %v2760 = vsub.f32 %v2752, %v2758
    %v2761 = vmul.f32 %v2630, -1.0
    %v2762 = vsub.f32 %v2760, %v1418
    %v2763 = vsub.f32 %v2761, %v2762
    %v2764 = vmax.f32 %v2763, 0.0
    %v2765 = vsub.f32 %v2759, %v1413
    %v2766 = vadd.f32 %v2627, %v2765
    %v2767 = vadd.f32 %v2760, %v2764
    %v2768 = vsub.f32 %v2767, %v1418
    %v2769 = vadd.f32 %v2630, %v2768
    %v2770 = vsub.f32 %v2764, %v1418
    %v2771 = vadd.f32 %v2769, %v2770
    %v2772 = vlaneseq
    %v2773 = vshrl.u32 %v2772, 7
    %v2774 = vsub.s32 0, %v2773
    %v2775 = vrot.slane %v2766, %v2774
    %v2776 = vmul.f32 %v1425, %v2775
    %v2777 = vmul.f32 %v1430, %v2775
    %v2778 = vsub.f32 %v1404, %v2776
    %v2779 = vsub.f32 %v1405, %v2777
    %v2780 = vlaneseq
    %v2781 = vshrl.u32 %v2780, 7
    %v2782 = vsub.s32 1, %v2781
    %v2783 = vrot.slane %v2766, %v2782
    %v2784 = vmul.f32 %v1434, %v2783
    %v2785 = vmul.f32 %v1438, %v2783
    %v2786 = vsub.f32 %v2778, %v2784
    %v2787 = vsub.f32 %v2779, %v2785
    %v2788 = vlaneseq
    %v2789 = vshrl.u32 %v2788, 7
    %v2790 = vsub.s32 2, %v2789
    %v2791 = vrot.slane %v2766, %v2790
    %v2792 = vmul.f32 %v1442, %v2791
    %v2793 = vmul.f32 %v1446, %v2791
    %v2794 = vsub.f32 %v2786, %v2792
    %v2795 = vsub.f32 %v2787, %v2793
    %v2796 = vlaneseq
    %v2797 = vshrl.u32 %v2796, 7
    %v2798 = vsub.s32 3, %v2797
    %v2799 = vrot.slane %v2766, %v2798
    %v2800 = vmul.f32 %v1450, %v2799
    %v2801 = vmul.f32 %v1454, %v2799
    %v2802 = vsub.f32 %v2794, %v2800
    %v2803 = vsub.f32 %v2795, %v2801
    %v2804 = vlaneseq
    %v2805 = vshrl.u32 %v2804, 7
    %v2806 = vsub.s32 4, %v2805
    %v2807 = vrot.slane %v2766, %v2806
    %v2808 = vmul.f32 %v1458, %v2807
    %v2809 = vmul.f32 %v1462, %v2807
    %v2810 = vsub.f32 %v2802, %v2808
    %v2811 = vsub.f32 %v2803, %v2809
    %v2812 = vlaneseq
    %v2813 = vshrl.u32 %v2812, 7
    %v2814 = vsub.s32 5, %v2813
    %v2815 = vrot.slane %v2766, %v2814
    %v2816 = vmul.f32 %v1466, %v2815
    %v2817 = vmul.f32 %v1470, %v2815
    %v2818 = vsub.f32 %v2810, %v2816
    %v2819 = vsub.f32 %v2811, %v2817
    %v2820 = vlaneseq
    %v2821 = vshrl.u32 %v2820, 7
    %v2822 = vsub.s32 6, %v2821
    %v2823 = vrot.slane %v2766, %v2822
    %v2824 = vmul.f32 %v1474, %v2823
    %v2825 = vmul.f32 %v1478, %v2823
    %v2826 = vsub.f32 %v2818, %v2824
    %v2827 = vsub.f32 %v2819, %v2825
    %v2828 = vlaneseq
    %v2829 = vshrl.u32 %v2828, 7
    %v2830 = vsub.s32 7, %v2829
    %v2831 = vrot.slane %v2766, %v2830
    %v2832 = vmul.f32 %v1482, %v2831
    %v2833 = vmul.f32 %v1486, %v2831
    %v2834 = vsub.f32 %v2826, %v2832
    %v2835 = vsub.f32 %v2827, %v2833
    %v2836 = vlaneseq
    %v2837 = vshrl.u32 %v2836, 7
    %v2838 = vsub.s32 0, %v2837
    %v2839 = vrot.slane %v2771, %v2838
    %v2840 = vmul.f32 %v1490, %v2839
    %v2841 = vmul.f32 %v1494, %v2839
    %v2842 = vsub.f32 %v2834, %v2840
    %v2843 = vsub.f32 %v2835, %v2841
    %v2844 = vlaneseq
    %v2845 = vshrl.u32 %v2844, 7
    %v2846 = vsub.s32 1, %v2845
    %v2847 = vrot.slane %v2771, %v2846
    %v2848 = vmul.f32 %v1498, %v2847
    %v2849 = vmul.f32 %v1502, %v2847
    %v2850 = vsub.f32 %v2842, %v2848
    %v2851 = vsub.f32 %v2843, %v2849
    %v2852 = vlaneseq
    %v2853 = vshrl.u32 %v2852, 7
    %v2854 = vsub.s32 2, %v2853
    %v2855 = vrot.slane %v2771, %v2854
    %v2856 = vmul.f32 %v1506, %v2855
    %v2857 = vmul.f32 %v1510, %v2855
    %v2858 = vsub.f32 %v2850, %v2856
    %v2859 = vsub.f32 %v2851, %v2857
    %v2860 = vlaneseq
    %v2861 = vshrl.u32 %v2860, 7
    %v2862 = vsub.s32 3, %v2861
    %v2863 = vrot.slane %v2771, %v2862
    %v2864 = vmul.f32 %v1514, %v2863
    %v2865 = vmul.f32 %v1518, %v2863
    %v2866 = vsub.f32 %v2858, %v2864
    %v2867 = vsub.f32 %v2859, %v2865
    %v2868 = vlaneseq
    %v2869 = vshrl.u32 %v2868, 7
    %v2870 = vsub.s32 4, %v2869
    %v2871 = vrot.slane %v2771, %v2870
    %v2872 = vmul.f32 %v1522, %v2871
    %v2873 = vmul.f32 %v1526, %v2871
    %v2874 = vsub.f32 %v2866, %v2872
    %v2875 = vsub.f32 %v2867, %v2873
    %v2876 = vlaneseq
    %v2877 = vshrl.u32 %v2876, 7
    %v2878 = vsub.s32 5, %v2877
    %v2879 = vrot.slane %v2771, %v2878
    %v2880 = vmul.f32 %v1530, %v2879
    %v2881 = vmul.f32 %v1534, %v2879
    %v2882 = vsub.f32 %v2874, %v2880
    %v2883 = vsub.f32 %v2875, %v2881
    %v2884 = vlaneseq
    %v2885 = vshrl.u32 %v2884, 7
    %v2886 = vsub.s32 6, %v2885
    %v2887 = vrot.slane %v2771, %v2886
    %v2888 = vmul.f32 %v1538, %v2887
    %v2889 = vmul.f32 %v1542, %v2887
    %v2890 = vsub.f32 %v2882, %v2888
    %v2891 = vsub.f32 %v2883, %v2889
    %v2892 = vlaneseq
    %v2893 = vshrl.u32 %v2892, 7
    %v2894 = vsub.s32 7, %v2893
    %v2895 = vrot.slane %v2771, %v2894
    %v2896 = vmul.f32 %v1546, %v2895
    %v2897 = vmul.f32 %v1550, %v2895
    %v2898 = vsub.f32 %v2890, %v2896
    %v2899 = vsub.f32 %v2891, %v2897
    %v2900 = vmul.f32 %v2769, -1.0
    %v2901 = vsub.f32 %v2899, %v1418
    %v2902 = vsub.f32 %v2900, %v2901
    %v2903 = vmax.f32 %v2902, 0.0
    %v2904 = vsub.f32 %v2898, %v1413
    %v2905 = vadd.f32 %v2766, %v2904
    %v2906 = vadd.f32 %v2899, %v2903
    %v2907 = vsub.f32 %v2906, %v1418
    %v2908 = vadd.f32 %v2769, %v2907
    %v2909 = vsub.f32 %v2903, %v1418
    %v2910 = vadd.f32 %v2908, %v2909
    %v2911 = vlaneseq
    %v2912 = vshrl.u32 %v2911, 7
    %v2913 = vsub.s32 0, %v2912
    %v2914 = vrot.slane %v2905, %v2913
    %v2915 = vmul.f32 %v1425, %v2914
    %v2916 = vmul.f32 %v1430, %v2914
    %v2917 = vsub.f32 %v1404, %v2915
    %v2918 = vsub.f32 %v1405, %v2916
    %v2919 = vlaneseq
    %v2920 = vshrl.u32 %v2919, 7
    %v2921 = vsub.s32 1, %v2920
    %v2922 = vrot.slane %v2905, %v2921
    %v2923 = vmul.f32 %v1434, %v2922
    %v2924 = vmul.f32 %v1438, %v2922
    %v2925 = vsub.f32 %v2917, %v2923
    %v2926 = vsub.f32 %v2918, %v2924
    %v2927 = vlaneseq
    %v2928 = vshrl.u32 %v2927, 7
    %v2929 = vsub.s32 2, %v2928
    %v2930 = vrot.slane %v2905, %v2929
    %v2931 = vmul.f32 %v1442, %v2930
    %v2932 = vmul.f32 %v1446, %v2930
    %v2933 = vsub.f32 %v2925, %v2931
    %v2934 = vsub.f32 %v2926, %v2932
    %v2935 = vlaneseq
    %v2936 = vshrl.u32 %v2935, 7
    %v2937 = vsub.s32 3, %v2936
    %v2938 = vrot.slane %v2905, %v2937
    %v2939 = vmul.f32 %v1450, %v2938
    %v2940 = vmul.f32 %v1454, %v2938
    %v2941 = vsub.f32 %v2933, %v2939
    %v2942 = vsub.f32 %v2934, %v2940
    %v2943 = vlaneseq
    %v2944 = vshrl.u32 %v2943, 7
    %v2945 = vsub.s32 4, %v2944
    %v2946 = vrot.slane %v2905, %v2945
    %v2947 = vmul.f32 %v1458, %v2946
    %v2948 = vmul.f32 %v1462, %v2946
    %v2949 = vsub.f32 %v2941, %v2947
    %v2950 = vsub.f32 %v2942, %v2948
    %v2951 = vlaneseq
    %v2952 = vshrl.u32 %v2951, 7
    %v2953 = vsub.s32 5, %v2952
    %v2954 = vrot.slane %v2905, %v2953
    %v2955 = vmul.f32 %v1466, %v2954
    %v2956 = vmul.f32 %v1470, %v2954
    %v2957 = vsub.f32 %v2949, %v2955
    %v2958 = vsub.f32 %v2950, %v2956
    %v2959 = vlaneseq
    %v2960 = vshrl.u32 %v2959, 7
    %v2961 = vsub.s32 6, %v2960
    %v2962 = vrot.slane %v2905, %v2961
    %v2963 = vmul.f32 %v1474, %v2962
    %v2964 = vmul.f32 %v1478, %v2962
    %v2965 = vsub.f32 %v2957, %v2963
    %v2966 = vsub.f32 %v2958, %v2964
    %v2967 = vlaneseq
    %v2968 = vshrl.u32 %v2967, 7
    %v2969 = vsub.s32 7, %v2968
    %v2970 = vrot.slane %v2905, %v2969
    %v2971 = vmul.f32 %v1482, %v2970
    %v2972 = vmul.f32 %v1486, %v2970
    %v2973 = vsub.f32 %v2965, %v2971
    %v2974 = vsub.f32 %v2966, %v2972
    %v2975 = vlaneseq
    %v2976 = vshrl.u32 %v2975, 7
    %v2977 = vsub.s32 0, %v2976
    %v2978 = vrot.slane %v2910, %v2977
    %v2979 = vmul.f32 %v1490, %v2978
    %v2980 = vmul.f32 %v1494, %v2978
    %v2981 = vsub.f32 %v2973, %v2979
    %v2982 = vsub.f32 %v2974, %v2980
    %v2983 = vlaneseq
    %v2984 = vshrl.u32 %v2983, 7
    %v2985 = vsub.s32 1, %v2984
    %v2986 = vrot.slane %v2910, %v2985
    %v2987 = vmul.f32 %v1498, %v2986
    %v2988 = vmul.f32 %v1502, %v2986
    %v2989 = vsub.f32 %v2981, %v2987
    %v2990 = vsub.f32 %v2982, %v2988
    %v2991 = vlaneseq
    %v2992 = vshrl.u32 %v2991, 7
    %v2993 = vsub.s32 2, %v2992
    %v2994 = vrot.slane %v2910, %v2993
    %v2995 = vmul.f32 %v1506, %v2994
    %v2996 = vmul.f32 %v1510, %v2994
    %v2997 = vsub.f32 %v2989, %v2995
    %v2998 = vsub.f32 %v2990, %v2996
    %v2999 = vlaneseq
    %v3000 = vshrl.u32 %v2999, 7
    %v3001 = vsub.s32 3, %v3000
    %v3002 = vrot.slane %v2910, %v3001
    %v3003 = vmul.f32 %v1514, %v3002
    %v3004 = vmul.f32 %v1518, %v3002
    %v3005 = vsub.f32 %v2997, %v3003
    %v3006 = vsub.f32 %v2998, %v3004
    %v3007 = vlaneseq
    %v3008 = vshrl.u32 %v3007, 7
    %v3009 = vsub.s32 4, %v3008
    %v3010 = vrot.slane %v2910, %v3009
    %v3011 = vmul.f32 %v1522, %v3010
    %v3012 = vmul.f32 %v1526, %v3010
    %v3013 = vsub.f32 %v3005, %v3011
    %v3014 = vsub.f32 %v3006, %v3012
    %v3015 = vlaneseq
    %v3016 = vshrl.u32 %v3015, 7
    %v3017 = vsub.s32 5, %v3016
    %v3018 = vrot.slane %v2910, %v3017
    %v3019 = vmul.f32 %v1530, %v3018
    %v3020 = vmul.f32 %v1534, %v3018
    %v3021 = vsub.f32 %v3013, %v3019
    %v3022 = vsub.f32 %v3014, %v3020
    %v3023 = vlaneseq
    %v3024 = vshrl.u32 %v3023, 7
    %v3025 = vsub.s32 6, %v3024
    %v3026 = vrot.slane %v2910, %v3025
    %v3027 = vmul.f32 %v1538, %v3026
    %v3028 = vmul.f32 %v1542, %v3026
    %v3029 = vsub.f32 %v3021, %v3027
    %v3030 = vsub.f32 %v3022, %v3028
    %v3031 = vlaneseq
    %v3032 = vshrl.u32 %v3031, 7
    %v3033 = vsub.s32 7, %v3032
    %v3034 = vrot.slane %v2910, %v3033
    %v3035 = vmul.f32 %v1546, %v3034
    %v3036 = vmul.f32 %v1550, %v3034
    %v3037 = vsub.f32 %v3029, %v3035
    %v3038 = vsub.f32 %v3030, %v3036
    %v3039 = vmul.f32 %v2908, -1.0
    %v3040 = vsub.f32 %v3038, %v1418
    %v3041 = vsub.f32 %v3039, %v3040
    %v3042 = vmax.f32 %v3041, 0.0
    %v3043 = vsub.f32 %v3037, %v1413
    %v3044 = vadd.f32 %v2905, %v3043
    %v3045 = vadd.f32 %v3038, %v3042
    %v3046 = vsub.f32 %v3045, %v1418
    %v3047 = vadd.f32 %v2908, %v3046
    %v3048 = vsub.f32 %v3042, %v1418
    %v3049 = vadd.f32 %v3047, %v3048
    %v3050 = vlaneseq
    %v3051 = vshrl.u32 %v3050, 7
    %v3052 = vsub.s32 0, %v3051
    %v3053 = vrot.slane %v3044, %v3052
    %v3054 = vmul.f32 %v1425, %v3053
    %v3055 = vmul.f32 %v1430, %v3053
    %v3056 = vsub.f32 %v1404, %v3054
    %v3057 = vsub.f32 %v1405, %v3055
    %v3058 = vlaneseq
    %v3059 = vshrl.u32 %v3058, 7
    %v3060 = vsub.s32 1, %v3059
    %v3061 = vrot.slane %v3044, %v3060
    %v3062 = vmul.f32 %v1434, %v3061
    %v3063 = vmul.f32 %v1438, %v3061
    %v3064 = vsub.f32 %v3056, %v3062
    %v3065 = vsub.f32 %v3057, %v3063
    %v3066 = vlaneseq
    %v3067 = vshrl.u32 %v3066, 7
    %v3068 = vsub.s32 2, %v3067
    %v3069 = vrot.slane %v3044, %v3068
    %v3070 = vmul.f32 %v1442, %v3069
    %v3071 = vmul.f32 %v1446, %v3069
    %v3072 = vsub.f32 %v3064, %v3070
    %v3073 = vsub.f32 %v3065, %v3071
    %v3074 = vlaneseq
    %v3075 = vshrl.u32 %v3074, 7
    %v3076 = vsub.s32 3, %v3075
    %v3077 = vrot.slane %v3044, %v3076
    %v3078 = vmul.f32 %v1450, %v3077
    %v3079 = vmul.f32 %v1454, %v3077
    %v3080 = vsub.f32 %v3072, %v3078
    %v3081 = vsub.f32 %v3073, %v3079
    %v3082 = vlaneseq
    %v3083 = vshrl.u32 %v3082, 7
    %v3084 = vsub.s32 4, %v3083
    %v3085 = vrot.slane %v3044, %v3084
    %v3086 = vmul.f32 %v1458, %v3085
    %v3087 = vmul.f32 %v1462, %v3085
    %v3088 = vsub.f32 %v3080, %v3086
    %v3089 = vsub.f32 %v3081, %v3087
    %v3090 = vlaneseq
    %v3091 = vshrl.u32 %v3090, 7
    %v3092 = vsub.s32 5, %v3091
    %v3093 = vrot.slane %v3044, %v3092
    %v3094 = vmul.f32 %v1466, %v3093
    %v3095 = vmul.f32 %v1470, %v3093
    %v3096 = vsub.f32 %v3088, %v3094
    %v3097 = vsub.f32 %v3089, %v3095
    %v3098 = vlaneseq
    %v3099 = vshrl.u32 %v3098, 7
    %v3100 = vsub.s32 6, %v3099
    %v3101 = vrot.slane %v3044, %v3100
    %v3102 = vmul.f32 %v1474, %v3101
    %v3103 = vmul.f32 %v1478, %v3101
    %v3104 = vsub.f32 %v3096, %v3102
    %v3105 = vsub.f32 %v3097, %v3103
    %v3106 = vlaneseq
    %v3107 = vshrl.u32 %v3106, 7
    %v3108 = vsub.s32 7, %v3107
    %v3109 = vrot.slane %v3044, %v3108
    %v3110 = vmul.f32 %v1482, %v3109
    %v3111 = vmul.f32 %v1486, %v3109
    %v3112 = vsub.f32 %v3104, %v3110
    %v3113 = vsub.f32 %v3105, %v3111
    %v3114 = vlaneseq
    %v3115 = vshrl.u32 %v3114, 7
    %v3116 = vsub.s32 0, %v3115
    %v3117 = vrot.slane %v3049, %v3116
    %v3118 = vmul.f32 %v1490, %v3117
    %v3119 = vmul.f32 %v1494, %v3117
    %v3120 = vsub.f32 %v3112, %v3118
    %v3121 = vsub.f32 %v3113, %v3119
    %v3122 = vlaneseq
    %v3123 = vshrl.u32 %v3122, 7
    %v3124 = vsub.s32 1, %v3123
    %v3125 = vrot.slane %v3049, %v3124
    %v3126 = vmul.f32 %v1498, %v3125
    %v3127 = vmul.f32 %v1502, %v3125
    %v3128 = vsub.f32 %v3120, %v3126
    %v3129 = vsub.f32 %v3121, %v3127
    %v3130 = vlaneseq
    %v3131 = vshrl.u32 %v3130, 7
    %v3132 = vsub.s32 2, %v3131
    %v3133 = vrot.slane %v3049, %v3132
    %v3134 = vmul.f32 %v1506, %v3133
    %v3135 = vmul.f32 %v1510, %v3133
    %v3136 = vsub.f32 %v3128, %v3134
    %v3137 = vsub.f32 %v3129, %v3135
    %v3138 = vlaneseq
    %v3139 = vshrl.u32 %v3138, 7
    %v3140 = vsub.s32 3, %v3139
    %v3141 = vrot.slane %v3049, %v3140
    %v3142 = vmul.f32 %v1514, %v3141
    %v3143 = vmul.f32 %v1518, %v3141
    %v3144 = vsub.f32 %v3136, %v3142
    %v3145 = vsub.f32 %v3137, %v3143
    %v3146 = vlaneseq
    %v3147 = vshrl.u32 %v3146, 7
    %v3148 = vsub.s32 4, %v3147
    %v3149 = vrot.slane %v3049, %v3148
    %v3150 = vmul.f32 %v1522, %v3149
    %v3151 = vmul.f32 %v1526, %v3149
    %v3152 = vsub.f32 %v3144, %v3150
    %v3153 = vsub.f32 %v3145, %v3151
    %v3154 = vlaneseq
    %v3155 = vshrl.u32 %v3154, 7
    %v3156 = vsub.s32 5, %v3155
    %v3157 = vrot.slane %v3049, %v3156
    %v3158 = vmul.f32 %v1530, %v3157
    %v3159 = vmul.f32 %v1534, %v3157
    %v3160 = vsub.f32 %v3152, %v3158
    %v3161 = vsub.f32 %v3153, %v3159
    %v3162 = vlaneseq
    %v3163 = vshrl.u32 %v3162, 7
    %v3164 = vsub.s32 6, %v3163
    %v3165 = vrot.slane %v3049, %v3164
    %v3166 = vmul.f32 %v1538, %v3165
    %v3167 = vmul.f32 %v1542, %v3165
    %v3168 = vsub.f32 %v3160, %v3166
    %v3169 = vsub.f32 %v3161, %v3167
    %v3170 = vlaneseq
    %v3171 = vshrl.u32 %v3170, 7
    %v3172 = vsub.s32 7, %v3171
    %v3173 = vrot.slane %v3049, %v3172
    %v3174 = vmul.f32 %v1546, %v3173
    %v3175 = vmul.f32 %v1550, %v3173
    %v3176 = vsub.f32 %v3168, %v3174
    %v3177 = vsub.f32 %v3169, %v3175
    %v3178 = vmul.f32 %v3047, -1.0
    %v3179 = vsub.f32 %v3177, %v1418
    %v3180 = vsub.f32 %v3178, %v3179
    %v3181 = vmax.f32 %v3180, 0.0
    %v3182 = vsub.f32 %v3176, %v1413
    %v3183 = vadd.f32 %v3044, %v3182
    %v3184 = vadd.f32 %v3177, %v3181
    %v3185 = vsub.f32 %v3184, %v1418
    %v3186 = vadd.f32 %v3047, %v3185
    %v3187 = vsub.f32 %v3181, %v1418
    %v3188 = vadd.f32 %v3186, %v3187
    %v3189 = vlaneseq
    %v3190 = vshrl.u32 %v3189, 7
    %v3191 = vsub.s32 0, %v3190
    %v3192 = vrot.slane %v3183, %v3191
    %v3193 = vmul.f32 %v1425, %v3192
    %v3194 = vmul.f32 %v1430, %v3192
    %v3195 = vsub.f32 %v1404, %v3193
    %v3196 = vsub.f32 %v1405, %v3194
    %v3197 = vlaneseq
    %v3198 = vshrl.u32 %v3197, 7
    %v3199 = vsub.s32 1, %v3198
    %v3200 = vrot.slane %v3183, %v3199
    %v3201 = vmul.f32 %v1434, %v3200
    %v3202 = vmul.f32 %v1438, %v3200
    %v3203 = vsub.f32 %v3195, %v3201
    %v3204 = vsub.f32 %v3196, %v3202
    %v3205 = vlaneseq
    %v3206 = vshrl.u32 %v3205, 7
    %v3207 = vsub.s32 2, %v3206
    %v3208 = vrot.slane %v3183, %v3207
    %v3209 = vmul.f32 %v1442, %v3208
    %v3210 = vmul.f32 %v1446, %v3208
    %v3211 = vsub.f32 %v3203, %v3209
    %v3212 = vsub.f32 %v3204, %v3210
    %v3213 = vlaneseq
    %v3214 = vshrl.u32 %v3213, 7
    %v3215 = vsub.s32 3, %v3214
    %v3216 = vrot.slane %v3183, %v3215
    %v3217 = vmul.f32 %v1450, %v3216
    %v3218 = vmul.f32 %v1454, %v3216
    %v3219 = vsub.f32 %v3211, %v3217
    %v3220 = vsub.f32 %v3212, %v3218
    %v3221 = vlaneseq
    %v3222 = vshrl.u32 %v3221, 7
    %v3223 = vsub.s32 4, %v3222
    %v3224 = vrot.slane %v3183, %v3223
    %v3225 = vmul.f32 %v1458, %v3224
    %v3226 = vmul.f32 %v1462, %v3224
    %v3227 = vsub.f32 %v3219, %v3225
    %v3228 = vsub.f32 %v3220, %v3226
    %v3229 = vlaneseq
    %v3230 = vshrl.u32 %v3229, 7
    %v3231 = vsub.s32 5, %v3230
    %v3232 = vrot.slane %v3183, %v3231
    %v3233 = vmul.f32 %v1466, %v3232
    %v3234 = vmul.f32 %v1470, %v3232
    %v3235 = vsub.f32 %v3227, %v3233
    %v3236 = vsub.f32 %v3228, %v3234
    %v3237 = vlaneseq
    %v3238 = vshrl.u32 %v3237, 7
    %v3239 = vsub.s32 6, %v3238
    %v3240 = vrot.slane %v3183, %v3239
    %v3241 = vmul.f32 %v1474, %v3240
    %v3242 = vmul.f32 %v1478, %v3240
    %v3243 = vsub.f32 %v3235, %v3241
    %v3244 = vsub.f32 %v3236, %v3242
    %v3245 = vlaneseq
    %v3246 = vshrl.u32 %v3245, 7
    %v3247 = vsub.s32 7, %v3246
    %v3248 = vrot.slane %v3183, %v3247
    %v3249 = vmul.f32 %v1482, %v3248
    %v3250 = vmul.f32 %v1486, %v3248
    %v3251 = vsub.f32 %v3243, %v3249
    %v3252 = vsub.f32 %v3244, %v3250
    %v3253 = vlaneseq
    %v3254 = vshrl.u32 %v3253, 7
    %v3255 = vsub.s32 0, %v3254
    %v3256 = vrot.slane %v3188, %v3255
    %v3257 = vmul.f32 %v1490, %v3256
    %v3258 = vmul.f32 %v1494, %v3256
    %v3259 = vsub.f32 %v3251, %v3257
    %v3260 = vsub.f32 %v3252, %v3258
    %v3261 = vlaneseq
    %v3262 = vshrl.u32 %v3261, 7
    %v3263 = vsub.s32 1, %v3262
    %v3264 = vrot.slane %v3188, %v3263
    %v3265 = vmul.f32 %v1498, %v3264
    %v3266 = vmul.f32 %v1502, %v3264
    %v3267 = vsub.f32 %v3259, %v3265
    %v3268 = vsub.f32 %v3260, %v3266
    %v3269 = vlaneseq
    %v3270 = vshrl.u32 %v3269, 7
    %v3271 = vsub.s32 2, %v3270
    %v3272 = vrot.slane %v3188, %v3271
    %v3273 = vmul.f32 %v1506, %v3272
    %v3274 = vmul.f32 %v1510, %v3272
    %v3275 = vsub.f32 %v3267, %v3273
    %v3276 = vsub.f32 %v3268, %v3274
    %v3277 = vlaneseq
    %v3278 = vshrl.u32 %v3277, 7
    %v3279 = vsub.s32 3, %v3278
    %v3280 = vrot.slane %v3188, %v3279
    %v3281 = vmul.f32 %v1514, %v3280
    %v3282 = vmul.f32 %v1518, %v3280
    %v3283 = vsub.f32 %v3275, %v3281
    %v3284 = vsub.f32 %v3276, %v3282
    %v3285 = vlaneseq
    %v3286 = vshrl.u32 %v3285, 7
    %v3287 = vsub.s32 4, %v3286
    %v3288 = vrot.slane %v3188, %v3287
    %v3289 = vmul.f32 %v1522, %v3288
    %v3290 = vmul.f32 %v1526, %v3288
    %v3291 = vsub.f32 %v3283, %v3289
    %v3292 = vsub.f32 %v3284, %v3290
    %v3293 = vlaneseq
    %v3294 = vshrl.u32 %v3293, 7
    %v3295 = vsub.s32 5, %v3294
    %v3296 = vrot.slane %v3188, %v3295
    %v3297 = vmul.f32 %v1530, %v3296
    %v3298 = vmul.f32 %v1534, %v3296
    %v3299 = vsub.f32 %v3291, %v3297
    %v3300 = vsub.f32 %v3292, %v3298
    %v3301 = vlaneseq
    %v3302 = vshrl.u32 %v3301, 7
    %v3303 = vsub.s32 6, %v3302
    %v3304 = vrot.slane %v3188, %v3303
    %v3305 = vmul.f32 %v1538, %v3304
    %v3306 = vmul.f32 %v1542, %v3304
    %v3307 = vsub.f32 %v3299, %v3305
    %v3308 = vsub.f32 %v3300, %v3306
    %v3309 = vlaneseq
    %v3310 = vshrl.u32 %v3309, 7
    %v3311 = vsub.s32 7, %v3310
    %v3312 = vrot.slane %v3188, %v3311
    %v3313 = vmul.f32 %v1546, %v3312
    %v3314 = vmul.f32 %v1550, %v3312
    %v3315 = vsub.f32 %v3307, %v3313
    %v3316 = vsub.f32 %v3308, %v3314
    %v3317 = vmul.f32 %v3186, -1.0
    %v3318 = vsub.f32 %v3316, %v1418
    %v3319 = vsub.f32 %v3317, %v3318
    %v3320 = vmax.f32 %v3319, 0.0
    %v3321 = vsub.f32 %v3315, %v1413
    %v3322 = vadd.f32 %v3183, %v3321
    %v3323 = vadd.f32 %v3316, %v3320
    %v3324 = vsub.f32 %v3323, %v1418
    %v3325 = vadd.f32 %v3186, %v3324
    %v3326 = vsub.f32 %v3320, %v1418
    %v3327 = vadd.f32 %v3325, %v3326
    %v3328 = vlaneseq
    %v3329 = vshrl.u32 %v3328, 7
    %v3330 = vsub.s32 0, %v3329
    %v3331 = vrot.slane %v3322, %v3330
    %v3332 = vmul.f32 %v1425, %v3331
    %v3333 = vmul.f32 %v1430, %v3331
    %v3334 = vsub.f32 %v1404, %v3332
    %v3335 = vsub.f32 %v1405, %v3333
    %v3336 = vlaneseq
    %v3337 = vshrl.u32 %v3336, 7
    %v3338 = vsub.s32 1, %v3337
    %v3339 = vrot.slane %v3322, %v3338
    %v3340 = vmul.f32 %v1434, %v3339
    %v3341 = vmul.f32 %v1438, %v3339
    %v3342 = vsub.f32 %v3334, %v3340
    %v3343 = vsub.f32 %v3335, %v3341
    %v3344 = vlaneseq
    %v3345 = vshrl.u32 %v3344, 7
    %v3346 = vsub.s32 2, %v3345
    %v3347 = vrot.slane %v3322, %v3346
    %v3348 = vmul.f32 %v1442, %v3347
    %v3349 = vmul.f32 %v1446, %v3347
    %v3350 = vsub.f32 %v3342, %v3348
    %v3351 = vsub.f32 %v3343, %v3349
    %v3352 = vlaneseq
    %v3353 = vshrl.u32 %v3352, 7
    %v3354 = vsub.s32 3, %v3353
    %v3355 = vrot.slane %v3322, %v3354
    %v3356 = vmul.f32 %v1450, %v3355
    %v3357 = vmul.f32 %v1454, %v3355
    %v3358 = vsub.f32 %v3350, %v3356
    %v3359 = vsub.f32 %v3351, %v3357
    %v3360 = vlaneseq
    %v3361 = vshrl.u32 %v3360, 7
    %v3362 = vsub.s32 4, %v3361
    %v3363 = vrot.slane %v3322, %v3362
    %v3364 = vmul.f32 %v1458, %v3363
    %v3365 = vmul.f32 %v1462, %v3363
    %v3366 = vsub.f32 %v3358, %v3364
    %v3367 = vsub.f32 %v3359, %v3365
    %v3368 = vlaneseq
    %v3369 = vshrl.u32 %v3368, 7
    %v3370 = vsub.s32 5, %v3369
    %v3371 = vrot.slane %v3322, %v3370
    %v3372 = vmul.f32 %v1466, %v3371
    %v3373 = vmul.f32 %v1470, %v3371
    %v3374 = vsub.f32 %v3366, %v3372
    %v3375 = vsub.f32 %v3367, %v3373
    %v3376 = vlaneseq
    %v3377 = vshrl.u32 %v3376, 7
    %v3378 = vsub.s32 6, %v3377
    %v3379 = vrot.slane %v3322, %v3378
    %v3380 = vmul.f32 %v1474, %v3379
    %v3381 = vmul.f32 %v1478, %v3379
    %v3382 = vsub.f32 %v3374, %v3380
    %v3383 = vsub.f32 %v3375, %v3381
    %v3384 = vlaneseq
    %v3385 = vshrl.u32 %v3384, 7
    %v3386 = vsub.s32 7, %v3385
    %v3387 = vrot.slane %v3322, %v3386
    %v3388 = vmul.f32 %v1482, %v3387
    %v3389 = vmul.f32 %v1486, %v3387
    %v3390 = vsub.f32 %v3382, %v3388
    %v3391 = vsub.f32 %v3383, %v3389
    %v3392 = vlaneseq
    %v3393 = vshrl.u32 %v3392, 7
    %v3394 = vsub.s32 0, %v3393
    %v3395 = vrot.slane %v3327, %v3394
    %v3396 = vmul.f32 %v1490, %v3395
    %v3397 = vmul.f32 %v1494, %v3395
    %v3398 = vsub.f32 %v3390, %v3396
    %v3399 = vsub.f32 %v3391, %v3397
    %v3400 = vlaneseq
    %v3401 = vshrl.u32 %v3400, 7
    %v3402 = vsub.s32 1, %v3401
    %v3403 = vrot.slane %v3327, %v3402
    %v3404 = vmul.f32 %v1498, %v3403
    %v3405 = vmul.f32 %v1502, %v3403
    %v3406 = vsub.f32 %v3398, %v3404
    %v3407 = vsub.f32 %v3399, %v3405
    %v3408 = vlaneseq
    %v3409 = vshrl.u32 %v3408, 7
    %v3410 = vsub.s32 2, %v3409
    %v3411 = vrot.slane %v3327, %v3410
    %v3412 = vmul.f32 %v1506, %v3411
    %v3413 = vmul.f32 %v1510, %v3411
    %v3414 = vsub.f32 %v3406, %v3412
    %v3415 = vsub.f32 %v3407, %v3413
    %v3416 = vlaneseq
    %v3417 = vshrl.u32 %v3416, 7
    %v3418 = vsub.s32 3, %v3417
    %v3419 = vrot.slane %v3327, %v3418
    %v3420 = vmul.f32 %v1514, %v3419
    %v3421 = vmul.f32 %v1518, %v3419
    %v3422 = vsub.f32 %v3414, %v3420
    %v3423 = vsub.f32 %v3415, %v3421
    %v3424 = vlaneseq
    %v3425 = vshrl.u32 %v3424, 7
    %v3426 = vsub.s32 4, %v3425
    %v3427 = vrot.slane %v3327, %v3426
    %v3428 = vmul.f32 %v1522, %v3427
    %v3429 = vmul.f32 %v1526, %v3427
    %v3430 = vsub.f32 %v3422, %v3428
    %v3431 = vsub.f32 %v3423, %v3429
    %v3432 = vlaneseq
    %v3433 = vshrl.u32 %v3432, 7
    %v3434 = vsub.s32 5, %v3433
    %v3435 = vrot.slane %v3327, %v3434
    %v3436 = vmul.f32 %v1530, %v3435
    %v3437 = vmul.f32 %v1534, %v3435
    %v3438 = vsub.f32 %v3430, %v3436
    %v3439 = vsub.f32 %v3431, %v3437
    %v3440 = vlaneseq
    %v3441 = vshrl.u32 %v3440, 7
    %v3442 = vsub.s32 6, %v3441
    %v3443 = vrot.slane %v3327, %v3442
    %v3444 = vmul.f32 %v1538, %v3443
    %v3445 = vmul.f32 %v1542, %v3443
    %v3446 = vsub.f32 %v3438, %v3444
    %v3447 = vsub.f32 %v3439, %v3445
    %v3448 = vlaneseq
    %v3449 = vshrl.u32 %v3448, 7
    %v3450 = vsub.s32 7, %v3449
    %v3451 = vrot.slane %v3327, %v3450
    %v3452 = vmul.f32 %v1546, %v3451
    %v3453 = vmul.f32 %v1550, %v3451
    %v3454 = vsub.f32 %v3446, %v3452
    %v3455 = vsub.f32 %v3447, %v3453
    %v3456 = vmul.f32 %v3325, -1.0
    %v3457 = vsub.f32 %v3455, %v1418
    %v3458 = vsub.f32 %v3456, %v3457
    %v3459 = vmax.f32 %v3458, 0.0
    %v3460 = vsub.f32 %v3454, %v1413
    %v3461 = vadd.f32 %v3322, %v3460
    %v3462 = vadd.f32 %v3455, %v3459
    %v3463 = vsub.f32 %v3462, %v1418
    %v3464 = vadd.f32 %v3325, %v3463
    %v3465 = vsub.f32 %v3459, %v1418
    %v3466 = vadd.f32 %v3464, %v3465
    %v3467 = vlaneseq
    %v3468 = vshrl.u32 %v3467, 7
    %v3469 = vsub.s32 0, %v3468
    %v3470 = vrot.slane %v3461, %v3469
    %v3471 = vmul.f32 %v1425, %v3470
    %v3472 = vmul.f32 %v1430, %v3470
    %v3473 = vsub.f32 %v1404, %v3471
    %v3474 = vsub.f32 %v1405, %v3472
    %v3475 = vlaneseq
    %v3476 = vshrl.u32 %v3475, 7
    %v3477 = vsub.s32 1, %v3476
    %v3478 = vrot.slane %v3461, %v3477
    %v3479 = vmul.f32 %v1434, %v3478
    %v3480 = vmul.f32 %v1438, %v3478
    %v3481 = vsub.f32 %v3473, %v3479
    %v3482 = vsub.f32 %v3474, %v3480
    %v3483 = vlaneseq
    %v3484 = vshrl.u32 %v3483, 7
    %v3485 = vsub.s32 2, %v3484
    %v3486 = vrot.slane %v3461, %v3485
    %v3487 = vmul.f32 %v1442, %v3486
    %v3488 = vmul.f32 %v1446, %v3486
    %v3489 = vsub.f32 %v3481, %v3487
    %v3490 = vsub.f32 %v3482, %v3488
    %v3491 = vlaneseq
    %v3492 = vshrl.u32 %v3491, 7
    %v3493 = vsub.s32 3, %v3492
    %v3494 = vrot.slane %v3461, %v3493
    %v3495 = vmul.f32 %v1450, %v3494
    %v3496 = vmul.f32 %v1454, %v3494
    %v3497 = vsub.f32 %v3489, %v3495
    %v3498 = vsub.f32 %v3490, %v3496
    %v3499 = vlaneseq
    %v3500 = vshrl.u32 %v3499, 7
    %v3501 = vsub.s32 4, %v3500
    %v3502 = vrot.slane %v3461, %v3501
    %v3503 = vmul.f32 %v1458, %v3502
    %v3504 = vmul.f32 %v1462, %v3502
    %v3505 = vsub.f32 %v3497, %v3503
    %v3506 = vsub.f32 %v3498, %v3504
    %v3507 = vlaneseq
    %v3508 = vshrl.u32 %v3507, 7
    %v3509 = vsub.s32 5, %v3508
    %v3510 = vrot.slane %v3461, %v3509
    %v3511 = vmul.f32 %v1466, %v3510
    %v3512 = vmul.f32 %v1470, %v3510
    %v3513 = vsub.f32 %v3505, %v3511
    %v3514 = vsub.f32 %v3506, %v3512
    %v3515 = vlaneseq
    %v3516 = vshrl.u32 %v3515, 7
    %v3517 = vsub.s32 6, %v3516
    %v3518 = vrot.slane %v3461, %v3517
    %v3519 = vmul.f32 %v1474, %v3518
    %v3520 = vmul.f32 %v1478, %v3518
    %v3521 = vsub.f32 %v3513, %v3519
    %v3522 = vsub.f32 %v3514, %v3520
    %v3523 = vlaneseq
    %v3524 = vshrl.u32 %v3523, 7
    %v3525 = vsub.s32 7, %v3524
    %v3526 = vrot.slane %v3461, %v3525
    %v3527 = vmul.f32 %v1482, %v3526
    %v3528 = vmul.f32 %v1486, %v3526
    %v3529 = vsub.f32 %v3521, %v3527
    %v3530 = vsub.f32 %v3522, %v3528
    %v3531 = vlaneseq
    %v3532 = vshrl.u32 %v3531, 7
    %v3533 = vsub.s32 0, %v3532
    %v3534 = vrot.slane %v3466, %v3533
    %v3535 = vmul.f32 %v1490, %v3534
    %v3536 = vmul.f32 %v1494, %v3534
    %v3537 = vsub.f32 %v3529, %v3535
    %v3538 = vsub.f32 %v3530, %v3536
    %v3539 = vlaneseq
    %v3540 = vshrl.u32 %v3539, 7
    %v3541 = vsub.s32 1, %v3540
    %v3542 = vrot.slane %v3466, %v3541
    %v3543 = vmul.f32 %v1498, %v3542
    %v3544 = vmul.f32 %v1502, %v3542
    %v3545 = vsub.f32 %v3537, %v3543
    %v3546 = vsub.f32 %v3538, %v3544
    %v3547 = vlaneseq
    %v3548 = vshrl.u32 %v3547, 7
    %v3549 = vsub.s32 2, %v3548
    %v3550 = vrot.slane %v3466, %v3549
    %v3551 = vmul.f32 %v1506, %v3550
    %v3552 = vmul.f32 %v1510, %v3550
    %v3553 = vsub.f32 %v3545, %v3551
    %v3554 = vsub.f32 %v3546, %v3552
    %v3555 = vlaneseq
    %v3556 = vshrl.u32 %v3555, 7
    %v3557 = vsub.s32 3, %v3556
    %v3558 = vrot.slane %v3466, %v3557
    %v3559 = vmul.f32 %v1514, %v3558
    %v3560 = vmul.f32 %v1518, %v3558
    %v3561 = vsub.f32 %v3553, %v3559
    %v3562 = vsub.f32 %v3554, %v3560
    %v3563 = vlaneseq
    %v3564 = vshrl.u32 %v3563, 7
    %v3565 = vsub.s32 4, %v3564
    %v3566 = vrot.slane %v3466, %v3565
    %v3567 = vmul.f32 %v1522, %v3566
    %v3568 = vmul.f32 %v1526, %v3566
    %v3569 = vsub.f32 %v3561, %v3567
    %v3570 = vsub.f32 %v3562, %v3568
    %v3571 = vlaneseq
    %v3572 = vshrl.u32 %v3571, 7
    %v3573 = vsub.s32 5, %v3572
    %v3574 = vrot.slane %v3466, %v3573
    %v3575 = vmul.f32 %v1530, %v3574
    %v3576 = vmul.f32 %v1534, %v3574
    %v3577 = vsub.f32 %v3569, %v3575
    %v3578 = vsub.f32 %v3570, %v3576
    %v3579 = vlaneseq
    %v3580 = vshrl.u32 %v3579, 7
    %v3581 = vsub.s32 6, %v3580
    %v3582 = vrot.slane %v3466, %v3581
    %v3583 = vmul.f32 %v1538, %v3582
    %v3584 = vmul.f32 %v1542, %v3582
    %v3585 = vsub.f32 %v3577, %v3583
    %v3586 = vsub.f32 %v3578, %v3584
    %v3587 = vlaneseq
    %v3588 = vshrl.u32 %v3587, 7
    %v3589 = vsub.s32 7, %v3588
    %v3590 = vrot.slane %v3466, %v3589
    %v3591 = vmul.f32 %v1546, %v3590
    %v3592 = vmul.f32 %v1550, %v3590
    %v3593 = vsub.f32 %v3585, %v3591
    %v3594 = vsub.f32 %v3586, %v3592
    %v3595 = vmul.f32 %v3464, -1.0
    %v3596 = vsub.f32 %v3594, %v1418
    %v3597 = vsub.f32 %v3595, %v3596
    %v3598 = vmax.f32 %v3597, 0.0
    %v3599 = vsub.f32 %v3593, %v1413
    %v3600 = vadd.f32 %v3461, %v3599
    %v3601 = vadd.f32 %v3594, %v3598
    %v3602 = vsub.f32 %v3601, %v1418
    %v3603 = vadd.f32 %v3464, %v3602
    %v3604 = vsub.f32 %v3598, %v1418
    %v3605 = vadd.f32 %v3603, %v3604
    %v3606 = vlaneseq
    %v3607 = vshrl.u32 %v3606, 7
    %v3608 = vsub.s32 0, %v3607
    %v3609 = vrot.slane %v3600, %v3608
    %v3610 = vmul.f32 %v1425, %v3609
    %v3611 = vmul.f32 %v1430, %v3609
    %v3612 = vsub.f32 %v1404, %v3610
    %v3613 = vsub.f32 %v1405, %v3611
    %v3614 = vlaneseq
    %v3615 = vshrl.u32 %v3614, 7
    %v3616 = vsub.s32 1, %v3615
    %v3617 = vrot.slane %v3600, %v3616
    %v3618 = vmul.f32 %v1434, %v3617
    %v3619 = vmul.f32 %v1438, %v3617
    %v3620 = vsub.f32 %v3612, %v3618
    %v3621 = vsub.f32 %v3613, %v3619
    %v3622 = vlaneseq
    %v3623 = vshrl.u32 %v3622, 7
    %v3624 = vsub.s32 2, %v3623
    %v3625 = vrot.slane %v3600, %v3624
    %v3626 = vmul.f32 %v1442, %v3625
    %v3627 = vmul.f32 %v1446, %v3625
    %v3628 = vsub.f32 %v3620, %v3626
    %v3629 = vsub.f32 %v3621, %v3627
    %v3630 = vlaneseq
    %v3631 = vshrl.u32 %v3630, 7
    %v3632 = vsub.s32 3, %v3631
    %v3633 = vrot.slane %v3600, %v3632
    %v3634 = vmul.f32 %v1450, %v3633
    %v3635 = vmul.f32 %v1454, %v3633
    %v3636 = vsub.f32 %v3628, %v3634
    %v3637 = vsub.f32 %v3629, %v3635
    %v3638 = vlaneseq
    %v3639 = vshrl.u32 %v3638, 7
    %v3640 = vsub.s32 4, %v3639
    %v3641 = vrot.slane %v3600, %v3640
    %v3642 = vmul.f32 %v1458, %v3641
    %v3643 = vmul.f32 %v1462, %v3641
    %v3644 = vsub.f32 %v3636, %v3642
    %v3645 = vsub.f32 %v3637, %v3643
    %v3646 = vlaneseq
    %v3647 = vshrl.u32 %v3646, 7
    %v3648 = vsub.s32 5, %v3647
    %v3649 = vrot.slane %v3600, %v3648
    %v3650 = vmul.f32 %v1466, %v3649
    %v3651 = vmul.f32 %v1470, %v3649
    %v3652 = vsub.f32 %v3644, %v3650
    %v3653 = vsub.f32 %v3645, %v3651
    %v3654 = vlaneseq
    %v3655 = vshrl.u32 %v3654, 7
    %v3656 = vsub.s32 6, %v3655
    %v3657 = vrot.slane %v3600, %v3656
    %v3658 = vmul.f32 %v1474, %v3657
    %v3659 = vmul.f32 %v1478, %v3657
    %v3660 = vsub.f32 %v3652, %v3658
    %v3661 = vsub.f32 %v3653, %v3659
    %v3662 = vlaneseq
    %v3663 = vshrl.u32 %v3662, 7
    %v3664 = vsub.s32 7, %v3663
    %v3665 = vrot.slane %v3600, %v3664
    %v3666 = vmul.f32 %v1482, %v3665
    %v3667 = vmul.f32 %v1486, %v3665
    %v3668 = vsub.f32 %v3660, %v3666
    %v3669 = vsub.f32 %v3661, %v3667
    %v3670 = vlaneseq
    %v3671 = vshrl.u32 %v3670, 7
    %v3672 = vsub.s32 0, %v3671
    %v3673 = vrot.slane %v3605, %v3672
    %v3674 = vmul.f32 %v1490, %v3673
    %v3675 = vmul.f32 %v1494, %v3673
    %v3676 = vsub.f32 %v3668, %v3674
    %v3677 = vsub.f32 %v3669, %v3675
    %v3678 = vlaneseq
    %v3679 = vshrl.u32 %v3678, 7
    %v3680 = vsub.s32 1, %v3679
    %v3681 = vrot.slane %v3605, %v3680
    %v3682 = vmul.f32 %v1498, %v3681
    %v3683 = vmul.f32 %v1502, %v3681
    %v3684 = vsub.f32 %v3676, %v3682
    %v3685 = vsub.f32 %v3677, %v3683
    %v3686 = vlaneseq
    %v3687 = vshrl.u32 %v3686, 7
    %v3688 = vsub.s32 2, %v3687
    %v3689 = vrot.slane %v3605, %v3688
    %v3690 = vmul.f32 %v1506, %v3689
    %v3691 = vmul.f32 %v1510, %v3689
    %v3692 = vsub.f32 %v3684, %v3690
    %v3693 = vsub.f32 %v3685, %v3691
    %v3694 = vlaneseq
    %v3695 = vshrl.u32 %v3694, 7
    %v3696 = vsub.s32 3, %v3695
    %v3697 = vrot.slane %v3605, %v3696
    %v3698 = vmul.f32 %v1514, %v3697
    %v3699 = vmul.f32 %v1518, %v3697
    %v3700 = vsub.f32 %v3692, %v3698
    %v3701 = vsub.f32 %v3693, %v3699
    %v3702 = vlaneseq
    %v3703 = vshrl.u32 %v3702, 7
    %v3704 = vsub.s32 4, %v3703
    %v3705 = vrot.slane %v3605, %v3704
    %v3706 = vmul.f32 %v1522, %v3705
    %v3707 = vmul.f32 %v1526, %v3705
    %v3708 = vsub.f32 %v3700, %v3706
    %v3709 = vsub.f32 %v3701, %v3707
    %v3710 = vlaneseq
    %v3711 = vshrl.u32 %v3710, 7
    %v3712 = vsub.s32 5, %v3711
    %v3713 = vrot.slane %v3605, %v3712
    %v3714 = vmul.f32 %v1530, %v3713
    %v3715 = vmul.f32 %v1534, %v3713
    %v3716 = vsub.f32 %v3708, %v3714
    %v3717 = vsub.f32 %v3709, %v3715
    %v3718 = vlaneseq
    %v3719 = vshrl.u32 %v3718, 7
    %v3720 = vsub.s32 6, %v3719
    %v3721 = vrot.slane %v3605, %v3720
    %v3722 = vmul.f32 %v1538, %v3721
    %v3723 = vmul.f32 %v1542, %v3721
    %v3724 = vsub.f32 %v3716, %v3722
    %v3725 = vsub.f32 %v3717, %v3723
    %v3726 = vlaneseq
    %v3727 = vshrl.u32 %v3726, 7
    %v3728 = vsub.s32 7, %v3727
    %v3729 = vrot.slane %v3605, %v3728
    %v3730 = vmul.f32 %v1546, %v3729
    %v3731 = vmul.f32 %v1550, %v3729
    %v3732 = vsub.f32 %v3724, %v3730
    %v3733 = vsub.f32 %v3725, %v3731
    %v3734 = vmul.f32 %v3603, -1.0
    %v3735 = vsub.f32 %v3733, %v1418
    %v3736 = vsub.f32 %v3734, %v3735
    %v3737 = vmax.f32 %v3736, 0.0
    %v3738 = vsub.f32 %v3732, %v1413
    %v3739 = vadd.f32 %v3600, %v3738
    %v3740 = vadd.f32 %v3733, %v3737
    %v3741 = vsub.f32 %v3740, %v1418
    %v3742 = vadd.f32 %v3603, %v3741
    %v3743 = vsub.f32 %v3737, %v1418
    %v3744 = vadd.f32 %v3742, %v3743
    %v3745 = vlaneseq
    %v3746 = vshrl.u32 %v3745, 7
    %v3747 = vsub.s32 0, %v3746
    %v3748 = vrot.slane %v3739, %v3747
    %v3749 = vmul.f32 %v1425, %v3748
    %v3750 = vmul.f32 %v1430, %v3748
    %v3751 = vsub.f32 %v1404, %v3749
    %v3752 = vsub.f32 %v1405, %v3750
    %v3753 = vlaneseq
    %v3754 = vshrl.u32 %v3753, 7
    %v3755 = vsub.s32 1, %v3754
    %v3756 = vrot.slane %v3739, %v3755
    %v3757 = vmul.f32 %v1434, %v3756
    %v3758 = vmul.f32 %v1438, %v3756
    %v3759 = vsub.f32 %v3751, %v3757
    %v3760 = vsub.f32 %v3752, %v3758
    %v3761 = vlaneseq
    %v3762 = vshrl.u32 %v3761, 7
    %v3763 = vsub.s32 2, %v3762
    %v3764 = vrot.slane %v3739, %v3763
    %v3765 = vmul.f32 %v1442, %v3764
    %v3766 = vmul.f32 %v1446, %v3764
    %v3767 = vsub.f32 %v3759, %v3765
    %v3768 = vsub.f32 %v3760, %v3766
    %v3769 = vlaneseq
    %v3770 = vshrl.u32 %v3769, 7
    %v3771 = vsub.s32 3, %v3770
    %v3772 = vrot.slane %v3739, %v3771
    %v3773 = vmul.f32 %v1450, %v3772
    %v3774 = vmul.f32 %v1454, %v3772
    %v3775 = vsub.f32 %v3767, %v3773
    %v3776 = vsub.f32 %v3768, %v3774
    %v3777 = vlaneseq
    %v3778 = vshrl.u32 %v3777, 7
    %v3779 = vsub.s32 4, %v3778
    %v3780 = vrot.slane %v3739, %v3779
    %v3781 = vmul.f32 %v1458, %v3780
    %v3782 = vmul.f32 %v1462, %v3780
    %v3783 = vsub.f32 %v3775, %v3781
    %v3784 = vsub.f32 %v3776, %v3782
    %v3785 = vlaneseq
    %v3786 = vshrl.u32 %v3785, 7
    %v3787 = vsub.s32 5, %v3786
    %v3788 = vrot.slane %v3739, %v3787
    %v3789 = vmul.f32 %v1466, %v3788
    %v3790 = vmul.f32 %v1470, %v3788
    %v3791 = vsub.f32 %v3783, %v3789
    %v3792 = vsub.f32 %v3784, %v3790
    %v3793 = vlaneseq
    %v3794 = vshrl.u32 %v3793, 7
    %v3795 = vsub.s32 6, %v3794
    %v3796 = vrot.slane %v3739, %v3795
    %v3797 = vmul.f32 %v1474, %v3796
    %v3798 = vmul.f32 %v1478, %v3796
    %v3799 = vsub.f32 %v3791, %v3797
    %v3800 = vsub.f32 %v3792, %v3798
    %v3801 = vlaneseq
    %v3802 = vshrl.u32 %v3801, 7
    %v3803 = vsub.s32 7, %v3802
    %v3804 = vrot.slane %v3739, %v3803
    %v3805 = vmul.f32 %v1482, %v3804
    %v3806 = vmul.f32 %v1486, %v3804
    %v3807 = vsub.f32 %v3799, %v3805
    %v3808 = vsub.f32 %v3800, %v3806
    %v3809 = vlaneseq
    %v3810 = vshrl.u32 %v3809, 7
    %v3811 = vsub.s32 0, %v3810
    %v3812 = vrot.slane %v3744, %v3811
    %v3813 = vmul.f32 %v1490, %v3812
    %v3814 = vmul.f32 %v1494, %v3812
    %v3815 = vsub.f32 %v3807, %v3813
    %v3816 = vsub.f32 %v3808, %v3814
    %v3817 = vlaneseq
    %v3818 = vshrl.u32 %v3817, 7
    %v3819 = vsub.s32 1, %v3818
    %v3820 = vrot.slane %v3744, %v3819
    %v3821 = vmul.f32 %v1498, %v3820
    %v3822 = vmul.f32 %v1502, %v3820
    %v3823 = vsub.f32 %v3815, %v3821
    %v3824 = vsub.f32 %v3816, %v3822
    %v3825 = vlaneseq
    %v3826 = vshrl.u32 %v3825, 7
    %v3827 = vsub.s32 2, %v3826
    %v3828 = vrot.slane %v3744, %v3827
    %v3829 = vmul.f32 %v1506, %v3828
    %v3830 = vmul.f32 %v1510, %v3828
    %v3831 = vsub.f32 %v3823, %v3829
    %v3832 = vsub.f32 %v3824, %v3830
    %v3833 = vlaneseq
    %v3834 = vshrl.u32 %v3833, 7
    %v3835 = vsub.s32 3, %v3834
    %v3836 = vrot.slane %v3744, %v3835
    %v3837 = vmul.f32 %v1514, %v3836
    %v3838 = vmul.f32 %v1518, %v3836
    %v3839 = vsub.f32 %v3831, %v3837
    %v3840 = vsub.f32 %v3832, %v3838
    %v3841 = vlaneseq
    %v3842 = vshrl.u32 %v3841, 7
    %v3843 = vsub.s32 4, %v3842
    %v3844 = vrot.slane %v3744, %v3843
    %v3845 = vmul.f32 %v1522, %v3844
    %v3846 = vmul.f32 %v1526, %v3844
    %v3847 = vsub.f32 %v3839, %v3845
    %v3848 = vsub.f32 %v3840, %v3846
    %v3849 = vlaneseq
    %v3850 = vshrl.u32 %v3849, 7
    %v3851 = vsub.s32 5, %v3850
    %v3852 = vrot.slane %v3744, %v3851
    %v3853 = vmul.f32 %v1530, %v3852
    %v3854 = vmul.f32 %v1534, %v3852
    %v3855 = vsub.f32 %v3847, %v3853
    %v3856 = vsub.f32 %v3848, %v3854
    %v3857 = vlaneseq
    %v3858 = vshrl.u32 %v3857, 7
    %v3859 = vsub.s32 6, %v3858
    %v3860 = vrot.slane %v3744, %v3859
    %v3861 = vmul.f32 %v1538, %v3860
    %v3862 = vmul.f32 %v1542, %v3860
    %v3863 = vsub.f32 %v3855, %v3861
    %v3864 = vsub.f32 %v3856, %v3862
    %v3865 = vlaneseq
    %v3866 = vshrl.u32 %v3865, 7
    %v3867 = vsub.s32 7, %v3866
    %v3868 = vrot.slane %v3744, %v3867
    %v3869 = vmul.f32 %v1546, %v3868
    %v3870 = vmul.f32 %v1550, %v3868
    %v3871 = vsub.f32 %v3863, %v3869
    %v3872 = vsub.f32 %v3864, %v3870
    %v3873 = vmul.f32 %v3742, -1.0
    %v3874 = vsub.f32 %v3872, %v1418
    %v3875 = vsub.f32 %v3873, %v3874
    %v3876 = vmax.f32 %v3875, 0.0
    %v3877 = vsub.f32 %v3871, %v1413
    %v3878 = vadd.f32 %v3739, %v3877
    %v3879 = vadd.f32 %v3872, %v3876
    %v3880 = vsub.f32 %v3879, %v1418
    %v3881 = vadd.f32 %v3742, %v3880
    %v3882 = vsub.f32 %v3876, %v1418
    %v3883 = vadd.f32 %v3881, %v3882
    %v3884 = vlaneseq
    %v3885 = vshrl.u32 %v3884, 7
    %v3886 = vsub.s32 0, %v3885
    %v3887 = vrot.slane %v3878, %v3886
    %v3888 = vmul.f32 %v1425, %v3887
    %v3889 = vmul.f32 %v1430, %v3887
    %v3890 = vsub.f32 %v1404, %v3888
    %v3891 = vsub.f32 %v1405, %v3889
    %v3892 = vlaneseq
    %v3893 = vshrl.u32 %v3892, 7
    %v3894 = vsub.s32 1, %v3893
    %v3895 = vrot.slane %v3878, %v3894
    %v3896 = vmul.f32 %v1434, %v3895
    %v3897 = vmul.f32 %v1438, %v3895
    %v3898 = vsub.f32 %v3890, %v3896
    %v3899 = vsub.f32 %v3891, %v3897
    %v3900 = vlaneseq
    %v3901 = vshrl.u32 %v3900, 7
    %v3902 = vsub.s32 2, %v3901
    %v3903 = vrot.slane %v3878, %v3902
    %v3904 = vmul.f32 %v1442, %v3903
    %v3905 = vmul.f32 %v1446, %v3903
    %v3906 = vsub.f32 %v3898, %v3904
    %v3907 = vsub.f32 %v3899, %v3905
    %v3908 = vlaneseq
    %v3909 = vshrl.u32 %v3908, 7
    %v3910 = vsub.s32 3, %v3909
    %v3911 = vrot.slane %v3878, %v3910
    %v3912 = vmul.f32 %v1450, %v3911
    %v3913 = vmul.f32 %v1454, %v3911
    %v3914 = vsub.f32 %v3906, %v3912
    %v3915 = vsub.f32 %v3907, %v3913
    %v3916 = vlaneseq
    %v3917 = vshrl.u32 %v3916, 7
    %v3918 = vsub.s32 4, %v3917
    %v3919 = vrot.slane %v3878, %v3918
    %v3920 = vmul.f32 %v1458, %v3919
    %v3921 = vmul.f32 %v1462, %v3919
    %v3922 = vsub.f32 %v3914, %v3920
    %v3923 = vsub.f32 %v3915, %v3921
    %v3924 = vlaneseq
    %v3925 = vshrl.u32 %v3924, 7
    %v3926 = vsub.s32 5, %v3925
    %v3927 = vrot.slane %v3878, %v3926
    %v3928 = vmul.f32 %v1466, %v3927
    %v3929 = vmul.f32 %v1470, %v3927
    %v3930 = vsub.f32 %v3922, %v3928
    %v3931 = vsub.f32 %v3923, %v3929
    %v3932 = vlaneseq
    %v3933 = vshrl.u32 %v3932, 7
    %v3934 = vsub.s32 6, %v3933
    %v3935 = vrot.slane %v3878, %v3934
    %v3936 = vmul.f32 %v1474, %v3935
    %v3937 = vmul.f32 %v1478, %v3935
    %v3938 = vsub.f32 %v3930, %v3936
    %v3939 = vsub.f32 %v3931, %v3937
    %v3940 = vlaneseq
    %v3941 = vshrl.u32 %v3940, 7
    %v3942 = vsub.s32 7, %v3941
    %v3943 = vrot.slane %v3878, %v3942
    %v3944 = vmul.f32 %v1482, %v3943
    %v3945 = vmul.f32 %v1486, %v3943
    %v3946 = vsub.f32 %v3938, %v3944
    %v3947 = vsub.f32 %v3939, %v3945
    %v3948 = vlaneseq
    %v3949 = vshrl.u32 %v3948, 7
    %v3950 = vsub.s32 0, %v3949
    %v3951 = vrot.slane %v3883, %v3950
    %v3952 = vmul.f32 %v1490, %v3951
    %v3953 = vmul.f32 %v1494, %v3951
    %v3954 = vsub.f32 %v3946, %v3952
    %v3955 = vsub.f32 %v3947, %v3953
    %v3956 = vlaneseq
    %v3957 = vshrl.u32 %v3956, 7
    %v3958 = vsub.s32 1, %v3957
    %v3959 = vrot.slane %v3883, %v3958
    %v3960 = vmul.f32 %v1498, %v3959
    %v3961 = vmul.f32 %v1502, %v3959
    %v3962 = vsub.f32 %v3954, %v3960
    %v3963 = vsub.f32 %v3955, %v3961
    %v3964 = vlaneseq
    %v3965 = vshrl.u32 %v3964, 7
    %v3966 = vsub.s32 2, %v3965
    %v3967 = vrot.slane %v3883, %v3966
    %v3968 = vmul.f32 %v1506, %v3967
    %v3969 = vmul.f32 %v1510, %v3967
    %v3970 = vsub.f32 %v3962, %v3968
    %v3971 = vsub.f32 %v3963, %v3969
    %v3972 = vlaneseq
    %v3973 = vshrl.u32 %v3972, 7
    %v3974 = vsub.s32 3, %v3973
    %v3975 = vrot.slane %v3883, %v3974
    %v3976 = vmul.f32 %v1514, %v3975
    %v3977 = vmul.f32 %v1518, %v3975
    %v3978 = vsub.f32 %v3970, %v3976
    %v3979 = vsub.f32 %v3971, %v3977
    %v3980 = vlaneseq
    %v3981 = vshrl.u32 %v3980, 7
    %v3982 = vsub.s32 4, %v3981
    %v3983 = vrot.slane %v3883, %v3982
    %v3984 = vmul.f32 %v1522, %v3983
    %v3985 = vmul.f32 %v1526, %v3983
    %v3986 = vsub.f32 %v3978, %v3984
    %v3987 = vsub.f32 %v3979, %v3985
    %v3988 = vlaneseq
    %v3989 = vshrl.u32 %v3988, 7
    %v3990 = vsub.s32 5, %v3989
    %v3991 = vrot.slane %v3883, %v3990
    %v3992 = vmul.f32 %v1530, %v3991
    %v3993 = vmul.f32 %v1534, %v3991
    %v3994 = vsub.f32 %v3986, %v3992
    %v3995 = vsub.f32 %v3987, %v3993
    %v3996 = vlaneseq
    %v3997 = vshrl.u32 %v3996, 7
    %v3998 = vsub.s32 6, %v3997
    %v3999 = vrot.slane %v3883, %v3998
    %v4000 = vmul.f32 %v1538, %v3999
    %v4001 = vmul.f32 %v1542, %v3999
    %v4002 = vsub.f32 %v3994, %v4000
    %v4003 = vsub.f32 %v3995, %v4001
    %v4004 = vlaneseq
    %v4005 = vshrl.u32 %v4004, 7
    %v4006 = vsub.s32 7, %v4005
    %v4007 = vrot.slane %v3883, %v4006
    %v4008 = vmul.f32 %v1546, %v4007
    %v4009 = vmul.f32 %v1550, %v4007
    %v4010 = vsub.f32 %v4002, %v4008
    %v4011 = vsub.f32 %v4003, %v4009
    %v4012 = vmul.f32 %v3881, -1.0
    %v4013 = vsub.f32 %v4011, %v1418
    %v4014 = vsub.f32 %v4012, %v4013
    %v4015 = vmax.f32 %v4014, 0.0
    %v4016 = vsub.f32 %v4010, %v1413
    %v4017 = vadd.f32 %v3878, %v4016
    %v4018 = vadd.f32 %v4011, %v4015
    %v4019 = vsub.f32 %v4018, %v1418
    %v4020 = vadd.f32 %v3881, %v4019
    %v4021 = vsub.f32 %v4015, %v1418
    %v4022 = vadd.f32 %v4020, %v4021
    %v4023 = vlaneseq
    %v4024 = vshrl.u32 %v4023, 7
    %v4025 = vsub.s32 0, %v4024
    %v4026 = vrot.slane %v4017, %v4025
    %v4027 = vmul.f32 %v1425, %v4026
    %v4028 = vmul.f32 %v1430, %v4026
    %v4029 = vsub.f32 %v1404, %v4027
    %v4030 = vsub.f32 %v1405, %v4028
    %v4031 = vlaneseq
    %v4032 = vshrl.u32 %v4031, 7
    %v4033 = vsub.s32 1, %v4032
    %v4034 = vrot.slane %v4017, %v4033
    %v4035 = vmul.f32 %v1434, %v4034
    %v4036 = vmul.f32 %v1438, %v4034
    %v4037 = vsub.f32 %v4029, %v4035
    %v4038 = vsub.f32 %v4030, %v4036
    %v4039 = vlaneseq
    %v4040 = vshrl.u32 %v4039, 7
    %v4041 = vsub.s32 2, %v4040
    %v4042 = vrot.slane %v4017, %v4041
    %v4043 = vmul.f32 %v1442, %v4042
    %v4044 = vmul.f32 %v1446, %v4042
    %v4045 = vsub.f32 %v4037, %v4043
    %v4046 = vsub.f32 %v4038, %v4044
    %v4047 = vlaneseq
    %v4048 = vshrl.u32 %v4047, 7
    %v4049 = vsub.s32 3, %v4048
    %v4050 = vrot.slane %v4017, %v4049
    %v4051 = vmul.f32 %v1450, %v4050
    %v4052 = vmul.f32 %v1454, %v4050
    %v4053 = vsub.f32 %v4045, %v4051
    %v4054 = vsub.f32 %v4046, %v4052
    %v4055 = vlaneseq
    %v4056 = vshrl.u32 %v4055, 7
    %v4057 = vsub.s32 4, %v4056
    %v4058 = vrot.slane %v4017, %v4057
    %v4059 = vmul.f32 %v1458, %v4058
    %v4060 = vmul.f32 %v1462, %v4058
    %v4061 = vsub.f32 %v4053, %v4059
    %v4062 = vsub.f32 %v4054, %v4060
    %v4063 = vlaneseq
    %v4064 = vshrl.u32 %v4063, 7
    %v4065 = vsub.s32 5, %v4064
    %v4066 = vrot.slane %v4017, %v4065
    %v4067 = vmul.f32 %v1466, %v4066
    %v4068 = vmul.f32 %v1470, %v4066
    %v4069 = vsub.f32 %v4061, %v4067
    %v4070 = vsub.f32 %v4062, %v4068
    %v4071 = vlaneseq
    %v4072 = vshrl.u32 %v4071, 7
    %v4073 = vsub.s32 6, %v4072
    %v4074 = vrot.slane %v4017, %v4073
    %v4075 = vmul.f32 %v1474, %v4074
    %v4076 = vmul.f32 %v1478, %v4074
    %v4077 = vsub.f32 %v4069, %v4075
    %v4078 = vsub.f32 %v4070, %v4076
    %v4079 = vlaneseq
    %v4080 = vshrl.u32 %v4079, 7
    %v4081 = vsub.s32 7, %v4080
    %v4082 = vrot.slane %v4017, %v4081
    %v4083 = vmul.f32 %v1482, %v4082
    %v4084 = vmul.f32 %v1486, %v4082
    %v4085 = vsub.f32 %v4077, %v4083
    %v4086 = vsub.f32 %v4078, %v4084
    %v4087 = vlaneseq
    %v4088 = vshrl.u32 %v4087, 7
    %v4089 = vsub.s32 0, %v4088
    %v4090 = vrot.slane %v4022, %v4089
    %v4091 = vmul.f32 %v1490, %v4090
    %v4092 = vmul.f32 %v1494, %v4090
    %v4093 = vsub.f32 %v4085, %v4091
    %v4094 = vsub.f32 %v4086, %v4092
    %v4095 = vlaneseq
    %v4096 = vshrl.u32 %v4095, 7
    %v4097 = vsub.s32 1, %v4096
    %v4098 = vrot.slane %v4022, %v4097
    %v4099 = vmul.f32 %v1498, %v4098
    %v4100 = vmul.f32 %v1502, %v4098
    %v4101 = vsub.f32 %v4093, %v4099
    %v4102 = vsub.f32 %v4094, %v4100
    %v4103 = vlaneseq
    %v4104 = vshrl.u32 %v4103, 7
    %v4105 = vsub.s32 2, %v4104
    %v4106 = vrot.slane %v4022, %v4105
    %v4107 = vmul.f32 %v1506, %v4106
    %v4108 = vmul.f32 %v1510, %v4106
    %v4109 = vsub.f32 %v4101, %v4107
    %v4110 = vsub.f32 %v4102, %v4108
    %v4111 = vlaneseq
    %v4112 = vshrl.u32 %v4111, 7
    %v4113 = vsub.s32 3, %v4112
    %v4114 = vrot.slane %v4022, %v4113
    %v4115 = vmul.f32 %v1514, %v4114
    %v4116 = vmul.f32 %v1518, %v4114
    %v4117 = vsub.f32 %v4109, %v4115
    %v4118 = vsub.f32 %v4110, %v4116
    %v4119 = vlaneseq
    %v4120 = vshrl.u32 %v4119, 7
    %v4121 = vsub.s32 4, %v4120
    %v4122 = vrot.slane %v4022, %v4121
    %v4123 = vmul.f32 %v1522, %v4122
    %v4124 = vmul.f32 %v1526, %v4122
    %v4125 = vsub.f32 %v4117, %v4123
    %v4126 = vsub.f32 %v4118, %v4124
    %v4127 = vlaneseq
    %v4128 = vshrl.u32 %v4127, 7
    %v4129 = vsub.s32 5, %v4128
    %v4130 = vrot.slane %v4022, %v4129
    %v4131 = vmul.f32 %v1530, %v4130
    %v4132 = vmul.f32 %v1534, %v4130
    %v4133 = vsub.f32 %v4125, %v4131
    %v4134 = vsub.f32 %v4126, %v4132
    %v4135 = vlaneseq
    %v4136 = vshrl.u32 %v4135, 7
    %v4137 = vsub.s32 6, %v4136
    %v4138 = vrot.slane %v4022, %v4137
    %v4139 = vmul.f32 %v1538, %v4138
    %v4140 = vmul.f32 %v1542, %v4138
    %v4141 = vsub.f32 %v4133, %v4139
    %v4142 = vsub.f32 %v4134, %v4140
    %v4143 = vlaneseq
    %v4144 = vshrl.u32 %v4143, 7
    %v4145 = vsub.s32 7, %v4144
    %v4146 = vrot.slane %v4022, %v4145
    %v4147 = vmul.f32 %v1546, %v4146
    %v4148 = vmul.f32 %v1550, %v4146
    %v4149 = vsub.f32 %v4141, %v4147
    %v4150 = vsub.f32 %v4142, %v4148
    %v4151 = vmul.f32 %v4020, -1.0
    %v4152 = vsub.f32 %v4150, %v1418
    %v4153 = vsub.f32 %v4151, %v4152
    %v4154 = vmax.f32 %v4153, 0.0
    %v4155 = vsub.f32 %v4149, %v1413
    %v4156 = vadd.f32 %v4017, %v4155
    %v4157 = vadd.f32 %v4150, %v4154
    %v4158 = vsub.f32 %v4157, %v1418
    %v4159 = vadd.f32 %v4020, %v4158
    %v4160 = vsub.f32 %v4154, %v1418
    %v4161 = vadd.f32 %v4159, %v4160
    %v4162 = vld [vmem:[%s6] sm:$0xff]
    %v4163 = vld [vmem:[%s6 + $0x8] sm:$0x3]
    %vm4164 = vcmask 130048
    %v4166 = vsel %vm4164, %v4162, 0
    %v4169 = vsel %vm4164, %v4163, 0
    %4171 = vmatprep.subr.mxu0 0.0
    %v4172 = vand.u32 %v4156, 4294901760
    %4173 = vmatpush1.msra.mxu0 %v4172
    %4174 = vmatprep.subr.mxu0 0.0
    %v4175 = vand.u32 %v4161, 4294901760
    %4176 = vmatpush1.msra.mxu0 %v4175
    %4177 = vmatprep.subr.mxu0 0.0
    %4178 = vmatpush1.msra.mxu0 0.0
    %4179 = vmatprep.subr.mxu0 0.0
    %4180 = vmatpush1.msra.mxu0 0.0
    %4181 = vmatprep.subr.mxu0 0.0
    %4182 = vmatpush1.msra.mxu0 0.0
    %4183 = vmatprep.subr.mxu0 0.0
    %4184 = vmatpush1.msra.mxu0 0.0
    %4185 = vmatprep.subr.mxu0 0.0
    %4186 = vmatpush1.msra.mxu0 0.0
    %4187 = vmatprep.subr.mxu0 0.0
    %4188 = vmatpush1.msra.mxu0 0.0
    %4189 = vmatprep.subr.mxu0 0.0
    %4190 = vmatpush1.msra.mxu0 0.0
    %4191 = vmatprep.subr.mxu0 0.0
    %4192 = vmatpush1.msra.mxu0 0.0
    %4193 = vmatprep.subr.mxu0 0.0
    %4194 = vmatpush1.msra.mxu0 0.0
    %4195 = vmatprep.subr.mxu0 0.0
    %4196 = vmatpush1.msra.mxu0 0.0
    %4197 = vmatprep.subr.mxu0 0.0
    %4198 = vmatpush1.msra.mxu0 0.0
    %4199 = vmatprep.subr.mxu0 0.0
    %4200 = vmatpush1.msra.mxu0 0.0
    %4201 = vmatprep.subr.mxu0 0.0
    %4202 = vmatpush1.msra.mxu0 0.0
    %4203 = vmatprep.subr.mxu0 0.0
    %4204 = vmatpush1.msra.mxu0 0.0
    %4205 = vmatprep.subr.mxu0 0.0
    %4206 = vmatpush1.msra.mxu0 0.0
    %4207 = vmatprep.subr.mxu0 0.0
    %4208 = vmatpush1.msra.mxu0 0.0
    %4209 = vmatprep.subr.mxu0 0.0
    %4210 = vmatpush1.msra.mxu0 0.0
    %4211 = vmatprep.subr.mxu0 0.0
    %4212 = vmatpush1.msra.mxu0 0.0
    %4213 = vmatprep.subr.mxu0 0.0
    %4214 = vmatpush1.msra.mxu0 0.0
    %4215 = vmatprep.subr.mxu0 0.0
    %4216 = vmatpush1.msra.mxu0 0.0
    %4217 = vmatprep.subr.mxu0 0.0
    %4218 = vmatpush1.msra.mxu0 0.0
    %4219 = vmatprep.subr.mxu0 0.0
    %4220 = vmatpush1.msra.mxu0 0.0
    %4221 = vmatprep.subr.mxu0 0.0
    %4222 = vmatpush1.msra.mxu0 0.0
    %4223 = vmatprep.subr.mxu0 0.0
    %4224 = vmatpush1.msra.mxu0 0.0
    %4225 = vmatprep.subr.mxu0 0.0
    %4226 = vmatpush1.msra.mxu0 0.0
    %4227 = vmatprep.subr.mxu0 0.0
    %4228 = vmatpush1.msra.mxu0 0.0
    %4229 = vmatprep.subr.mxu0 0.0
    %4230 = vmatpush1.msra.mxu0 0.0
    %4231 = vmatprep.subr.mxu0 0.0
    %4232 = vmatpush1.msra.mxu0 0.0
    %4233 = vmatprep.subr.mxu0 0.0
    %4234 = vmatpush1.msra.mxu0 0.0
    %4235 = vmatprep.subr.mxu0 0.0
    %4236 = vmatpush1.msra.mxu0 0.0
    %4237 = vmatprep.mubr.f32.mxu0 0.0
    %v4238 = vand.u32 %v4166, 4294901760
    %v4239 = vsub.f32 %v4166, %v4238
    %v4240 = vand.u32 %v4239, 4294901760
    %v4241 = vsub.f32 %v4239, %v4240
    %v4242 = vand.u32 %v4241, 4294901760
    %4243 = vmatmul.mubr.f32.gmra.mrb[0].mxu0 %v4242
    %v4244 = vpop.f32.mrb[0].mxu0
    %v4245 = vadd.f32 0.0, %v4244
    %v4246 = vpop.f32.mrb[0].mxu0
    %4247 = vmatprep.mubr.f32.mxu0 0.0
    %v4248 = vand.u32 %v4169, 4294901760
    %v4249 = vsub.f32 %v4169, %v4248
    %v4250 = vand.u32 %v4249, 4294901760
    %v4251 = vsub.f32 %v4249, %v4250
    %v4252 = vand.u32 %v4251, 4294901760
    %4253 = vmatmul.mubr.f32.gmra.mrb[0].mxu0 %v4252
    %v4254 = vpop.f32.mrb[0].mxu0
    %v4255 = vadd.f32 0.0, %v4254
    %v4256 = vpop.f32.mrb[0].mxu0
    %4257 = vdwg.mxu0
    %4258 = vmatprep.subr.mxu0 0.0
    %v4259 = vand.u32 %v4156, 4294901760
    %v4260 = vsub.f32 %v4156, %v4259
    %v4261 = vand.u32 %v4260, 4294901760
    %v4262 = vsub.f32 %v4260, %v4261
    %v4263 = vand.u32 %v4262, 4294901760
    %4264 = vmatpush1.msra.mxu0 %v4263
    %4265 = vmatprep.subr.mxu0 0.0
    %v4266 = vand.u32 %v4161, 4294901760
    %v4267 = vsub.f32 %v4161, %v4266
    %v4268 = vand.u32 %v4267, 4294901760
    %v4269 = vsub.f32 %v4267, %v4268
    %v4270 = vand.u32 %v4269, 4294901760
    %4271 = vmatpush1.msra.mxu0 %v4270
    %4272 = vmatprep.subr.mxu0 0.0
    %4273 = vmatpush1.msra.mxu0 0.0
    %4274 = vmatprep.subr.mxu0 0.0
    %4275 = vmatpush1.msra.mxu0 0.0
    %4276 = vmatprep.subr.mxu0 0.0
    %4277 = vmatpush1.msra.mxu0 0.0
    %4278 = vmatprep.subr.mxu0 0.0
    %4279 = vmatpush1.msra.mxu0 0.0
    %4280 = vmatprep.subr.mxu0 0.0
    %4281 = vmatpush1.msra.mxu0 0.0
    %4282 = vmatprep.subr.mxu0 0.0
    %4283 = vmatpush1.msra.mxu0 0.0
    %4284 = vmatprep.subr.mxu0 0.0
    %4285 = vmatpush1.msra.mxu0 0.0
    %4286 = vmatprep.subr.mxu0 0.0
    %4287 = vmatpush1.msra.mxu0 0.0
    %4288 = vmatprep.subr.mxu0 0.0
    %4289 = vmatpush1.msra.mxu0 0.0
    %4290 = vmatprep.subr.mxu0 0.0
    %4291 = vmatpush1.msra.mxu0 0.0
    %4292 = vmatprep.subr.mxu0 0.0
    %4293 = vmatpush1.msra.mxu0 0.0
    %4294 = vmatprep.subr.mxu0 0.0
    %4295 = vmatpush1.msra.mxu0 0.0
    %4296 = vmatprep.subr.mxu0 0.0
    %4297 = vmatpush1.msra.mxu0 0.0
    %4298 = vmatprep.subr.mxu0 0.0
    %4299 = vmatpush1.msra.mxu0 0.0
    %4300 = vmatprep.subr.mxu0 0.0
    %4301 = vmatpush1.msra.mxu0 0.0
    %4302 = vmatprep.subr.mxu0 0.0
    %4303 = vmatpush1.msra.mxu0 0.0
    %4304 = vmatprep.subr.mxu0 0.0
    %4305 = vmatpush1.msra.mxu0 0.0
    %4306 = vmatprep.subr.mxu0 0.0
    %4307 = vmatpush1.msra.mxu0 0.0
    %4308 = vmatprep.subr.mxu0 0.0
    %4309 = vmatpush1.msra.mxu0 0.0
    %4310 = vmatprep.subr.mxu0 0.0
    %4311 = vmatpush1.msra.mxu0 0.0
    %4312 = vmatprep.subr.mxu0 0.0
    %4313 = vmatpush1.msra.mxu0 0.0
    %4314 = vmatprep.subr.mxu0 0.0
    %4315 = vmatpush1.msra.mxu0 0.0
    %4316 = vmatprep.subr.mxu0 0.0
    %4317 = vmatpush1.msra.mxu0 0.0
    %4318 = vmatprep.subr.mxu0 0.0
    %4319 = vmatpush1.msra.mxu0 0.0
    %4320 = vmatprep.subr.mxu0 0.0
    %4321 = vmatpush1.msra.mxu0 0.0
    %4322 = vmatprep.subr.mxu0 0.0
    %4323 = vmatpush1.msra.mxu0 0.0
    %4324 = vmatprep.subr.mxu0 0.0
    %4325 = vmatpush1.msra.mxu0 0.0
    %4326 = vmatprep.subr.mxu0 0.0
    %4327 = vmatpush1.msra.mxu0 0.0
    %4328 = vmatprep.subr.mxu0 0.0
    %4329 = vmatpush1.msra.mxu0 0.0
    %4330 = vmatprep.subr.mxu0 0.0
    %4331 = vmatpush1.msra.mxu0 0.0
    %4332 = vmatprep.mubr.f32.mxu0 0.0
    %v4333 = vand.u32 %v4166, 4294901760
    %4334 = vmatmul.mubr.f32.gmra.mrb[0].mxu0 %v4333
    %v4335 = vpop.f32.mrb[0].mxu0
    %v4336 = vadd.f32 %v4245, %v4335
    %v4337 = vpop.f32.mrb[0].mxu0
    %4338 = vmatprep.mubr.f32.mxu0 0.0
    %v4339 = vand.u32 %v4169, 4294901760
    %4340 = vmatmul.mubr.f32.gmra.mrb[0].mxu0 %v4339
    %v4341 = vpop.f32.mrb[0].mxu0
    %v4342 = vadd.f32 %v4255, %v4341
    %v4343 = vpop.f32.mrb[0].mxu0
    %4344 = vdwg.mxu0
    %4345 = vmatprep.subr.mxu0 0.0
    %v4346 = vand.u32 %v4156, 4294901760
    %v4347 = vsub.f32 %v4156, %v4346
    %4348 = vmatpush1.msra.mxu0 %v4347
    %4349 = vmatprep.subr.mxu0 0.0
    %v4350 = vand.u32 %v4161, 4294901760
    %v4351 = vsub.f32 %v4161, %v4350
    %4352 = vmatpush1.msra.mxu0 %v4351
    %4353 = vmatprep.subr.mxu0 0.0
    %4354 = vmatpush1.msra.mxu0 0.0
    %4355 = vmatprep.subr.mxu0 0.0
    %4356 = vmatpush1.msra.mxu0 0.0
    %4357 = vmatprep.subr.mxu0 0.0
    %4358 = vmatpush1.msra.mxu0 0.0
    %4359 = vmatprep.subr.mxu0 0.0
    %4360 = vmatpush1.msra.mxu0 0.0
    %4361 = vmatprep.subr.mxu0 0.0
    %4362 = vmatpush1.msra.mxu0 0.0
    %4363 = vmatprep.subr.mxu0 0.0
    %4364 = vmatpush1.msra.mxu0 0.0
    %4365 = vmatprep.subr.mxu0 0.0
    %4366 = vmatpush1.msra.mxu0 0.0
    %4367 = vmatprep.subr.mxu0 0.0
    %4368 = vmatpush1.msra.mxu0 0.0
    %4369 = vmatprep.subr.mxu0 0.0
    %4370 = vmatpush1.msra.mxu0 0.0
    %4371 = vmatprep.subr.mxu0 0.0
    %4372 = vmatpush1.msra.mxu0 0.0
    %4373 = vmatprep.subr.mxu0 0.0
    %4374 = vmatpush1.msra.mxu0 0.0
    %4375 = vmatprep.subr.mxu0 0.0
    %4376 = vmatpush1.msra.mxu0 0.0
    %4377 = vmatprep.subr.mxu0 0.0
    %4378 = vmatpush1.msra.mxu0 0.0
    %4379 = vmatprep.subr.mxu0 0.0
    %4380 = vmatpush1.msra.mxu0 0.0
    %4381 = vmatprep.subr.mxu0 0.0
    %4382 = vmatpush1.msra.mxu0 0.0
    %4383 = vmatprep.subr.mxu0 0.0
    %4384 = vmatpush1.msra.mxu0 0.0
    %4385 = vmatprep.subr.mxu0 0.0
    %4386 = vmatpush1.msra.mxu0 0.0
    %4387 = vmatprep.subr.mxu0 0.0
    %4388 = vmatpush1.msra.mxu0 0.0
    %4389 = vmatprep.subr.mxu0 0.0
    %4390 = vmatpush1.msra.mxu0 0.0
    %4391 = vmatprep.subr.mxu0 0.0
    %4392 = vmatpush1.msra.mxu0 0.0
    %4393 = vmatprep.subr.mxu0 0.0
    %4394 = vmatpush1.msra.mxu0 0.0
    %4395 = vmatprep.subr.mxu0 0.0
    %4396 = vmatpush1.msra.mxu0 0.0
    %4397 = vmatprep.subr.mxu0 0.0
    %4398 = vmatpush1.msra.mxu0 0.0
    %4399 = vmatprep.subr.mxu0 0.0
    %4400 = vmatpush1.msra.mxu0 0.0
    %4401 = vmatprep.subr.mxu0 0.0
    %4402 = vmatpush1.msra.mxu0 0.0
    %4403 = vmatprep.subr.mxu0 0.0
    %4404 = vmatpush1.msra.mxu0 0.0
    %4405 = vmatprep.subr.mxu0 0.0
    %4406 = vmatpush1.msra.mxu0 0.0
    %4407 = vmatprep.subr.mxu0 0.0
    %4408 = vmatpush1.msra.mxu0 0.0
    %4409 = vmatprep.subr.mxu0 0.0
    %4410 = vmatpush1.msra.mxu0 0.0
    %4411 = vmatprep.subr.mxu0 0.0
    %4412 = vmatpush1.msra.mxu0 0.0
    %4413 = vmatprep.mubr.f32.mxu0 0.0
    %v4414 = vand.u32 %v4166, 4294901760
    %v4415 = vsub.f32 %v4166, %v4414
    %4416 = vmatmul.mubr.f32.gmra.mrb[0].mxu0 %v4415
    %v4417 = vpop.f32.mrb[0].mxu0
    %v4418 = vadd.f32 %v4336, %v4417
    %v4419 = vpop.f32.mrb[0].mxu0
    %4420 = vmatprep.mubr.f32.mxu0 0.0
    %v4421 = vand.u32 %v4169, 4294901760
    %v4422 = vsub.f32 %v4169, %v4421
    %4423 = vmatmul.mubr.f32.gmra.mrb[0].mxu0 %v4422
    %v4424 = vpop.f32.mrb[0].mxu0
    %v4425 = vadd.f32 %v4342, %v4424
    %v4426 = vpop.f32.mrb[0].mxu0
    %4427 = vdwg.mxu0
    %4428 = vmatprep.subr.mxu0 0.0
    %v4429 = vand.u32 %v4156, 4294901760
    %4430 = vmatpush1.msra.mxu0 %v4429
    %4431 = vmatprep.subr.mxu0 0.0
    %v4432 = vand.u32 %v4161, 4294901760
    %4433 = vmatpush1.msra.mxu0 %v4432
    %4434 = vmatprep.subr.mxu0 0.0
    %4435 = vmatpush1.msra.mxu0 0.0
    %4436 = vmatprep.subr.mxu0 0.0
    %4437 = vmatpush1.msra.mxu0 0.0
    %4438 = vmatprep.subr.mxu0 0.0
    %4439 = vmatpush1.msra.mxu0 0.0
    %4440 = vmatprep.subr.mxu0 0.0
    %4441 = vmatpush1.msra.mxu0 0.0
    %4442 = vmatprep.subr.mxu0 0.0
    %4443 = vmatpush1.msra.mxu0 0.0
    %4444 = vmatprep.subr.mxu0 0.0
    %4445 = vmatpush1.msra.mxu0 0.0
    %4446 = vmatprep.subr.mxu0 0.0
    %4447 = vmatpush1.msra.mxu0 0.0
    %4448 = vmatprep.subr.mxu0 0.0
    %4449 = vmatpush1.msra.mxu0 0.0
    %4450 = vmatprep.subr.mxu0 0.0
    %4451 = vmatpush1.msra.mxu0 0.0
    %4452 = vmatprep.subr.mxu0 0.0
    %4453 = vmatpush1.msra.mxu0 0.0
    %4454 = vmatprep.subr.mxu0 0.0
    %4455 = vmatpush1.msra.mxu0 0.0
    %4456 = vmatprep.subr.mxu0 0.0
    %4457 = vmatpush1.msra.mxu0 0.0
    %4458 = vmatprep.subr.mxu0 0.0
    %4459 = vmatpush1.msra.mxu0 0.0
    %4460 = vmatprep.subr.mxu0 0.0
    %4461 = vmatpush1.msra.mxu0 0.0
    %4462 = vmatprep.subr.mxu0 0.0
    %4463 = vmatpush1.msra.mxu0 0.0
    %4464 = vmatprep.subr.mxu0 0.0
    %4465 = vmatpush1.msra.mxu0 0.0
    %4466 = vmatprep.subr.mxu0 0.0
    %4467 = vmatpush1.msra.mxu0 0.0
    %4468 = vmatprep.subr.mxu0 0.0
    %4469 = vmatpush1.msra.mxu0 0.0
    %4470 = vmatprep.subr.mxu0 0.0
    %4471 = vmatpush1.msra.mxu0 0.0
    %4472 = vmatprep.subr.mxu0 0.0
    %4473 = vmatpush1.msra.mxu0 0.0
    %4474 = vmatprep.subr.mxu0 0.0
    %4475 = vmatpush1.msra.mxu0 0.0
    %4476 = vmatprep.subr.mxu0 0.0
    %4477 = vmatpush1.msra.mxu0 0.0
    %4478 = vmatprep.subr.mxu0 0.0
    %4479 = vmatpush1.msra.mxu0 0.0
    %4480 = vmatprep.subr.mxu0 0.0
    %4481 = vmatpush1.msra.mxu0 0.0
    %4482 = vmatprep.subr.mxu0 0.0
    %4483 = vmatpush1.msra.mxu0 0.0
    %4484 = vmatprep.subr.mxu0 0.0
    %4485 = vmatpush1.msra.mxu0 0.0
    %4486 = vmatprep.subr.mxu0 0.0
    %4487 = vmatpush1.msra.mxu0 0.0
    %4488 = vmatprep.subr.mxu0 0.0
    %4489 = vmatpush1.msra.mxu0 0.0
    %4490 = vmatprep.subr.mxu0 0.0
    %4491 = vmatpush1.msra.mxu0 0.0
    %4492 = vmatprep.subr.mxu0 0.0
    %4493 = vmatpush1.msra.mxu0 0.0
    %4494 = vmatprep.mubr.f32.mxu0 0.0
    %v4495 = vand.u32 %v4166, 4294901760
    %v4496 = vsub.f32 %v4166, %v4495
    %v4497 = vand.u32 %v4496, 4294901760
    %4498 = vmatmul.mubr.f32.gmra.mrb[0].mxu0 %v4497
    %v4499 = vpop.f32.mrb[0].mxu0
    %v4500 = vadd.f32 %v4418, %v4499
    %v4501 = vpop.f32.mrb[0].mxu0
    %4502 = vmatprep.mubr.f32.mxu0 0.0
    %v4503 = vand.u32 %v4169, 4294901760
    %v4504 = vsub.f32 %v4169, %v4503
    %v4505 = vand.u32 %v4504, 4294901760
    %4506 = vmatmul.mubr.f32.gmra.mrb[0].mxu0 %v4505
    %v4507 = vpop.f32.mrb[0].mxu0
    %v4508 = vadd.f32 %v4425, %v4507
    %v4509 = vpop.f32.mrb[0].mxu0
    %4510 = vdwg.mxu0
    %4511 = vmatprep.subr.mxu0 0.0
    %v4512 = vand.u32 %v4156, 4294901760
    %v4513 = vsub.f32 %v4156, %v4512
    %v4514 = vand.u32 %v4513, 4294901760
    %4515 = vmatpush1.msra.mxu0 %v4514
    %4516 = vmatprep.subr.mxu0 0.0
    %v4517 = vand.u32 %v4161, 4294901760
    %v4518 = vsub.f32 %v4161, %v4517
    %v4519 = vand.u32 %v4518, 4294901760
    %4520 = vmatpush1.msra.mxu0 %v4519
    %4521 = vmatprep.subr.mxu0 0.0
    %4522 = vmatpush1.msra.mxu0 0.0
    %4523 = vmatprep.subr.mxu0 0.0
    %4524 = vmatpush1.msra.mxu0 0.0
    %4525 = vmatprep.subr.mxu0 0.0
    %4526 = vmatpush1.msra.mxu0 0.0
    %4527 = vmatprep.subr.mxu0 0.0
    %4528 = vmatpush1.msra.mxu0 0.0
    %4529 = vmatprep.subr.mxu0 0.0
    %4530 = vmatpush1.msra.mxu0 0.0
    %4531 = vmatprep.subr.mxu0 0.0
    %4532 = vmatpush1.msra.mxu0 0.0
    %4533 = vmatprep.subr.mxu0 0.0
    %4534 = vmatpush1.msra.mxu0 0.0
    %4535 = vmatprep.subr.mxu0 0.0
    %4536 = vmatpush1.msra.mxu0 0.0
    %4537 = vmatprep.subr.mxu0 0.0
    %4538 = vmatpush1.msra.mxu0 0.0
    %4539 = vmatprep.subr.mxu0 0.0
    %4540 = vmatpush1.msra.mxu0 0.0
    %4541 = vmatprep.subr.mxu0 0.0
    %4542 = vmatpush1.msra.mxu0 0.0
    %4543 = vmatprep.subr.mxu0 0.0
    %4544 = vmatpush1.msra.mxu0 0.0
    %4545 = vmatprep.subr.mxu0 0.0
    %4546 = vmatpush1.msra.mxu0 0.0
    %4547 = vmatprep.subr.mxu0 0.0
    %4548 = vmatpush1.msra.mxu0 0.0
    %4549 = vmatprep.subr.mxu0 0.0
    %4550 = vmatpush1.msra.mxu0 0.0
    %4551 = vmatprep.subr.mxu0 0.0
    %4552 = vmatpush1.msra.mxu0 0.0
    %4553 = vmatprep.subr.mxu0 0.0
    %4554 = vmatpush1.msra.mxu0 0.0
    %4555 = vmatprep.subr.mxu0 0.0
    %4556 = vmatpush1.msra.mxu0 0.0
    %4557 = vmatprep.subr.mxu0 0.0
    %4558 = vmatpush1.msra.mxu0 0.0
    %4559 = vmatprep.subr.mxu0 0.0
    %4560 = vmatpush1.msra.mxu0 0.0
    %4561 = vmatprep.subr.mxu0 0.0
    %4562 = vmatpush1.msra.mxu0 0.0
    %4563 = vmatprep.subr.mxu0 0.0
    %4564 = vmatpush1.msra.mxu0 0.0
    %4565 = vmatprep.subr.mxu0 0.0
    %4566 = vmatpush1.msra.mxu0 0.0
    %4567 = vmatprep.subr.mxu0 0.0
    %4568 = vmatpush1.msra.mxu0 0.0
    %4569 = vmatprep.subr.mxu0 0.0
    %4570 = vmatpush1.msra.mxu0 0.0
    %4571 = vmatprep.subr.mxu0 0.0
    %4572 = vmatpush1.msra.mxu0 0.0
    %4573 = vmatprep.subr.mxu0 0.0
    %4574 = vmatpush1.msra.mxu0 0.0
    %4575 = vmatprep.subr.mxu0 0.0
    %4576 = vmatpush1.msra.mxu0 0.0
    %4577 = vmatprep.subr.mxu0 0.0
    %4578 = vmatpush1.msra.mxu0 0.0
    %4579 = vmatprep.subr.mxu0 0.0
    %4580 = vmatpush1.msra.mxu0 0.0
    %4581 = vmatprep.mubr.f32.mxu0 0.0
    %v4582 = vand.u32 %v4166, 4294901760
    %4583 = vmatmul.mubr.f32.gmra.mrb[0].mxu0 %v4582
    %v4584 = vpop.f32.mrb[0].mxu0
    %v4585 = vadd.f32 %v4500, %v4584
    %v4586 = vpop.f32.mrb[0].mxu0
    %4587 = vmatprep.mubr.f32.mxu0 0.0
    %v4588 = vand.u32 %v4169, 4294901760
    %4589 = vmatmul.mubr.f32.gmra.mrb[0].mxu0 %v4588
    %v4590 = vpop.f32.mrb[0].mxu0
    %v4591 = vadd.f32 %v4508, %v4590
    %v4592 = vpop.f32.mrb[0].mxu0
    %4593 = vdwg.mxu0
    %4594 = vmatprep.subr.mxu0 0.0
    %v4595 = vand.u32 %v4156, 4294901760
    %4596 = vmatpush1.msra.mxu0 %v4595
    %4597 = vmatprep.subr.mxu0 0.0
    %v4598 = vand.u32 %v4161, 4294901760
    %4599 = vmatpush1.msra.mxu0 %v4598
    %4600 = vmatprep.subr.mxu0 0.0
    %4601 = vmatpush1.msra.mxu0 0.0
    %4602 = vmatprep.subr.mxu0 0.0
    %4603 = vmatpush1.msra.mxu0 0.0
    %4604 = vmatprep.subr.mxu0 0.0
    %4605 = vmatpush1.msra.mxu0 0.0
    %4606 = vmatprep.subr.mxu0 0.0
    %4607 = vmatpush1.msra.mxu0 0.0
    %4608 = vmatprep.subr.mxu0 0.0
    %4609 = vmatpush1.msra.mxu0 0.0
    %4610 = vmatprep.subr.mxu0 0.0
    %4611 = vmatpush1.msra.mxu0 0.0
    %4612 = vmatprep.subr.mxu0 0.0
    %4613 = vmatpush1.msra.mxu0 0.0
    %4614 = vmatprep.subr.mxu0 0.0
    %4615 = vmatpush1.msra.mxu0 0.0
    %4616 = vmatprep.subr.mxu0 0.0
    %4617 = vmatpush1.msra.mxu0 0.0
    %4618 = vmatprep.subr.mxu0 0.0
    %4619 = vmatpush1.msra.mxu0 0.0
    %4620 = vmatprep.subr.mxu0 0.0
    %4621 = vmatpush1.msra.mxu0 0.0
    %4622 = vmatprep.subr.mxu0 0.0
    %4623 = vmatpush1.msra.mxu0 0.0
    %4624 = vmatprep.subr.mxu0 0.0
    %4625 = vmatpush1.msra.mxu0 0.0
    %4626 = vmatprep.subr.mxu0 0.0
    %4627 = vmatpush1.msra.mxu0 0.0
    %4628 = vmatprep.subr.mxu0 0.0
    %4629 = vmatpush1.msra.mxu0 0.0
    %4630 = vmatprep.subr.mxu0 0.0
    %4631 = vmatpush1.msra.mxu0 0.0
    %4632 = vmatprep.subr.mxu0 0.0
    %4633 = vmatpush1.msra.mxu0 0.0
    %4634 = vmatprep.subr.mxu0 0.0
    %4635 = vmatpush1.msra.mxu0 0.0
    %4636 = vmatprep.subr.mxu0 0.0
    %4637 = vmatpush1.msra.mxu0 0.0
    %4638 = vmatprep.subr.mxu0 0.0
    %4639 = vmatpush1.msra.mxu0 0.0
    %4640 = vmatprep.subr.mxu0 0.0
    %4641 = vmatpush1.msra.mxu0 0.0
    %4642 = vmatprep.subr.mxu0 0.0
    %4643 = vmatpush1.msra.mxu0 0.0
    %4644 = vmatprep.subr.mxu0 0.0
    %4645 = vmatpush1.msra.mxu0 0.0
    %4646 = vmatprep.subr.mxu0 0.0
    %4647 = vmatpush1.msra.mxu0 0.0
    %4648 = vmatprep.subr.mxu0 0.0
    %4649 = vmatpush1.msra.mxu0 0.0
    %4650 = vmatprep.subr.mxu0 0.0
    %4651 = vmatpush1.msra.mxu0 0.0
    %4652 = vmatprep.subr.mxu0 0.0
    %4653 = vmatpush1.msra.mxu0 0.0
    %4654 = vmatprep.subr.mxu0 0.0
    %4655 = vmatpush1.msra.mxu0 0.0
    %4656 = vmatprep.subr.mxu0 0.0
    %4657 = vmatpush1.msra.mxu0 0.0
    %4658 = vmatprep.subr.mxu0 0.0
    %4659 = vmatpush1.msra.mxu0 0.0
    %4660 = vmatprep.mubr.f32.mxu0 0.0
    %v4661 = vand.u32 %v4166, 4294901760
    %4662 = vmatmul.mubr.f32.gmra.mrb[0].mxu0 %v4661
    %v4663 = vpop.f32.mrb[0].mxu0
    %v4664 = vadd.f32 %v4585, %v4663
    %v4665 = vpop.f32.mrb[0].mxu0
    %4666 = vmatprep.mubr.f32.mxu0 0.0
    %v4667 = vand.u32 %v4169, 4294901760
    %4668 = vmatmul.mubr.f32.gmra.mrb[0].mxu0 %v4667
    %v4669 = vpop.f32.mrb[0].mxu0
    %v4670 = vadd.f32 %v4591, %v4669
    %v4671 = vpop.f32.mrb[0].mxu0
    %4672 = vdwg.mxu0
    %v4673 = vsub.f32 %v1406, %v4664
    %v4674 = vsub.f32 %v1407, %v4670
    %v4675 = vsel %vm4164, %v4673, -inf
    %vm4676 = vcmask 123904
    %v4677 = vsel %vm4676, %v4674, -inf
    %v4678 = vmax.f32 %v4675, %v4677
    %v4679 = vrot.slane %v4678, 4
    %v4680 = vmax.f32 %v4678, %v4679
    %v4681 = vrot.slane %v4680, 2
    %v4682 = vmax.f32 %v4680, %v4681
    %v4683 = vrot.slane %v4682, 1
    %v4684 = vmax.f32 %v4682, %v4683
    %v4685 = vsub.f32 %v4673, %v4684
    %v4686 = vsub.f32 %v4674, %v4684
    %v4687 = vmul.f32 %v4685, 1.442695
    %v4688 = vpow.pop %v4687
    %v4689 = vmul.f32 %v4686, 1.442695
    %v4690 = vpow.pop %v4689
    %v4691 = vsel %vm4164, %v4688, 0.0
    %v4692 = vsel %vm4676, %v4690, 0.0
    %v4693 = vadd.f32 %v4691, %v4692
    %v4694 = vrot.slane %v4693, 4
    %v4695 = vadd.f32 %v4693, %v4694
    %v4696 = vrot.slane %v4695, 2
    %v4697 = vadd.f32 %v4695, %v4696
    %v4698 = vrot.slane %v4697, 1
    %v4699 = vadd.f32 %v4697, %v4698
    %v4700 = vlog2.pop %v4699
    %v4701 = vmul.f32 %v4700, 0.6931472
    %v4702 = vadd.f32 %v4684, %v4701
    %v4703 = vsub.f32 %v4673, %v4702
    %v4704 = vsub.f32 %v4674, %v4702
    %4705 = vst.msk [vmem:[#allocation2] sm:$0xff] %vm4164, %v4703
    %4706 = vst.msk [vmem:[#allocation2 + $0x8] sm:$0x3] %vm4676, %v4704
    // Predicated region
    $region34: #{tpu_custom_call.1} parent=1 // pred_check
      _
    $region35: #{tpu_custom_call.1} parent=1 // pred_check_branch
      %4708 = sbr.rel (0) target = $region37
    $region36: #{tpu_custom_call.1} parent=1 // pred_region
      %s4710 = ssub.s32 256, 256
      %4711 = vsyncadd [#allocation3], %s4710
      %s4712 = sshll.u32 [#allocation2], 4
      %s4713 = int_to_ptr.vmem [resolvable:$true] %s4712
      %4718 = dma.vmem_to_hbm [thread:$0]  %s4713, 256, %s8, [#allocation3], 128, 128, 8
    $region37: #{tpu_custom_call.1} parent=1 // pred_fallthru
      _
    // Predicated region
    $region38: #{tpu_custom_call.1} parent=1 // pred_check
      _
    $region39: #{tpu_custom_call.1} parent=1 // pred_check_branch
      %4720 = sbr.rel (0) target = $region41
    $region40: #{tpu_custom_call.1} parent=1 // pred_region
      %4721 = dma.done [#allocation3], 256
    $region41: #{tpu_custom_call.1} parent=1 // pred_fallthru
      _
    %4722 = vsyncpa [#allocation3], 1

</llo_original>
